<compile_context>
chip_gen: v5e
topology: v5e:2x2
jax: 0.10.0
libtpu: 0.0.40
codegen_flags: <defaults>
</compile_context>

<pallas_src>
import functools

import jax
import jax.numpy as jnp
from jax.experimental import pallas as pl
from jax.experimental.pallas import tpu as pltpu


# Per-batch-tile activation budget (leaves headroom for weights + double
# buffering inside the 32 MiB scoped VMEM limit, safe on v5e/v6e/v7x).
VMEM_ACT_BUDGET = 20 * 1024 * 1024
VMEM_LIMIT_BYTES = 32 * 1024 * 1024


# ---------------------------------------------------------------------------
# In-kernel helpers
# ---------------------------------------------------------------------------
def _zero_halo(pref, h, w):
    """Zero only the padding halo of a (BT, h+2, w+4, C) scratch ref.

    Rows 0 / h+1 and columns 1 / w+2 form the conv zero padding.  The W axis
    is padded by 2 per side so every bf16 store is sublane-pair aligned; the
    outermost columns (0, w+3) are never read but zeroing them keeps the halo
    stores aligned as well.  The interior is NOT touched here (written once
    by the caller)."""
    bt, c = pref.shape[0], pref.shape[3]
    dt = pref.dtype
    zrow = jnp.zeros((bt, 1, w + 4, c), dt)
    pref[:, 0:1, :, :] = zrow
    pref[:, h + 1:h + 2, :, :] = zrow
    zcol = jnp.zeros((bt, h, 2, c), dt)
    pref[:, 1:h + 1, 0:2, :] = zcol
    pref[:, 1:h + 1, w + 2:w + 4, :] = zcol


def _im2col3x3(pad_ref, h, w):
    """Gather the 9 shifted 3x3 taps of a zero-padded (BT, h+2, w+4, Cin) bf16
    scratch ref into one big-K patch matrix of shape (BT*h*w, 9*Cin).
    Columns are offset by +1 because of the 2-wide (alignment) W halo."""
    b, cin = pad_ref.shape[0], pad_ref.shape[3]
    taps = [pad_ref[:, ky:ky + h, kx + 1:kx + 1 + w, :]
            for ky in range(3) for kx in range(3)]
    return jnp.concatenate(taps, axis=-1).reshape(b * h * w, 9 * cin)


def _maxpool2x2(y, batch, h, w, c):
    """2x2 / stride-2 max pool.  y: (batch*h*w, c) rows in (b,h,w) order.
    Returns (batch, h//2, w//2, c) in f32."""
    y = y.reshape(batch * h, w, c)
    y = y.reshape(batch * h, w // 2, 2, c)
    y = jnp.maximum(y[:, :, 0, :], y[:, :, 1, :])          # pool along W
    y = y.reshape(batch * (h // 2), 2, w // 2, c)
    y = jnp.maximum(y[:, 0], y[:, 1])                      # pool along H
    return y.reshape(batch, h // 2, w // 2, c)


# ---------------------------------------------------------------------------
# Fused forward kernel (one batch tile per grid step)
# ---------------------------------------------------------------------------
def captcha_fused_kernel(
    x_ref,                        # (BT, H, W, 3)    f32 NHWC input tile
    w1_ref, b1_ref,               # (27, 32)   bf16 (BN scale folded), (1, 32) f32
    w2_ref, b2_ref,               # (288, 64)  bf16, (1, 64)  f32
    w3_ref, b3_ref,               # (576, 128) bf16, (1, 128) f32
    fw1_ref, fb1_ref,             # (flat, 512) bf16 NHWC-permuted, (1, 512) f32
    fw2_ref, fb2_ref,             # (512, Npad) bf16 lane-padded, (1, Npad) f32
    o_ref,                        # (BT, Npad) f32 lane-padded logits
    p1_ref, p2_ref, p3_ref,       # bf16 padded-activation scratch
    *, BT, H, W):
    H2, W2 = H // 2, W // 2
    H4, W4 = H // 4, W // 4
    H8, W8 = H // 8, W // 8
    bf16 = jnp.bfloat16

    # ---- conv block 1: 3 -> 32  (single im2col matmul, K = 27) --------------
    _zero_halo(p1_ref, H, W)
    p1_ref[:, 1:H + 1, 2:W + 2, :] = x_ref[...].astype(bf16)
    y = jnp.dot(_im2col3x3(p1_ref, H, W), w1_ref[...],
                preferred_element_type=jnp.float32)
    y = jnp.maximum(y + b1_ref[0], 0.0)                    # BN folded + ReLU
    y = _maxpool2x2(y, BT, H, W, 32)                       # (BT, H2, W2, 32)

    # ---- conv block 2: 32 -> 64 (single im2col matmul, K = 288) -------------
    _zero_halo(p2_ref, H2, W2)
    p2_ref[:, 1:H2 + 1, 2:W2 + 2, :] = y.astype(bf16)      # bf16 scratch store
    y = jnp.dot(_im2col3x3(p2_ref, H2, W2), w2_ref[...],
                preferred_element_type=jnp.float32)
    y = jnp.maximum(y + b2_ref[0], 0.0)
    y = _maxpool2x2(y, BT, H2, W2, 64)                     # (BT, H4, W4, 64)

    # ---- conv block 3: 64 -> 128 (single im2col matmul, K = 576) ------------
    _zero_halo(p3_ref, H4, W4)
    p3_ref[:, 1:H4 + 1, 2:W4 + 2, :] = y.astype(bf16)
    y = jnp.dot(_im2col3x3(p3_ref, H4, W4), w3_ref[...],
                preferred_element_type=jnp.float32)
    y = jnp.maximum(y + b3_ref[0], 0.0)
    y = _maxpool2x2(y, BT, H4, W4, 128)                    # (BT, H8, W8, 128)

    # ---- classifier (Dropout = identity at inference) -----------------------
    # NHWC flatten as lane-aligned 128-wide concatenations (matches fw1's
    # pre-permuted column order), then ONE big-K matmul for fc1.
    feats = jnp.concatenate(
        [y[:, hh, ww, :] for hh in range(H8) for ww in range(W8)],
        axis=-1).astype(bf16)                              # (BT, H8*W8*128)
    h1 = jnp.dot(feats, fw1_ref[...], preferred_element_type=jnp.float32)
    h1 = jnp.maximum(h1 + fb1_ref[0], 0.0)                 # ReLU

    out = jnp.dot(h1.astype(bf16), fw2_ref[...],
                  preferred_element_type=jnp.float32) + fb2_ref[0]
    o_ref[...] = out.astype(o_ref.dtype)                   # lane-dense store


# ---------------------------------------------------------------------------
# One-time parameter preparation (PyTorch layout -> kernel layout)
# ---------------------------------------------------------------------------
def prepare_params(params, image_height, image_width, eps=1e-5, lane=128):
    """Fold BN scale into the bf16 conv weights (bias-only epilogue), reshape
    conv weights to im2col layout, permute fc1 columns to NHWC flatten order,
    and lane-pad fc2 to a multiple of 128 output columns."""
    def bn_scale_bias(conv_b, bn):
        gamma, beta, mean, var = bn
        scale = gamma / jnp.sqrt(var + eps)
        bias = (conv_b - mean) * scale + beta
        return scale.astype(jnp.float32), bias.reshape(1, -1).astype(jnp.float32)

    def conv_im2col(w, scale):   # (Cout, Cin, 3, 3) -> (9*Cin, Cout), K=(ky,kx,cin)
        cout, cin = w.shape[0], w.shape[1]
        w = w * scale[:, None, None, None]                 # fold BN scale
        return jnp.transpose(w, (2, 3, 1, 0)).reshape(9 * cin, cout).astype(jnp.bfloat16)

    h8, w8 = image_height // 8, image_width // 8
    s1, b1 = bn_scale_bias(params["conv1_b"], params["bn1"])
    s2, b2 = bn_scale_bias(params["conv2_b"], params["bn2"])
    s3, b3 = bn_scale_bias(params["conv3_b"], params["bn3"])

    # PyTorch flattens NCHW (c, h, w); permute fc1 columns to NHWC (h, w, c)
    # so no runtime transpose of the activations is needed.
    fc1_w = params["fc1_w"]                                   # (512, 128*h8*w8)
    fw1 = (fc1_w.reshape(512, 128, h8, w8)
           .transpose(2, 3, 1, 0)
           .reshape(h8 * w8 * 128, 512)).astype(jnp.bfloat16)

    num_out = params["fc2_w"].shape[0]
    n_pad = ((num_out + lane - 1) // lane) * lane
    fw2 = jnp.zeros((512, n_pad), jnp.float32).at[:, :num_out].set(
        jnp.transpose(params["fc2_w"])).astype(jnp.bfloat16)
    fb2 = jnp.zeros((1, n_pad), jnp.float32).at[0, :num_out].set(params["fc2_b"])

    return {
        "w1": conv_im2col(params["conv1_w"], s1), "b1": b1,
        "w2": conv_im2col(params["conv2_w"], s2), "b2": b2,
        "w3": conv_im2col(params["conv3_w"], s3), "b3": b3,
        "fw1": fw1, "fb1": params["fc1_b"].reshape(1, -1).astype(jnp.float32),
        "fw2": fw2, "fb2": fb2,
    }


# ---------------------------------------------------------------------------
# Batch-tile selection from an explicit VMEM budget
# ---------------------------------------------------------------------------
def _choose_batch_tile(B, H, W, budget_bytes=VMEM_ACT_BUDGET):
    hw = H * W
    per = (
        (H + 2) * (W + 4) * 3 * 2                       # p1 scratch (bf16)
        + (H // 2 + 2) * (W // 2 + 4) * 32 * 2          # p2 scratch
        + (H // 4 + 2) * (W // 4 + 4) * 64 * 2          # p3 scratch
        + hw * (27 * 2 + 32 * 4)                        # conv1 patches + f32 act
        + (hw // 4) * (288 * 2 + 64 * 4)                # conv2 patches + f32 act
        + (hw // 16) * (576 * 2 + 128 * 4)              # conv3 patches + f32 act
        + 2 * hw * 3 * 4                                # double-buffered input block
    )
    max_bt = max(1, budget_bytes // per)
    if B <= max_bt:
        return B
    for bt in range(min(max_bt, B), 0, -1):             # prefer 8-aligned tiles
        if B % bt == 0 and (bt % 8 == 0 or bt == B):
            return bt
    for bt in range(min(max_bt, B), 0, -1):
        if B % bt == 0:
            return bt
    return 1


# ---------------------------------------------------------------------------
# Forward wrapper: one pallas_call, batch-gridded
# ---------------------------------------------------------------------------
def captcha_cnn_forward(x_nchw, kp, num_chars, num_classes):
    B, C, H, W = x_nchw.shape
    assert C == 3, "CaptchaCNN takes 3-channel images"
    assert H % 8 == 0 and W % 8 == 0, "spatial dims must be divisible by 8"
    num_out = num_chars * num_classes
    n_pad = kp["fw2"].shape[1]                         # lane-padded logit width

    # Tiny NCHW -> NHWC relayout of the raw input; all other layout work is
    # done once in prepare_params or inside the fused kernel.
    x = jnp.transpose(x_nchw, (0, 2, 3, 1)).astype(jnp.float32)

    BT = _choose_batch_tile(B, H, W)
    grid = (B // BT,)

    def const_spec(a):                                 # weights stay resident
        return pl.BlockSpec(a.shape, lambda b, a=a: (0,) * a.ndim)

    kernel = functools.partial(captcha_fused_kernel, BT=BT, H=H, W=W)
    out = pl.pallas_call(
        kernel,
        grid=grid,
        in_specs=[
            pl.BlockSpec((BT, H, W, 3), lambda b: (b, 0, 0, 0)),
            const_spec(kp["w1"]), const_spec(kp["b1"]),
            const_spec(kp["w2"]), const_spec(kp["b2"]),
            const_spec(kp["w3"]), const_spec(kp["b3"]),
            const_spec(kp["fw1"]), const_spec(kp["fb1"]),
            const_spec(kp["fw2"]), const_spec(kp["fb2"]),
        ],
        out_specs=pl.BlockSpec((BT, n_pad), lambda b: (b, 0)),
        out_shape=jax.ShapeDtypeStruct((B, n_pad), jnp.float32),
        scratch_shapes=[
            pltpu.VMEM((BT, H + 2, W + 4, 3), jnp.bfloat16),           # pad conv1
            pltpu.VMEM((BT, H // 2 + 2, W // 2 + 4, 32), jnp.bfloat16),  # pad conv2
            pltpu.VMEM((BT, H // 4 + 2, W // 4 + 4, 64), jnp.bfloat16),  # pad conv3
        ],
        compiler_params=pltpu.CompilerParams(
            dimension_semantics=("parallel",),
            vmem_limit_bytes=VMEM_LIMIT_BYTES),
    )(x,
      kp["w1"], kp["b1"], kp["w2"], kp["b2"], kp["w3"], kp["b3"],
      kp["fw1"], kp["fb1"], kp["fw2"], kp["fb2"])
    return out[:, :num_out].reshape(B, num_chars, num_classes)


# ---------------------------------------------------------------------------
# Pure-JAX reference (eval-mode semantics), for correctness checking
# ---------------------------------------------------------------------------
def reference_forward(x_nchw, params, num_chars, num_classes, eps=1e-5):
    def block(x, w, b, bn):
        gamma, beta, mean, var = bn
        y = jax.lax.conv_general_dilated(
            x, w, window_strides=(1, 1), padding="SAME",
            dimension_numbers=("NCHW", "OIHW", "NCHW"))
        y = y + b[None, :, None, None]
        scale = (gamma / jnp.sqrt(var + eps))[None, :, None, None]
        y = (y - mean[None, :, None, None]) * scale + beta[None, :, None, None]
        y = jnp.maximum(y, 0.0)
        Bc, Cc, Hc, Wc = y.shape
        return y.reshape(Bc, Cc, Hc // 2, 2, Wc // 2, 2).max(axis=(3, 5))

    y = block(x_nchw, params["conv1_w"], params["conv1_b"], params["bn1"])
    y = block(y, params["conv2_w"], params["conv2_b"], params["bn2"])
    y = block(y, params["conv3_w"], params["conv3_b"], params["bn3"])
    B = y.shape[0]
    y = y.reshape(B, -1)
    h = jnp.maximum(y @ params["fc1_w"].T + params["fc1_b"], 0.0)
    out = h @ params["fc2_w"].T + params["fc2_b"]
    return out.reshape(B, num_chars, num_classes)


# ---------------------------------------------------------------------------
# Deterministic parameter init (PyTorch shapes, incl. conv biases)
# ---------------------------------------------------------------------------
def init_params(key, num_chars, num_classes, image_height, image_width):
    h_out, w_out = image_height // 8, image_width // 8
    flat = 128 * h_out * w_out
    ks = jax.random.split(key, 13)

    def conv_w(k, cout, cin):
        return 0.1 * jax.random.normal(k, (cout, cin, 3, 3), jnp.float32)

    def bn(k, c):
        k1, k2, k3, k4 = jax.random.split(k, 4)
        gamma = 1.0 + 0.1 * jax.random.normal(k1, (c,), jnp.float32)
        beta = 0.1 * jax.random.normal(k2, (c,), jnp.float32)
        mean = 0.1 * jax.random.normal(k3, (c,), jnp.float32)
        var = jax.random.uniform(k4, (c,), jnp.float32, 0.5, 1.5)
        return (gamma, beta, mean, var)

    return {
        "conv1_w": conv_w(ks[0], 32, 3),
        "conv1_b": 0.05 * jax.random.normal(ks[1], (32,), jnp.float32),
        "bn1": bn(ks[2], 32),
        "conv2_w": conv_w(ks[3], 64, 32),
        "conv2_b": 0.05 * jax.random.normal(ks[4], (64,), jnp.float32),
        "bn2": bn(ks[5], 64),
        "conv3_w": conv_w(ks[6], 128, 64),
        "conv3_b": 0.05 * jax.random.normal(ks[7], (128,), jnp.float32),
        "bn3": bn(ks[8], 128),
        "fc1_w": 0.05 * jax.random.normal(ks[9], (512, flat), jnp.float32),
        "fc1_b": 0.05 * jax.random.normal(ks[10], (512,), jnp.float32),
        "fc2_w": 0.05 * jax.random.normal(ks[11], (num_chars * num_classes, 512),
                                          jnp.float32),
        "fc2_b": 0.05 * jax.random.normal(ks[12], (num_chars * num_classes,),
                                          jnp.float32),
    }


if __name__ == "__main__":
    B, C, H, W = 2, 3, 16, 16          # CaptchaCNN takes 3-channel images
    num_chars, num_classes = 4, 10

    key = jax.random.PRNGKey(0)
    kx, kparam = jax.random.split(key)
    x = jax.random.normal(kx, (B, C, H, W), jnp.float32)

    params = init_params(kparam, num_chars, num_classes, H, W)
    kparams = prepare_params(params, H, W)     # one-time weight preprocessing

    fwd = jax.jit(functools.partial(captcha_cnn_forward,
                                    num_chars=num_chars,
                                    num_classes=num_classes))
    out = jax.block_until_ready(fwd(x, kparams))

    assert out.shape == (B, num_chars, num_classes), out.shape
    assert bool(jnp.all(jnp.isfinite(out)))

    # Correctness vs. pure-JAX f32 reference (bf16 matmuls => loose tolerance).
    ref = reference_forward(x, params, num_chars, num_classes)
    err = float(jnp.max(jnp.abs(out - ref)))
    scale = float(jnp.max(jnp.abs(ref))) + 1e-6
    assert err <= 0.1 * scale + 5e-3, (err, scale)

    print("KERNEL_OK")
</pallas_src>

<mosaic_0001>
module attributes {stable_mosaic.version = 11 : i64} {
  func.func @captcha_fused_kernel(%arg0: i32, %arg1: memref<2x16x16x3xf32, #tpu.memory_space<vmem>>, %arg2: memref<27x32xbf16, #tpu.memory_space<vmem>>, %arg3: memref<1x32xf32, #tpu.memory_space<vmem>>, %arg4: memref<288x64xbf16, #tpu.memory_space<vmem>>, %arg5: memref<1x64xf32, #tpu.memory_space<vmem>>, %arg6: memref<576x128xbf16, #tpu.memory_space<vmem>>, %arg7: memref<1x128xf32, #tpu.memory_space<vmem>>, %arg8: memref<512x512xbf16, #tpu.memory_space<vmem>>, %arg9: memref<1x512xf32, #tpu.memory_space<vmem>>, %arg10: memref<512x128xbf16, #tpu.memory_space<vmem>>, %arg11: memref<1x128xf32, #tpu.memory_space<vmem>>, %arg12: memref<2x128xf32, #tpu.memory_space<vmem>>, %arg13: memref<2x18x20x3xbf16, #tpu.memory_space<vmem>>, %arg14: memref<2x10x12x32xbf16, #tpu.memory_space<vmem>>, %arg15: memref<2x6x8x64xbf16, #tpu.memory_space<vmem>>) attributes {dimension_semantics = [#tpu.dimension_semantics<parallel>], iteration_bounds = array<i64: 1>, scalar_prefetch = 0 : i64, scratch_operands = 3 : i64, tpu.core_type = #tpu.core_type<tc>, window_params = [{transform_indices = @transform_0, window_bounds = array<i64: 2, 16, 16, 3>}, {pipeline_mode = #tpu.pipeline_mode<synchronous>, transform_indices = @transform_1, window_bounds = array<i64: 27, 32>}, {pipeline_mode = #tpu.pipeline_mode<synchronous>, transform_indices = @transform_2, window_bounds = array<i64: 1, 32>}, {pipeline_mode = #tpu.pipeline_mode<synchronous>, transform_indices = @transform_3, window_bounds = array<i64: 288, 64>}, {pipeline_mode = #tpu.pipeline_mode<synchronous>, transform_indices = @transform_4, window_bounds = array<i64: 1, 64>}, {pipeline_mode = #tpu.pipeline_mode<synchronous>, transform_indices = @transform_5, window_bounds = array<i64: 576, 128>}, {pipeline_mode = #tpu.pipeline_mode<synchronous>, transform_indices = @transform_6, window_bounds = array<i64: 1, 128>}, {pipeline_mode = #tpu.pipeline_mode<synchronous>, transform_indices = @transform_7, window_bounds = array<i64: 512, 512>}, {pipeline_mode = #tpu.pipeline_mode<synchronous>, transform_indices = @transform_8, window_bounds = array<i64: 1, 512>}, {pipeline_mode = #tpu.pipeline_mode<synchronous>, transform_indices = @transform_9, window_bounds = array<i64: 512, 128>}, {pipeline_mode = #tpu.pipeline_mode<synchronous>, transform_indices = @transform_10, window_bounds = array<i64: 1, 128>}, {transform_indices = @transform_11, window_bounds = array<i64: 2, 128>}]} {
    %cst = arith.constant 0.000000e+00 : bf16
    %0 = vector.broadcast %cst : bf16 to vector<2x1x20x3xbf16>
    %c0 = arith.constant 0 : index
    %c0_0 = arith.constant 0 : index
    %c0_1 = arith.constant 0 : index
    %c0_2 = arith.constant 0 : index
    %1 = vector.load %arg13[%c0, %c0_0, %c0_1, %c0_2] : memref<2x18x20x3xbf16, #tpu.memory_space<vmem>>, vector<2x1x20x3xbf16>
    tpu.vector_store %arg13[%c0, %c0_0, %c0_1, %c0_2], %0 {strides = array<i32>} : memref<2x18x20x3xbf16, #tpu.memory_space<vmem>>, vector<2x1x20x3xbf16>,
    %c0_3 = arith.constant 0 : index
    %c17 = arith.constant 17 : index
    %c0_4 = arith.constant 0 : index
    %c0_5 = arith.constant 0 : index
    %2 = vector.load %arg13[%c0_3, %c17, %c0_4, %c0_5] : memref<2x18x20x3xbf16, #tpu.memory_space<vmem>>, vector<2x1x20x3xbf16>
    tpu.vector_store %arg13[%c0_3, %c17, %c0_4, %c0_5], %0 {strides = array<i32>} : memref<2x18x20x3xbf16, #tpu.memory_space<vmem>>, vector<2x1x20x3xbf16>,
    %cst_6 = arith.constant 0.000000e+00 : bf16
    %3 = vector.broadcast %cst_6 : bf16 to vector<2x16x2x3xbf16>
    %c0_7 = arith.constant 0 : index
    %c1 = arith.constant 1 : index
    %c0_8 = arith.constant 0 : index
    %c0_9 = arith.constant 0 : index
    %4 = vector.load %arg13[%c0_7, %c1, %c0_8, %c0_9] : memref<2x18x20x3xbf16, #tpu.memory_space<vmem>>, vector<2x16x2x3xbf16>
    tpu.vector_store %arg13[%c0_7, %c1, %c0_8, %c0_9], %3 {strides = array<i32>} : memref<2x18x20x3xbf16, #tpu.memory_space<vmem>>, vector<2x16x2x3xbf16>,
    %c0_10 = arith.constant 0 : index
    %c1_11 = arith.constant 1 : index
    %c18 = arith.constant 18 : index
    %c0_12 = arith.constant 0 : index
    %5 = vector.load %arg13[%c0_10, %c1_11, %c18, %c0_12] : memref<2x18x20x3xbf16, #tpu.memory_space<vmem>>, vector<2x16x2x3xbf16>
    tpu.vector_store %arg13[%c0_10, %c1_11, %c18, %c0_12], %3 {strides = array<i32>} : memref<2x18x20x3xbf16, #tpu.memory_space<vmem>>, vector<2x16x2x3xbf16>,
    %c0_13 = arith.constant 0 : index
    %c0_14 = arith.constant 0 : index
    %c0_15 = arith.constant 0 : index
    %c0_16 = arith.constant 0 : index
    %6 = vector.load %arg1[%c0_13, %c0_14, %c0_15, %c0_16] : memref<2x16x16x3xf32, #tpu.memory_space<vmem>>, vector<2x16x16x3xf32>
    %7 = arith.truncf %6 : vector<2x16x16x3xf32> to vector<2x16x16x3xbf16>
    %c0_17 = arith.constant 0 : index
    %c1_18 = arith.constant 1 : index
    %c2 = arith.constant 2 : index
    %c0_19 = arith.constant 0 : index
    %8 = vector.load %arg13[%c0_17, %c1_18, %c2, %c0_19] : memref<2x18x20x3xbf16, #tpu.memory_space<vmem>>, vector<2x16x16x3xbf16>
    tpu.vector_store %arg13[%c0_17, %c1_18, %c2, %c0_19], %7 {strides = array<i32>} : memref<2x18x20x3xbf16, #tpu.memory_space<vmem>>, vector<2x16x16x3xbf16>,
    %c0_20 = arith.constant 0 : index
    %c0_21 = arith.constant 0 : index
    %c1_22 = arith.constant 1 : index
    %c0_23 = arith.constant 0 : index
    %9 = vector.load %arg13[%c0_20, %c0_21, %c1_22, %c0_23] : memref<2x18x20x3xbf16, #tpu.memory_space<vmem>>, vector<2x16x16x3xbf16>
    %c0_24 = arith.constant 0 : index
    %c0_25 = arith.constant 0 : index
    %c2_26 = arith.constant 2 : index
    %c0_27 = arith.constant 0 : index
    %10 = vector.load %arg13[%c0_24, %c0_25, %c2_26, %c0_27] : memref<2x18x20x3xbf16, #tpu.memory_space<vmem>>, vector<2x16x16x3xbf16>
    %c0_28 = arith.constant 0 : index
    %c0_29 = arith.constant 0 : index
    %c3 = arith.constant 3 : index
    %c0_30 = arith.constant 0 : index
    %11 = vector.load %arg13[%c0_28, %c0_29, %c3, %c0_30] : memref<2x18x20x3xbf16, #tpu.memory_space<vmem>>, vector<2x16x16x3xbf16>
    %c0_31 = arith.constant 0 : index
    %c1_32 = arith.constant 1 : index
    %c1_33 = arith.constant 1 : index
    %c0_34 = arith.constant 0 : index
    %12 = vector.load %arg13[%c0_31, %c1_32, %c1_33, %c0_34] : memref<2x18x20x3xbf16, #tpu.memory_space<vmem>>, vector<2x16x16x3xbf16>
    %c0_35 = arith.constant 0 : index
    %c1_36 = arith.constant 1 : index
    %c2_37 = arith.constant 2 : index
    %c0_38 = arith.constant 0 : index
    %13 = vector.load %arg13[%c0_35, %c1_36, %c2_37, %c0_38] : memref<2x18x20x3xbf16, #tpu.memory_space<vmem>>, vector<2x16x16x3xbf16>
    %c0_39 = arith.constant 0 : index
    %c1_40 = arith.constant 1 : index
    %c3_41 = arith.constant 3 : index
    %c0_42 = arith.constant 0 : index
    %14 = vector.load %arg13[%c0_39, %c1_40, %c3_41, %c0_42] : memref<2x18x20x3xbf16, #tpu.memory_space<vmem>>, vector<2x16x16x3xbf16>
    %c0_43 = arith.constant 0 : index
    %c2_44 = arith.constant 2 : index
    %c1_45 = arith.constant 1 : index
    %c0_46 = arith.constant 0 : index
    %15 = vector.load %arg13[%c0_43, %c2_44, %c1_45, %c0_46] : memref<2x18x20x3xbf16, #tpu.memory_space<vmem>>, vector<2x16x16x3xbf16>
    %c0_47 = arith.constant 0 : index
    %c2_48 = arith.constant 2 : index
    %c2_49 = arith.constant 2 : index
    %c0_50 = arith.constant 0 : index
    %16 = vector.load %arg13[%c0_47, %c2_48, %c2_49, %c0_50] : memref<2x18x20x3xbf16, #tpu.memory_space<vmem>>, vector<2x16x16x3xbf16>
    %c0_51 = arith.constant 0 : index
    %c2_52 = arith.constant 2 : index
    %c3_53 = arith.constant 3 : index
    %c0_54 = arith.constant 0 : index
    %17 = vector.load %arg13[%c0_51, %c2_52, %c3_53, %c0_54] : memref<2x18x20x3xbf16, #tpu.memory_space<vmem>>, vector<2x16x16x3xbf16>
    %18 = tpu.concatenate %9, %10, %11, %12, %13, %14, %15, %16, %17 in 3 : vector<2x16x16x3xbf16>, vector<2x16x16x3xbf16>, vector<2x16x16x3xbf16>, vector<2x16x16x3xbf16>, vector<2x16x16x3xbf16>, vector<2x16x16x3xbf16>, vector<2x16x16x3xbf16>, vector<2x16x16x3xbf16>, vector<2x16x16x3xbf16> -> vector<2x16x16x27xbf16>
    %19 = vector.shape_cast %18 : vector<2x16x16x27xbf16> to vector<512x27xbf16>
    %c0_55 = arith.constant 0 : index
    %c0_56 = arith.constant 0 : index
    %20 = vector.load %arg2[%c0_55, %c0_56] : memref<27x32xbf16, #tpu.memory_space<vmem>>, vector<27x32xbf16>
    %cst_57 = arith.constant dense<0.000000e+00> : vector<512x32xf32>
    %21 = tpu.matmul %19, %20, %cst_57 {dimension_numbers = #tpu.dot_dimension_numbers<[1], [0], [0], [1], [0, 0, 1, 1], [], []>} : vector<512x27xbf16>, vector<27x32xbf16>, vector<512x32xf32> -> vector<512x32xf32>
    %c0_58 = arith.constant 0 : index
    %c0_59 = arith.constant 0 : index
    %22 = vector.load %arg3[%c0_58, %c0_59] : memref<1x32xf32, #tpu.memory_space<vmem>>, vector<1x32xf32>
    %23 = vector.shape_cast %22 : vector<1x32xf32> to vector<32xf32>
    %24 = vector.shape_cast %23 : vector<32xf32> to vector<1x32xf32>
    %25 = vector.broadcast %24 : vector<1x32xf32> to vector<512x32xf32>
    %26 = arith.addf %21, %25 : vector<512x32xf32>
    %cst_60 = arith.constant 0.000000e+00 : f32
    %27 = vector.broadcast %cst_60 : f32 to vector<512x32xf32>
    %28 = arith.maximumf %26, %27 : vector<512x32xf32>
    %29 = vector.shape_cast %28 : vector<512x32xf32> to vector<32x16x32xf32>
    %30 = vector.shape_cast %29 : vector<32x16x32xf32> to vector<32x8x2x32xf32>
    %31 = vector.extract_strided_slice %30 {offsets = [0, 0, 0, 0], sizes = [32, 8, 1, 32], strides = [1, 1, 1, 1]} : vector<32x8x2x32xf32> to vector<32x8x1x32xf32>
    %32 = vector.shape_cast %31 : vector<32x8x1x32xf32> to vector<32x8x32xf32>
    %33 = vector.extract_strided_slice %30 {offsets = [0, 0, 1, 0], sizes = [32, 8, 1, 32], strides = [1, 1, 1, 1]} : vector<32x8x2x32xf32> to vector<32x8x1x32xf32>
    %34 = vector.shape_cast %33 : vector<32x8x1x32xf32> to vector<32x8x32xf32>
    %35 = arith.maximumf %32, %34 : vector<32x8x32xf32>
    %36 = vector.shape_cast %35 : vector<32x8x32xf32> to vector<16x2x8x32xf32>
    %37 = vector.extract_strided_slice %36 {offsets = [0, 0, 0, 0], sizes = [16, 1, 8, 32], strides = [1, 1, 1, 1]} : vector<16x2x8x32xf32> to vector<16x1x8x32xf32>
    %38 = vector.shape_cast %37 : vector<16x1x8x32xf32> to vector<16x8x32xf32>
    %39 = vector.extract_strided_slice %36 {offsets = [0, 1, 0, 0], sizes = [16, 1, 8, 32], strides = [1, 1, 1, 1]} : vector<16x2x8x32xf32> to vector<16x1x8x32xf32>
    %40 = vector.shape_cast %39 : vector<16x1x8x32xf32> to vector<16x8x32xf32>
    %41 = arith.maximumf %38, %40 : vector<16x8x32xf32>
    %42 = vector.shape_cast %41 : vector<16x8x32xf32> to vector<2x8x8x32xf32>
    %cst_61 = arith.constant 0.000000e+00 : bf16
    %43 = vector.broadcast %cst_61 : bf16 to vector<2x1x12x32xbf16>
    %c0_62 = arith.constant 0 : index
    %c0_63 = arith.constant 0 : index
    %c0_64 = arith.constant 0 : index
    %c0_65 = arith.constant 0 : index
    %44 = vector.load %arg14[%c0_62, %c0_63, %c0_64, %c0_65] : memref<2x10x12x32xbf16, #tpu.memory_space<vmem>>, vector<2x1x12x32xbf16>
    tpu.vector_store %arg14[%c0_62, %c0_63, %c0_64, %c0_65], %43 {strides = array<i32>} : memref<2x10x12x32xbf16, #tpu.memory_space<vmem>>, vector<2x1x12x32xbf16>,
    %c0_66 = arith.constant 0 : index
    %c9 = arith.constant 9 : index
    %c0_67 = arith.constant 0 : index
    %c0_68 = arith.constant 0 : index
    %45 = vector.load %arg14[%c0_66, %c9, %c0_67, %c0_68] : memref<2x10x12x32xbf16, #tpu.memory_space<vmem>>, vector<2x1x12x32xbf16>
    tpu.vector_store %arg14[%c0_66, %c9, %c0_67, %c0_68], %43 {strides = array<i32>} : memref<2x10x12x32xbf16, #tpu.memory_space<vmem>>, vector<2x1x12x32xbf16>,
    %cst_69 = arith.constant 0.000000e+00 : bf16
    %46 = vector.broadcast %cst_69 : bf16 to vector<2x8x2x32xbf16>
    %c0_70 = arith.constant 0 : index
    %c1_71 = arith.constant 1 : index
    %c0_72 = arith.constant 0 : index
    %c0_73 = arith.constant 0 : index
    %47 = vector.load %arg14[%c0_70, %c1_71, %c0_72, %c0_73] : memref<2x10x12x32xbf16, #tpu.memory_space<vmem>>, vector<2x8x2x32xbf16>
    tpu.vector_store %arg14[%c0_70, %c1_71, %c0_72, %c0_73], %46 {strides = array<i32>} : memref<2x10x12x32xbf16, #tpu.memory_space<vmem>>, vector<2x8x2x32xbf16>,
    %c0_74 = arith.constant 0 : index
    %c1_75 = arith.constant 1 : index
    %c10 = arith.constant 10 : index
    %c0_76 = arith.constant 0 : index
    %48 = vector.load %arg14[%c0_74, %c1_75, %c10, %c0_76] : memref<2x10x12x32xbf16, #tpu.memory_space<vmem>>, vector<2x8x2x32xbf16>
    tpu.vector_store %arg14[%c0_74, %c1_75, %c10, %c0_76], %46 {strides = array<i32>} : memref<2x10x12x32xbf16, #tpu.memory_space<vmem>>, vector<2x8x2x32xbf16>,
    %49 = arith.truncf %42 : vector<2x8x8x32xf32> to vector<2x8x8x32xbf16>
    %c0_77 = arith.constant 0 : index
    %c1_78 = arith.constant 1 : index
    %c2_79 = arith.constant 2 : index
    %c0_80 = arith.constant 0 : index
    %50 = vector.load %arg14[%c0_77, %c1_78, %c2_79, %c0_80] : memref<2x10x12x32xbf16, #tpu.memory_space<vmem>>, vector<2x8x8x32xbf16>
    tpu.vector_store %arg14[%c0_77, %c1_78, %c2_79, %c0_80], %49 {strides = array<i32>} : memref<2x10x12x32xbf16, #tpu.memory_space<vmem>>, vector<2x8x8x32xbf16>,
    %c0_81 = arith.constant 0 : index
    %c0_82 = arith.constant 0 : index
    %c1_83 = arith.constant 1 : index
    %c0_84 = arith.constant 0 : index
    %51 = vector.load %arg14[%c0_81, %c0_82, %c1_83, %c0_84] : memref<2x10x12x32xbf16, #tpu.memory_space<vmem>>, vector<2x8x8x32xbf16>
    %c0_85 = arith.constant 0 : index
    %c0_86 = arith.constant 0 : index
    %c2_87 = arith.constant 2 : index
    %c0_88 = arith.constant 0 : index
    %52 = vector.load %arg14[%c0_85, %c0_86, %c2_87, %c0_88] : memref<2x10x12x32xbf16, #tpu.memory_space<vmem>>, vector<2x8x8x32xbf16>
    %c0_89 = arith.constant 0 : index
    %c0_90 = arith.constant 0 : index
    %c3_91 = arith.constant 3 : index
    %c0_92 = arith.constant 0 : index
    %53 = vector.load %arg14[%c0_89, %c0_90, %c3_91, %c0_92] : memref<2x10x12x32xbf16, #tpu.memory_space<vmem>>, vector<2x8x8x32xbf16>
    %c0_93 = arith.constant 0 : index
    %c1_94 = arith.constant 1 : index
    %c1_95 = arith.constant 1 : index
    %c0_96 = arith.constant 0 : index
    %54 = vector.load %arg14[%c0_93, %c1_94, %c1_95, %c0_96] : memref<2x10x12x32xbf16, #tpu.memory_space<vmem>>, vector<2x8x8x32xbf16>
    %c0_97 = arith.constant 0 : index
    %c1_98 = arith.constant 1 : index
    %c2_99 = arith.constant 2 : index
    %c0_100 = arith.constant 0 : index
    %55 = vector.load %arg14[%c0_97, %c1_98, %c2_99, %c0_100] : memref<2x10x12x32xbf16, #tpu.memory_space<vmem>>, vector<2x8x8x32xbf16>
    %c0_101 = arith.constant 0 : index
    %c1_102 = arith.constant 1 : index
    %c3_103 = arith.constant 3 : index
    %c0_104 = arith.constant 0 : index
    %56 = vector.load %arg14[%c0_101, %c1_102, %c3_103, %c0_104] : memref<2x10x12x32xbf16, #tpu.memory_space<vmem>>, vector<2x8x8x32xbf16>
    %c0_105 = arith.constant 0 : index
    %c2_106 = arith.constant 2 : index
    %c1_107 = arith.constant 1 : index
    %c0_108 = arith.constant 0 : index
    %57 = vector.load %arg14[%c0_105, %c2_106, %c1_107, %c0_108] : memref<2x10x12x32xbf16, #tpu.memory_space<vmem>>, vector<2x8x8x32xbf16>
    %c0_109 = arith.constant 0 : index
    %c2_110 = arith.constant 2 : index
    %c2_111 = arith.constant 2 : index
    %c0_112 = arith.constant 0 : index
    %58 = vector.load %arg14[%c0_109, %c2_110, %c2_111, %c0_112] : memref<2x10x12x32xbf16, #tpu.memory_space<vmem>>, vector<2x8x8x32xbf16>
    %c0_113 = arith.constant 0 : index
    %c2_114 = arith.constant 2 : index
    %c3_115 = arith.constant 3 : index
    %c0_116 = arith.constant 0 : index
    %59 = vector.load %arg14[%c0_113, %c2_114, %c3_115, %c0_116] : memref<2x10x12x32xbf16, #tpu.memory_space<vmem>>, vector<2x8x8x32xbf16>
    %60 = tpu.concatenate %51, %52, %53, %54, %55, %56, %57, %58, %59 in 3 : vector<2x8x8x32xbf16>, vector<2x8x8x32xbf16>, vector<2x8x8x32xbf16>, vector<2x8x8x32xbf16>, vector<2x8x8x32xbf16>, vector<2x8x8x32xbf16>, vector<2x8x8x32xbf16>, vector<2x8x8x32xbf16>, vector<2x8x8x32xbf16> -> vector<2x8x8x288xbf16>
    %61 = vector.shape_cast %60 : vector<2x8x8x288xbf16> to vector<128x288xbf16>
    %c0_117 = arith.constant 0 : index
    %c0_118 = arith.constant 0 : index
    %62 = vector.load %arg4[%c0_117, %c0_118] : memref<288x64xbf16, #tpu.memory_space<vmem>>, vector<288x64xbf16>
    %cst_119 = arith.constant dense<0.000000e+00> : vector<128x64xf32>
    %63 = tpu.matmul %61, %62, %cst_119 {dimension_numbers = #tpu.dot_dimension_numbers<[1], [0], [0], [1], [0, 0, 1, 1], [], []>} : vector<128x288xbf16>, vector<288x64xbf16>, vector<128x64xf32> -> vector<128x64xf32>
    %c0_120 = arith.constant 0 : index
    %c0_121 = arith.constant 0 : index
    %64 = vector.load %arg5[%c0_120, %c0_121] : memref<1x64xf32, #tpu.memory_space<vmem>>, vector<1x64xf32>
    %65 = vector.shape_cast %64 : vector<1x64xf32> to vector<64xf32>
    %66 = vector.shape_cast %65 : vector<64xf32> to vector<1x64xf32>
    %67 = vector.broadcast %66 : vector<1x64xf32> to vector<128x64xf32>
    %68 = arith.addf %63, %67 : vector<128x64xf32>
    %cst_122 = arith.constant 0.000000e+00 : f32
    %69 = vector.broadcast %cst_122 : f32 to vector<128x64xf32>
    %70 = arith.maximumf %68, %69 : vector<128x64xf32>
    %71 = vector.shape_cast %70 : vector<128x64xf32> to vector<16x8x64xf32>
    %72 = vector.shape_cast %71 : vector<16x8x64xf32> to vector<16x4x2x64xf32>
    %73 = vector.extract_strided_slice %72 {offsets = [0, 0, 0, 0], sizes = [16, 4, 1, 64], strides = [1, 1, 1, 1]} : vector<16x4x2x64xf32> to vector<16x4x1x64xf32>
    %74 = vector.shape_cast %73 : vector<16x4x1x64xf32> to vector<16x4x64xf32>
    %75 = vector.extract_strided_slice %72 {offsets = [0, 0, 1, 0], sizes = [16, 4, 1, 64], strides = [1, 1, 1, 1]} : vector<16x4x2x64xf32> to vector<16x4x1x64xf32>
    %76 = vector.shape_cast %75 : vector<16x4x1x64xf32> to vector<16x4x64xf32>
    %77 = arith.maximumf %74, %76 : vector<16x4x64xf32>
    %78 = vector.shape_cast %77 : vector<16x4x64xf32> to vector<8x2x4x64xf32>
    %79 = vector.extract_strided_slice %78 {offsets = [0, 0, 0, 0], sizes = [8, 1, 4, 64], strides = [1, 1, 1, 1]} : vector<8x2x4x64xf32> to vector<8x1x4x64xf32>
    %80 = vector.shape_cast %79 : vector<8x1x4x64xf32> to vector<8x4x64xf32>
    %81 = vector.extract_strided_slice %78 {offsets = [0, 1, 0, 0], sizes = [8, 1, 4, 64], strides = [1, 1, 1, 1]} : vector<8x2x4x64xf32> to vector<8x1x4x64xf32>
    %82 = vector.shape_cast %81 : vector<8x1x4x64xf32> to vector<8x4x64xf32>
    %83 = arith.maximumf %80, %82 : vector<8x4x64xf32>
    %84 = vector.shape_cast %83 : vector<8x4x64xf32> to vector<2x4x4x64xf32>
    %cst_123 = arith.constant 0.000000e+00 : bf16
    %85 = vector.broadcast %cst_123 : bf16 to vector<2x1x8x64xbf16>
    %c0_124 = arith.constant 0 : index
    %c0_125 = arith.constant 0 : index
    %c0_126 = arith.constant 0 : index
    %c0_127 = arith.constant 0 : index
    %86 = vector.load %arg15[%c0_124, %c0_125, %c0_126, %c0_127] : memref<2x6x8x64xbf16, #tpu.memory_space<vmem>>, vector<2x1x8x64xbf16>
    tpu.vector_store %arg15[%c0_124, %c0_125, %c0_126, %c0_127], %85 {strides = array<i32>} : memref<2x6x8x64xbf16, #tpu.memory_space<vmem>>, vector<2x1x8x64xbf16>,
    %c0_128 = arith.constant 0 : index
    %c5 = arith.constant 5 : index
    %c0_129 = arith.constant 0 : index
    %c0_130 = arith.constant 0 : index
    %87 = vector.load %arg15[%c0_128, %c5, %c0_129, %c0_130] : memref<2x6x8x64xbf16, #tpu.memory_space<vmem>>, vector<2x1x8x64xbf16>
    tpu.vector_store %arg15[%c0_128, %c5, %c0_129, %c0_130], %85 {strides = array<i32>} : memref<2x6x8x64xbf16, #tpu.memory_space<vmem>>, vector<2x1x8x64xbf16>,
    %cst_131 = arith.constant 0.000000e+00 : bf16
    %88 = vector.broadcast %cst_131 : bf16 to vector<2x4x2x64xbf16>
    %c0_132 = arith.constant 0 : index
    %c1_133 = arith.constant 1 : index
    %c0_134 = arith.constant 0 : index
    %c0_135 = arith.constant 0 : index
    %89 = vector.load %arg15[%c0_132, %c1_133, %c0_134, %c0_135] : memref<2x6x8x64xbf16, #tpu.memory_space<vmem>>, vector<2x4x2x64xbf16>
    tpu.vector_store %arg15[%c0_132, %c1_133, %c0_134, %c0_135], %88 {strides = array<i32>} : memref<2x6x8x64xbf16, #tpu.memory_space<vmem>>, vector<2x4x2x64xbf16>,
    %c0_136 = arith.constant 0 : index
    %c1_137 = arith.constant 1 : index
    %c6 = arith.constant 6 : index
    %c0_138 = arith.constant 0 : index
    %90 = vector.load %arg15[%c0_136, %c1_137, %c6, %c0_138] : memref<2x6x8x64xbf16, #tpu.memory_space<vmem>>, vector<2x4x2x64xbf16>
    tpu.vector_store %arg15[%c0_136, %c1_137, %c6, %c0_138], %88 {strides = array<i32>} : memref<2x6x8x64xbf16, #tpu.memory_space<vmem>>, vector<2x4x2x64xbf16>,
    %91 = arith.truncf %84 : vector<2x4x4x64xf32> to vector<2x4x4x64xbf16>
    %c0_139 = arith.constant 0 : index
    %c1_140 = arith.constant 1 : index
    %c2_141 = arith.constant 2 : index
    %c0_142 = arith.constant 0 : index
    %92 = vector.load %arg15[%c0_139, %c1_140, %c2_141, %c0_142] : memref<2x6x8x64xbf16, #tpu.memory_space<vmem>>, vector<2x4x4x64xbf16>
    tpu.vector_store %arg15[%c0_139, %c1_140, %c2_141, %c0_142], %91 {strides = array<i32>} : memref<2x6x8x64xbf16, #tpu.memory_space<vmem>>, vector<2x4x4x64xbf16>,
    %c0_143 = arith.constant 0 : index
    %c0_144 = arith.constant 0 : index
    %c1_145 = arith.constant 1 : index
    %c0_146 = arith.constant 0 : index
    %93 = vector.load %arg15[%c0_143, %c0_144, %c1_145, %c0_146] : memref<2x6x8x64xbf16, #tpu.memory_space<vmem>>, vector<2x4x4x64xbf16>
    %c0_147 = arith.constant 0 : index
    %c0_148 = arith.constant 0 : index
    %c2_149 = arith.constant 2 : index
    %c0_150 = arith.constant 0 : index
    %94 = vector.load %arg15[%c0_147, %c0_148, %c2_149, %c0_150] : memref<2x6x8x64xbf16, #tpu.memory_space<vmem>>, vector<2x4x4x64xbf16>
    %c0_151 = arith.constant 0 : index
    %c0_152 = arith.constant 0 : index
    %c3_153 = arith.constant 3 : index
    %c0_154 = arith.constant 0 : index
    %95 = vector.load %arg15[%c0_151, %c0_152, %c3_153, %c0_154] : memref<2x6x8x64xbf16, #tpu.memory_space<vmem>>, vector<2x4x4x64xbf16>
    %c0_155 = arith.constant 0 : index
    %c1_156 = arith.constant 1 : index
    %c1_157 = arith.constant 1 : index
    %c0_158 = arith.constant 0 : index
    %96 = vector.load %arg15[%c0_155, %c1_156, %c1_157, %c0_158] : memref<2x6x8x64xbf16, #tpu.memory_space<vmem>>, vector<2x4x4x64xbf16>
    %c0_159 = arith.constant 0 : index
    %c1_160 = arith.constant 1 : index
    %c2_161 = arith.constant 2 : index
    %c0_162 = arith.constant 0 : index
    %97 = vector.load %arg15[%c0_159, %c1_160, %c2_161, %c0_162] : memref<2x6x8x64xbf16, #tpu.memory_space<vmem>>, vector<2x4x4x64xbf16>
    %c0_163 = arith.constant 0 : index
    %c1_164 = arith.constant 1 : index
    %c3_165 = arith.constant 3 : index
    %c0_166 = arith.constant 0 : index
    %98 = vector.load %arg15[%c0_163, %c1_164, %c3_165, %c0_166] : memref<2x6x8x64xbf16, #tpu.memory_space<vmem>>, vector<2x4x4x64xbf16>
    %c0_167 = arith.constant 0 : index
    %c2_168 = arith.constant 2 : index
    %c1_169 = arith.constant 1 : index
    %c0_170 = arith.constant 0 : index
    %99 = vector.load %arg15[%c0_167, %c2_168, %c1_169, %c0_170] : memref<2x6x8x64xbf16, #tpu.memory_space<vmem>>, vector<2x4x4x64xbf16>
    %c0_171 = arith.constant 0 : index
    %c2_172 = arith.constant 2 : index
    %c2_173 = arith.constant 2 : index
    %c0_174 = arith.constant 0 : index
    %100 = vector.load %arg15[%c0_171, %c2_172, %c2_173, %c0_174] : memref<2x6x8x64xbf16, #tpu.memory_space<vmem>>, vector<2x4x4x64xbf16>
    %c0_175 = arith.constant 0 : index
    %c2_176 = arith.constant 2 : index
    %c3_177 = arith.constant 3 : index
    %c0_178 = arith.constant 0 : index
    %101 = vector.load %arg15[%c0_175, %c2_176, %c3_177, %c0_178] : memref<2x6x8x64xbf16, #tpu.memory_space<vmem>>, vector<2x4x4x64xbf16>
    %102 = tpu.concatenate %93, %94, %95, %96, %97, %98, %99, %100, %101 in 3 : vector<2x4x4x64xbf16>, vector<2x4x4x64xbf16>, vector<2x4x4x64xbf16>, vector<2x4x4x64xbf16>, vector<2x4x4x64xbf16>, vector<2x4x4x64xbf16>, vector<2x4x4x64xbf16>, vector<2x4x4x64xbf16>, vector<2x4x4x64xbf16> -> vector<2x4x4x576xbf16>
    %103 = vector.shape_cast %102 : vector<2x4x4x576xbf16> to vector<32x576xbf16>
    %c0_179 = arith.constant 0 : index
    %c0_180 = arith.constant 0 : index
    %104 = vector.load %arg6[%c0_179, %c0_180] : memref<576x128xbf16, #tpu.memory_space<vmem>>, vector<576x128xbf16>
    %cst_181 = arith.constant dense<0.000000e+00> : vector<32x128xf32>
    %105 = tpu.matmul %103, %104, %cst_181 {dimension_numbers = #tpu.dot_dimension_numbers<[1], [0], [0], [1], [0, 0, 1, 1], [], []>} : vector<32x576xbf16>, vector<576x128xbf16>, vector<32x128xf32> -> vector<32x128xf32>
    %c0_182 = arith.constant 0 : index
    %c0_183 = arith.constant 0 : index
    %106 = vector.load %arg7[%c0_182, %c0_183] : memref<1x128xf32, #tpu.memory_space<vmem>>, vector<1x128xf32>
    %107 = vector.shape_cast %106 : vector<1x128xf32> to vector<128xf32>
    %108 = vector.shape_cast %107 : vector<128xf32> to vector<1x128xf32>
    %109 = vector.broadcast %108 : vector<1x128xf32> to vector<32x128xf32>
    %110 = arith.addf %105, %109 : vector<32x128xf32>
    %cst_184 = arith.constant 0.000000e+00 : f32
    %111 = vector.broadcast %cst_184 : f32 to vector<32x128xf32>
    %112 = arith.maximumf %110, %111 : vector<32x128xf32>
    %113 = vector.shape_cast %112 : vector<32x128xf32> to vector<8x4x128xf32>
    %114 = vector.shape_cast %113 : vector<8x4x128xf32> to vector<8x2x2x128xf32>
    %115 = vector.extract_strided_slice %114 {offsets = [0, 0, 0, 0], sizes = [8, 2, 1, 128], strides = [1, 1, 1, 1]} : vector<8x2x2x128xf32> to vector<8x2x1x128xf32>
    %116 = vector.shape_cast %115 : vector<8x2x1x128xf32> to vector<8x2x128xf32>
    %117 = vector.extract_strided_slice %114 {offsets = [0, 0, 1, 0], sizes = [8, 2, 1, 128], strides = [1, 1, 1, 1]} : vector<8x2x2x128xf32> to vector<8x2x1x128xf32>
    %118 = vector.shape_cast %117 : vector<8x2x1x128xf32> to vector<8x2x128xf32>
    %119 = arith.maximumf %116, %118 : vector<8x2x128xf32>
    %120 = vector.shape_cast %119 : vector<8x2x128xf32> to vector<4x2x2x128xf32>
    %121 = vector.extract_strided_slice %120 {offsets = [0, 0, 0, 0], sizes = [4, 1, 2, 128], strides = [1, 1, 1, 1]} : vector<4x2x2x128xf32> to vector<4x1x2x128xf32>
    %122 = vector.shape_cast %121 : vector<4x1x2x128xf32> to vector<4x2x128xf32>
    %123 = vector.extract_strided_slice %120 {offsets = [0, 1, 0, 0], sizes = [4, 1, 2, 128], strides = [1, 1, 1, 1]} : vector<4x2x2x128xf32> to vector<4x1x2x128xf32>
    %124 = vector.shape_cast %123 : vector<4x1x2x128xf32> to vector<4x2x128xf32>
    %125 = arith.maximumf %122, %124 : vector<4x2x128xf32>
    %126 = vector.shape_cast %125 : vector<4x2x128xf32> to vector<2x2x2x128xf32>
    %127 = vector.extract_strided_slice %126 {offsets = [0, 0, 0, 0], sizes = [2, 1, 1, 128], strides = [1, 1, 1, 1]} : vector<2x2x2x128xf32> to vector<2x1x1x128xf32>
    %128 = vector.shape_cast %127 : vector<2x1x1x128xf32> to vector<2x128xf32>
    %129 = vector.extract_strided_slice %126 {offsets = [0, 0, 1, 0], sizes = [2, 1, 1, 128], strides = [1, 1, 1, 1]} : vector<2x2x2x128xf32> to vector<2x1x1x128xf32>
    %130 = vector.shape_cast %129 : vector<2x1x1x128xf32> to vector<2x128xf32>
    %131 = vector.extract_strided_slice %126 {offsets = [0, 1, 0, 0], sizes = [2, 1, 1, 128], strides = [1, 1, 1, 1]} : vector<2x2x2x128xf32> to vector<2x1x1x128xf32>
    %132 = vector.shape_cast %131 : vector<2x1x1x128xf32> to vector<2x128xf32>
    %133 = vector.extract_strided_slice %126 {offsets = [0, 1, 1, 0], sizes = [2, 1, 1, 128], strides = [1, 1, 1, 1]} : vector<2x2x2x128xf32> to vector<2x1x1x128xf32>
    %134 = vector.shape_cast %133 : vector<2x1x1x128xf32> to vector<2x128xf32>
    %135 = tpu.concatenate %128, %130, %132, %134 in 1 : vector<2x128xf32>, vector<2x128xf32>, vector<2x128xf32>, vector<2x128xf32> -> vector<2x512xf32>
    %136 = arith.truncf %135 : vector<2x512xf32> to vector<2x512xbf16>
    %c0_185 = arith.constant 0 : index
    %c0_186 = arith.constant 0 : index
    %137 = vector.load %arg8[%c0_185, %c0_186] : memref<512x512xbf16, #tpu.memory_space<vmem>>, vector<512x512xbf16>
    %cst_187 = arith.constant dense<0.000000e+00> : vector<2x512xf32>
    %138 = tpu.matmul %136, %137, %cst_187 {dimension_numbers = #tpu.dot_dimension_numbers<[1], [0], [0], [1], [0, 0, 1, 1], [], []>} : vector<2x512xbf16>, vector<512x512xbf16>, vector<2x512xf32> -> vector<2x512xf32>
    %c0_188 = arith.constant 0 : index
    %c0_189 = arith.constant 0 : index
    %139 = vector.load %arg9[%c0_188, %c0_189] : memref<1x512xf32, #tpu.memory_space<vmem>>, vector<1x512xf32>
    %140 = vector.shape_cast %139 : vector<1x512xf32> to vector<512xf32>
    %141 = vector.shape_cast %140 : vector<512xf32> to vector<1x512xf32>
    %142 = vector.broadcast %141 : vector<1x512xf32> to vector<2x512xf32>
    %143 = arith.addf %138, %142 : vector<2x512xf32>
    %cst_190 = arith.constant 0.000000e+00 : f32
    %144 = vector.broadcast %cst_190 : f32 to vector<2x512xf32>
    %145 = arith.maximumf %143, %144 : vector<2x512xf32>
    %146 = arith.truncf %145 : vector<2x512xf32> to vector<2x512xbf16>
    %c0_191 = arith.constant 0 : index
    %c0_192 = arith.constant 0 : index
    %147 = vector.load %arg10[%c0_191, %c0_192] : memref<512x128xbf16, #tpu.memory_space<vmem>>, vector<512x128xbf16>
    %cst_193 = arith.constant dense<0.000000e+00> : vector<2x128xf32>
    %148 = tpu.matmul %146, %147, %cst_193 {dimension_numbers = #tpu.dot_dimension_numbers<[1], [0], [0], [1], [0, 0, 1, 1], [], []>} : vector<2x512xbf16>, vector<512x128xbf16>, vector<2x128xf32> -> vector<2x128xf32>
    %c0_194 = arith.constant 0 : index
    %c0_195 = arith.constant 0 : index
    %149 = vector.load %arg11[%c0_194, %c0_195] : memref<1x128xf32, #tpu.memory_space<vmem>>, vector<1x128xf32>
    %150 = vector.shape_cast %149 : vector<1x128xf32> to vector<128xf32>
    %151 = vector.shape_cast %150 : vector<128xf32> to vector<1x128xf32>
    %152 = vector.broadcast %151 : vector<1x128xf32> to vector<2x128xf32>
    %153 = arith.addf %148, %152 : vector<2x128xf32>
    %c0_196 = arith.constant 0 : index
    %c0_197 = arith.constant 0 : index
    %154 = vector.load %arg12[%c0_196, %c0_197] : memref<2x128xf32, #tpu.memory_space<vmem>>, vector<2x128xf32>
    tpu.vector_store %arg12[%c0_196, %c0_197], %153 {strides = array<i32>} : memref<2x128xf32, #tpu.memory_space<vmem>>, vector<2x128xf32>,
    return
  }
  func.func @transform_0(%arg0: i32) -> (i32, i32, i32, i32) {
    %c0_i32 = arith.constant 0 : i32
    %c0_i32_0 = arith.constant 0 : i32
    %c0_i32_1 = arith.constant 0 : i32
    %c0_i32_2 = arith.constant 0 : i32
    return %arg0, %c0_i32, %c0_i32_0, %c0_i32_1 : i32, i32, i32, i32
  }
  func.func @transform_1(%arg0: i32) -> (i32, i32) {
    %c0_i32 = arith.constant 0 : i32
    %c0_i32_0 = arith.constant 0 : i32
    %c0_i32_1 = arith.constant 0 : i32
    return %c0_i32, %c0_i32_0 : i32, i32
  }
  func.func @transform_2(%arg0: i32) -> (i32, i32) {
    %c0_i32 = arith.constant 0 : i32
    %c0_i32_0 = arith.constant 0 : i32
    %c0_i32_1 = arith.constant 0 : i32
    return %c0_i32, %c0_i32_0 : i32, i32
  }
  func.func @transform_3(%arg0: i32) -> (i32, i32) {
    %c0_i32 = arith.constant 0 : i32
    %c0_i32_0 = arith.constant 0 : i32
    %c0_i32_1 = arith.constant 0 : i32
    return %c0_i32, %c0_i32_0 : i32, i32
  }
  func.func @transform_4(%arg0: i32) -> (i32, i32) {
    %c0_i32 = arith.constant 0 : i32
    %c0_i32_0 = arith.constant 0 : i32
    %c0_i32_1 = arith.constant 0 : i32
    return %c0_i32, %c0_i32_0 : i32, i32
  }
  func.func @transform_5(%arg0: i32) -> (i32, i32) {
    %c0_i32 = arith.constant 0 : i32
    %c0_i32_0 = arith.constant 0 : i32
    %c0_i32_1 = arith.constant 0 : i32
    return %c0_i32, %c0_i32_0 : i32, i32
  }
  func.func @transform_6(%arg0: i32) -> (i32, i32) {
    %c0_i32 = arith.constant 0 : i32
    %c0_i32_0 = arith.constant 0 : i32
    %c0_i32_1 = arith.constant 0 : i32
    return %c0_i32, %c0_i32_0 : i32, i32
  }
  func.func @transform_7(%arg0: i32) -> (i32, i32) {
    %c0_i32 = arith.constant 0 : i32
    %c0_i32_0 = arith.constant 0 : i32
    %c0_i32_1 = arith.constant 0 : i32
    return %c0_i32, %c0_i32_0 : i32, i32
  }
  func.func @transform_8(%arg0: i32) -> (i32, i32) {
    %c0_i32 = arith.constant 0 : i32
    %c0_i32_0 = arith.constant 0 : i32
    %c0_i32_1 = arith.constant 0 : i32
    return %c0_i32, %c0_i32_0 : i32, i32
  }
  func.func @transform_9(%arg0: i32) -> (i32, i32) {
    %c0_i32 = arith.constant 0 : i32
    %c0_i32_0 = arith.constant 0 : i32
    %c0_i32_1 = arith.constant 0 : i32
    return %c0_i32, %c0_i32_0 : i32, i32
  }
  func.func @transform_10(%arg0: i32) -> (i32, i32) {
    %c0_i32 = arith.constant 0 : i32
    %c0_i32_0 = arith.constant 0 : i32
    %c0_i32_1 = arith.constant 0 : i32
    return %c0_i32, %c0_i32_0 : i32, i32
  }
  func.func @transform_11(%arg0: i32) -> (i32, i32) {
    %c0_i32 = arith.constant 0 : i32
    %c0_i32_0 = arith.constant 0 : i32
    return %arg0, %c0_i32 : i32, i32
  }
}

</mosaic_0001>

<llo_original>
// kernel: captcha_cnn_forward.1
$region0: #{captcha_cnn_forward.1}
  #allocation0 [shape = 'u32[]', space=smem, size = 0x4, offset = 0x4, fixed_abs, tag = 'smem constant byte address 0x4 - core index']
  #allocation1 [shape = 'u32[72,128]{1,0:T(1,128)}', space=vmem, size = 0x9000, scoped, tag = 'internal scratch']
  #allocation2 [shape = 'bf16[2,18,20,3]{3,2,1,0:T(8,128)(2,1)}', space=vmem, size = 0x36000, scoped, tag = 'scratch operand']
  #allocation3 [shape = 'bf16[2,10,12,32]{3,2,1,0:T(8,128)(2,1)}', space=vmem, size = 0x14000, scoped, tag = 'scratch operand']
  #allocation4 [shape = 'bf16[2,6,8,64]{3,2,1,0:T(8,128)(2,1)}', space=vmem, size = 0x6000, scoped, tag = 'scratch operand']
  %s0 = inlined_call_operand.vmem [shape: f32[2,16,16,3], index: 0, kind: input, shape index: {}]
  %s1 = inlined_call_operand.vmem [shape: bf16[27,32], index: 1, kind: input, shape index: {}]
  %s2 = inlined_call_operand.vmem [shape: f32[1,32], index: 2, kind: input, shape index: {}]
  %s3 = inlined_call_operand.vmem [shape: bf16[288,64], index: 3, kind: input, shape index: {}]
  %s4 = inlined_call_operand.vmem [shape: f32[1,64], index: 4, kind: input, shape index: {}]
  %s5 = inlined_call_operand.vmem [shape: bf16[576,128], index: 5, kind: input, shape index: {}]
  %s6 = inlined_call_operand.vmem [shape: f32[1,128], index: 6, kind: input, shape index: {}]
  %s7 = inlined_call_operand.hbm [shape: bf16[512,512], index: 7, kind: input, shape index: {}]
  %s8 = inlined_call_operand.vmem [shape: f32[1,512], index: 8, kind: input, shape index: {}]
  %s9 = inlined_call_operand.vmem [shape: bf16[512,128], index: 9, kind: input, shape index: {}]
  %s10 = inlined_call_operand.vmem [shape: f32[1,128], index: 10, kind: input, shape index: {}]
  %s11 = inlined_call_operand.vmem [shape: f32[2,128], index: 11, kind: output, shape index: {}]
  %s12 = sld [smem:[#allocation0]]
  $region58: #{captcha_cnn_forward.1} parent=0
    _
  %s14 = ssub.s32 1, %s12
  %s15 = scalar_select 0, %s14, %s12
  $region1: #{captcha_cnn_forward.1} parent=0
    #allocation5 [shape = 'u8[524288]{0}', space=vmem, size = 0x80000, scoped, tag = 'input window, operand 7, single buffered']
    #allocation6 [shape = 's32[1]{0}', space=sflag, size = 0x4, scoped, tag = 'scoped memory for captcha_cnn_forward.1']
    %16 = vsyncpa [#allocation6], 0
    // Predicated region
    $region2: #{captcha_cnn_forward.1} parent=1 // pred_check
      _
    $region3: #{captcha_cnn_forward.1} parent=1 // pred_check_branch
      %18 = sbr.rel (0) target = $region5
    $region4: #{captcha_cnn_forward.1} parent=1 // pred_region
      _
    $region5: #{captcha_cnn_forward.1} parent=1 // pred_fallthru
      _
    // Predicated region
    $region6: #{captcha_cnn_forward.1} parent=1 // pred_check
      _
    $region7: #{captcha_cnn_forward.1} parent=1 // pred_check_branch
      %20 = sbr.rel (0) target = $region9
    $region8: #{captcha_cnn_forward.1} parent=1 // pred_region
      _
    $region9: #{captcha_cnn_forward.1} parent=1 // pred_fallthru
      _
    // Predicated region
    $region10: #{captcha_cnn_forward.1} parent=1 // pred_check
      _
    $region11: #{captcha_cnn_forward.1} parent=1 // pred_check_branch
      %22 = sbr.rel (0) target = $region13
    $region12: #{captcha_cnn_forward.1} parent=1 // pred_region
      _
    $region13: #{captcha_cnn_forward.1} parent=1 // pred_fallthru
      _
    // Predicated region
    $region14: #{captcha_cnn_forward.1} parent=1 // pred_check
      _
    $region15: #{captcha_cnn_forward.1} parent=1 // pred_check_branch
      %24 = sbr.rel (0) target = $region17
    $region16: #{captcha_cnn_forward.1} parent=1 // pred_region
      _
    $region17: #{captcha_cnn_forward.1} parent=1 // pred_fallthru
      _
    // Predicated region
    $region18: #{captcha_cnn_forward.1} parent=1 // pred_check
      _
    $region19: #{captcha_cnn_forward.1} parent=1 // pred_check_branch
      %26 = sbr.rel (0) target = $region21
    $region20: #{captcha_cnn_forward.1} parent=1 // pred_region
      _
    $region21: #{captcha_cnn_forward.1} parent=1 // pred_fallthru
      _
    // Predicated region
    $region22: #{captcha_cnn_forward.1} parent=1 // pred_check
      _
    $region23: #{captcha_cnn_forward.1} parent=1 // pred_check_branch
      %28 = sbr.rel (0) target = $region25
    $region24: #{captcha_cnn_forward.1} parent=1 // pred_region
      _
    $region25: #{captcha_cnn_forward.1} parent=1 // pred_fallthru
      _
    // Predicated region
    $region26: #{captcha_cnn_forward.1} parent=1 // pred_check
      _
    $region27: #{captcha_cnn_forward.1} parent=1 // pred_check_branch
      %30 = sbr.rel (0) target = $region29
    $region28: #{captcha_cnn_forward.1} parent=1 // pred_region
      _
    $region29: #{captcha_cnn_forward.1} parent=1 // pred_fallthru
      _
    // Predicated region
    $region30: #{captcha_cnn_forward.1} parent=1 // pred_check
      _
    $region31: #{captcha_cnn_forward.1} parent=1 // pred_check_branch
      %32 = sbr.rel (0) target = $region33
    $region32: #{captcha_cnn_forward.1} parent=1 // pred_region
      %34 = vsyncadd [#allocation6], 0
      %s35 = sshll.u32 %s7, 4
      %s36 = int_to_ptr.hbm [resolvable:$true] %s35
      %s37 = sshll.u32 [#allocation5], 4
      %s38 = int_to_ptr.vmem [resolvable:$true] %s37
      %43 = dma.hbm_to_vmem [thread:$0]  %s36, 16384, %s38, [#allocation6], 256, 256, 16
    $region33: #{captcha_cnn_forward.1} parent=1 // pred_fallthru
      _
    // Predicated region
    $region34: #{captcha_cnn_forward.1} parent=1 // pred_check
      _
    $region35: #{captcha_cnn_forward.1} parent=1 // pred_check_branch
      %45 = sbr.rel (0) target = $region37
    $region36: #{captcha_cnn_forward.1} parent=1 // pred_region
      _
    $region37: #{captcha_cnn_forward.1} parent=1 // pred_fallthru
      _
    // Predicated region
    $region38: #{captcha_cnn_forward.1} parent=1 // pred_check
      _
    $region39: #{captcha_cnn_forward.1} parent=1 // pred_check_branch
      %47 = sbr.rel (0) target = $region41
    $region40: #{captcha_cnn_forward.1} parent=1 // pred_region
      _
    $region41: #{captcha_cnn_forward.1} parent=1 // pred_fallthru
      _
    // Predicated region
    $region42: #{captcha_cnn_forward.1} parent=1 // pred_check
      _
    $region43: #{captcha_cnn_forward.1} parent=1 // pred_check_branch
      %49 = sbr.rel (0) target = $region45
    $region44: #{captcha_cnn_forward.1} parent=1 // pred_region
      _
    $region45: #{captcha_cnn_forward.1} parent=1 // pred_fallthru
      _
    // Predicated region
    $region46: #{captcha_cnn_forward.1} parent=1 // pred_check
      _
    $region47: #{captcha_cnn_forward.1} parent=1 // pred_check_branch
      %51 = sbr.rel (0) target = $region49
    $region48: #{captcha_cnn_forward.1} parent=1 // pred_region
      %53 = dma.done [#allocation6], 16384
    $region49: #{captcha_cnn_forward.1} parent=1 // pred_fallthru
      _
    %vm55 = vcmask 19456
    %56 = vst.msk [vmem:[#allocation2] sm:$0xf] %vm55, 0
    %57 = vst.msk [vmem:[#allocation2 + $0x4] sm:$0xf] %vm55, 0
    %vm58 = vcmask 17408
    %59 = vst.msk [vmem:[#allocation2 + $0x8] sm:$0x3] %vm58, 0
    %60 = vst.msk [vmem:[#allocation2 + $0xd8] sm:$0xf] %vm55, 0
    %61 = vst.msk [vmem:[#allocation2 + $0xdc] sm:$0xf] %vm55, 0
    %62 = vst.msk [vmem:[#allocation2 + $0xe0] sm:$0x3] %vm58, 0
    %s63 = scalar_lea.vmem [#allocation2], 204
    %64 = vst.msk [vmem:[%s63] sm:$0xf] %vm55, 0
    %65 = vst.msk [vmem:[%s63 + $0x4] sm:$0xf] %vm55, 0
    %66 = vst.msk [vmem:[%s63 + $0x8] sm:$0x3] %vm58, 0
    %67 = vst.msk [vmem:[%s63 + $0xd8] sm:$0xf] %vm55, 0
    %68 = vst.msk [vmem:[%s63 + $0xdc] sm:$0xf] %vm55, 0
    %69 = vst.msk [vmem:[%s63 + $0xe0] sm:$0x3] %vm58, 0
    %s70 = scalar_lea.vmem [#allocation2], 12
    %vm71 = vcmask 16384
    %72 = vst.msk [vmem:[%s70] sm:$0x1] %vm71, 0
    %73 = vst.msk [vmem:[%s70 + $0xc] sm:$0x1] %vm71, 0
    %74 = vst.msk [vmem:[%s70 + $0x18] sm:$0x1] %vm71, 0
    %75 = vst.msk [vmem:[%s70 + $0x24] sm:$0x1] %vm71, 0
    %76 = vst.msk [vmem:[%s70 + $0x30] sm:$0x1] %vm71, 0
    %77 = vst.msk [vmem:[%s70 + $0x3c] sm:$0x1] %vm71, 0
    %78 = vst.msk [vmem:[%s70 + $0x48] sm:$0x1] %vm71, 0
    %79 = vst.msk [vmem:[%s70 + $0x54] sm:$0x1] %vm71, 0
    %80 = vst.msk [vmem:[%s70 + $0x60] sm:$0x1] %vm71, 0
    %81 = vst.msk [vmem:[%s70 + $0x6c] sm:$0x1] %vm71, 0
    %82 = vst.msk [vmem:[%s70 + $0x78] sm:$0x1] %vm71, 0
    %83 = vst.msk [vmem:[%s70 + $0x84] sm:$0x1] %vm71, 0
    %84 = vst.msk [vmem:[%s70 + $0x90] sm:$0x1] %vm71, 0
    %85 = vst.msk [vmem:[%s70 + $0x9c] sm:$0x1] %vm71, 0
    %86 = vst.msk [vmem:[%s70 + $0xa8] sm:$0x1] %vm71, 0
    %87 = vst.msk [vmem:[%s70 + $0xb4] sm:$0x1] %vm71, 0
    %88 = vst.msk [vmem:[%s70 + $0xd8] sm:$0x1] %vm71, 0
    %89 = vst.msk [vmem:[%s70 + $0xe4] sm:$0x1] %vm71, 0
    %90 = vst.msk [vmem:[%s70 + $0xf0] sm:$0x1] %vm71, 0
    %91 = vst.msk [vmem:[%s70 + $0xfc] sm:$0x1] %vm71, 0
    %92 = vst.msk [vmem:[%s70 + $0x108] sm:$0x1] %vm71, 0
    %93 = vst.msk [vmem:[%s70 + $0x114] sm:$0x1] %vm71, 0
    %94 = vst.msk [vmem:[%s70 + $0x120] sm:$0x1] %vm71, 0
    %95 = vst.msk [vmem:[%s70 + $0x12c] sm:$0x1] %vm71, 0
    %96 = vst.msk [vmem:[%s70 + $0x138] sm:$0x1] %vm71, 0
    %97 = vst.msk [vmem:[%s70 + $0x144] sm:$0x1] %vm71, 0
    %98 = vst.msk [vmem:[%s70 + $0x150] sm:$0x1] %vm71, 0
    %99 = vst.msk [vmem:[%s70 + $0x15c] sm:$0x1] %vm71, 0
    %100 = vst.msk [vmem:[%s70 + $0x168] sm:$0x1] %vm71, 0
    %101 = vst.msk [vmem:[%s70 + $0x174] sm:$0x1] %vm71, 0
    %102 = vst.msk [vmem:[%s70 + $0x180] sm:$0x1] %vm71, 0
    %103 = vst.msk [vmem:[%s70 + $0x18c] sm:$0x1] %vm71, 0
    %vm104 = vcmask 17409
    %105 = vst.msk [vmem:[%s70 + $0x8] sm:$0x2] %vm104, 0
    %106 = vst.msk [vmem:[%s70 + $0x14] sm:$0x2] %vm104, 0
    %107 = vst.msk [vmem:[%s70 + $0x20] sm:$0x2] %vm104, 0
    %108 = vst.msk [vmem:[%s70 + $0x2c] sm:$0x2] %vm104, 0
    %109 = vst.msk [vmem:[%s70 + $0x38] sm:$0x2] %vm104, 0
    %110 = vst.msk [vmem:[%s70 + $0x44] sm:$0x2] %vm104, 0
    %111 = vst.msk [vmem:[%s70 + $0x50] sm:$0x2] %vm104, 0
    %112 = vst.msk [vmem:[%s70 + $0x5c] sm:$0x2] %vm104, 0
    %113 = vst.msk [vmem:[%s70 + $0x68] sm:$0x2] %vm104, 0
    %114 = vst.msk [vmem:[%s70 + $0x74] sm:$0x2] %vm104, 0
    %115 = vst.msk [vmem:[%s70 + $0x80] sm:$0x2] %vm104, 0
    %116 = vst.msk [vmem:[%s70 + $0x8c] sm:$0x2] %vm104, 0
    %117 = vst.msk [vmem:[%s70 + $0x98] sm:$0x2] %vm104, 0
    %118 = vst.msk [vmem:[%s70 + $0xa4] sm:$0x2] %vm104, 0
    %119 = vst.msk [vmem:[%s70 + $0xb0] sm:$0x2] %vm104, 0
    %120 = vst.msk [vmem:[%s70 + $0xbc] sm:$0x2] %vm104, 0
    %121 = vst.msk [vmem:[%s70 + $0xe0] sm:$0x2] %vm104, 0
    %122 = vst.msk [vmem:[%s70 + $0xec] sm:$0x2] %vm104, 0
    %123 = vst.msk [vmem:[%s70 + $0xf8] sm:$0x2] %vm104, 0
    %124 = vst.msk [vmem:[%s70 + $0x104] sm:$0x2] %vm104, 0
    %125 = vst.msk [vmem:[%s70 + $0x110] sm:$0x2] %vm104, 0
    %126 = vst.msk [vmem:[%s70 + $0x11c] sm:$0x2] %vm104, 0
    %127 = vst.msk [vmem:[%s70 + $0x128] sm:$0x2] %vm104, 0
    %128 = vst.msk [vmem:[%s70 + $0x134] sm:$0x2] %vm104, 0
    %129 = vst.msk [vmem:[%s70 + $0x140] sm:$0x2] %vm104, 0
    %130 = vst.msk [vmem:[%s70 + $0x14c] sm:$0x2] %vm104, 0
    %131 = vst.msk [vmem:[%s70 + $0x158] sm:$0x2] %vm104, 0
    %132 = vst.msk [vmem:[%s70 + $0x164] sm:$0x2] %vm104, 0
    %133 = vst.msk [vmem:[%s70 + $0x170] sm:$0x2] %vm104, 0
    %134 = vst.msk [vmem:[%s70 + $0x17c] sm:$0x2] %vm104, 0
    %135 = vst.msk [vmem:[%s70 + $0x188] sm:$0x2] %vm104, 0
    %136 = vst.msk [vmem:[%s70 + $0x194] sm:$0x2] %vm104, 0
    %v137 = vld [vmem:[%s0] sm:$0xff]
    %v138 = vld [vmem:[%s0 + $0x8] sm:$0xff]
    %v139 = vld [vmem:[%s0 + $0x10] sm:$0xff]
    %v140 = vld [vmem:[%s0 + $0x18] sm:$0xff]
    %v141 = vld [vmem:[%s0 + $0x20] sm:$0xff]
    %v142 = vld [vmem:[%s0 + $0x28] sm:$0xff]
    %v143 = vld [vmem:[%s0 + $0x30] sm:$0xff]
    %v144 = vld [vmem:[%s0 + $0x38] sm:$0xff]
    %v145 = vld [vmem:[%s0 + $0x40] sm:$0xff]
    %v146 = vld [vmem:[%s0 + $0x48] sm:$0xff]
    %v147 = vld [vmem:[%s0 + $0x50] sm:$0xff]
    %v148 = vld [vmem:[%s0 + $0x58] sm:$0xff]
    %v149 = vld [vmem:[%s0 + $0x60] sm:$0xff]
    %v150 = vld [vmem:[%s0 + $0x68] sm:$0xff]
    %v151 = vld [vmem:[%s0 + $0x70] sm:$0xff]
    %v152 = vld [vmem:[%s0 + $0x78] sm:$0xff]
    %v153 = vld [vmem:[%s0 + $0x80] sm:$0xff]
    %v154 = vld [vmem:[%s0 + $0x88] sm:$0xff]
    %v155 = vld [vmem:[%s0 + $0x90] sm:$0xff]
    %v156 = vld [vmem:[%s0 + $0x98] sm:$0xff]
    %v157 = vld [vmem:[%s0 + $0xa0] sm:$0xff]
    %v158 = vld [vmem:[%s0 + $0xa8] sm:$0xff]
    %v159 = vld [vmem:[%s0 + $0xb0] sm:$0xff]
    %v160 = vld [vmem:[%s0 + $0xb8] sm:$0xff]
    %v161 = vld [vmem:[%s0 + $0xc0] sm:$0xff]
    %v162 = vld [vmem:[%s0 + $0xc8] sm:$0xff]
    %v163 = vld [vmem:[%s0 + $0xd0] sm:$0xff]
    %v164 = vld [vmem:[%s0 + $0xd8] sm:$0xff]
    %v165 = vld [vmem:[%s0 + $0xe0] sm:$0xff]
    %v166 = vld [vmem:[%s0 + $0xe8] sm:$0xff]
    %v167 = vld [vmem:[%s0 + $0xf0] sm:$0xff]
    %v168 = vld [vmem:[%s0 + $0xf8] sm:$0xff]
    %v169 = vld [vmem:[%s0 + $0x100] sm:$0xff]
    %v170 = vld [vmem:[%s0 + $0x108] sm:$0xff]
    %v171 = vld [vmem:[%s0 + $0x110] sm:$0xff]
    %v172 = vld [vmem:[%s0 + $0x118] sm:$0xff]
    %v173 = vld [vmem:[%s0 + $0x120] sm:$0xff]
    %v174 = vld [vmem:[%s0 + $0x128] sm:$0xff]
    %v175 = vld [vmem:[%s0 + $0x130] sm:$0xff]
    %v176 = vld [vmem:[%s0 + $0x138] sm:$0xff]
    %v177 = vld [vmem:[%s0 + $0x140] sm:$0xff]
    %v178 = vld [vmem:[%s0 + $0x148] sm:$0xff]
    %v179 = vld [vmem:[%s0 + $0x150] sm:$0xff]
    %v180 = vld [vmem:[%s0 + $0x158] sm:$0xff]
    %v181 = vld [vmem:[%s0 + $0x160] sm:$0xff]
    %v182 = vld [vmem:[%s0 + $0x168] sm:$0xff]
    %v183 = vld [vmem:[%s0 + $0x170] sm:$0xff]
    %v184 = vld [vmem:[%s0 + $0x178] sm:$0xff]
    %v185 = vld [vmem:[%s0 + $0x180] sm:$0xff]
    %v186 = vld [vmem:[%s0 + $0x188] sm:$0xff]
    %v187 = vld [vmem:[%s0 + $0x190] sm:$0xff]
    %v188 = vld [vmem:[%s0 + $0x198] sm:$0xff]
    %v189 = vld [vmem:[%s0 + $0x1a0] sm:$0xff]
    %v190 = vld [vmem:[%s0 + $0x1a8] sm:$0xff]
    %v191 = vld [vmem:[%s0 + $0x1b0] sm:$0xff]
    %v192 = vld [vmem:[%s0 + $0x1b8] sm:$0xff]
    %v193 = vld [vmem:[%s0 + $0x1c0] sm:$0xff]
    %v194 = vld [vmem:[%s0 + $0x1c8] sm:$0xff]
    %v195 = vld [vmem:[%s0 + $0x1d0] sm:$0xff]
    %v196 = vld [vmem:[%s0 + $0x1d8] sm:$0xff]
    %v197 = vld [vmem:[%s0 + $0x1e0] sm:$0xff]
    %v198 = vld [vmem:[%s0 + $0x1e8] sm:$0xff]
    %v199 = vld [vmem:[%s0 + $0x1f0] sm:$0xff]
    %v200 = vld [vmem:[%s0 + $0x1f8] sm:$0xff]
    %v201 = vpack.c.bf16 %v137, %v137
    %v202 = vpack.c.bf16 %v138, %v138
    %v203 = vpack.c.bf16 %v139, %v139
    %v204 = vpack.c.bf16 %v140, %v140
    %v205 = vpack.c.bf16 %v141, %v141
    %v206 = vpack.c.bf16 %v142, %v142
    %v207 = vpack.c.bf16 %v143, %v143
    %v208 = vpack.c.bf16 %v144, %v144
    %v209 = vpack.c.bf16 %v145, %v145
    %v210 = vpack.c.bf16 %v146, %v146
    %v211 = vpack.c.bf16 %v147, %v147
    %v212 = vpack.c.bf16 %v148, %v148
    %v213 = vpack.c.bf16 %v149, %v149
    %v214 = vpack.c.bf16 %v150, %v150
    %v215 = vpack.c.bf16 %v151, %v151
    %v216 = vpack.c.bf16 %v152, %v152
    %v217 = vpack.c.bf16 %v153, %v153
    %v218 = vpack.c.bf16 %v154, %v154
    %v219 = vpack.c.bf16 %v155, %v155
    %v220 = vpack.c.bf16 %v156, %v156
    %v221 = vpack.c.bf16 %v157, %v157
    %v222 = vpack.c.bf16 %v158, %v158
    %v223 = vpack.c.bf16 %v159, %v159
    %v224 = vpack.c.bf16 %v160, %v160
    %v225 = vpack.c.bf16 %v161, %v161
    %v226 = vpack.c.bf16 %v162, %v162
    %v227 = vpack.c.bf16 %v163, %v163
    %v228 = vpack.c.bf16 %v164, %v164
    %v229 = vpack.c.bf16 %v165, %v165
    %v230 = vpack.c.bf16 %v166, %v166
    %v231 = vpack.c.bf16 %v167, %v167
    %v232 = vpack.c.bf16 %v168, %v168
    %v233 = vpack.c.bf16 %v169, %v169
    %v234 = vpack.c.bf16 %v170, %v170
    %v235 = vpack.c.bf16 %v171, %v171
    %v236 = vpack.c.bf16 %v172, %v172
    %v237 = vpack.c.bf16 %v173, %v173
    %v238 = vpack.c.bf16 %v174, %v174
    %v239 = vpack.c.bf16 %v175, %v175
    %v240 = vpack.c.bf16 %v176, %v176
    %v241 = vpack.c.bf16 %v177, %v177
    %v242 = vpack.c.bf16 %v178, %v178
    %v243 = vpack.c.bf16 %v179, %v179
    %v244 = vpack.c.bf16 %v180, %v180
    %v245 = vpack.c.bf16 %v181, %v181
    %v246 = vpack.c.bf16 %v182, %v182
    %v247 = vpack.c.bf16 %v183, %v183
    %v248 = vpack.c.bf16 %v184, %v184
    %v249 = vpack.c.bf16 %v185, %v185
    %v250 = vpack.c.bf16 %v186, %v186
    %v251 = vpack.c.bf16 %v187, %v187
    %v252 = vpack.c.bf16 %v188, %v188
    %v253 = vpack.c.bf16 %v189, %v189
    %v254 = vpack.c.bf16 %v190, %v190
    %v255 = vpack.c.bf16 %v191, %v191
    %v256 = vpack.c.bf16 %v192, %v192
    %v257 = vpack.c.bf16 %v193, %v193
    %v258 = vpack.c.bf16 %v194, %v194
    %v259 = vpack.c.bf16 %v195, %v195
    %v260 = vpack.c.bf16 %v196, %v196
    %v261 = vpack.c.bf16 %v197, %v197
    %v262 = vpack.c.bf16 %v198, %v198
    %v263 = vpack.c.bf16 %v199, %v199
    %v264 = vpack.c.bf16 %v200, %v200
    %vm329 = vcmask 1040384
    %vm330 = vcmask 1044484
    %vm331 = vmor %vm329, %vm330
    %v332 = vrot.slane %v201, 7
    %v333 = vrot.slane %v332, 4
    %v334 = vrot.slane %v202, 7
    %v335 = vsel %vm331, %v333, %v334
    %v336 = vrot.slane %v334, 4
    %v337 = vrot.slane %v203, 7
    %v338 = vrot.slane %v337, 4
    %v339 = vrot.slane %v204, 7
    %v340 = vsel %vm331, %v338, %v339
    %v341 = vrot.slane %v339, 4
    %v342 = vrot.slane %v205, 7
    %v343 = vrot.slane %v342, 4
    %v344 = vrot.slane %v206, 7
    %v345 = vsel %vm331, %v343, %v344
    %v346 = vrot.slane %v344, 4
    %v347 = vrot.slane %v207, 7
    %v348 = vrot.slane %v347, 4
    %v349 = vrot.slane %v208, 7
    %v350 = vsel %vm331, %v348, %v349
    %v351 = vrot.slane %v349, 4
    %v352 = vrot.slane %v209, 7
    %v353 = vrot.slane %v352, 4
    %v354 = vrot.slane %v210, 7
    %v355 = vsel %vm331, %v353, %v354
    %v356 = vrot.slane %v354, 4
    %v357 = vrot.slane %v211, 7
    %v358 = vrot.slane %v357, 4
    %v359 = vrot.slane %v212, 7
    %v360 = vsel %vm331, %v358, %v359
    %v361 = vrot.slane %v359, 4
    %v362 = vrot.slane %v213, 7
    %v363 = vrot.slane %v362, 4
    %v364 = vrot.slane %v214, 7
    %v365 = vsel %vm331, %v363, %v364
    %v366 = vrot.slane %v364, 4
    %v367 = vrot.slane %v215, 7
    %v368 = vrot.slane %v367, 4
    %v369 = vrot.slane %v216, 7
    %v370 = vsel %vm331, %v368, %v369
    %v371 = vrot.slane %v369, 4
    %v372 = vrot.slane %v217, 7
    %v373 = vrot.slane %v372, 4
    %v374 = vrot.slane %v218, 7
    %v375 = vsel %vm331, %v373, %v374
    %v376 = vrot.slane %v374, 4
    %v377 = vrot.slane %v219, 7
    %v378 = vrot.slane %v377, 4
    %v379 = vrot.slane %v220, 7
    %v380 = vsel %vm331, %v378, %v379
    %v381 = vrot.slane %v379, 4
    %v382 = vrot.slane %v221, 7
    %v383 = vrot.slane %v382, 4
    %v384 = vrot.slane %v222, 7
    %v385 = vsel %vm331, %v383, %v384
    %v386 = vrot.slane %v384, 4
    %v387 = vrot.slane %v223, 7
    %v388 = vrot.slane %v387, 4
    %v389 = vrot.slane %v224, 7
    %v390 = vsel %vm331, %v388, %v389
    %v391 = vrot.slane %v389, 4
    %v392 = vrot.slane %v225, 7
    %v393 = vrot.slane %v392, 4
    %v394 = vrot.slane %v226, 7
    %v395 = vsel %vm331, %v393, %v394
    %v396 = vrot.slane %v394, 4
    %v397 = vrot.slane %v227, 7
    %v398 = vrot.slane %v397, 4
    %v399 = vrot.slane %v228, 7
    %v400 = vsel %vm331, %v398, %v399
    %v401 = vrot.slane %v399, 4
    %v402 = vrot.slane %v229, 7
    %v403 = vrot.slane %v402, 4
    %v404 = vrot.slane %v230, 7
    %v405 = vsel %vm331, %v403, %v404
    %v406 = vrot.slane %v404, 4
    %v407 = vrot.slane %v231, 7
    %v408 = vrot.slane %v407, 4
    %v409 = vrot.slane %v232, 7
    %v410 = vsel %vm331, %v408, %v409
    %v411 = vrot.slane %v409, 4
    %v412 = vrot.slane %v233, 7
    %v413 = vrot.slane %v412, 4
    %v414 = vrot.slane %v234, 7
    %v415 = vsel %vm331, %v413, %v414
    %v416 = vrot.slane %v414, 4
    %v417 = vrot.slane %v235, 7
    %v418 = vrot.slane %v417, 4
    %v419 = vrot.slane %v236, 7
    %v420 = vsel %vm331, %v418, %v419
    %v421 = vrot.slane %v419, 4
    %v422 = vrot.slane %v237, 7
    %v423 = vrot.slane %v422, 4
    %v424 = vrot.slane %v238, 7
    %v425 = vsel %vm331, %v423, %v424
    %v426 = vrot.slane %v424, 4
    %v427 = vrot.slane %v239, 7
    %v428 = vrot.slane %v427, 4
    %v429 = vrot.slane %v240, 7
    %v430 = vsel %vm331, %v428, %v429
    %v431 = vrot.slane %v429, 4
    %v432 = vrot.slane %v241, 7
    %v433 = vrot.slane %v432, 4
    %v434 = vrot.slane %v242, 7
    %v435 = vsel %vm331, %v433, %v434
    %v436 = vrot.slane %v434, 4
    %v437 = vrot.slane %v243, 7
    %v438 = vrot.slane %v437, 4
    %v439 = vrot.slane %v244, 7
    %v440 = vsel %vm331, %v438, %v439
    %v441 = vrot.slane %v439, 4
    %v442 = vrot.slane %v245, 7
    %v443 = vrot.slane %v442, 4
    %v444 = vrot.slane %v246, 7
    %v445 = vsel %vm331, %v443, %v444
    %v446 = vrot.slane %v444, 4
    %v447 = vrot.slane %v247, 7
    %v448 = vrot.slane %v447, 4
    %v449 = vrot.slane %v248, 7
    %v450 = vsel %vm331, %v448, %v449
    %v451 = vrot.slane %v449, 4
    %v452 = vrot.slane %v249, 7
    %v453 = vrot.slane %v452, 4
    %v454 = vrot.slane %v250, 7
    %v455 = vsel %vm331, %v453, %v454
    %v456 = vrot.slane %v454, 4
    %v457 = vrot.slane %v251, 7
    %v458 = vrot.slane %v457, 4
    %v459 = vrot.slane %v252, 7
    %v460 = vsel %vm331, %v458, %v459
    %v461 = vrot.slane %v459, 4
    %v462 = vrot.slane %v253, 7
    %v463 = vrot.slane %v462, 4
    %v464 = vrot.slane %v254, 7
    %v465 = vsel %vm331, %v463, %v464
    %v466 = vrot.slane %v464, 4
    %v467 = vrot.slane %v255, 7
    %v468 = vrot.slane %v467, 4
    %v469 = vrot.slane %v256, 7
    %v470 = vsel %vm331, %v468, %v469
    %v471 = vrot.slane %v469, 4
    %v472 = vrot.slane %v257, 7
    %v473 = vrot.slane %v472, 4
    %v474 = vrot.slane %v258, 7
    %v475 = vsel %vm331, %v473, %v474
    %v476 = vrot.slane %v474, 4
    %v477 = vrot.slane %v259, 7
    %v478 = vrot.slane %v477, 4
    %v479 = vrot.slane %v260, 7
    %v480 = vsel %vm331, %v478, %v479
    %v481 = vrot.slane %v479, 4
    %v482 = vrot.slane %v261, 7
    %v483 = vrot.slane %v482, 4
    %v484 = vrot.slane %v262, 7
    %v485 = vsel %vm331, %v483, %v484
    %v486 = vrot.slane %v484, 4
    %v487 = vrot.slane %v263, 7
    %v488 = vrot.slane %v487, 4
    %v489 = vrot.slane %v264, 7
    %v490 = vsel %vm331, %v488, %v489
    %v491 = vrot.slane %v489, 4
    %vm588 = vcmask 19457
    %589 = vst.msk [vmem:[%s70] sm:$0xe] %vm588, %v332
    %590 = vst.msk [vmem:[%s70 + $0x4] sm:$0xf] %vm55, %v335
    %591 = vst.msk [vmem:[%s70 + $0x8] sm:$0x1] %vm71, %v336
    %592 = vst.msk [vmem:[%s70 + $0xc] sm:$0xe] %vm588, %v337
    %593 = vst.msk [vmem:[%s70 + $0x10] sm:$0xf] %vm55, %v340
    %594 = vst.msk [vmem:[%s70 + $0x14] sm:$0x1] %vm71, %v341
    %595 = vst.msk [vmem:[%s70 + $0x18] sm:$0xe] %vm588, %v342
    %596 = vst.msk [vmem:[%s70 + $0x1c] sm:$0xf] %vm55, %v345
    %597 = vst.msk [vmem:[%s70 + $0x20] sm:$0x1] %vm71, %v346
    %598 = vst.msk [vmem:[%s70 + $0x24] sm:$0xe] %vm588, %v347
    %599 = vst.msk [vmem:[%s70 + $0x28] sm:$0xf] %vm55, %v350
    %600 = vst.msk [vmem:[%s70 + $0x2c] sm:$0x1] %vm71, %v351
    %601 = vst.msk [vmem:[%s70 + $0x30] sm:$0xe] %vm588, %v352
    %602 = vst.msk [vmem:[%s70 + $0x34] sm:$0xf] %vm55, %v355
    %603 = vst.msk [vmem:[%s70 + $0x38] sm:$0x1] %vm71, %v356
    %604 = vst.msk [vmem:[%s70 + $0x3c] sm:$0xe] %vm588, %v357
    %605 = vst.msk [vmem:[%s70 + $0x40] sm:$0xf] %vm55, %v360
    %606 = vst.msk [vmem:[%s70 + $0x44] sm:$0x1] %vm71, %v361
    %607 = vst.msk [vmem:[%s70 + $0x48] sm:$0xe] %vm588, %v362
    %608 = vst.msk [vmem:[%s70 + $0x4c] sm:$0xf] %vm55, %v365
    %609 = vst.msk [vmem:[%s70 + $0x50] sm:$0x1] %vm71, %v366
    %610 = vst.msk [vmem:[%s70 + $0x54] sm:$0xe] %vm588, %v367
    %611 = vst.msk [vmem:[%s70 + $0x58] sm:$0xf] %vm55, %v370
    %612 = vst.msk [vmem:[%s70 + $0x5c] sm:$0x1] %vm71, %v371
    %613 = vst.msk [vmem:[%s70 + $0x60] sm:$0xe] %vm588, %v372
    %614 = vst.msk [vmem:[%s70 + $0x64] sm:$0xf] %vm55, %v375
    %615 = vst.msk [vmem:[%s70 + $0x68] sm:$0x1] %vm71, %v376
    %616 = vst.msk [vmem:[%s70 + $0x6c] sm:$0xe] %vm588, %v377
    %617 = vst.msk [vmem:[%s70 + $0x70] sm:$0xf] %vm55, %v380
    %618 = vst.msk [vmem:[%s70 + $0x74] sm:$0x1] %vm71, %v381
    %619 = vst.msk [vmem:[%s70 + $0x78] sm:$0xe] %vm588, %v382
    %620 = vst.msk [vmem:[%s70 + $0x7c] sm:$0xf] %vm55, %v385
    %621 = vst.msk [vmem:[%s70 + $0x80] sm:$0x1] %vm71, %v386
    %622 = vst.msk [vmem:[%s70 + $0x84] sm:$0xe] %vm588, %v387
    %623 = vst.msk [vmem:[%s70 + $0x88] sm:$0xf] %vm55, %v390
    %624 = vst.msk [vmem:[%s70 + $0x8c] sm:$0x1] %vm71, %v391
    %625 = vst.msk [vmem:[%s70 + $0x90] sm:$0xe] %vm588, %v392
    %626 = vst.msk [vmem:[%s70 + $0x94] sm:$0xf] %vm55, %v395
    %627 = vst.msk [vmem:[%s70 + $0x98] sm:$0x1] %vm71, %v396
    %628 = vst.msk [vmem:[%s70 + $0x9c] sm:$0xe] %vm588, %v397
    %629 = vst.msk [vmem:[%s70 + $0xa0] sm:$0xf] %vm55, %v400
    %630 = vst.msk [vmem:[%s70 + $0xa4] sm:$0x1] %vm71, %v401
    %631 = vst.msk [vmem:[%s70 + $0xa8] sm:$0xe] %vm588, %v402
    %632 = vst.msk [vmem:[%s70 + $0xac] sm:$0xf] %vm55, %v405
    %633 = vst.msk [vmem:[%s70 + $0xb0] sm:$0x1] %vm71, %v406
    %634 = vst.msk [vmem:[%s70 + $0xb4] sm:$0xe] %vm588, %v407
    %635 = vst.msk [vmem:[%s70 + $0xb8] sm:$0xf] %vm55, %v410
    %636 = vst.msk [vmem:[%s70 + $0xbc] sm:$0x1] %vm71, %v411
    %637 = vst.msk [vmem:[%s70 + $0xd8] sm:$0xe] %vm588, %v412
    %638 = vst.msk [vmem:[%s70 + $0xdc] sm:$0xf] %vm55, %v415
    %639 = vst.msk [vmem:[%s70 + $0xe0] sm:$0x1] %vm71, %v416
    %640 = vst.msk [vmem:[%s70 + $0xe4] sm:$0xe] %vm588, %v417
    %641 = vst.msk [vmem:[%s70 + $0xe8] sm:$0xf] %vm55, %v420
    %642 = vst.msk [vmem:[%s70 + $0xec] sm:$0x1] %vm71, %v421
    %643 = vst.msk [vmem:[%s70 + $0xf0] sm:$0xe] %vm588, %v422
    %644 = vst.msk [vmem:[%s70 + $0xf4] sm:$0xf] %vm55, %v425
    %645 = vst.msk [vmem:[%s70 + $0xf8] sm:$0x1] %vm71, %v426
    %646 = vst.msk [vmem:[%s70 + $0xfc] sm:$0xe] %vm588, %v427
    %647 = vst.msk [vmem:[%s70 + $0x100] sm:$0xf] %vm55, %v430
    %648 = vst.msk [vmem:[%s70 + $0x104] sm:$0x1] %vm71, %v431
    %649 = vst.msk [vmem:[%s70 + $0x108] sm:$0xe] %vm588, %v432
    %650 = vst.msk [vmem:[%s70 + $0x10c] sm:$0xf] %vm55, %v435
    %651 = vst.msk [vmem:[%s70 + $0x110] sm:$0x1] %vm71, %v436
    %652 = vst.msk [vmem:[%s70 + $0x114] sm:$0xe] %vm588, %v437
    %653 = vst.msk [vmem:[%s70 + $0x118] sm:$0xf] %vm55, %v440
    %654 = vst.msk [vmem:[%s70 + $0x11c] sm:$0x1] %vm71, %v441
    %655 = vst.msk [vmem:[%s70 + $0x120] sm:$0xe] %vm588, %v442
    %656 = vst.msk [vmem:[%s70 + $0x124] sm:$0xf] %vm55, %v445
    %657 = vst.msk [vmem:[%s70 + $0x128] sm:$0x1] %vm71, %v446
    %658 = vst.msk [vmem:[%s70 + $0x12c] sm:$0xe] %vm588, %v447
    %659 = vst.msk [vmem:[%s70 + $0x130] sm:$0xf] %vm55, %v450
    %660 = vst.msk [vmem:[%s70 + $0x134] sm:$0x1] %vm71, %v451
    %661 = vst.msk [vmem:[%s70 + $0x138] sm:$0xe] %vm588, %v452
    %662 = vst.msk [vmem:[%s70 + $0x13c] sm:$0xf] %vm55, %v455
    %663 = vst.msk [vmem:[%s70 + $0x140] sm:$0x1] %vm71, %v456
    %664 = vst.msk [vmem:[%s70 + $0x144] sm:$0xe] %vm588, %v457
    %665 = vst.msk [vmem:[%s70 + $0x148] sm:$0xf] %vm55, %v460
    %666 = vst.msk [vmem:[%s70 + $0x14c] sm:$0x1] %vm71, %v461
    %667 = vst.msk [vmem:[%s70 + $0x150] sm:$0xe] %vm588, %v462
    %668 = vst.msk [vmem:[%s70 + $0x154] sm:$0xf] %vm55, %v465
    %669 = vst.msk [vmem:[%s70 + $0x158] sm:$0x1] %vm71, %v466
    %670 = vst.msk [vmem:[%s70 + $0x15c] sm:$0xe] %vm588, %v467
    %671 = vst.msk [vmem:[%s70 + $0x160] sm:$0xf] %vm55, %v470
    %672 = vst.msk [vmem:[%s70 + $0x164] sm:$0x1] %vm71, %v471
    %673 = vst.msk [vmem:[%s70 + $0x168] sm:$0xe] %vm588, %v472
    %674 = vst.msk [vmem:[%s70 + $0x16c] sm:$0xf] %vm55, %v475
    %675 = vst.msk [vmem:[%s70 + $0x170] sm:$0x1] %vm71, %v476
    %676 = vst.msk [vmem:[%s70 + $0x174] sm:$0xe] %vm588, %v477
    %677 = vst.msk [vmem:[%s70 + $0x178] sm:$0xf] %vm55, %v480
    %678 = vst.msk [vmem:[%s70 + $0x17c] sm:$0x1] %vm71, %v481
    %679 = vst.msk [vmem:[%s70 + $0x180] sm:$0xe] %vm588, %v482
    %680 = vst.msk [vmem:[%s70 + $0x184] sm:$0xf] %vm55, %v485
    %681 = vst.msk [vmem:[%s70 + $0x188] sm:$0x1] %vm71, %v486
    %682 = vst.msk [vmem:[%s70 + $0x18c] sm:$0xe] %vm588, %v487
    %683 = vst.msk [vmem:[%s70 + $0x190] sm:$0xf] %vm55, %v490
    %684 = vst.msk [vmem:[%s70 + $0x194] sm:$0x1] %vm71, %v491
    %v685 = vld [vmem:[#allocation2] sm:$0xf]
    %v686 = vld [vmem:[#allocation2 + $0x4] sm:$0xf]
    %v687 = vld [vmem:[#allocation2 + $0x8] sm:$0x1]
    %v688 = vld [vmem:[#allocation2 + $0xc] sm:$0xf]
    %v689 = vld [vmem:[#allocation2 + $0x10] sm:$0xf]
    %v690 = vld [vmem:[#allocation2 + $0x14] sm:$0x1]
    %v691 = vld [vmem:[#allocation2 + $0x18] sm:$0xf]
    %v692 = vld [vmem:[#allocation2 + $0x1c] sm:$0xf]
    %v693 = vld [vmem:[#allocation2 + $0x20] sm:$0x1]
    %v694 = vld [vmem:[#allocation2 + $0x24] sm:$0xf]
    %v695 = vld [vmem:[#allocation2 + $0x28] sm:$0xf]
    %v696 = vld [vmem:[#allocation2 + $0x2c] sm:$0x1]
    %v697 = vld [vmem:[#allocation2 + $0x30] sm:$0xf]
    %v698 = vld [vmem:[#allocation2 + $0x34] sm:$0xf]
    %v699 = vld [vmem:[#allocation2 + $0x38] sm:$0x1]
    %v700 = vld [vmem:[#allocation2 + $0x3c] sm:$0xf]
    %v701 = vld [vmem:[#allocation2 + $0x40] sm:$0xf]
    %v702 = vld [vmem:[#allocation2 + $0x44] sm:$0x1]
    %v703 = vld [vmem:[#allocation2 + $0x48] sm:$0xf]
    %v704 = vld [vmem:[#allocation2 + $0x4c] sm:$0xf]
    %v705 = vld [vmem:[#allocation2 + $0x50] sm:$0x1]
    %v706 = vld [vmem:[#allocation2 + $0x54] sm:$0xf]
    %v707 = vld [vmem:[#allocation2 + $0x58] sm:$0xf]
    %v708 = vld [vmem:[#allocation2 + $0x5c] sm:$0x1]
    %v709 = vld [vmem:[#allocation2 + $0x60] sm:$0xf]
    %v710 = vld [vmem:[#allocation2 + $0x64] sm:$0xf]
    %v711 = vld [vmem:[#allocation2 + $0x68] sm:$0x1]
    %v712 = vld [vmem:[#allocation2 + $0x6c] sm:$0xf]
    %v713 = vld [vmem:[#allocation2 + $0x70] sm:$0xf]
    %v714 = vld [vmem:[#allocation2 + $0x74] sm:$0x1]
    %v715 = vld [vmem:[#allocation2 + $0x78] sm:$0xf]
    %v716 = vld [vmem:[#allocation2 + $0x7c] sm:$0xf]
    %v717 = vld [vmem:[#allocation2 + $0x80] sm:$0x1]
    %v718 = vld [vmem:[#allocation2 + $0x84] sm:$0xf]
    %v719 = vld [vmem:[#allocation2 + $0x88] sm:$0xf]
    %v720 = vld [vmem:[#allocation2 + $0x8c] sm:$0x1]
    %v721 = vld [vmem:[#allocation2 + $0x90] sm:$0xf]
    %v722 = vld [vmem:[#allocation2 + $0x94] sm:$0xf]
    %v723 = vld [vmem:[#allocation2 + $0x98] sm:$0x1]
    %v724 = vld [vmem:[#allocation2 + $0x9c] sm:$0xf]
    %v725 = vld [vmem:[#allocation2 + $0xa0] sm:$0xf]
    %v726 = vld [vmem:[#allocation2 + $0xa4] sm:$0x1]
    %v727 = vld [vmem:[#allocation2 + $0xa8] sm:$0xf]
    %v728 = vld [vmem:[#allocation2 + $0xac] sm:$0xf]
    %v729 = vld [vmem:[#allocation2 + $0xb0] sm:$0x1]
    %v730 = vld [vmem:[#allocation2 + $0xb4] sm:$0xf]
    %v731 = vld [vmem:[#allocation2 + $0xb8] sm:$0xf]
    %v732 = vld [vmem:[#allocation2 + $0xbc] sm:$0x1]
    %v733 = vld [vmem:[#allocation2 + $0xd8] sm:$0xf]
    %v734 = vld [vmem:[#allocation2 + $0xdc] sm:$0xf]
    %v735 = vld [vmem:[#allocation2 + $0xe0] sm:$0x1]
    %v736 = vld [vmem:[#allocation2 + $0xe4] sm:$0xf]
    %v737 = vld [vmem:[#allocation2 + $0xe8] sm:$0xf]
    %v738 = vld [vmem:[#allocation2 + $0xec] sm:$0x1]
    %v739 = vld [vmem:[#allocation2 + $0xf0] sm:$0xf]
    %v740 = vld [vmem:[#allocation2 + $0xf4] sm:$0xf]
    %v741 = vld [vmem:[#allocation2 + $0xf8] sm:$0x1]
    %v742 = vld [vmem:[#allocation2 + $0xfc] sm:$0xf]
    %v743 = vld [vmem:[#allocation2 + $0x100] sm:$0xf]
    %v744 = vld [vmem:[#allocation2 + $0x104] sm:$0x1]
    %v745 = vld [vmem:[#allocation2 + $0x108] sm:$0xf]
    %v746 = vld [vmem:[#allocation2 + $0x10c] sm:$0xf]
    %v747 = vld [vmem:[#allocation2 + $0x110] sm:$0x1]
    %v748 = vld [vmem:[#allocation2 + $0x114] sm:$0xf]
    %v749 = vld [vmem:[#allocation2 + $0x118] sm:$0xf]
    %v750 = vld [vmem:[#allocation2 + $0x11c] sm:$0x1]
    %v751 = vld [vmem:[#allocation2 + $0x120] sm:$0xf]
    %v752 = vld [vmem:[#allocation2 + $0x124] sm:$0xf]
    %v753 = vld [vmem:[#allocation2 + $0x128] sm:$0x1]
    %v754 = vld [vmem:[#allocation2 + $0x12c] sm:$0xf]
    %v755 = vld [vmem:[#allocation2 + $0x130] sm:$0xf]
    %v756 = vld [vmem:[#allocation2 + $0x134] sm:$0x1]
    %v757 = vld [vmem:[#allocation2 + $0x138] sm:$0xf]
    %v758 = vld [vmem:[#allocation2 + $0x13c] sm:$0xf]
    %v759 = vld [vmem:[#allocation2 + $0x140] sm:$0x1]
    %v760 = vld [vmem:[#allocation2 + $0x144] sm:$0xf]
    %v761 = vld [vmem:[#allocation2 + $0x148] sm:$0xf]
    %v762 = vld [vmem:[#allocation2 + $0x14c] sm:$0x1]
    %v763 = vld [vmem:[#allocation2 + $0x150] sm:$0xf]
    %v764 = vld [vmem:[#allocation2 + $0x154] sm:$0xf]
    %v765 = vld [vmem:[#allocation2 + $0x158] sm:$0x1]
    %v766 = vld [vmem:[#allocation2 + $0x15c] sm:$0xf]
    %v767 = vld [vmem:[#allocation2 + $0x160] sm:$0xf]
    %v768 = vld [vmem:[#allocation2 + $0x164] sm:$0x1]
    %v769 = vld [vmem:[#allocation2 + $0x168] sm:$0xf]
    %v770 = vld [vmem:[#allocation2 + $0x16c] sm:$0xf]
    %v771 = vld [vmem:[#allocation2 + $0x170] sm:$0x1]
    %v772 = vld [vmem:[#allocation2 + $0x174] sm:$0xf]
    %v773 = vld [vmem:[#allocation2 + $0x178] sm:$0xf]
    %v774 = vld [vmem:[#allocation2 + $0x17c] sm:$0x1]
    %v775 = vld [vmem:[#allocation2 + $0x180] sm:$0xf]
    %v776 = vld [vmem:[#allocation2 + $0x184] sm:$0xf]
    %v777 = vld [vmem:[#allocation2 + $0x188] sm:$0x1]
    %v778 = vld [vmem:[#allocation2 + $0x18c] sm:$0xf]
    %v779 = vld [vmem:[#allocation2 + $0x190] sm:$0xf]
    %v780 = vld [vmem:[#allocation2 + $0x194] sm:$0x1]
    %v781 = vld [vmem:[#allocation2] sm:$0xe]
    %v782 = vld [vmem:[#allocation2 + $0xc] sm:$0xe]
    %v783 = vld [vmem:[#allocation2 + $0x18] sm:$0xe]
    %v784 = vld [vmem:[#allocation2 + $0x24] sm:$0xe]
    %v785 = vld [vmem:[#allocation2 + $0x30] sm:$0xe]
    %v786 = vld [vmem:[#allocation2 + $0x3c] sm:$0xe]
    %v787 = vld [vmem:[#allocation2 + $0x48] sm:$0xe]
    %v788 = vld [vmem:[#allocation2 + $0x54] sm:$0xe]
    %v789 = vld [vmem:[#allocation2 + $0x60] sm:$0xe]
    %v790 = vld [vmem:[#allocation2 + $0x6c] sm:$0xe]
    %v791 = vld [vmem:[#allocation2 + $0x78] sm:$0xe]
    %v792 = vld [vmem:[#allocation2 + $0x84] sm:$0xe]
    %v793 = vld [vmem:[#allocation2 + $0x90] sm:$0xe]
    %v794 = vld [vmem:[#allocation2 + $0x9c] sm:$0xe]
    %v795 = vld [vmem:[#allocation2 + $0xa8] sm:$0xe]
    %v796 = vld [vmem:[#allocation2 + $0xb4] sm:$0xe]
    %v797 = vld [vmem:[#allocation2 + $0xd8] sm:$0xe]
    %v798 = vld [vmem:[#allocation2 + $0xe4] sm:$0xe]
    %v799 = vld [vmem:[#allocation2 + $0xf0] sm:$0xe]
    %v800 = vld [vmem:[#allocation2 + $0xfc] sm:$0xe]
    %v801 = vld [vmem:[#allocation2 + $0x108] sm:$0xe]
    %v802 = vld [vmem:[#allocation2 + $0x114] sm:$0xe]
    %v803 = vld [vmem:[#allocation2 + $0x120] sm:$0xe]
    %v804 = vld [vmem:[#allocation2 + $0x12c] sm:$0xe]
    %v805 = vld [vmem:[#allocation2 + $0x138] sm:$0xe]
    %v806 = vld [vmem:[#allocation2 + $0x144] sm:$0xe]
    %v807 = vld [vmem:[#allocation2 + $0x150] sm:$0xe]
    %v808 = vld [vmem:[#allocation2 + $0x15c] sm:$0xe]
    %v809 = vld [vmem:[#allocation2 + $0x168] sm:$0xe]
    %v810 = vld [vmem:[#allocation2 + $0x174] sm:$0xe]
    %v811 = vld [vmem:[#allocation2 + $0x180] sm:$0xe]
    %v812 = vld [vmem:[#allocation2 + $0x18c] sm:$0xe]
    %v813 = vld [vmem:[#allocation2 + $0x8] sm:$0x3]
    %v814 = vld [vmem:[#allocation2 + $0x14] sm:$0x3]
    %v815 = vld [vmem:[#allocation2 + $0x20] sm:$0x3]
    %v816 = vld [vmem:[#allocation2 + $0x2c] sm:$0x3]
    %v817 = vld [vmem:[#allocation2 + $0x38] sm:$0x3]
    %v818 = vld [vmem:[#allocation2 + $0x44] sm:$0x3]
    %v819 = vld [vmem:[#allocation2 + $0x50] sm:$0x3]
    %v820 = vld [vmem:[#allocation2 + $0x5c] sm:$0x3]
    %v821 = vld [vmem:[#allocation2 + $0x68] sm:$0x3]
    %v822 = vld [vmem:[#allocation2 + $0x74] sm:$0x3]
    %v823 = vld [vmem:[#allocation2 + $0x80] sm:$0x3]
    %v824 = vld [vmem:[#allocation2 + $0x8c] sm:$0x3]
    %v825 = vld [vmem:[#allocation2 + $0x98] sm:$0x3]
    %v826 = vld [vmem:[#allocation2 + $0xa4] sm:$0x3]
    %v827 = vld [vmem:[#allocation2 + $0xb0] sm:$0x3]
    %v828 = vld [vmem:[#allocation2 + $0xbc] sm:$0x3]
    %v829 = vld [vmem:[#allocation2 + $0xe0] sm:$0x3]
    %v830 = vld [vmem:[#allocation2 + $0xec] sm:$0x3]
    %v831 = vld [vmem:[#allocation2 + $0xf8] sm:$0x3]
    %v832 = vld [vmem:[#allocation2 + $0x104] sm:$0x3]
    %v833 = vld [vmem:[#allocation2 + $0x110] sm:$0x3]
    %v834 = vld [vmem:[#allocation2 + $0x11c] sm:$0x3]
    %v835 = vld [vmem:[#allocation2 + $0x128] sm:$0x3]
    %v836 = vld [vmem:[#allocation2 + $0x134] sm:$0x3]
    %v837 = vld [vmem:[#allocation2 + $0x140] sm:$0x3]
    %v838 = vld [vmem:[#allocation2 + $0x14c] sm:$0x3]
    %v839 = vld [vmem:[#allocation2 + $0x158] sm:$0x3]
    %v840 = vld [vmem:[#allocation2 + $0x164] sm:$0x3]
    %v841 = vld [vmem:[#allocation2 + $0x170] sm:$0x3]
    %v842 = vld [vmem:[#allocation2 + $0x17c] sm:$0x3]
    %v843 = vld [vmem:[#allocation2 + $0x188] sm:$0x3]
    %v844 = vld [vmem:[#allocation2 + $0x194] sm:$0x3]
    %v845 = vld [vmem:[%s70] sm:$0xf]
    %v846 = vld [vmem:[%s70 + $0x4] sm:$0xf]
    %v847 = vld [vmem:[%s70 + $0x8] sm:$0x1]
    %v848 = vld [vmem:[%s70 + $0xc] sm:$0xf]
    %v849 = vld [vmem:[%s70 + $0x10] sm:$0xf]
    %v850 = vld [vmem:[%s70 + $0x14] sm:$0x1]
    %v851 = vld [vmem:[%s70 + $0x18] sm:$0xf]
    %v852 = vld [vmem:[%s70 + $0x1c] sm:$0xf]
    %v853 = vld [vmem:[%s70 + $0x20] sm:$0x1]
    %v854 = vld [vmem:[%s70 + $0x24] sm:$0xf]
    %v855 = vld [vmem:[%s70 + $0x28] sm:$0xf]
    %v856 = vld [vmem:[%s70 + $0x2c] sm:$0x1]
    %v857 = vld [vmem:[%s70 + $0x30] sm:$0xf]
    %v858 = vld [vmem:[%s70 + $0x34] sm:$0xf]
    %v859 = vld [vmem:[%s70 + $0x38] sm:$0x1]
    %v860 = vld [vmem:[%s70 + $0x3c] sm:$0xf]
    %v861 = vld [vmem:[%s70 + $0x40] sm:$0xf]
    %v862 = vld [vmem:[%s70 + $0x44] sm:$0x1]
    %v863 = vld [vmem:[%s70 + $0x48] sm:$0xf]
    %v864 = vld [vmem:[%s70 + $0x4c] sm:$0xf]
    %v865 = vld [vmem:[%s70 + $0x50] sm:$0x1]
    %v866 = vld [vmem:[%s70 + $0x54] sm:$0xf]
    %v867 = vld [vmem:[%s70 + $0x58] sm:$0xf]
    %v868 = vld [vmem:[%s70 + $0x5c] sm:$0x1]
    %v869 = vld [vmem:[%s70 + $0x60] sm:$0xf]
    %v870 = vld [vmem:[%s70 + $0x64] sm:$0xf]
    %v871 = vld [vmem:[%s70 + $0x68] sm:$0x1]
    %v872 = vld [vmem:[%s70 + $0x6c] sm:$0xf]
    %v873 = vld [vmem:[%s70 + $0x70] sm:$0xf]
    %v874 = vld [vmem:[%s70 + $0x74] sm:$0x1]
    %v875 = vld [vmem:[%s70 + $0x78] sm:$0xf]
    %v876 = vld [vmem:[%s70 + $0x7c] sm:$0xf]
    %v877 = vld [vmem:[%s70 + $0x80] sm:$0x1]
    %v878 = vld [vmem:[%s70 + $0x84] sm:$0xf]
    %v879 = vld [vmem:[%s70 + $0x88] sm:$0xf]
    %v880 = vld [vmem:[%s70 + $0x8c] sm:$0x1]
    %v881 = vld [vmem:[%s70 + $0x90] sm:$0xf]
    %v882 = vld [vmem:[%s70 + $0x94] sm:$0xf]
    %v883 = vld [vmem:[%s70 + $0x98] sm:$0x1]
    %v884 = vld [vmem:[%s70 + $0x9c] sm:$0xf]
    %v885 = vld [vmem:[%s70 + $0xa0] sm:$0xf]
    %v886 = vld [vmem:[%s70 + $0xa4] sm:$0x1]
    %v887 = vld [vmem:[%s70 + $0xa8] sm:$0xf]
    %v888 = vld [vmem:[%s70 + $0xac] sm:$0xf]
    %v889 = vld [vmem:[%s70 + $0xb0] sm:$0x1]
    %v890 = vld [vmem:[%s70 + $0xb4] sm:$0xf]
    %v891 = vld [vmem:[%s70 + $0xb8] sm:$0xf]
    %v892 = vld [vmem:[%s70 + $0xbc] sm:$0x1]
    %v893 = vld [vmem:[%s70 + $0xd8] sm:$0xf]
    %v894 = vld [vmem:[%s70 + $0xdc] sm:$0xf]
    %v895 = vld [vmem:[%s70 + $0xe0] sm:$0x1]
    %v896 = vld [vmem:[%s70 + $0xe4] sm:$0xf]
    %v897 = vld [vmem:[%s70 + $0xe8] sm:$0xf]
    %v898 = vld [vmem:[%s70 + $0xec] sm:$0x1]
    %v899 = vld [vmem:[%s70 + $0xf0] sm:$0xf]
    %v900 = vld [vmem:[%s70 + $0xf4] sm:$0xf]
    %v901 = vld [vmem:[%s70 + $0xf8] sm:$0x1]
    %v902 = vld [vmem:[%s70 + $0xfc] sm:$0xf]
    %v903 = vld [vmem:[%s70 + $0x100] sm:$0xf]
    %v904 = vld [vmem:[%s70 + $0x104] sm:$0x1]
    %v905 = vld [vmem:[%s70 + $0x108] sm:$0xf]
    %v906 = vld [vmem:[%s70 + $0x10c] sm:$0xf]
    %v907 = vld [vmem:[%s70 + $0x110] sm:$0x1]
    %v908 = vld [vmem:[%s70 + $0x114] sm:$0xf]
    %v909 = vld [vmem:[%s70 + $0x118] sm:$0xf]
    %v910 = vld [vmem:[%s70 + $0x11c] sm:$0x1]
    %v911 = vld [vmem:[%s70 + $0x120] sm:$0xf]
    %v912 = vld [vmem:[%s70 + $0x124] sm:$0xf]
    %v913 = vld [vmem:[%s70 + $0x128] sm:$0x1]
    %v914 = vld [vmem:[%s70 + $0x12c] sm:$0xf]
    %v915 = vld [vmem:[%s70 + $0x130] sm:$0xf]
    %v916 = vld [vmem:[%s70 + $0x134] sm:$0x1]
    %v917 = vld [vmem:[%s70 + $0x138] sm:$0xf]
    %v918 = vld [vmem:[%s70 + $0x13c] sm:$0xf]
    %v919 = vld [vmem:[%s70 + $0x140] sm:$0x1]
    %v920 = vld [vmem:[%s70 + $0x144] sm:$0xf]
    %v921 = vld [vmem:[%s70 + $0x148] sm:$0xf]
    %v922 = vld [vmem:[%s70 + $0x14c] sm:$0x1]
    %v923 = vld [vmem:[%s70 + $0x150] sm:$0xf]
    %v924 = vld [vmem:[%s70 + $0x154] sm:$0xf]
    %v925 = vld [vmem:[%s70 + $0x158] sm:$0x1]
    %v926 = vld [vmem:[%s70 + $0x15c] sm:$0xf]
    %v927 = vld [vmem:[%s70 + $0x160] sm:$0xf]
    %v928 = vld [vmem:[%s70 + $0x164] sm:$0x1]
    %v929 = vld [vmem:[%s70 + $0x168] sm:$0xf]
    %v930 = vld [vmem:[%s70 + $0x16c] sm:$0xf]
    %v931 = vld [vmem:[%s70 + $0x170] sm:$0x1]
    %v932 = vld [vmem:[%s70 + $0x174] sm:$0xf]
    %v933 = vld [vmem:[%s70 + $0x178] sm:$0xf]
    %v934 = vld [vmem:[%s70 + $0x17c] sm:$0x1]
    %v935 = vld [vmem:[%s70 + $0x180] sm:$0xf]
    %v936 = vld [vmem:[%s70 + $0x184] sm:$0xf]
    %v937 = vld [vmem:[%s70 + $0x188] sm:$0x1]
    %v938 = vld [vmem:[%s70 + $0x18c] sm:$0xf]
    %v939 = vld [vmem:[%s70 + $0x190] sm:$0xf]
    %v940 = vld [vmem:[%s70 + $0x194] sm:$0x1]
    %v941 = vld [vmem:[%s70] sm:$0xe]
    %v942 = vld [vmem:[%s70 + $0xc] sm:$0xe]
    %v943 = vld [vmem:[%s70 + $0x18] sm:$0xe]
    %v944 = vld [vmem:[%s70 + $0x24] sm:$0xe]
    %v945 = vld [vmem:[%s70 + $0x30] sm:$0xe]
    %v946 = vld [vmem:[%s70 + $0x3c] sm:$0xe]
    %v947 = vld [vmem:[%s70 + $0x48] sm:$0xe]
    %v948 = vld [vmem:[%s70 + $0x54] sm:$0xe]
    %v949 = vld [vmem:[%s70 + $0x60] sm:$0xe]
    %v950 = vld [vmem:[%s70 + $0x6c] sm:$0xe]
    %v951 = vld [vmem:[%s70 + $0x78] sm:$0xe]
    %v952 = vld [vmem:[%s70 + $0x84] sm:$0xe]
    %v953 = vld [vmem:[%s70 + $0x90] sm:$0xe]
    %v954 = vld [vmem:[%s70 + $0x9c] sm:$0xe]
    %v955 = vld [vmem:[%s70 + $0xa8] sm:$0xe]
    %v956 = vld [vmem:[%s70 + $0xb4] sm:$0xe]
    %v957 = vld [vmem:[%s70 + $0xd8] sm:$0xe]
    %v958 = vld [vmem:[%s70 + $0xe4] sm:$0xe]
    %v959 = vld [vmem:[%s70 + $0xf0] sm:$0xe]
    %v960 = vld [vmem:[%s70 + $0xfc] sm:$0xe]
    %v961 = vld [vmem:[%s70 + $0x108] sm:$0xe]
    %v962 = vld [vmem:[%s70 + $0x114] sm:$0xe]
    %v963 = vld [vmem:[%s70 + $0x120] sm:$0xe]
    %v964 = vld [vmem:[%s70 + $0x12c] sm:$0xe]
    %v965 = vld [vmem:[%s70 + $0x138] sm:$0xe]
    %v966 = vld [vmem:[%s70 + $0x144] sm:$0xe]
    %v967 = vld [vmem:[%s70 + $0x150] sm:$0xe]
    %v968 = vld [vmem:[%s70 + $0x15c] sm:$0xe]
    %v969 = vld [vmem:[%s70 + $0x168] sm:$0xe]
    %v970 = vld [vmem:[%s70 + $0x174] sm:$0xe]
    %v971 = vld [vmem:[%s70 + $0x180] sm:$0xe]
    %v972 = vld [vmem:[%s70 + $0x18c] sm:$0xe]
    %v973 = vld [vmem:[%s70 + $0x8] sm:$0x3]
    %v974 = vld [vmem:[%s70 + $0x14] sm:$0x3]
    %v975 = vld [vmem:[%s70 + $0x20] sm:$0x3]
    %v976 = vld [vmem:[%s70 + $0x2c] sm:$0x3]
    %v977 = vld [vmem:[%s70 + $0x38] sm:$0x3]
    %v978 = vld [vmem:[%s70 + $0x44] sm:$0x3]
    %v979 = vld [vmem:[%s70 + $0x50] sm:$0x3]
    %v980 = vld [vmem:[%s70 + $0x5c] sm:$0x3]
    %v981 = vld [vmem:[%s70 + $0x68] sm:$0x3]
    %v982 = vld [vmem:[%s70 + $0x74] sm:$0x3]
    %v983 = vld [vmem:[%s70 + $0x80] sm:$0x3]
    %v984 = vld [vmem:[%s70 + $0x8c] sm:$0x3]
    %v985 = vld [vmem:[%s70 + $0x98] sm:$0x3]
    %v986 = vld [vmem:[%s70 + $0xa4] sm:$0x3]
    %v987 = vld [vmem:[%s70 + $0xb0] sm:$0x3]
    %v988 = vld [vmem:[%s70 + $0xbc] sm:$0x3]
    %v989 = vld [vmem:[%s70 + $0xe0] sm:$0x3]
    %v990 = vld [vmem:[%s70 + $0xec] sm:$0x3]
    %v991 = vld [vmem:[%s70 + $0xf8] sm:$0x3]
    %v992 = vld [vmem:[%s70 + $0x104] sm:$0x3]
    %v993 = vld [vmem:[%s70 + $0x110] sm:$0x3]
    %v994 = vld [vmem:[%s70 + $0x11c] sm:$0x3]
    %v995 = vld [vmem:[%s70 + $0x128] sm:$0x3]
    %v996 = vld [vmem:[%s70 + $0x134] sm:$0x3]
    %v997 = vld [vmem:[%s70 + $0x140] sm:$0x3]
    %v998 = vld [vmem:[%s70 + $0x14c] sm:$0x3]
    %v999 = vld [vmem:[%s70 + $0x158] sm:$0x3]
    %v1000 = vld [vmem:[%s70 + $0x164] sm:$0x3]
    %v1001 = vld [vmem:[%s70 + $0x170] sm:$0x3]
    %v1002 = vld [vmem:[%s70 + $0x17c] sm:$0x3]
    %v1003 = vld [vmem:[%s70 + $0x188] sm:$0x3]
    %v1004 = vld [vmem:[%s70 + $0x194] sm:$0x3]
    %s1005 = scalar_lea.vmem [#allocation2], 24
    %v1006 = vld [vmem:[%s1005] sm:$0xf]
    %v1007 = vld [vmem:[%s1005 + $0x4] sm:$0xf]
    %v1008 = vld [vmem:[%s1005 + $0x8] sm:$0x1]
    %v1009 = vld [vmem:[%s1005 + $0xc] sm:$0xf]
    %v1010 = vld [vmem:[%s1005 + $0x10] sm:$0xf]
    %v1011 = vld [vmem:[%s1005 + $0x14] sm:$0x1]
    %v1012 = vld [vmem:[%s1005 + $0x18] sm:$0xf]
    %v1013 = vld [vmem:[%s1005 + $0x1c] sm:$0xf]
    %v1014 = vld [vmem:[%s1005 + $0x20] sm:$0x1]
    %v1015 = vld [vmem:[%s1005 + $0x24] sm:$0xf]
    %v1016 = vld [vmem:[%s1005 + $0x28] sm:$0xf]
    %v1017 = vld [vmem:[%s1005 + $0x2c] sm:$0x1]
    %v1018 = vld [vmem:[%s1005 + $0x30] sm:$0xf]
    %v1019 = vld [vmem:[%s1005 + $0x34] sm:$0xf]
    %v1020 = vld [vmem:[%s1005 + $0x38] sm:$0x1]
    %v1021 = vld [vmem:[%s1005 + $0x3c] sm:$0xf]
    %v1022 = vld [vmem:[%s1005 + $0x40] sm:$0xf]
    %v1023 = vld [vmem:[%s1005 + $0x44] sm:$0x1]
    %v1024 = vld [vmem:[%s1005 + $0x48] sm:$0xf]
    %v1025 = vld [vmem:[%s1005 + $0x4c] sm:$0xf]
    %v1026 = vld [vmem:[%s1005 + $0x50] sm:$0x1]
    %v1027 = vld [vmem:[%s1005 + $0x54] sm:$0xf]
    %v1028 = vld [vmem:[%s1005 + $0x58] sm:$0xf]
    %v1029 = vld [vmem:[%s1005 + $0x5c] sm:$0x1]
    %v1030 = vld [vmem:[%s1005 + $0x60] sm:$0xf]
    %v1031 = vld [vmem:[%s1005 + $0x64] sm:$0xf]
    %v1032 = vld [vmem:[%s1005 + $0x68] sm:$0x1]
    %v1033 = vld [vmem:[%s1005 + $0x6c] sm:$0xf]
    %v1034 = vld [vmem:[%s1005 + $0x70] sm:$0xf]
    %v1035 = vld [vmem:[%s1005 + $0x74] sm:$0x1]
    %v1036 = vld [vmem:[%s1005 + $0x78] sm:$0xf]
    %v1037 = vld [vmem:[%s1005 + $0x7c] sm:$0xf]
    %v1038 = vld [vmem:[%s1005 + $0x80] sm:$0x1]
    %v1039 = vld [vmem:[%s1005 + $0x84] sm:$0xf]
    %v1040 = vld [vmem:[%s1005 + $0x88] sm:$0xf]
    %v1041 = vld [vmem:[%s1005 + $0x8c] sm:$0x1]
    %v1042 = vld [vmem:[%s1005 + $0x90] sm:$0xf]
    %v1043 = vld [vmem:[%s1005 + $0x94] sm:$0xf]
    %v1044 = vld [vmem:[%s1005 + $0x98] sm:$0x1]
    %v1045 = vld [vmem:[%s1005 + $0x9c] sm:$0xf]
    %v1046 = vld [vmem:[%s1005 + $0xa0] sm:$0xf]
    %v1047 = vld [vmem:[%s1005 + $0xa4] sm:$0x1]
    %v1048 = vld [vmem:[%s1005 + $0xa8] sm:$0xf]
    %v1049 = vld [vmem:[%s1005 + $0xac] sm:$0xf]
    %v1050 = vld [vmem:[%s1005 + $0xb0] sm:$0x1]
    %v1051 = vld [vmem:[%s1005 + $0xb4] sm:$0xf]
    %v1052 = vld [vmem:[%s1005 + $0xb8] sm:$0xf]
    %v1053 = vld [vmem:[%s1005 + $0xbc] sm:$0x1]
    %v1054 = vld [vmem:[%s1005 + $0xd8] sm:$0xf]
    %v1055 = vld [vmem:[%s1005 + $0xdc] sm:$0xf]
    %v1056 = vld [vmem:[%s1005 + $0xe0] sm:$0x1]
    %v1057 = vld [vmem:[%s1005 + $0xe4] sm:$0xf]
    %v1058 = vld [vmem:[%s1005 + $0xe8] sm:$0xf]
    %v1059 = vld [vmem:[%s1005 + $0xec] sm:$0x1]
    %v1060 = vld [vmem:[%s1005 + $0xf0] sm:$0xf]
    %v1061 = vld [vmem:[%s1005 + $0xf4] sm:$0xf]
    %v1062 = vld [vmem:[%s1005 + $0xf8] sm:$0x1]
    %v1063 = vld [vmem:[%s1005 + $0xfc] sm:$0xf]
    %v1064 = vld [vmem:[%s1005 + $0x100] sm:$0xf]
    %v1065 = vld [vmem:[%s1005 + $0x104] sm:$0x1]
    %v1066 = vld [vmem:[%s1005 + $0x108] sm:$0xf]
    %v1067 = vld [vmem:[%s1005 + $0x10c] sm:$0xf]
    %v1068 = vld [vmem:[%s1005 + $0x110] sm:$0x1]
    %v1069 = vld [vmem:[%s1005 + $0x114] sm:$0xf]
    %v1070 = vld [vmem:[%s1005 + $0x118] sm:$0xf]
    %v1071 = vld [vmem:[%s1005 + $0x11c] sm:$0x1]
    %v1072 = vld [vmem:[%s1005 + $0x120] sm:$0xf]
    %v1073 = vld [vmem:[%s1005 + $0x124] sm:$0xf]
    %v1074 = vld [vmem:[%s1005 + $0x128] sm:$0x1]
    %v1075 = vld [vmem:[%s1005 + $0x12c] sm:$0xf]
    %v1076 = vld [vmem:[%s1005 + $0x130] sm:$0xf]
    %v1077 = vld [vmem:[%s1005 + $0x134] sm:$0x1]
    %v1078 = vld [vmem:[%s1005 + $0x138] sm:$0xf]
    %v1079 = vld [vmem:[%s1005 + $0x13c] sm:$0xf]
    %v1080 = vld [vmem:[%s1005 + $0x140] sm:$0x1]
    %v1081 = vld [vmem:[%s1005 + $0x144] sm:$0xf]
    %v1082 = vld [vmem:[%s1005 + $0x148] sm:$0xf]
    %v1083 = vld [vmem:[%s1005 + $0x14c] sm:$0x1]
    %v1084 = vld [vmem:[%s1005 + $0x150] sm:$0xf]
    %v1085 = vld [vmem:[%s1005 + $0x154] sm:$0xf]
    %v1086 = vld [vmem:[%s1005 + $0x158] sm:$0x1]
    %v1087 = vld [vmem:[%s1005 + $0x15c] sm:$0xf]
    %v1088 = vld [vmem:[%s1005 + $0x160] sm:$0xf]
    %v1089 = vld [vmem:[%s1005 + $0x164] sm:$0x1]
    %v1090 = vld [vmem:[%s1005 + $0x168] sm:$0xf]
    %v1091 = vld [vmem:[%s1005 + $0x16c] sm:$0xf]
    %v1092 = vld [vmem:[%s1005 + $0x170] sm:$0x1]
    %v1093 = vld [vmem:[%s1005 + $0x174] sm:$0xf]
    %v1094 = vld [vmem:[%s1005 + $0x178] sm:$0xf]
    %v1095 = vld [vmem:[%s1005 + $0x17c] sm:$0x1]
    %v1096 = vld [vmem:[%s1005 + $0x180] sm:$0xf]
    %v1097 = vld [vmem:[%s1005 + $0x184] sm:$0xf]
    %v1098 = vld [vmem:[%s1005 + $0x188] sm:$0x1]
    %v1099 = vld [vmem:[%s1005 + $0x18c] sm:$0xf]
    %v1100 = vld [vmem:[%s1005 + $0x190] sm:$0xf]
    %v1101 = vld [vmem:[%s1005 + $0x194] sm:$0x1]
    %v1102 = vld [vmem:[%s1005] sm:$0xe]
    %v1103 = vld [vmem:[%s1005 + $0xc] sm:$0xe]
    %v1104 = vld [vmem:[%s1005 + $0x18] sm:$0xe]
    %v1105 = vld [vmem:[%s1005 + $0x24] sm:$0xe]
    %v1106 = vld [vmem:[%s1005 + $0x30] sm:$0xe]
    %v1107 = vld [vmem:[%s1005 + $0x3c] sm:$0xe]
    %v1108 = vld [vmem:[%s1005 + $0x48] sm:$0xe]
    %v1109 = vld [vmem:[%s1005 + $0x54] sm:$0xe]
    %v1110 = vld [vmem:[%s1005 + $0x60] sm:$0xe]
    %v1111 = vld [vmem:[%s1005 + $0x6c] sm:$0xe]
    %v1112 = vld [vmem:[%s1005 + $0x78] sm:$0xe]
    %v1113 = vld [vmem:[%s1005 + $0x84] sm:$0xe]
    %v1114 = vld [vmem:[%s1005 + $0x90] sm:$0xe]
    %v1115 = vld [vmem:[%s1005 + $0x9c] sm:$0xe]
    %v1116 = vld [vmem:[%s1005 + $0xa8] sm:$0xe]
    %v1117 = vld [vmem:[%s1005 + $0xb4] sm:$0xe]
    %v1118 = vld [vmem:[%s1005 + $0xd8] sm:$0xe]
    %v1119 = vld [vmem:[%s1005 + $0xe4] sm:$0xe]
    %v1120 = vld [vmem:[%s1005 + $0xf0] sm:$0xe]
    %v1121 = vld [vmem:[%s1005 + $0xfc] sm:$0xe]
    %v1122 = vld [vmem:[%s1005 + $0x108] sm:$0xe]
    %v1123 = vld [vmem:[%s1005 + $0x114] sm:$0xe]
    %v1124 = vld [vmem:[%s1005 + $0x120] sm:$0xe]
    %v1125 = vld [vmem:[%s1005 + $0x12c] sm:$0xe]
    %v1126 = vld [vmem:[%s1005 + $0x138] sm:$0xe]
    %v1127 = vld [vmem:[%s1005 + $0x144] sm:$0xe]
    %v1128 = vld [vmem:[%s1005 + $0x150] sm:$0xe]
    %v1129 = vld [vmem:[%s1005 + $0x15c] sm:$0xe]
    %v1130 = vld [vmem:[%s1005 + $0x168] sm:$0xe]
    %v1131 = vld [vmem:[%s1005 + $0x174] sm:$0xe]
    %v1132 = vld [vmem:[%s1005 + $0x180] sm:$0xe]
    %v1133 = vld [vmem:[%s1005 + $0x18c] sm:$0xe]
    %v1134 = vld [vmem:[%s1005 + $0x8] sm:$0x3]
    %v1135 = vld [vmem:[%s1005 + $0x14] sm:$0x3]
    %v1136 = vld [vmem:[%s1005 + $0x20] sm:$0x3]
    %v1137 = vld [vmem:[%s1005 + $0x2c] sm:$0x3]
    %v1138 = vld [vmem:[%s1005 + $0x38] sm:$0x3]
    %v1139 = vld [vmem:[%s1005 + $0x44] sm:$0x3]
    %v1140 = vld [vmem:[%s1005 + $0x50] sm:$0x3]
    %v1141 = vld [vmem:[%s1005 + $0x5c] sm:$0x3]
    %v1142 = vld [vmem:[%s1005 + $0x68] sm:$0x3]
    %v1143 = vld [vmem:[%s1005 + $0x74] sm:$0x3]
    %v1144 = vld [vmem:[%s1005 + $0x80] sm:$0x3]
    %v1145 = vld [vmem:[%s1005 + $0x8c] sm:$0x3]
    %v1146 = vld [vmem:[%s1005 + $0x98] sm:$0x3]
    %v1147 = vld [vmem:[%s1005 + $0xa4] sm:$0x3]
    %v1148 = vld [vmem:[%s1005 + $0xb0] sm:$0x3]
    %v1149 = vld [vmem:[%s1005 + $0xbc] sm:$0x3]
    %v1150 = vld [vmem:[%s1005 + $0xe0] sm:$0x3]
    %v1151 = vld [vmem:[%s1005 + $0xec] sm:$0x3]
    %v1152 = vld [vmem:[%s1005 + $0xf8] sm:$0x3]
    %v1153 = vld [vmem:[%s1005 + $0x104] sm:$0x3]
    %v1154 = vld [vmem:[%s1005 + $0x110] sm:$0x3]
    %v1155 = vld [vmem:[%s1005 + $0x11c] sm:$0x3]
    %v1156 = vld [vmem:[%s1005 + $0x128] sm:$0x3]
    %v1157 = vld [vmem:[%s1005 + $0x134] sm:$0x3]
    %v1158 = vld [vmem:[%s1005 + $0x140] sm:$0x3]
    %v1159 = vld [vmem:[%s1005 + $0x14c] sm:$0x3]
    %v1160 = vld [vmem:[%s1005 + $0x158] sm:$0x3]
    %v1161 = vld [vmem:[%s1005 + $0x164] sm:$0x3]
    %v1162 = vld [vmem:[%s1005 + $0x170] sm:$0x3]
    %v1163 = vld [vmem:[%s1005 + $0x17c] sm:$0x3]
    %v1164 = vld [vmem:[%s1005 + $0x188] sm:$0x3]
    %v1165 = vld [vmem:[%s1005 + $0x194] sm:$0x3]
    %v1262 = vunpack.c.l.b16 %v685
    %v1263 = vunpack.c.l.b16 %v686
    %v1264 = vunpack.c.l.b16 %v687
    %v1265 = vunpack.c.l.b16 %v688
    %v1266 = vunpack.c.l.b16 %v689
    %v1267 = vunpack.c.l.b16 %v690
    %v1268 = vunpack.c.l.b16 %v691
    %v1269 = vunpack.c.l.b16 %v692
    %v1270 = vunpack.c.l.b16 %v693
    %v1271 = vunpack.c.l.b16 %v694
    %v1272 = vunpack.c.l.b16 %v695
    %v1273 = vunpack.c.l.b16 %v696
    %v1274 = vunpack.c.l.b16 %v697
    %v1275 = vunpack.c.l.b16 %v698
    %v1276 = vunpack.c.l.b16 %v699
    %v1277 = vunpack.c.l.b16 %v700
    %v1278 = vunpack.c.l.b16 %v701
    %v1279 = vunpack.c.l.b16 %v702
    %v1280 = vunpack.c.l.b16 %v703
    %v1281 = vunpack.c.l.b16 %v704
    %v1282 = vunpack.c.l.b16 %v705
    %v1283 = vunpack.c.l.b16 %v706
    %v1284 = vunpack.c.l.b16 %v707
    %v1285 = vunpack.c.l.b16 %v708
    %v1286 = vunpack.c.l.b16 %v709
    %v1287 = vunpack.c.l.b16 %v710
    %v1288 = vunpack.c.l.b16 %v711
    %v1289 = vunpack.c.l.b16 %v712
    %v1290 = vunpack.c.l.b16 %v713
    %v1291 = vunpack.c.l.b16 %v714
    %v1292 = vunpack.c.l.b16 %v715
    %v1293 = vunpack.c.l.b16 %v716
    %v1294 = vunpack.c.l.b16 %v717
    %v1295 = vunpack.c.l.b16 %v718
    %v1296 = vunpack.c.l.b16 %v719
    %v1297 = vunpack.c.l.b16 %v720
    %v1298 = vunpack.c.l.b16 %v721
    %v1299 = vunpack.c.l.b16 %v722
    %v1300 = vunpack.c.l.b16 %v723
    %v1301 = vunpack.c.l.b16 %v724
    %v1302 = vunpack.c.l.b16 %v725
    %v1303 = vunpack.c.l.b16 %v726
    %v1304 = vunpack.c.l.b16 %v727
    %v1305 = vunpack.c.l.b16 %v728
    %v1306 = vunpack.c.l.b16 %v729
    %v1307 = vunpack.c.l.b16 %v730
    %v1308 = vunpack.c.l.b16 %v731
    %v1309 = vunpack.c.l.b16 %v732
    %v1310 = vunpack.c.l.b16 %v733
    %v1311 = vunpack.c.l.b16 %v734
    %v1312 = vunpack.c.l.b16 %v735
    %v1313 = vunpack.c.l.b16 %v736
    %v1314 = vunpack.c.l.b16 %v737
    %v1315 = vunpack.c.l.b16 %v738
    %v1316 = vunpack.c.l.b16 %v739
    %v1317 = vunpack.c.l.b16 %v740
    %v1318 = vunpack.c.l.b16 %v741
    %v1319 = vunpack.c.l.b16 %v742
    %v1320 = vunpack.c.l.b16 %v743
    %v1321 = vunpack.c.l.b16 %v744
    %v1322 = vunpack.c.l.b16 %v745
    %v1323 = vunpack.c.l.b16 %v746
    %v1324 = vunpack.c.l.b16 %v747
    %v1325 = vunpack.c.l.b16 %v748
    %v1326 = vunpack.c.l.b16 %v749
    %v1327 = vunpack.c.l.b16 %v750
    %v1328 = vunpack.c.l.b16 %v751
    %v1329 = vunpack.c.l.b16 %v752
    %v1330 = vunpack.c.l.b16 %v753
    %v1331 = vunpack.c.l.b16 %v754
    %v1332 = vunpack.c.l.b16 %v755
    %v1333 = vunpack.c.l.b16 %v756
    %v1334 = vunpack.c.l.b16 %v757
    %v1335 = vunpack.c.l.b16 %v758
    %v1336 = vunpack.c.l.b16 %v759
    %v1337 = vunpack.c.l.b16 %v760
    %v1338 = vunpack.c.l.b16 %v761
    %v1339 = vunpack.c.l.b16 %v762
    %v1340 = vunpack.c.l.b16 %v763
    %v1341 = vunpack.c.l.b16 %v764
    %v1342 = vunpack.c.l.b16 %v765
    %v1343 = vunpack.c.l.b16 %v766
    %v1344 = vunpack.c.l.b16 %v767
    %v1345 = vunpack.c.l.b16 %v768
    %v1346 = vunpack.c.l.b16 %v769
    %v1347 = vunpack.c.l.b16 %v770
    %v1348 = vunpack.c.l.b16 %v771
    %v1349 = vunpack.c.l.b16 %v772
    %v1350 = vunpack.c.l.b16 %v773
    %v1351 = vunpack.c.l.b16 %v774
    %v1352 = vunpack.c.l.b16 %v775
    %v1353 = vunpack.c.l.b16 %v776
    %v1354 = vunpack.c.l.b16 %v777
    %v1355 = vunpack.c.l.b16 %v778
    %v1356 = vunpack.c.l.b16 %v779
    %v1357 = vunpack.c.l.b16 %v780
    %v1358 = vpack.c.b16 %v1263, %v1262
    %v1359 = vpack.c.b16 %v1264, %v1264
    %v1360 = vpack.c.b16 %v1266, %v1265
    %v1361 = vpack.c.b16 %v1267, %v1267
    %v1362 = vpack.c.b16 %v1269, %v1268
    %v1363 = vpack.c.b16 %v1270, %v1270
    %v1364 = vpack.c.b16 %v1272, %v1271
    %v1365 = vpack.c.b16 %v1273, %v1273
    %v1366 = vpack.c.b16 %v1275, %v1274
    %v1367 = vpack.c.b16 %v1276, %v1276
    %v1368 = vpack.c.b16 %v1278, %v1277
    %v1369 = vpack.c.b16 %v1279, %v1279
    %v1370 = vpack.c.b16 %v1281, %v1280
    %v1371 = vpack.c.b16 %v1282, %v1282
    %v1372 = vpack.c.b16 %v1284, %v1283
    %v1373 = vpack.c.b16 %v1285, %v1285
    %v1374 = vpack.c.b16 %v1287, %v1286
    %v1375 = vpack.c.b16 %v1288, %v1288
    %v1376 = vpack.c.b16 %v1290, %v1289
    %v1377 = vpack.c.b16 %v1291, %v1291
    %v1378 = vpack.c.b16 %v1293, %v1292
    %v1379 = vpack.c.b16 %v1294, %v1294
    %v1380 = vpack.c.b16 %v1296, %v1295
    %v1381 = vpack.c.b16 %v1297, %v1297
    %v1382 = vpack.c.b16 %v1299, %v1298
    %v1383 = vpack.c.b16 %v1300, %v1300
    %v1384 = vpack.c.b16 %v1302, %v1301
    %v1385 = vpack.c.b16 %v1303, %v1303
    %v1386 = vpack.c.b16 %v1305, %v1304
    %v1387 = vpack.c.b16 %v1306, %v1306
    %v1388 = vpack.c.b16 %v1308, %v1307
    %v1389 = vpack.c.b16 %v1309, %v1309
    %v1390 = vpack.c.b16 %v1311, %v1310
    %v1391 = vpack.c.b16 %v1312, %v1312
    %v1392 = vpack.c.b16 %v1314, %v1313
    %v1393 = vpack.c.b16 %v1315, %v1315
    %v1394 = vpack.c.b16 %v1317, %v1316
    %v1395 = vpack.c.b16 %v1318, %v1318
    %v1396 = vpack.c.b16 %v1320, %v1319
    %v1397 = vpack.c.b16 %v1321, %v1321
    %v1398 = vpack.c.b16 %v1323, %v1322
    %v1399 = vpack.c.b16 %v1324, %v1324
    %v1400 = vpack.c.b16 %v1326, %v1325
    %v1401 = vpack.c.b16 %v1327, %v1327
    %v1402 = vpack.c.b16 %v1329, %v1328
    %v1403 = vpack.c.b16 %v1330, %v1330
    %v1404 = vpack.c.b16 %v1332, %v1331
    %v1405 = vpack.c.b16 %v1333, %v1333
    %v1406 = vpack.c.b16 %v1335, %v1334
    %v1407 = vpack.c.b16 %v1336, %v1336
    %v1408 = vpack.c.b16 %v1338, %v1337
    %v1409 = vpack.c.b16 %v1339, %v1339
    %v1410 = vpack.c.b16 %v1341, %v1340
    %v1411 = vpack.c.b16 %v1342, %v1342
    %v1412 = vpack.c.b16 %v1344, %v1343
    %v1413 = vpack.c.b16 %v1345, %v1345
    %v1414 = vpack.c.b16 %v1347, %v1346
    %v1415 = vpack.c.b16 %v1348, %v1348
    %v1416 = vpack.c.b16 %v1350, %v1349
    %v1417 = vpack.c.b16 %v1351, %v1351
    %v1418 = vpack.c.b16 %v1353, %v1352
    %v1419 = vpack.c.b16 %v1354, %v1354
    %v1420 = vpack.c.b16 %v1356, %v1355
    %v1421 = vpack.c.b16 %v1357, %v1357
    %v1454 = vunpack.c.l.b16 %v781
    %v1455 = vunpack.c.l.b16 %v782
    %v1456 = vunpack.c.l.b16 %v783
    %v1457 = vunpack.c.l.b16 %v784
    %v1458 = vunpack.c.l.b16 %v785
    %v1459 = vunpack.c.l.b16 %v786
    %v1460 = vunpack.c.l.b16 %v787
    %v1461 = vunpack.c.l.b16 %v788
    %v1462 = vunpack.c.l.b16 %v789
    %v1463 = vunpack.c.l.b16 %v790
    %v1464 = vunpack.c.l.b16 %v791
    %v1465 = vunpack.c.l.b16 %v792
    %v1466 = vunpack.c.l.b16 %v793
    %v1467 = vunpack.c.l.b16 %v794
    %v1468 = vunpack.c.l.b16 %v795
    %v1469 = vunpack.c.l.b16 %v796
    %v1470 = vunpack.c.l.b16 %v797
    %v1471 = vunpack.c.l.b16 %v798
    %v1472 = vunpack.c.l.b16 %v799
    %v1473 = vunpack.c.l.b16 %v800
    %v1474 = vunpack.c.l.b16 %v801
    %v1475 = vunpack.c.l.b16 %v802
    %v1476 = vunpack.c.l.b16 %v803
    %v1477 = vunpack.c.l.b16 %v804
    %v1478 = vunpack.c.l.b16 %v805
    %v1479 = vunpack.c.l.b16 %v806
    %v1480 = vunpack.c.l.b16 %v807
    %v1481 = vunpack.c.l.b16 %v808
    %v1482 = vunpack.c.l.b16 %v809
    %v1483 = vunpack.c.l.b16 %v810
    %v1484 = vunpack.c.l.b16 %v811
    %v1485 = vunpack.c.l.b16 %v812
    %v1486 = vpack.c.b16 %v1263, %v1454
    %v1487 = vpack.c.b16 %v1266, %v1455
    %v1488 = vpack.c.b16 %v1269, %v1456
    %v1489 = vpack.c.b16 %v1272, %v1457
    %v1490 = vpack.c.b16 %v1275, %v1458
    %v1491 = vpack.c.b16 %v1278, %v1459
    %v1492 = vpack.c.b16 %v1281, %v1460
    %v1493 = vpack.c.b16 %v1284, %v1461
    %v1494 = vpack.c.b16 %v1287, %v1462
    %v1495 = vpack.c.b16 %v1290, %v1463
    %v1496 = vpack.c.b16 %v1293, %v1464
    %v1497 = vpack.c.b16 %v1296, %v1465
    %v1498 = vpack.c.b16 %v1299, %v1466
    %v1499 = vpack.c.b16 %v1302, %v1467
    %v1500 = vpack.c.b16 %v1305, %v1468
    %v1501 = vpack.c.b16 %v1308, %v1469
    %v1502 = vpack.c.b16 %v1311, %v1470
    %v1503 = vpack.c.b16 %v1314, %v1471
    %v1504 = vpack.c.b16 %v1317, %v1472
    %v1505 = vpack.c.b16 %v1320, %v1473
    %v1506 = vpack.c.b16 %v1323, %v1474
    %v1507 = vpack.c.b16 %v1326, %v1475
    %v1508 = vpack.c.b16 %v1329, %v1476
    %v1509 = vpack.c.b16 %v1332, %v1477
    %v1510 = vpack.c.b16 %v1335, %v1478
    %v1511 = vpack.c.b16 %v1338, %v1479
    %v1512 = vpack.c.b16 %v1341, %v1480
    %v1513 = vpack.c.b16 %v1344, %v1481
    %v1514 = vpack.c.b16 %v1347, %v1482
    %v1515 = vpack.c.b16 %v1350, %v1483
    %v1516 = vpack.c.b16 %v1353, %v1484
    %v1517 = vpack.c.b16 %v1356, %v1485
    %vm1518 = vsmask.f32 7424
    %v1520 = vshrl.u32 %v1486, 16
    %v1522 = vshll.u32 %v1486, 16
    %v1524 = vrot.slane %v1522, 1
    %v1525 = vor.u32 %v1520, %v1524
    %v1527 = vshll.u32 %v1359, 16
    %v1529 = vrot.slane %v1527, 1
    %v1530 = vsel %vm1518, %v1525, %v1529
    %v1531 = vshrl.u32 %v1359, 16
    %v1534 = vshrl.u32 %v1487, 16
    %v1536 = vshll.u32 %v1487, 16
    %v1538 = vrot.slane %v1536, 1
    %v1539 = vor.u32 %v1534, %v1538
    %v1541 = vshll.u32 %v1361, 16
    %v1543 = vrot.slane %v1541, 1
    %v1544 = vsel %vm1518, %v1539, %v1543
    %v1545 = vshrl.u32 %v1361, 16
    %v1548 = vshrl.u32 %v1488, 16
    %v1550 = vshll.u32 %v1488, 16
    %v1552 = vrot.slane %v1550, 1
    %v1553 = vor.u32 %v1548, %v1552
    %v1555 = vshll.u32 %v1363, 16
    %v1557 = vrot.slane %v1555, 1
    %v1558 = vsel %vm1518, %v1553, %v1557
    %v1559 = vshrl.u32 %v1363, 16
    %v1562 = vshrl.u32 %v1489, 16
    %v1564 = vshll.u32 %v1489, 16
    %v1566 = vrot.slane %v1564, 1
    %v1567 = vor.u32 %v1562, %v1566
    %v1569 = vshll.u32 %v1365, 16
    %v1571 = vrot.slane %v1569, 1
    %v1572 = vsel %vm1518, %v1567, %v1571
    %v1573 = vshrl.u32 %v1365, 16
    %v1576 = vshrl.u32 %v1490, 16
    %v1578 = vshll.u32 %v1490, 16
    %v1580 = vrot.slane %v1578, 1
    %v1581 = vor.u32 %v1576, %v1580
    %v1583 = vshll.u32 %v1367, 16
    %v1585 = vrot.slane %v1583, 1
    %v1586 = vsel %vm1518, %v1581, %v1585
    %v1587 = vshrl.u32 %v1367, 16
    %v1590 = vshrl.u32 %v1491, 16
    %v1592 = vshll.u32 %v1491, 16
    %v1594 = vrot.slane %v1592, 1
    %v1595 = vor.u32 %v1590, %v1594
    %v1597 = vshll.u32 %v1369, 16
    %v1599 = vrot.slane %v1597, 1
    %v1600 = vsel %vm1518, %v1595, %v1599
    %v1601 = vshrl.u32 %v1369, 16
    %v1604 = vshrl.u32 %v1492, 16
    %v1606 = vshll.u32 %v1492, 16
    %v1608 = vrot.slane %v1606, 1
    %v1609 = vor.u32 %v1604, %v1608
    %v1611 = vshll.u32 %v1371, 16
    %v1613 = vrot.slane %v1611, 1
    %v1614 = vsel %vm1518, %v1609, %v1613
    %v1615 = vshrl.u32 %v1371, 16
    %v1618 = vshrl.u32 %v1493, 16
    %v1620 = vshll.u32 %v1493, 16
    %v1622 = vrot.slane %v1620, 1
    %v1623 = vor.u32 %v1618, %v1622
    %v1625 = vshll.u32 %v1373, 16
    %v1627 = vrot.slane %v1625, 1
    %v1628 = vsel %vm1518, %v1623, %v1627
    %v1629 = vshrl.u32 %v1373, 16
    %v1632 = vshrl.u32 %v1494, 16
    %v1634 = vshll.u32 %v1494, 16
    %v1636 = vrot.slane %v1634, 1
    %v1637 = vor.u32 %v1632, %v1636
    %v1639 = vshll.u32 %v1375, 16
    %v1641 = vrot.slane %v1639, 1
    %v1642 = vsel %vm1518, %v1637, %v1641
    %v1643 = vshrl.u32 %v1375, 16
    %v1646 = vshrl.u32 %v1495, 16
    %v1648 = vshll.u32 %v1495, 16
    %v1650 = vrot.slane %v1648, 1
    %v1651 = vor.u32 %v1646, %v1650
    %v1653 = vshll.u32 %v1377, 16
    %v1655 = vrot.slane %v1653, 1
    %v1656 = vsel %vm1518, %v1651, %v1655
    %v1657 = vshrl.u32 %v1377, 16
    %v1660 = vshrl.u32 %v1496, 16
    %v1662 = vshll.u32 %v1496, 16
    %v1664 = vrot.slane %v1662, 1
    %v1665 = vor.u32 %v1660, %v1664
    %v1667 = vshll.u32 %v1379, 16
    %v1669 = vrot.slane %v1667, 1
    %v1670 = vsel %vm1518, %v1665, %v1669
    %v1671 = vshrl.u32 %v1379, 16
    %v1674 = vshrl.u32 %v1497, 16
    %v1676 = vshll.u32 %v1497, 16
    %v1678 = vrot.slane %v1676, 1
    %v1679 = vor.u32 %v1674, %v1678
    %v1681 = vshll.u32 %v1381, 16
    %v1683 = vrot.slane %v1681, 1
    %v1684 = vsel %vm1518, %v1679, %v1683
    %v1685 = vshrl.u32 %v1381, 16
    %v1688 = vshrl.u32 %v1498, 16
    %v1690 = vshll.u32 %v1498, 16
    %v1692 = vrot.slane %v1690, 1
    %v1693 = vor.u32 %v1688, %v1692
    %v1695 = vshll.u32 %v1383, 16
    %v1697 = vrot.slane %v1695, 1
    %v1698 = vsel %vm1518, %v1693, %v1697
    %v1699 = vshrl.u32 %v1383, 16
    %v1702 = vshrl.u32 %v1499, 16
    %v1704 = vshll.u32 %v1499, 16
    %v1706 = vrot.slane %v1704, 1
    %v1707 = vor.u32 %v1702, %v1706
    %v1709 = vshll.u32 %v1385, 16
    %v1711 = vrot.slane %v1709, 1
    %v1712 = vsel %vm1518, %v1707, %v1711
    %v1713 = vshrl.u32 %v1385, 16
    %v1716 = vshrl.u32 %v1500, 16
    %v1718 = vshll.u32 %v1500, 16
    %v1720 = vrot.slane %v1718, 1
    %v1721 = vor.u32 %v1716, %v1720
    %v1723 = vshll.u32 %v1387, 16
    %v1725 = vrot.slane %v1723, 1
    %v1726 = vsel %vm1518, %v1721, %v1725
    %v1727 = vshrl.u32 %v1387, 16
    %v1730 = vshrl.u32 %v1501, 16
    %v1732 = vshll.u32 %v1501, 16
    %v1734 = vrot.slane %v1732, 1
    %v1735 = vor.u32 %v1730, %v1734
    %v1737 = vshll.u32 %v1389, 16
    %v1739 = vrot.slane %v1737, 1
    %v1740 = vsel %vm1518, %v1735, %v1739
    %v1741 = vshrl.u32 %v1389, 16
    %v1744 = vshrl.u32 %v1502, 16
    %v1746 = vshll.u32 %v1502, 16
    %v1748 = vrot.slane %v1746, 1
    %v1749 = vor.u32 %v1744, %v1748
    %v1751 = vshll.u32 %v1391, 16
    %v1753 = vrot.slane %v1751, 1
    %v1754 = vsel %vm1518, %v1749, %v1753
    %v1755 = vshrl.u32 %v1391, 16
    %v1758 = vshrl.u32 %v1503, 16
    %v1760 = vshll.u32 %v1503, 16
    %v1762 = vrot.slane %v1760, 1
    %v1763 = vor.u32 %v1758, %v1762
    %v1765 = vshll.u32 %v1393, 16
    %v1767 = vrot.slane %v1765, 1
    %v1768 = vsel %vm1518, %v1763, %v1767
    %v1769 = vshrl.u32 %v1393, 16
    %v1772 = vshrl.u32 %v1504, 16
    %v1774 = vshll.u32 %v1504, 16
    %v1776 = vrot.slane %v1774, 1
    %v1777 = vor.u32 %v1772, %v1776
    %v1779 = vshll.u32 %v1395, 16
    %v1781 = vrot.slane %v1779, 1
    %v1782 = vsel %vm1518, %v1777, %v1781
    %v1783 = vshrl.u32 %v1395, 16
    %v1786 = vshrl.u32 %v1505, 16
    %v1788 = vshll.u32 %v1505, 16
    %v1790 = vrot.slane %v1788, 1
    %v1791 = vor.u32 %v1786, %v1790
    %v1793 = vshll.u32 %v1397, 16
    %v1795 = vrot.slane %v1793, 1
    %v1796 = vsel %vm1518, %v1791, %v1795
    %v1797 = vshrl.u32 %v1397, 16
    %v1800 = vshrl.u32 %v1506, 16
    %v1802 = vshll.u32 %v1506, 16
    %v1804 = vrot.slane %v1802, 1
    %v1805 = vor.u32 %v1800, %v1804
    %v1807 = vshll.u32 %v1399, 16
    %v1809 = vrot.slane %v1807, 1
    %v1810 = vsel %vm1518, %v1805, %v1809
    %v1811 = vshrl.u32 %v1399, 16
    %v1814 = vshrl.u32 %v1507, 16
    %v1816 = vshll.u32 %v1507, 16
    %v1818 = vrot.slane %v1816, 1
    %v1819 = vor.u32 %v1814, %v1818
    %v1821 = vshll.u32 %v1401, 16
    %v1823 = vrot.slane %v1821, 1
    %v1824 = vsel %vm1518, %v1819, %v1823
    %v1825 = vshrl.u32 %v1401, 16
    %v1828 = vshrl.u32 %v1508, 16
    %v1830 = vshll.u32 %v1508, 16
    %v1832 = vrot.slane %v1830, 1
    %v1833 = vor.u32 %v1828, %v1832
    %v1835 = vshll.u32 %v1403, 16
    %v1837 = vrot.slane %v1835, 1
    %v1838 = vsel %vm1518, %v1833, %v1837
    %v1839 = vshrl.u32 %v1403, 16
    %v1842 = vshrl.u32 %v1509, 16
    %v1844 = vshll.u32 %v1509, 16
    %v1846 = vrot.slane %v1844, 1
    %v1847 = vor.u32 %v1842, %v1846
    %v1849 = vshll.u32 %v1405, 16
    %v1851 = vrot.slane %v1849, 1
    %v1852 = vsel %vm1518, %v1847, %v1851
    %v1853 = vshrl.u32 %v1405, 16
    %v1856 = vshrl.u32 %v1510, 16
    %v1858 = vshll.u32 %v1510, 16
    %v1860 = vrot.slane %v1858, 1
    %v1861 = vor.u32 %v1856, %v1860
    %v1863 = vshll.u32 %v1407, 16
    %v1865 = vrot.slane %v1863, 1
    %v1866 = vsel %vm1518, %v1861, %v1865
    %v1867 = vshrl.u32 %v1407, 16
    %v1870 = vshrl.u32 %v1511, 16
    %v1872 = vshll.u32 %v1511, 16
    %v1874 = vrot.slane %v1872, 1
    %v1875 = vor.u32 %v1870, %v1874
    %v1877 = vshll.u32 %v1409, 16
    %v1879 = vrot.slane %v1877, 1
    %v1880 = vsel %vm1518, %v1875, %v1879
    %v1881 = vshrl.u32 %v1409, 16
    %v1884 = vshrl.u32 %v1512, 16
    %v1886 = vshll.u32 %v1512, 16
    %v1888 = vrot.slane %v1886, 1
    %v1889 = vor.u32 %v1884, %v1888
    %v1891 = vshll.u32 %v1411, 16
    %v1893 = vrot.slane %v1891, 1
    %v1894 = vsel %vm1518, %v1889, %v1893
    %v1895 = vshrl.u32 %v1411, 16
    %v1898 = vshrl.u32 %v1513, 16
    %v1900 = vshll.u32 %v1513, 16
    %v1902 = vrot.slane %v1900, 1
    %v1903 = vor.u32 %v1898, %v1902
    %v1905 = vshll.u32 %v1413, 16
    %v1907 = vrot.slane %v1905, 1
    %v1908 = vsel %vm1518, %v1903, %v1907
    %v1909 = vshrl.u32 %v1413, 16
    %v1912 = vshrl.u32 %v1514, 16
    %v1914 = vshll.u32 %v1514, 16
    %v1916 = vrot.slane %v1914, 1
    %v1917 = vor.u32 %v1912, %v1916
    %v1919 = vshll.u32 %v1415, 16
    %v1921 = vrot.slane %v1919, 1
    %v1922 = vsel %vm1518, %v1917, %v1921
    %v1923 = vshrl.u32 %v1415, 16
    %v1926 = vshrl.u32 %v1515, 16
    %v1928 = vshll.u32 %v1515, 16
    %v1930 = vrot.slane %v1928, 1
    %v1931 = vor.u32 %v1926, %v1930
    %v1933 = vshll.u32 %v1417, 16
    %v1935 = vrot.slane %v1933, 1
    %v1936 = vsel %vm1518, %v1931, %v1935
    %v1937 = vshrl.u32 %v1417, 16
    %v1940 = vshrl.u32 %v1516, 16
    %v1942 = vshll.u32 %v1516, 16
    %v1944 = vrot.slane %v1942, 1
    %v1945 = vor.u32 %v1940, %v1944
    %v1947 = vshll.u32 %v1419, 16
    %v1949 = vrot.slane %v1947, 1
    %v1950 = vsel %vm1518, %v1945, %v1949
    %v1951 = vshrl.u32 %v1419, 16
    %v1954 = vshrl.u32 %v1517, 16
    %v1956 = vshll.u32 %v1517, 16
    %v1958 = vrot.slane %v1956, 1
    %v1959 = vor.u32 %v1954, %v1958
    %v1961 = vshll.u32 %v1421, 16
    %v1963 = vrot.slane %v1961, 1
    %v1964 = vsel %vm1518, %v1959, %v1963
    %v1965 = vshrl.u32 %v1421, 16
    %1967 = vrot.lane.b32.xlu0 %v1530, 3
    %v1968 = vpop.permute.xlu0 %1967
    %1969 = vrot.lane.b32.xlu0 %v1531, 3
    %v1970 = vpop.permute.xlu0 %1969
    %1971 = vrot.lane.b32.xlu0 %v1544, 3
    %v1972 = vpop.permute.xlu0 %1971
    %1973 = vrot.lane.b32.xlu0 %v1545, 3
    %v1974 = vpop.permute.xlu0 %1973
    %1975 = vrot.lane.b32.xlu0 %v1558, 3
    %v1976 = vpop.permute.xlu0 %1975
    %1977 = vrot.lane.b32.xlu0 %v1559, 3
    %v1978 = vpop.permute.xlu0 %1977
    %1979 = vrot.lane.b32.xlu0 %v1572, 3
    %v1980 = vpop.permute.xlu0 %1979
    %1981 = vrot.lane.b32.xlu0 %v1573, 3
    %v1982 = vpop.permute.xlu0 %1981
    %1983 = vrot.lane.b32.xlu0 %v1586, 3
    %v1984 = vpop.permute.xlu0 %1983
    %1985 = vrot.lane.b32.xlu0 %v1587, 3
    %v1986 = vpop.permute.xlu0 %1985
    %1987 = vrot.lane.b32.xlu0 %v1600, 3
    %v1988 = vpop.permute.xlu0 %1987
    %1989 = vrot.lane.b32.xlu0 %v1601, 3
    %v1990 = vpop.permute.xlu0 %1989
    %1991 = vrot.lane.b32.xlu0 %v1614, 3
    %v1992 = vpop.permute.xlu0 %1991
    %1993 = vrot.lane.b32.xlu0 %v1615, 3
    %v1994 = vpop.permute.xlu0 %1993
    %1995 = vrot.lane.b32.xlu0 %v1628, 3
    %v1996 = vpop.permute.xlu0 %1995
    %1997 = vrot.lane.b32.xlu0 %v1629, 3
    %v1998 = vpop.permute.xlu0 %1997
    %1999 = vrot.lane.b32.xlu0 %v1642, 3
    %v2000 = vpop.permute.xlu0 %1999
    %2001 = vrot.lane.b32.xlu0 %v1643, 3
    %v2002 = vpop.permute.xlu0 %2001
    %2003 = vrot.lane.b32.xlu0 %v1656, 3
    %v2004 = vpop.permute.xlu0 %2003
    %2005 = vrot.lane.b32.xlu0 %v1657, 3
    %v2006 = vpop.permute.xlu0 %2005
    %2007 = vrot.lane.b32.xlu0 %v1670, 3
    %v2008 = vpop.permute.xlu0 %2007
    %2009 = vrot.lane.b32.xlu0 %v1671, 3
    %v2010 = vpop.permute.xlu0 %2009
    %2011 = vrot.lane.b32.xlu0 %v1684, 3
    %v2012 = vpop.permute.xlu0 %2011
    %2013 = vrot.lane.b32.xlu0 %v1685, 3
    %v2014 = vpop.permute.xlu0 %2013
    %2015 = vrot.lane.b32.xlu0 %v1698, 3
    %v2016 = vpop.permute.xlu0 %2015
    %2017 = vrot.lane.b32.xlu0 %v1699, 3
    %v2018 = vpop.permute.xlu0 %2017
    %2019 = vrot.lane.b32.xlu0 %v1712, 3
    %v2020 = vpop.permute.xlu0 %2019
    %2021 = vrot.lane.b32.xlu0 %v1713, 3
    %v2022 = vpop.permute.xlu0 %2021
    %2023 = vrot.lane.b32.xlu0 %v1726, 3
    %v2024 = vpop.permute.xlu0 %2023
    %2025 = vrot.lane.b32.xlu0 %v1727, 3
    %v2026 = vpop.permute.xlu0 %2025
    %2027 = vrot.lane.b32.xlu0 %v1740, 3
    %v2028 = vpop.permute.xlu0 %2027
    %2029 = vrot.lane.b32.xlu0 %v1741, 3
    %v2030 = vpop.permute.xlu0 %2029
    %2031 = vrot.lane.b32.xlu0 %v1754, 3
    %v2032 = vpop.permute.xlu0 %2031
    %2033 = vrot.lane.b32.xlu0 %v1755, 3
    %v2034 = vpop.permute.xlu0 %2033
    %2035 = vrot.lane.b32.xlu0 %v1768, 3
    %v2036 = vpop.permute.xlu0 %2035
    %2037 = vrot.lane.b32.xlu0 %v1769, 3
    %v2038 = vpop.permute.xlu0 %2037
    %2039 = vrot.lane.b32.xlu0 %v1782, 3
    %v2040 = vpop.permute.xlu0 %2039
    %2041 = vrot.lane.b32.xlu0 %v1783, 3
    %v2042 = vpop.permute.xlu0 %2041
    %2043 = vrot.lane.b32.xlu0 %v1796, 3
    %v2044 = vpop.permute.xlu0 %2043
    %2045 = vrot.lane.b32.xlu0 %v1797, 3
    %v2046 = vpop.permute.xlu0 %2045
    %2047 = vrot.lane.b32.xlu0 %v1810, 3
    %v2048 = vpop.permute.xlu0 %2047
    %2049 = vrot.lane.b32.xlu0 %v1811, 3
    %v2050 = vpop.permute.xlu0 %2049
    %2051 = vrot.lane.b32.xlu0 %v1824, 3
    %v2052 = vpop.permute.xlu0 %2051
    %2053 = vrot.lane.b32.xlu0 %v1825, 3
    %v2054 = vpop.permute.xlu0 %2053
    %2055 = vrot.lane.b32.xlu0 %v1838, 3
    %v2056 = vpop.permute.xlu0 %2055
    %2057 = vrot.lane.b32.xlu0 %v1839, 3
    %v2058 = vpop.permute.xlu0 %2057
    %2059 = vrot.lane.b32.xlu0 %v1852, 3
    %v2060 = vpop.permute.xlu0 %2059
    %2061 = vrot.lane.b32.xlu0 %v1853, 3
    %v2062 = vpop.permute.xlu0 %2061
    %2063 = vrot.lane.b32.xlu0 %v1866, 3
    %v2064 = vpop.permute.xlu0 %2063
    %2065 = vrot.lane.b32.xlu0 %v1867, 3
    %v2066 = vpop.permute.xlu0 %2065
    %2067 = vrot.lane.b32.xlu0 %v1880, 3
    %v2068 = vpop.permute.xlu0 %2067
    %2069 = vrot.lane.b32.xlu0 %v1881, 3
    %v2070 = vpop.permute.xlu0 %2069
    %2071 = vrot.lane.b32.xlu0 %v1894, 3
    %v2072 = vpop.permute.xlu0 %2071
    %2073 = vrot.lane.b32.xlu0 %v1895, 3
    %v2074 = vpop.permute.xlu0 %2073
    %2075 = vrot.lane.b32.xlu0 %v1908, 3
    %v2076 = vpop.permute.xlu0 %2075
    %2077 = vrot.lane.b32.xlu0 %v1909, 3
    %v2078 = vpop.permute.xlu0 %2077
    %2079 = vrot.lane.b32.xlu0 %v1922, 3
    %v2080 = vpop.permute.xlu0 %2079
    %2081 = vrot.lane.b32.xlu0 %v1923, 3
    %v2082 = vpop.permute.xlu0 %2081
    %2083 = vrot.lane.b32.xlu0 %v1936, 3
    %v2084 = vpop.permute.xlu0 %2083
    %2085 = vrot.lane.b32.xlu0 %v1937, 3
    %v2086 = vpop.permute.xlu0 %2085
    %2087 = vrot.lane.b32.xlu0 %v1950, 3
    %v2088 = vpop.permute.xlu0 %2087
    %2089 = vrot.lane.b32.xlu0 %v1951, 3
    %v2090 = vpop.permute.xlu0 %2089
    %2091 = vrot.lane.b32.xlu0 %v1964, 3
    %v2092 = vpop.permute.xlu0 %2091
    %2093 = vrot.lane.b32.xlu0 %v1965, 3
    %v2094 = vpop.permute.xlu0 %2093
    %v2127 = vunpack.c.l.b16 %v813
    %v2128 = vunpack.c.l.b16 %v814
    %v2129 = vunpack.c.l.b16 %v815
    %v2130 = vunpack.c.l.b16 %v816
    %v2131 = vunpack.c.l.b16 %v817
    %v2132 = vunpack.c.l.b16 %v818
    %v2133 = vunpack.c.l.b16 %v819
    %v2134 = vunpack.c.l.b16 %v820
    %v2135 = vunpack.c.l.b16 %v821
    %v2136 = vunpack.c.l.b16 %v822
    %v2137 = vunpack.c.l.b16 %v823
    %v2138 = vunpack.c.l.b16 %v824
    %v2139 = vunpack.c.l.b16 %v825
    %v2140 = vunpack.c.l.b16 %v826
    %v2141 = vunpack.c.l.b16 %v827
    %v2142 = vunpack.c.l.b16 %v828
    %v2143 = vunpack.c.l.b16 %v829
    %v2144 = vunpack.c.l.b16 %v830
    %v2145 = vunpack.c.l.b16 %v831
    %v2146 = vunpack.c.l.b16 %v832
    %v2147 = vunpack.c.l.b16 %v833
    %v2148 = vunpack.c.l.b16 %v834
    %v2149 = vunpack.c.l.b16 %v835
    %v2150 = vunpack.c.l.b16 %v836
    %v2151 = vunpack.c.l.b16 %v837
    %v2152 = vunpack.c.l.b16 %v838
    %v2153 = vunpack.c.l.b16 %v839
    %v2154 = vunpack.c.l.b16 %v840
    %v2155 = vunpack.c.l.b16 %v841
    %v2156 = vunpack.c.l.b16 %v842
    %v2157 = vunpack.c.l.b16 %v843
    %v2158 = vunpack.c.l.b16 %v844
    %v2159 = vpack.c.b16 %v2127, %v2127
    %v2160 = vpack.c.b16 %v2128, %v2128
    %v2161 = vpack.c.b16 %v2129, %v2129
    %v2162 = vpack.c.b16 %v2130, %v2130
    %v2163 = vpack.c.b16 %v2131, %v2131
    %v2164 = vpack.c.b16 %v2132, %v2132
    %v2165 = vpack.c.b16 %v2133, %v2133
    %v2166 = vpack.c.b16 %v2134, %v2134
    %v2167 = vpack.c.b16 %v2135, %v2135
    %v2168 = vpack.c.b16 %v2136, %v2136
    %v2169 = vpack.c.b16 %v2137, %v2137
    %v2170 = vpack.c.b16 %v2138, %v2138
    %v2171 = vpack.c.b16 %v2139, %v2139
    %v2172 = vpack.c.b16 %v2140, %v2140
    %v2173 = vpack.c.b16 %v2141, %v2141
    %v2174 = vpack.c.b16 %v2142, %v2142
    %v2175 = vpack.c.b16 %v2143, %v2143
    %v2176 = vpack.c.b16 %v2144, %v2144
    %v2177 = vpack.c.b16 %v2145, %v2145
    %v2178 = vpack.c.b16 %v2146, %v2146
    %v2179 = vpack.c.b16 %v2147, %v2147
    %v2180 = vpack.c.b16 %v2148, %v2148
    %v2181 = vpack.c.b16 %v2149, %v2149
    %v2182 = vpack.c.b16 %v2150, %v2150
    %v2183 = vpack.c.b16 %v2151, %v2151
    %v2184 = vpack.c.b16 %v2152, %v2152
    %v2185 = vpack.c.b16 %v2153, %v2153
    %v2186 = vpack.c.b16 %v2154, %v2154
    %v2187 = vpack.c.b16 %v2155, %v2155
    %v2188 = vpack.c.b16 %v2156, %v2156
    %v2189 = vpack.c.b16 %v2157, %v2157
    %v2190 = vpack.c.b16 %v2158, %v2158
    %vm2191 = vcmask 1046528
    %v2192 = vrot.slane %v1486, 1
    %v2193 = vrot.slane %v2159, 1
    %v2194 = vsel %vm2191, %v2192, %v2193
    %v2195 = vrot.slane %v1487, 1
    %v2196 = vrot.slane %v2160, 1
    %v2197 = vsel %vm2191, %v2195, %v2196
    %v2198 = vrot.slane %v1488, 1
    %v2199 = vrot.slane %v2161, 1
    %v2200 = vsel %vm2191, %v2198, %v2199
    %v2201 = vrot.slane %v1489, 1
    %v2202 = vrot.slane %v2162, 1
    %v2203 = vsel %vm2191, %v2201, %v2202
    %v2204 = vrot.slane %v1490, 1
    %v2205 = vrot.slane %v2163, 1
    %v2206 = vsel %vm2191, %v2204, %v2205
    %v2207 = vrot.slane %v1491, 1
    %v2208 = vrot.slane %v2164, 1
    %v2209 = vsel %vm2191, %v2207, %v2208
    %v2210 = vrot.slane %v1492, 1
    %v2211 = vrot.slane %v2165, 1
    %v2212 = vsel %vm2191, %v2210, %v2211
    %v2213 = vrot.slane %v1493, 1
    %v2214 = vrot.slane %v2166, 1
    %v2215 = vsel %vm2191, %v2213, %v2214
    %v2216 = vrot.slane %v1494, 1
    %v2217 = vrot.slane %v2167, 1
    %v2218 = vsel %vm2191, %v2216, %v2217
    %v2219 = vrot.slane %v1495, 1
    %v2220 = vrot.slane %v2168, 1
    %v2221 = vsel %vm2191, %v2219, %v2220
    %v2222 = vrot.slane %v1496, 1
    %v2223 = vrot.slane %v2169, 1
    %v2224 = vsel %vm2191, %v2222, %v2223
    %v2225 = vrot.slane %v1497, 1
    %v2226 = vrot.slane %v2170, 1
    %v2227 = vsel %vm2191, %v2225, %v2226
    %v2228 = vrot.slane %v1498, 1
    %v2229 = vrot.slane %v2171, 1
    %v2230 = vsel %vm2191, %v2228, %v2229
    %v2231 = vrot.slane %v1499, 1
    %v2232 = vrot.slane %v2172, 1
    %v2233 = vsel %vm2191, %v2231, %v2232
    %v2234 = vrot.slane %v1500, 1
    %v2235 = vrot.slane %v2173, 1
    %v2236 = vsel %vm2191, %v2234, %v2235
    %v2237 = vrot.slane %v1501, 1
    %v2238 = vrot.slane %v2174, 1
    %v2239 = vsel %vm2191, %v2237, %v2238
    %v2240 = vrot.slane %v1502, 1
    %v2241 = vrot.slane %v2175, 1
    %v2242 = vsel %vm2191, %v2240, %v2241
    %v2243 = vrot.slane %v1503, 1
    %v2244 = vrot.slane %v2176, 1
    %v2245 = vsel %vm2191, %v2243, %v2244
    %v2246 = vrot.slane %v1504, 1
    %v2247 = vrot.slane %v2177, 1
    %v2248 = vsel %vm2191, %v2246, %v2247
    %v2249 = vrot.slane %v1505, 1
    %v2250 = vrot.slane %v2178, 1
    %v2251 = vsel %vm2191, %v2249, %v2250
    %v2252 = vrot.slane %v1506, 1
    %v2253 = vrot.slane %v2179, 1
    %v2254 = vsel %vm2191, %v2252, %v2253
    %v2255 = vrot.slane %v1507, 1
    %v2256 = vrot.slane %v2180, 1
    %v2257 = vsel %vm2191, %v2255, %v2256
    %v2258 = vrot.slane %v1508, 1
    %v2259 = vrot.slane %v2181, 1
    %v2260 = vsel %vm2191, %v2258, %v2259
    %v2261 = vrot.slane %v1509, 1
    %v2262 = vrot.slane %v2182, 1
    %v2263 = vsel %vm2191, %v2261, %v2262
    %v2264 = vrot.slane %v1510, 1
    %v2265 = vrot.slane %v2183, 1
    %v2266 = vsel %vm2191, %v2264, %v2265
    %v2267 = vrot.slane %v1511, 1
    %v2268 = vrot.slane %v2184, 1
    %v2269 = vsel %vm2191, %v2267, %v2268
    %v2270 = vrot.slane %v1512, 1
    %v2271 = vrot.slane %v2185, 1
    %v2272 = vsel %vm2191, %v2270, %v2271
    %v2273 = vrot.slane %v1513, 1
    %v2274 = vrot.slane %v2186, 1
    %v2275 = vsel %vm2191, %v2273, %v2274
    %v2276 = vrot.slane %v1514, 1
    %v2277 = vrot.slane %v2187, 1
    %v2278 = vsel %vm2191, %v2276, %v2277
    %v2279 = vrot.slane %v1515, 1
    %v2280 = vrot.slane %v2188, 1
    %v2281 = vsel %vm2191, %v2279, %v2280
    %v2282 = vrot.slane %v1516, 1
    %v2283 = vrot.slane %v2189, 1
    %v2284 = vsel %vm2191, %v2282, %v2283
    %v2285 = vrot.slane %v1517, 1
    %v2286 = vrot.slane %v2190, 1
    %v2287 = vsel %vm2191, %v2285, %v2286
    %2288 = vrot.lane.b32.xlu0 %v2194, 6
    %v2289 = vpop.permute.xlu0 %2288
    %2290 = vrot.lane.b32.xlu0 %v2193, 6
    %v2291 = vpop.permute.xlu0 %2290
    %2292 = vrot.lane.b32.xlu0 %v2197, 6
    %v2293 = vpop.permute.xlu0 %2292
    %2294 = vrot.lane.b32.xlu0 %v2196, 6
    %v2295 = vpop.permute.xlu0 %2294
    %2296 = vrot.lane.b32.xlu0 %v2200, 6
    %v2297 = vpop.permute.xlu0 %2296
    %2298 = vrot.lane.b32.xlu0 %v2199, 6
    %v2299 = vpop.permute.xlu0 %2298
    %2300 = vrot.lane.b32.xlu0 %v2203, 6
    %v2301 = vpop.permute.xlu0 %2300
    %2302 = vrot.lane.b32.xlu0 %v2202, 6
    %v2303 = vpop.permute.xlu0 %2302
    %2304 = vrot.lane.b32.xlu0 %v2206, 6
    %v2305 = vpop.permute.xlu0 %2304
    %2306 = vrot.lane.b32.xlu0 %v2205, 6
    %v2307 = vpop.permute.xlu0 %2306
    %2308 = vrot.lane.b32.xlu0 %v2209, 6
    %v2309 = vpop.permute.xlu0 %2308
    %2310 = vrot.lane.b32.xlu0 %v2208, 6
    %v2311 = vpop.permute.xlu0 %2310
    %2312 = vrot.lane.b32.xlu0 %v2212, 6
    %v2313 = vpop.permute.xlu0 %2312
    %2314 = vrot.lane.b32.xlu0 %v2211, 6
    %v2315 = vpop.permute.xlu0 %2314
    %2316 = vrot.lane.b32.xlu0 %v2215, 6
    %v2317 = vpop.permute.xlu0 %2316
    %2318 = vrot.lane.b32.xlu0 %v2214, 6
    %v2319 = vpop.permute.xlu0 %2318
    %2320 = vrot.lane.b32.xlu0 %v2218, 6
    %v2321 = vpop.permute.xlu0 %2320
    %2322 = vrot.lane.b32.xlu0 %v2217, 6
    %v2323 = vpop.permute.xlu0 %2322
    %2324 = vrot.lane.b32.xlu0 %v2221, 6
    %v2325 = vpop.permute.xlu0 %2324
    %2326 = vrot.lane.b32.xlu0 %v2220, 6
    %v2327 = vpop.permute.xlu0 %2326
    %2328 = vrot.lane.b32.xlu0 %v2224, 6
    %v2329 = vpop.permute.xlu0 %2328
    %2330 = vrot.lane.b32.xlu0 %v2223, 6
    %v2331 = vpop.permute.xlu0 %2330
    %2332 = vrot.lane.b32.xlu0 %v2227, 6
    %v2333 = vpop.permute.xlu0 %2332
    %2334 = vrot.lane.b32.xlu0 %v2226, 6
    %v2335 = vpop.permute.xlu0 %2334
    %2336 = vrot.lane.b32.xlu0 %v2230, 6
    %v2337 = vpop.permute.xlu0 %2336
    %2338 = vrot.lane.b32.xlu0 %v2229, 6
    %v2339 = vpop.permute.xlu0 %2338
    %2340 = vrot.lane.b32.xlu0 %v2233, 6
    %v2341 = vpop.permute.xlu0 %2340
    %2342 = vrot.lane.b32.xlu0 %v2232, 6
    %v2343 = vpop.permute.xlu0 %2342
    %2344 = vrot.lane.b32.xlu0 %v2236, 6
    %v2345 = vpop.permute.xlu0 %2344
    %2346 = vrot.lane.b32.xlu0 %v2235, 6
    %v2347 = vpop.permute.xlu0 %2346
    %2348 = vrot.lane.b32.xlu0 %v2239, 6
    %v2349 = vpop.permute.xlu0 %2348
    %2350 = vrot.lane.b32.xlu0 %v2238, 6
    %v2351 = vpop.permute.xlu0 %2350
    %2352 = vrot.lane.b32.xlu0 %v2242, 6
    %v2353 = vpop.permute.xlu0 %2352
    %2354 = vrot.lane.b32.xlu0 %v2241, 6
    %v2355 = vpop.permute.xlu0 %2354
    %2356 = vrot.lane.b32.xlu0 %v2245, 6
    %v2357 = vpop.permute.xlu0 %2356
    %2358 = vrot.lane.b32.xlu0 %v2244, 6
    %v2359 = vpop.permute.xlu0 %2358
    %2360 = vrot.lane.b32.xlu0 %v2248, 6
    %v2361 = vpop.permute.xlu0 %2360
    %2362 = vrot.lane.b32.xlu0 %v2247, 6
    %v2363 = vpop.permute.xlu0 %2362
    %2364 = vrot.lane.b32.xlu0 %v2251, 6
    %v2365 = vpop.permute.xlu0 %2364
    %2366 = vrot.lane.b32.xlu0 %v2250, 6
    %v2367 = vpop.permute.xlu0 %2366
    %2368 = vrot.lane.b32.xlu0 %v2254, 6
    %v2369 = vpop.permute.xlu0 %2368
    %2370 = vrot.lane.b32.xlu0 %v2253, 6
    %v2371 = vpop.permute.xlu0 %2370
    %2372 = vrot.lane.b32.xlu0 %v2257, 6
    %v2373 = vpop.permute.xlu0 %2372
    %2374 = vrot.lane.b32.xlu0 %v2256, 6
    %v2375 = vpop.permute.xlu0 %2374
    %2376 = vrot.lane.b32.xlu0 %v2260, 6
    %v2377 = vpop.permute.xlu0 %2376
    %2378 = vrot.lane.b32.xlu0 %v2259, 6
    %v2379 = vpop.permute.xlu0 %2378
    %2380 = vrot.lane.b32.xlu0 %v2263, 6
    %v2381 = vpop.permute.xlu0 %2380
    %2382 = vrot.lane.b32.xlu0 %v2262, 6
    %v2383 = vpop.permute.xlu0 %2382
    %2384 = vrot.lane.b32.xlu0 %v2266, 6
    %v2385 = vpop.permute.xlu0 %2384
    %2386 = vrot.lane.b32.xlu0 %v2265, 6
    %v2387 = vpop.permute.xlu0 %2386
    %2388 = vrot.lane.b32.xlu0 %v2269, 6
    %v2389 = vpop.permute.xlu0 %2388
    %2390 = vrot.lane.b32.xlu0 %v2268, 6
    %v2391 = vpop.permute.xlu0 %2390
    %2392 = vrot.lane.b32.xlu0 %v2272, 6
    %v2393 = vpop.permute.xlu0 %2392
    %2394 = vrot.lane.b32.xlu0 %v2271, 6
    %v2395 = vpop.permute.xlu0 %2394
    %2396 = vrot.lane.b32.xlu0 %v2275, 6
    %v2397 = vpop.permute.xlu0 %2396
    %2398 = vrot.lane.b32.xlu0 %v2274, 6
    %v2399 = vpop.permute.xlu0 %2398
    %2400 = vrot.lane.b32.xlu0 %v2278, 6
    %v2401 = vpop.permute.xlu0 %2400
    %2402 = vrot.lane.b32.xlu0 %v2277, 6
    %v2403 = vpop.permute.xlu0 %2402
    %2404 = vrot.lane.b32.xlu0 %v2281, 6
    %v2405 = vpop.permute.xlu0 %2404
    %2406 = vrot.lane.b32.xlu0 %v2280, 6
    %v2407 = vpop.permute.xlu0 %2406
    %2408 = vrot.lane.b32.xlu0 %v2284, 6
    %v2409 = vpop.permute.xlu0 %2408
    %2410 = vrot.lane.b32.xlu0 %v2283, 6
    %v2411 = vpop.permute.xlu0 %2410
    %2412 = vrot.lane.b32.xlu0 %v2287, 6
    %v2413 = vpop.permute.xlu0 %2412
    %2414 = vrot.lane.b32.xlu0 %v2286, 6
    %v2415 = vpop.permute.xlu0 %2414
    %v2512 = vunpack.c.l.b16 %v845
    %v2513 = vunpack.c.l.b16 %v846
    %v2514 = vunpack.c.l.b16 %v847
    %v2515 = vunpack.c.l.b16 %v848
    %v2516 = vunpack.c.l.b16 %v849
    %v2517 = vunpack.c.l.b16 %v850
    %v2518 = vunpack.c.l.b16 %v851
    %v2519 = vunpack.c.l.b16 %v852
    %v2520 = vunpack.c.l.b16 %v853
    %v2521 = vunpack.c.l.b16 %v854
    %v2522 = vunpack.c.l.b16 %v855
    %v2523 = vunpack.c.l.b16 %v856
    %v2524 = vunpack.c.l.b16 %v857
    %v2525 = vunpack.c.l.b16 %v858
    %v2526 = vunpack.c.l.b16 %v859
    %v2527 = vunpack.c.l.b16 %v860
    %v2528 = vunpack.c.l.b16 %v861
    %v2529 = vunpack.c.l.b16 %v862
    %v2530 = vunpack.c.l.b16 %v863
    %v2531 = vunpack.c.l.b16 %v864
    %v2532 = vunpack.c.l.b16 %v865
    %v2533 = vunpack.c.l.b16 %v866
    %v2534 = vunpack.c.l.b16 %v867
    %v2535 = vunpack.c.l.b16 %v868
    %v2536 = vunpack.c.l.b16 %v869
    %v2537 = vunpack.c.l.b16 %v870
    %v2538 = vunpack.c.l.b16 %v871
    %v2539 = vunpack.c.l.b16 %v872
    %v2540 = vunpack.c.l.b16 %v873
    %v2541 = vunpack.c.l.b16 %v874
    %v2542 = vunpack.c.l.b16 %v875
    %v2543 = vunpack.c.l.b16 %v876
    %v2544 = vunpack.c.l.b16 %v877
    %v2545 = vunpack.c.l.b16 %v878
    %v2546 = vunpack.c.l.b16 %v879
    %v2547 = vunpack.c.l.b16 %v880
    %v2548 = vunpack.c.l.b16 %v881
    %v2549 = vunpack.c.l.b16 %v882
    %v2550 = vunpack.c.l.b16 %v883
    %v2551 = vunpack.c.l.b16 %v884
    %v2552 = vunpack.c.l.b16 %v885
    %v2553 = vunpack.c.l.b16 %v886
    %v2554 = vunpack.c.l.b16 %v887
    %v2555 = vunpack.c.l.b16 %v888
    %v2556 = vunpack.c.l.b16 %v889
    %v2557 = vunpack.c.l.b16 %v890
    %v2558 = vunpack.c.l.b16 %v891
    %v2559 = vunpack.c.l.b16 %v892
    %v2560 = vunpack.c.l.b16 %v893
    %v2561 = vunpack.c.l.b16 %v894
    %v2562 = vunpack.c.l.b16 %v895
    %v2563 = vunpack.c.l.b16 %v896
    %v2564 = vunpack.c.l.b16 %v897
    %v2565 = vunpack.c.l.b16 %v898
    %v2566 = vunpack.c.l.b16 %v899
    %v2567 = vunpack.c.l.b16 %v900
    %v2568 = vunpack.c.l.b16 %v901
    %v2569 = vunpack.c.l.b16 %v902
    %v2570 = vunpack.c.l.b16 %v903
    %v2571 = vunpack.c.l.b16 %v904
    %v2572 = vunpack.c.l.b16 %v905
    %v2573 = vunpack.c.l.b16 %v906
    %v2574 = vunpack.c.l.b16 %v907
    %v2575 = vunpack.c.l.b16 %v908
    %v2576 = vunpack.c.l.b16 %v909
    %v2577 = vunpack.c.l.b16 %v910
    %v2578 = vunpack.c.l.b16 %v911
    %v2579 = vunpack.c.l.b16 %v912
    %v2580 = vunpack.c.l.b16 %v913
    %v2581 = vunpack.c.l.b16 %v914
    %v2582 = vunpack.c.l.b16 %v915
    %v2583 = vunpack.c.l.b16 %v916
    %v2584 = vunpack.c.l.b16 %v917
    %v2585 = vunpack.c.l.b16 %v918
    %v2586 = vunpack.c.l.b16 %v919
    %v2587 = vunpack.c.l.b16 %v920
    %v2588 = vunpack.c.l.b16 %v921
    %v2589 = vunpack.c.l.b16 %v922
    %v2590 = vunpack.c.l.b16 %v923
    %v2591 = vunpack.c.l.b16 %v924
    %v2592 = vunpack.c.l.b16 %v925
    %v2593 = vunpack.c.l.b16 %v926
    %v2594 = vunpack.c.l.b16 %v927
    %v2595 = vunpack.c.l.b16 %v928
    %v2596 = vunpack.c.l.b16 %v929
    %v2597 = vunpack.c.l.b16 %v930
    %v2598 = vunpack.c.l.b16 %v931
    %v2599 = vunpack.c.l.b16 %v932
    %v2600 = vunpack.c.l.b16 %v933
    %v2601 = vunpack.c.l.b16 %v934
    %v2602 = vunpack.c.l.b16 %v935
    %v2603 = vunpack.c.l.b16 %v936
    %v2604 = vunpack.c.l.b16 %v937
    %v2605 = vunpack.c.l.b16 %v938
    %v2606 = vunpack.c.l.b16 %v939
    %v2607 = vunpack.c.l.b16 %v940
    %v2608 = vpack.c.b16 %v2513, %v2512
    %v2609 = vpack.c.b16 %v2514, %v2514
    %v2610 = vpack.c.b16 %v2516, %v2515
    %v2611 = vpack.c.b16 %v2517, %v2517
    %v2612 = vpack.c.b16 %v2519, %v2518
    %v2613 = vpack.c.b16 %v2520, %v2520
    %v2614 = vpack.c.b16 %v2522, %v2521
    %v2615 = vpack.c.b16 %v2523, %v2523
    %v2616 = vpack.c.b16 %v2525, %v2524
    %v2617 = vpack.c.b16 %v2526, %v2526
    %v2618 = vpack.c.b16 %v2528, %v2527
    %v2619 = vpack.c.b16 %v2529, %v2529
    %v2620 = vpack.c.b16 %v2531, %v2530
    %v2621 = vpack.c.b16 %v2532, %v2532
    %v2622 = vpack.c.b16 %v2534, %v2533
    %v2623 = vpack.c.b16 %v2535, %v2535
    %v2624 = vpack.c.b16 %v2537, %v2536
    %v2625 = vpack.c.b16 %v2538, %v2538
    %v2626 = vpack.c.b16 %v2540, %v2539
    %v2627 = vpack.c.b16 %v2541, %v2541
    %v2628 = vpack.c.b16 %v2543, %v2542
    %v2629 = vpack.c.b16 %v2544, %v2544
    %v2630 = vpack.c.b16 %v2546, %v2545
    %v2631 = vpack.c.b16 %v2547, %v2547
    %v2632 = vpack.c.b16 %v2549, %v2548
    %v2633 = vpack.c.b16 %v2550, %v2550
    %v2634 = vpack.c.b16 %v2552, %v2551
    %v2635 = vpack.c.b16 %v2553, %v2553
    %v2636 = vpack.c.b16 %v2555, %v2554
    %v2637 = vpack.c.b16 %v2556, %v2556
    %v2638 = vpack.c.b16 %v2558, %v2557
    %v2639 = vpack.c.b16 %v2559, %v2559
    %v2640 = vpack.c.b16 %v2561, %v2560
    %v2641 = vpack.c.b16 %v2562, %v2562
    %v2642 = vpack.c.b16 %v2564, %v2563
    %v2643 = vpack.c.b16 %v2565, %v2565
    %v2644 = vpack.c.b16 %v2567, %v2566
    %v2645 = vpack.c.b16 %v2568, %v2568
    %v2646 = vpack.c.b16 %v2570, %v2569
    %v2647 = vpack.c.b16 %v2571, %v2571
    %v2648 = vpack.c.b16 %v2573, %v2572
    %v2649 = vpack.c.b16 %v2574, %v2574
    %v2650 = vpack.c.b16 %v2576, %v2575
    %v2651 = vpack.c.b16 %v2577, %v2577
    %v2652 = vpack.c.b16 %v2579, %v2578
    %v2653 = vpack.c.b16 %v2580, %v2580
    %v2654 = vpack.c.b16 %v2582, %v2581
    %v2655 = vpack.c.b16 %v2583, %v2583
    %v2656 = vpack.c.b16 %v2585, %v2584
    %v2657 = vpack.c.b16 %v2586, %v2586
    %v2658 = vpack.c.b16 %v2588, %v2587
    %v2659 = vpack.c.b16 %v2589, %v2589
    %v2660 = vpack.c.b16 %v2591, %v2590
    %v2661 = vpack.c.b16 %v2592, %v2592
    %v2662 = vpack.c.b16 %v2594, %v2593
    %v2663 = vpack.c.b16 %v2595, %v2595
    %v2664 = vpack.c.b16 %v2597, %v2596
    %v2665 = vpack.c.b16 %v2598, %v2598
    %v2666 = vpack.c.b16 %v2600, %v2599
    %v2667 = vpack.c.b16 %v2601, %v2601
    %v2668 = vpack.c.b16 %v2603, %v2602
    %v2669 = vpack.c.b16 %v2604, %v2604
    %v2670 = vpack.c.b16 %v2606, %v2605
    %v2671 = vpack.c.b16 %v2607, %v2607
    %2672 = vrot.lane.b32.xlu0 %v2608, 9
    %v2673 = vpop.permute.xlu0 %2672
    %2674 = vrot.lane.b32.xlu0 %v2609, 9
    %v2675 = vpop.permute.xlu0 %2674
    %2676 = vrot.lane.b32.xlu0 %v2610, 9
    %v2677 = vpop.permute.xlu0 %2676
    %2678 = vrot.lane.b32.xlu0 %v2611, 9
    %v2679 = vpop.permute.xlu0 %2678
    %2680 = vrot.lane.b32.xlu0 %v2612, 9
    %v2681 = vpop.permute.xlu0 %2680
    %2682 = vrot.lane.b32.xlu0 %v2613, 9
    %v2683 = vpop.permute.xlu0 %2682
    %2684 = vrot.lane.b32.xlu0 %v2614, 9
    %v2685 = vpop.permute.xlu0 %2684
    %2686 = vrot.lane.b32.xlu0 %v2615, 9
    %v2687 = vpop.permute.xlu0 %2686
    %2688 = vrot.lane.b32.xlu0 %v2616, 9
    %v2689 = vpop.permute.xlu0 %2688
    %2690 = vrot.lane.b32.xlu0 %v2617, 9
    %v2691 = vpop.permute.xlu0 %2690
    %2692 = vrot.lane.b32.xlu0 %v2618, 9
    %v2693 = vpop.permute.xlu0 %2692
    %2694 = vrot.lane.b32.xlu0 %v2619, 9
    %v2695 = vpop.permute.xlu0 %2694
    %2696 = vrot.lane.b32.xlu0 %v2620, 9
    %v2697 = vpop.permute.xlu0 %2696
    %2698 = vrot.lane.b32.xlu0 %v2621, 9
    %v2699 = vpop.permute.xlu0 %2698
    %2700 = vrot.lane.b32.xlu0 %v2622, 9
    %v2701 = vpop.permute.xlu0 %2700
    %2702 = vrot.lane.b32.xlu0 %v2623, 9
    %v2703 = vpop.permute.xlu0 %2702
    %2704 = vrot.lane.b32.xlu0 %v2624, 9
    %v2705 = vpop.permute.xlu0 %2704
    %2706 = vrot.lane.b32.xlu0 %v2625, 9
    %v2707 = vpop.permute.xlu0 %2706
    %2708 = vrot.lane.b32.xlu0 %v2626, 9
    %v2709 = vpop.permute.xlu0 %2708
    %2710 = vrot.lane.b32.xlu0 %v2627, 9
    %v2711 = vpop.permute.xlu0 %2710
    %2712 = vrot.lane.b32.xlu0 %v2628, 9
    %v2713 = vpop.permute.xlu0 %2712
    %2714 = vrot.lane.b32.xlu0 %v2629, 9
    %v2715 = vpop.permute.xlu0 %2714
    %2716 = vrot.lane.b32.xlu0 %v2630, 9
    %v2717 = vpop.permute.xlu0 %2716
    %2718 = vrot.lane.b32.xlu0 %v2631, 9
    %v2719 = vpop.permute.xlu0 %2718
    %2720 = vrot.lane.b32.xlu0 %v2632, 9
    %v2721 = vpop.permute.xlu0 %2720
    %2722 = vrot.lane.b32.xlu0 %v2633, 9
    %v2723 = vpop.permute.xlu0 %2722
    %2724 = vrot.lane.b32.xlu0 %v2634, 9
    %v2725 = vpop.permute.xlu0 %2724
    %2726 = vrot.lane.b32.xlu0 %v2635, 9
    %v2727 = vpop.permute.xlu0 %2726
    %2728 = vrot.lane.b32.xlu0 %v2636, 9
    %v2729 = vpop.permute.xlu0 %2728
    %2730 = vrot.lane.b32.xlu0 %v2637, 9
    %v2731 = vpop.permute.xlu0 %2730
    %2732 = vrot.lane.b32.xlu0 %v2638, 9
    %v2733 = vpop.permute.xlu0 %2732
    %2734 = vrot.lane.b32.xlu0 %v2639, 9
    %v2735 = vpop.permute.xlu0 %2734
    %2736 = vrot.lane.b32.xlu0 %v2640, 9
    %v2737 = vpop.permute.xlu0 %2736
    %2738 = vrot.lane.b32.xlu0 %v2641, 9
    %v2739 = vpop.permute.xlu0 %2738
    %2740 = vrot.lane.b32.xlu0 %v2642, 9
    %v2741 = vpop.permute.xlu0 %2740
    %2742 = vrot.lane.b32.xlu0 %v2643, 9
    %v2743 = vpop.permute.xlu0 %2742
    %2744 = vrot.lane.b32.xlu0 %v2644, 9
    %v2745 = vpop.permute.xlu0 %2744
    %2746 = vrot.lane.b32.xlu0 %v2645, 9
    %v2747 = vpop.permute.xlu0 %2746
    %2748 = vrot.lane.b32.xlu0 %v2646, 9
    %v2749 = vpop.permute.xlu0 %2748
    %2750 = vrot.lane.b32.xlu0 %v2647, 9
    %v2751 = vpop.permute.xlu0 %2750
    %2752 = vrot.lane.b32.xlu0 %v2648, 9
    %v2753 = vpop.permute.xlu0 %2752
    %2754 = vrot.lane.b32.xlu0 %v2649, 9
    %v2755 = vpop.permute.xlu0 %2754
    %2756 = vrot.lane.b32.xlu0 %v2650, 9
    %v2757 = vpop.permute.xlu0 %2756
    %2758 = vrot.lane.b32.xlu0 %v2651, 9
    %v2759 = vpop.permute.xlu0 %2758
    %2760 = vrot.lane.b32.xlu0 %v2652, 9
    %v2761 = vpop.permute.xlu0 %2760
    %2762 = vrot.lane.b32.xlu0 %v2653, 9
    %v2763 = vpop.permute.xlu0 %2762
    %2764 = vrot.lane.b32.xlu0 %v2654, 9
    %v2765 = vpop.permute.xlu0 %2764
    %2766 = vrot.lane.b32.xlu0 %v2655, 9
    %v2767 = vpop.permute.xlu0 %2766
    %2768 = vrot.lane.b32.xlu0 %v2656, 9
    %v2769 = vpop.permute.xlu0 %2768
    %2770 = vrot.lane.b32.xlu0 %v2657, 9
    %v2771 = vpop.permute.xlu0 %2770
    %2772 = vrot.lane.b32.xlu0 %v2658, 9
    %v2773 = vpop.permute.xlu0 %2772
    %2774 = vrot.lane.b32.xlu0 %v2659, 9
    %v2775 = vpop.permute.xlu0 %2774
    %2776 = vrot.lane.b32.xlu0 %v2660, 9
    %v2777 = vpop.permute.xlu0 %2776
    %2778 = vrot.lane.b32.xlu0 %v2661, 9
    %v2779 = vpop.permute.xlu0 %2778
    %2780 = vrot.lane.b32.xlu0 %v2662, 9
    %v2781 = vpop.permute.xlu0 %2780
    %2782 = vrot.lane.b32.xlu0 %v2663, 9
    %v2783 = vpop.permute.xlu0 %2782
    %2784 = vrot.lane.b32.xlu0 %v2664, 9
    %v2785 = vpop.permute.xlu0 %2784
    %2786 = vrot.lane.b32.xlu0 %v2665, 9
    %v2787 = vpop.permute.xlu0 %2786
    %2788 = vrot.lane.b32.xlu0 %v2666, 9
    %v2789 = vpop.permute.xlu0 %2788
    %2790 = vrot.lane.b32.xlu0 %v2667, 9
    %v2791 = vpop.permute.xlu0 %2790
    %2792 = vrot.lane.b32.xlu0 %v2668, 9
    %v2793 = vpop.permute.xlu0 %2792
    %2794 = vrot.lane.b32.xlu0 %v2669, 9
    %v2795 = vpop.permute.xlu0 %2794
    %2796 = vrot.lane.b32.xlu0 %v2670, 9
    %v2797 = vpop.permute.xlu0 %2796
    %2798 = vrot.lane.b32.xlu0 %v2671, 9
    %v2799 = vpop.permute.xlu0 %2798
    %v2832 = vunpack.c.l.b16 %v941
    %v2833 = vunpack.c.l.b16 %v942
    %v2834 = vunpack.c.l.b16 %v943
    %v2835 = vunpack.c.l.b16 %v944
    %v2836 = vunpack.c.l.b16 %v945
    %v2837 = vunpack.c.l.b16 %v946
    %v2838 = vunpack.c.l.b16 %v947
    %v2839 = vunpack.c.l.b16 %v948
    %v2840 = vunpack.c.l.b16 %v949
    %v2841 = vunpack.c.l.b16 %v950
    %v2842 = vunpack.c.l.b16 %v951
    %v2843 = vunpack.c.l.b16 %v952
    %v2844 = vunpack.c.l.b16 %v953
    %v2845 = vunpack.c.l.b16 %v954
    %v2846 = vunpack.c.l.b16 %v955
    %v2847 = vunpack.c.l.b16 %v956
    %v2848 = vunpack.c.l.b16 %v957
    %v2849 = vunpack.c.l.b16 %v958
    %v2850 = vunpack.c.l.b16 %v959
    %v2851 = vunpack.c.l.b16 %v960
    %v2852 = vunpack.c.l.b16 %v961
    %v2853 = vunpack.c.l.b16 %v962
    %v2854 = vunpack.c.l.b16 %v963
    %v2855 = vunpack.c.l.b16 %v964
    %v2856 = vunpack.c.l.b16 %v965
    %v2857 = vunpack.c.l.b16 %v966
    %v2858 = vunpack.c.l.b16 %v967
    %v2859 = vunpack.c.l.b16 %v968
    %v2860 = vunpack.c.l.b16 %v969
    %v2861 = vunpack.c.l.b16 %v970
    %v2862 = vunpack.c.l.b16 %v971
    %v2863 = vunpack.c.l.b16 %v972
    %v2864 = vpack.c.b16 %v2513, %v2832
    %v2865 = vpack.c.b16 %v2516, %v2833
    %v2866 = vpack.c.b16 %v2519, %v2834
    %v2867 = vpack.c.b16 %v2522, %v2835
    %v2868 = vpack.c.b16 %v2525, %v2836
    %v2869 = vpack.c.b16 %v2528, %v2837
    %v2870 = vpack.c.b16 %v2531, %v2838
    %v2871 = vpack.c.b16 %v2534, %v2839
    %v2872 = vpack.c.b16 %v2537, %v2840
    %v2873 = vpack.c.b16 %v2540, %v2841
    %v2874 = vpack.c.b16 %v2543, %v2842
    %v2875 = vpack.c.b16 %v2546, %v2843
    %v2876 = vpack.c.b16 %v2549, %v2844
    %v2877 = vpack.c.b16 %v2552, %v2845
    %v2878 = vpack.c.b16 %v2555, %v2846
    %v2879 = vpack.c.b16 %v2558, %v2847
    %v2880 = vpack.c.b16 %v2561, %v2848
    %v2881 = vpack.c.b16 %v2564, %v2849
    %v2882 = vpack.c.b16 %v2567, %v2850
    %v2883 = vpack.c.b16 %v2570, %v2851
    %v2884 = vpack.c.b16 %v2573, %v2852
    %v2885 = vpack.c.b16 %v2576, %v2853
    %v2886 = vpack.c.b16 %v2579, %v2854
    %v2887 = vpack.c.b16 %v2582, %v2855
    %v2888 = vpack.c.b16 %v2585, %v2856
    %v2889 = vpack.c.b16 %v2588, %v2857
    %v2890 = vpack.c.b16 %v2591, %v2858
    %v2891 = vpack.c.b16 %v2594, %v2859
    %v2892 = vpack.c.b16 %v2597, %v2860
    %v2893 = vpack.c.b16 %v2600, %v2861
    %v2894 = vpack.c.b16 %v2603, %v2862
    %v2895 = vpack.c.b16 %v2606, %v2863
    %v2897 = vshrl.u32 %v2864, 16
    %v2899 = vshll.u32 %v2864, 16
    %v2901 = vrot.slane %v2899, 1
    %v2902 = vor.u32 %v2897, %v2901
    %v2904 = vshll.u32 %v2609, 16
    %v2906 = vrot.slane %v2904, 1
    %v2907 = vsel %vm1518, %v2902, %v2906
    %v2908 = vshrl.u32 %v2609, 16
    %v2911 = vshrl.u32 %v2865, 16
    %v2913 = vshll.u32 %v2865, 16
    %v2915 = vrot.slane %v2913, 1
    %v2916 = vor.u32 %v2911, %v2915
    %v2918 = vshll.u32 %v2611, 16
    %v2920 = vrot.slane %v2918, 1
    %v2921 = vsel %vm1518, %v2916, %v2920
    %v2922 = vshrl.u32 %v2611, 16
    %v2925 = vshrl.u32 %v2866, 16
    %v2927 = vshll.u32 %v2866, 16
    %v2929 = vrot.slane %v2927, 1
    %v2930 = vor.u32 %v2925, %v2929
    %v2932 = vshll.u32 %v2613, 16
    %v2934 = vrot.slane %v2932, 1
    %v2935 = vsel %vm1518, %v2930, %v2934
    %v2936 = vshrl.u32 %v2613, 16
    %v2939 = vshrl.u32 %v2867, 16
    %v2941 = vshll.u32 %v2867, 16
    %v2943 = vrot.slane %v2941, 1
    %v2944 = vor.u32 %v2939, %v2943
    %v2946 = vshll.u32 %v2615, 16
    %v2948 = vrot.slane %v2946, 1
    %v2949 = vsel %vm1518, %v2944, %v2948
    %v2950 = vshrl.u32 %v2615, 16
    %v2953 = vshrl.u32 %v2868, 16
    %v2955 = vshll.u32 %v2868, 16
    %v2957 = vrot.slane %v2955, 1
    %v2958 = vor.u32 %v2953, %v2957
    %v2960 = vshll.u32 %v2617, 16
    %v2962 = vrot.slane %v2960, 1
    %v2963 = vsel %vm1518, %v2958, %v2962
    %v2964 = vshrl.u32 %v2617, 16
    %v2967 = vshrl.u32 %v2869, 16
    %v2969 = vshll.u32 %v2869, 16
    %v2971 = vrot.slane %v2969, 1
    %v2972 = vor.u32 %v2967, %v2971
    %v2974 = vshll.u32 %v2619, 16
    %v2976 = vrot.slane %v2974, 1
    %v2977 = vsel %vm1518, %v2972, %v2976
    %v2978 = vshrl.u32 %v2619, 16
    %v2981 = vshrl.u32 %v2870, 16
    %v2983 = vshll.u32 %v2870, 16
    %v2985 = vrot.slane %v2983, 1
    %v2986 = vor.u32 %v2981, %v2985
    %v2988 = vshll.u32 %v2621, 16
    %v2990 = vrot.slane %v2988, 1
    %v2991 = vsel %vm1518, %v2986, %v2990
    %v2992 = vshrl.u32 %v2621, 16
    %v2995 = vshrl.u32 %v2871, 16
    %v2997 = vshll.u32 %v2871, 16
    %v2999 = vrot.slane %v2997, 1
    %v3000 = vor.u32 %v2995, %v2999
    %v3002 = vshll.u32 %v2623, 16
    %v3004 = vrot.slane %v3002, 1
    %v3005 = vsel %vm1518, %v3000, %v3004
    %v3006 = vshrl.u32 %v2623, 16
    %v3009 = vshrl.u32 %v2872, 16
    %v3011 = vshll.u32 %v2872, 16
    %v3013 = vrot.slane %v3011, 1
    %v3014 = vor.u32 %v3009, %v3013
    %v3016 = vshll.u32 %v2625, 16
    %v3018 = vrot.slane %v3016, 1
    %v3019 = vsel %vm1518, %v3014, %v3018
    %v3020 = vshrl.u32 %v2625, 16
    %v3023 = vshrl.u32 %v2873, 16
    %v3025 = vshll.u32 %v2873, 16
    %v3027 = vrot.slane %v3025, 1
    %v3028 = vor.u32 %v3023, %v3027
    %v3030 = vshll.u32 %v2627, 16
    %v3032 = vrot.slane %v3030, 1
    %v3033 = vsel %vm1518, %v3028, %v3032
    %v3034 = vshrl.u32 %v2627, 16
    %v3037 = vshrl.u32 %v2874, 16
    %v3039 = vshll.u32 %v2874, 16
    %v3041 = vrot.slane %v3039, 1
    %v3042 = vor.u32 %v3037, %v3041
    %v3044 = vshll.u32 %v2629, 16
    %v3046 = vrot.slane %v3044, 1
    %v3047 = vsel %vm1518, %v3042, %v3046
    %v3048 = vshrl.u32 %v2629, 16
    %v3051 = vshrl.u32 %v2875, 16
    %v3053 = vshll.u32 %v2875, 16
    %v3055 = vrot.slane %v3053, 1
    %v3056 = vor.u32 %v3051, %v3055
    %v3058 = vshll.u32 %v2631, 16
    %v3060 = vrot.slane %v3058, 1
    %v3061 = vsel %vm1518, %v3056, %v3060
    %v3062 = vshrl.u32 %v2631, 16
    %v3065 = vshrl.u32 %v2876, 16
    %v3067 = vshll.u32 %v2876, 16
    %v3069 = vrot.slane %v3067, 1
    %v3070 = vor.u32 %v3065, %v3069
    %v3072 = vshll.u32 %v2633, 16
    %v3074 = vrot.slane %v3072, 1
    %v3075 = vsel %vm1518, %v3070, %v3074
    %v3076 = vshrl.u32 %v2633, 16
    %v3079 = vshrl.u32 %v2877, 16
    %v3081 = vshll.u32 %v2877, 16
    %v3083 = vrot.slane %v3081, 1
    %v3084 = vor.u32 %v3079, %v3083
    %v3086 = vshll.u32 %v2635, 16
    %v3088 = vrot.slane %v3086, 1
    %v3089 = vsel %vm1518, %v3084, %v3088
    %v3090 = vshrl.u32 %v2635, 16
    %v3093 = vshrl.u32 %v2878, 16
    %v3095 = vshll.u32 %v2878, 16
    %v3097 = vrot.slane %v3095, 1
    %v3098 = vor.u32 %v3093, %v3097
    %v3100 = vshll.u32 %v2637, 16
    %v3102 = vrot.slane %v3100, 1
    %v3103 = vsel %vm1518, %v3098, %v3102
    %v3104 = vshrl.u32 %v2637, 16
    %v3107 = vshrl.u32 %v2879, 16
    %v3109 = vshll.u32 %v2879, 16
    %v3111 = vrot.slane %v3109, 1
    %v3112 = vor.u32 %v3107, %v3111
    %v3114 = vshll.u32 %v2639, 16
    %v3116 = vrot.slane %v3114, 1
    %v3117 = vsel %vm1518, %v3112, %v3116
    %v3118 = vshrl.u32 %v2639, 16
    %v3121 = vshrl.u32 %v2880, 16
    %v3123 = vshll.u32 %v2880, 16
    %v3125 = vrot.slane %v3123, 1
    %v3126 = vor.u32 %v3121, %v3125
    %v3128 = vshll.u32 %v2641, 16
    %v3130 = vrot.slane %v3128, 1
    %v3131 = vsel %vm1518, %v3126, %v3130
    %v3132 = vshrl.u32 %v2641, 16
    %v3135 = vshrl.u32 %v2881, 16
    %v3137 = vshll.u32 %v2881, 16
    %v3139 = vrot.slane %v3137, 1
    %v3140 = vor.u32 %v3135, %v3139
    %v3142 = vshll.u32 %v2643, 16
    %v3144 = vrot.slane %v3142, 1
    %v3145 = vsel %vm1518, %v3140, %v3144
    %v3146 = vshrl.u32 %v2643, 16
    %v3149 = vshrl.u32 %v2882, 16
    %v3151 = vshll.u32 %v2882, 16
    %v3153 = vrot.slane %v3151, 1
    %v3154 = vor.u32 %v3149, %v3153
    %v3156 = vshll.u32 %v2645, 16
    %v3158 = vrot.slane %v3156, 1
    %v3159 = vsel %vm1518, %v3154, %v3158
    %v3160 = vshrl.u32 %v2645, 16
    %v3163 = vshrl.u32 %v2883, 16
    %v3165 = vshll.u32 %v2883, 16
    %v3167 = vrot.slane %v3165, 1
    %v3168 = vor.u32 %v3163, %v3167
    %v3170 = vshll.u32 %v2647, 16
    %v3172 = vrot.slane %v3170, 1
    %v3173 = vsel %vm1518, %v3168, %v3172
    %v3174 = vshrl.u32 %v2647, 16
    %v3177 = vshrl.u32 %v2884, 16
    %v3179 = vshll.u32 %v2884, 16
    %v3181 = vrot.slane %v3179, 1
    %v3182 = vor.u32 %v3177, %v3181
    %v3184 = vshll.u32 %v2649, 16
    %v3186 = vrot.slane %v3184, 1
    %v3187 = vsel %vm1518, %v3182, %v3186
    %v3188 = vshrl.u32 %v2649, 16
    %v3191 = vshrl.u32 %v2885, 16
    %v3193 = vshll.u32 %v2885, 16
    %v3195 = vrot.slane %v3193, 1
    %v3196 = vor.u32 %v3191, %v3195
    %v3198 = vshll.u32 %v2651, 16
    %v3200 = vrot.slane %v3198, 1
    %v3201 = vsel %vm1518, %v3196, %v3200
    %v3202 = vshrl.u32 %v2651, 16
    %v3205 = vshrl.u32 %v2886, 16
    %v3207 = vshll.u32 %v2886, 16
    %v3209 = vrot.slane %v3207, 1
    %v3210 = vor.u32 %v3205, %v3209
    %v3212 = vshll.u32 %v2653, 16
    %v3214 = vrot.slane %v3212, 1
    %v3215 = vsel %vm1518, %v3210, %v3214
    %v3216 = vshrl.u32 %v2653, 16
    %v3219 = vshrl.u32 %v2887, 16
    %v3221 = vshll.u32 %v2887, 16
    %v3223 = vrot.slane %v3221, 1
    %v3224 = vor.u32 %v3219, %v3223
    %v3226 = vshll.u32 %v2655, 16
    %v3228 = vrot.slane %v3226, 1
    %v3229 = vsel %vm1518, %v3224, %v3228
    %v3230 = vshrl.u32 %v2655, 16
    %v3233 = vshrl.u32 %v2888, 16
    %v3235 = vshll.u32 %v2888, 16
    %v3237 = vrot.slane %v3235, 1
    %v3238 = vor.u32 %v3233, %v3237
    %v3240 = vshll.u32 %v2657, 16
    %v3242 = vrot.slane %v3240, 1
    %v3243 = vsel %vm1518, %v3238, %v3242
    %v3244 = vshrl.u32 %v2657, 16
    %v3247 = vshrl.u32 %v2889, 16
    %v3249 = vshll.u32 %v2889, 16
    %v3251 = vrot.slane %v3249, 1
    %v3252 = vor.u32 %v3247, %v3251
    %v3254 = vshll.u32 %v2659, 16
    %v3256 = vrot.slane %v3254, 1
    %v3257 = vsel %vm1518, %v3252, %v3256
    %v3258 = vshrl.u32 %v2659, 16
    %v3261 = vshrl.u32 %v2890, 16
    %v3263 = vshll.u32 %v2890, 16
    %v3265 = vrot.slane %v3263, 1
    %v3266 = vor.u32 %v3261, %v3265
    %v3268 = vshll.u32 %v2661, 16
    %v3270 = vrot.slane %v3268, 1
    %v3271 = vsel %vm1518, %v3266, %v3270
    %v3272 = vshrl.u32 %v2661, 16
    %v3275 = vshrl.u32 %v2891, 16
    %v3277 = vshll.u32 %v2891, 16
    %v3279 = vrot.slane %v3277, 1
    %v3280 = vor.u32 %v3275, %v3279
    %v3282 = vshll.u32 %v2663, 16
    %v3284 = vrot.slane %v3282, 1
    %v3285 = vsel %vm1518, %v3280, %v3284
    %v3286 = vshrl.u32 %v2663, 16
    %v3289 = vshrl.u32 %v2892, 16
    %v3291 = vshll.u32 %v2892, 16
    %v3293 = vrot.slane %v3291, 1
    %v3294 = vor.u32 %v3289, %v3293
    %v3296 = vshll.u32 %v2665, 16
    %v3298 = vrot.slane %v3296, 1
    %v3299 = vsel %vm1518, %v3294, %v3298
    %v3300 = vshrl.u32 %v2665, 16
    %v3303 = vshrl.u32 %v2893, 16
    %v3305 = vshll.u32 %v2893, 16
    %v3307 = vrot.slane %v3305, 1
    %v3308 = vor.u32 %v3303, %v3307
    %v3310 = vshll.u32 %v2667, 16
    %v3312 = vrot.slane %v3310, 1
    %v3313 = vsel %vm1518, %v3308, %v3312
    %v3314 = vshrl.u32 %v2667, 16
    %v3317 = vshrl.u32 %v2894, 16
    %v3319 = vshll.u32 %v2894, 16
    %v3321 = vrot.slane %v3319, 1
    %v3322 = vor.u32 %v3317, %v3321
    %v3324 = vshll.u32 %v2669, 16
    %v3326 = vrot.slane %v3324, 1
    %v3327 = vsel %vm1518, %v3322, %v3326
    %v3328 = vshrl.u32 %v2669, 16
    %v3331 = vshrl.u32 %v2895, 16
    %v3333 = vshll.u32 %v2895, 16
    %v3335 = vrot.slane %v3333, 1
    %v3336 = vor.u32 %v3331, %v3335
    %v3338 = vshll.u32 %v2671, 16
    %v3340 = vrot.slane %v3338, 1
    %v3341 = vsel %vm1518, %v3336, %v3340
    %v3342 = vshrl.u32 %v2671, 16
    %3344 = vrot.lane.b32.xlu0 %v2907, 12
    %v3345 = vpop.permute.xlu0 %3344
    %3346 = vrot.lane.b32.xlu0 %v2908, 12
    %v3347 = vpop.permute.xlu0 %3346
    %3348 = vrot.lane.b32.xlu0 %v2921, 12
    %v3349 = vpop.permute.xlu0 %3348
    %3350 = vrot.lane.b32.xlu0 %v2922, 12
    %v3351 = vpop.permute.xlu0 %3350
    %3352 = vrot.lane.b32.xlu0 %v2935, 12
    %v3353 = vpop.permute.xlu0 %3352
    %3354 = vrot.lane.b32.xlu0 %v2936, 12
    %v3355 = vpop.permute.xlu0 %3354
    %3356 = vrot.lane.b32.xlu0 %v2949, 12
    %v3357 = vpop.permute.xlu0 %3356
    %3358 = vrot.lane.b32.xlu0 %v2950, 12
    %v3359 = vpop.permute.xlu0 %3358
    %3360 = vrot.lane.b32.xlu0 %v2963, 12
    %v3361 = vpop.permute.xlu0 %3360
    %3362 = vrot.lane.b32.xlu0 %v2964, 12
    %v3363 = vpop.permute.xlu0 %3362
    %3364 = vrot.lane.b32.xlu0 %v2977, 12
    %v3365 = vpop.permute.xlu0 %3364
    %3366 = vrot.lane.b32.xlu0 %v2978, 12
    %v3367 = vpop.permute.xlu0 %3366
    %3368 = vrot.lane.b32.xlu0 %v2991, 12
    %v3369 = vpop.permute.xlu0 %3368
    %3370 = vrot.lane.b32.xlu0 %v2992, 12
    %v3371 = vpop.permute.xlu0 %3370
    %3372 = vrot.lane.b32.xlu0 %v3005, 12
    %v3373 = vpop.permute.xlu0 %3372
    %3374 = vrot.lane.b32.xlu0 %v3006, 12
    %v3375 = vpop.permute.xlu0 %3374
    %3376 = vrot.lane.b32.xlu0 %v3019, 12
    %v3377 = vpop.permute.xlu0 %3376
    %3378 = vrot.lane.b32.xlu0 %v3020, 12
    %v3379 = vpop.permute.xlu0 %3378
    %3380 = vrot.lane.b32.xlu0 %v3033, 12
    %v3381 = vpop.permute.xlu0 %3380
    %3382 = vrot.lane.b32.xlu0 %v3034, 12
    %v3383 = vpop.permute.xlu0 %3382
    %3384 = vrot.lane.b32.xlu0 %v3047, 12
    %v3385 = vpop.permute.xlu0 %3384
    %3386 = vrot.lane.b32.xlu0 %v3048, 12
    %v3387 = vpop.permute.xlu0 %3386
    %3388 = vrot.lane.b32.xlu0 %v3061, 12
    %v3389 = vpop.permute.xlu0 %3388
    %3390 = vrot.lane.b32.xlu0 %v3062, 12
    %v3391 = vpop.permute.xlu0 %3390
    %3392 = vrot.lane.b32.xlu0 %v3075, 12
    %v3393 = vpop.permute.xlu0 %3392
    %3394 = vrot.lane.b32.xlu0 %v3076, 12
    %v3395 = vpop.permute.xlu0 %3394
    %3396 = vrot.lane.b32.xlu0 %v3089, 12
    %v3397 = vpop.permute.xlu0 %3396
    %3398 = vrot.lane.b32.xlu0 %v3090, 12
    %v3399 = vpop.permute.xlu0 %3398
    %3400 = vrot.lane.b32.xlu0 %v3103, 12
    %v3401 = vpop.permute.xlu0 %3400
    %3402 = vrot.lane.b32.xlu0 %v3104, 12
    %v3403 = vpop.permute.xlu0 %3402
    %3404 = vrot.lane.b32.xlu0 %v3117, 12
    %v3405 = vpop.permute.xlu0 %3404
    %3406 = vrot.lane.b32.xlu0 %v3118, 12
    %v3407 = vpop.permute.xlu0 %3406
    %3408 = vrot.lane.b32.xlu0 %v3131, 12
    %v3409 = vpop.permute.xlu0 %3408
    %3410 = vrot.lane.b32.xlu0 %v3132, 12
    %v3411 = vpop.permute.xlu0 %3410
    %3412 = vrot.lane.b32.xlu0 %v3145, 12
    %v3413 = vpop.permute.xlu0 %3412
    %3414 = vrot.lane.b32.xlu0 %v3146, 12
    %v3415 = vpop.permute.xlu0 %3414
    %3416 = vrot.lane.b32.xlu0 %v3159, 12
    %v3417 = vpop.permute.xlu0 %3416
    %3418 = vrot.lane.b32.xlu0 %v3160, 12
    %v3419 = vpop.permute.xlu0 %3418
    %3420 = vrot.lane.b32.xlu0 %v3173, 12
    %v3421 = vpop.permute.xlu0 %3420
    %3422 = vrot.lane.b32.xlu0 %v3174, 12
    %v3423 = vpop.permute.xlu0 %3422
    %3424 = vrot.lane.b32.xlu0 %v3187, 12
    %v3425 = vpop.permute.xlu0 %3424
    %3426 = vrot.lane.b32.xlu0 %v3188, 12
    %v3427 = vpop.permute.xlu0 %3426
    %3428 = vrot.lane.b32.xlu0 %v3201, 12
    %v3429 = vpop.permute.xlu0 %3428
    %3430 = vrot.lane.b32.xlu0 %v3202, 12
    %v3431 = vpop.permute.xlu0 %3430
    %3432 = vrot.lane.b32.xlu0 %v3215, 12
    %v3433 = vpop.permute.xlu0 %3432
    %3434 = vrot.lane.b32.xlu0 %v3216, 12
    %v3435 = vpop.permute.xlu0 %3434
    %3436 = vrot.lane.b32.xlu0 %v3229, 12
    %v3437 = vpop.permute.xlu0 %3436
    %3438 = vrot.lane.b32.xlu0 %v3230, 12
    %v3439 = vpop.permute.xlu0 %3438
    %3440 = vrot.lane.b32.xlu0 %v3243, 12
    %v3441 = vpop.permute.xlu0 %3440
    %3442 = vrot.lane.b32.xlu0 %v3244, 12
    %v3443 = vpop.permute.xlu0 %3442
    %3444 = vrot.lane.b32.xlu0 %v3257, 12
    %v3445 = vpop.permute.xlu0 %3444
    %3446 = vrot.lane.b32.xlu0 %v3258, 12
    %v3447 = vpop.permute.xlu0 %3446
    %3448 = vrot.lane.b32.xlu0 %v3271, 12
    %v3449 = vpop.permute.xlu0 %3448
    %3450 = vrot.lane.b32.xlu0 %v3272, 12
    %v3451 = vpop.permute.xlu0 %3450
    %3452 = vrot.lane.b32.xlu0 %v3285, 12
    %v3453 = vpop.permute.xlu0 %3452
    %3454 = vrot.lane.b32.xlu0 %v3286, 12
    %v3455 = vpop.permute.xlu0 %3454
    %3456 = vrot.lane.b32.xlu0 %v3299, 12
    %v3457 = vpop.permute.xlu0 %3456
    %3458 = vrot.lane.b32.xlu0 %v3300, 12
    %v3459 = vpop.permute.xlu0 %3458
    %3460 = vrot.lane.b32.xlu0 %v3313, 12
    %v3461 = vpop.permute.xlu0 %3460
    %3462 = vrot.lane.b32.xlu0 %v3314, 12
    %v3463 = vpop.permute.xlu0 %3462
    %3464 = vrot.lane.b32.xlu0 %v3327, 12
    %v3465 = vpop.permute.xlu0 %3464
    %3466 = vrot.lane.b32.xlu0 %v3328, 12
    %v3467 = vpop.permute.xlu0 %3466
    %3468 = vrot.lane.b32.xlu0 %v3341, 12
    %v3469 = vpop.permute.xlu0 %3468
    %3470 = vrot.lane.b32.xlu0 %v3342, 12
    %v3471 = vpop.permute.xlu0 %3470
    %v3504 = vunpack.c.l.b16 %v973
    %v3505 = vunpack.c.l.b16 %v974
    %v3506 = vunpack.c.l.b16 %v975
    %v3507 = vunpack.c.l.b16 %v976
    %v3508 = vunpack.c.l.b16 %v977
    %v3509 = vunpack.c.l.b16 %v978
    %v3510 = vunpack.c.l.b16 %v979
    %v3511 = vunpack.c.l.b16 %v980
    %v3512 = vunpack.c.l.b16 %v981
    %v3513 = vunpack.c.l.b16 %v982
    %v3514 = vunpack.c.l.b16 %v983
    %v3515 = vunpack.c.l.b16 %v984
    %v3516 = vunpack.c.l.b16 %v985
    %v3517 = vunpack.c.l.b16 %v986
    %v3518 = vunpack.c.l.b16 %v987
    %v3519 = vunpack.c.l.b16 %v988
    %v3520 = vunpack.c.l.b16 %v989
    %v3521 = vunpack.c.l.b16 %v990
    %v3522 = vunpack.c.l.b16 %v991
    %v3523 = vunpack.c.l.b16 %v992
    %v3524 = vunpack.c.l.b16 %v993
    %v3525 = vunpack.c.l.b16 %v994
    %v3526 = vunpack.c.l.b16 %v995
    %v3527 = vunpack.c.l.b16 %v996
    %v3528 = vunpack.c.l.b16 %v997
    %v3529 = vunpack.c.l.b16 %v998
    %v3530 = vunpack.c.l.b16 %v999
    %v3531 = vunpack.c.l.b16 %v1000
    %v3532 = vunpack.c.l.b16 %v1001
    %v3533 = vunpack.c.l.b16 %v1002
    %v3534 = vunpack.c.l.b16 %v1003
    %v3535 = vunpack.c.l.b16 %v1004
    %v3536 = vpack.c.b16 %v3504, %v3504
    %v3537 = vpack.c.b16 %v3505, %v3505
    %v3538 = vpack.c.b16 %v3506, %v3506
    %v3539 = vpack.c.b16 %v3507, %v3507
    %v3540 = vpack.c.b16 %v3508, %v3508
    %v3541 = vpack.c.b16 %v3509, %v3509
    %v3542 = vpack.c.b16 %v3510, %v3510
    %v3543 = vpack.c.b16 %v3511, %v3511
    %v3544 = vpack.c.b16 %v3512, %v3512
    %v3545 = vpack.c.b16 %v3513, %v3513
    %v3546 = vpack.c.b16 %v3514, %v3514
    %v3547 = vpack.c.b16 %v3515, %v3515
    %v3548 = vpack.c.b16 %v3516, %v3516
    %v3549 = vpack.c.b16 %v3517, %v3517
    %v3550 = vpack.c.b16 %v3518, %v3518
    %v3551 = vpack.c.b16 %v3519, %v3519
    %v3552 = vpack.c.b16 %v3520, %v3520
    %v3553 = vpack.c.b16 %v3521, %v3521
    %v3554 = vpack.c.b16 %v3522, %v3522
    %v3555 = vpack.c.b16 %v3523, %v3523
    %v3556 = vpack.c.b16 %v3524, %v3524
    %v3557 = vpack.c.b16 %v3525, %v3525
    %v3558 = vpack.c.b16 %v3526, %v3526
    %v3559 = vpack.c.b16 %v3527, %v3527
    %v3560 = vpack.c.b16 %v3528, %v3528
    %v3561 = vpack.c.b16 %v3529, %v3529
    %v3562 = vpack.c.b16 %v3530, %v3530
    %v3563 = vpack.c.b16 %v3531, %v3531
    %v3564 = vpack.c.b16 %v3532, %v3532
    %v3565 = vpack.c.b16 %v3533, %v3533
    %v3566 = vpack.c.b16 %v3534, %v3534
    %v3567 = vpack.c.b16 %v3535, %v3535
    %v3568 = vrot.slane %v2864, 1
    %v3569 = vrot.slane %v3536, 1
    %v3570 = vsel %vm2191, %v3568, %v3569
    %v3571 = vrot.slane %v2865, 1
    %v3572 = vrot.slane %v3537, 1
    %v3573 = vsel %vm2191, %v3571, %v3572
    %v3574 = vrot.slane %v2866, 1
    %v3575 = vrot.slane %v3538, 1
    %v3576 = vsel %vm2191, %v3574, %v3575
    %v3577 = vrot.slane %v2867, 1
    %v3578 = vrot.slane %v3539, 1
    %v3579 = vsel %vm2191, %v3577, %v3578
    %v3580 = vrot.slane %v2868, 1
    %v3581 = vrot.slane %v3540, 1
    %v3582 = vsel %vm2191, %v3580, %v3581
    %v3583 = vrot.slane %v2869, 1
    %v3584 = vrot.slane %v3541, 1
    %v3585 = vsel %vm2191, %v3583, %v3584
    %v3586 = vrot.slane %v2870, 1
    %v3587 = vrot.slane %v3542, 1
    %v3588 = vsel %vm2191, %v3586, %v3587
    %v3589 = vrot.slane %v2871, 1
    %v3590 = vrot.slane %v3543, 1
    %v3591 = vsel %vm2191, %v3589, %v3590
    %v3592 = vrot.slane %v2872, 1
    %v3593 = vrot.slane %v3544, 1
    %v3594 = vsel %vm2191, %v3592, %v3593
    %v3595 = vrot.slane %v2873, 1
    %v3596 = vrot.slane %v3545, 1
    %v3597 = vsel %vm2191, %v3595, %v3596
    %v3598 = vrot.slane %v2874, 1
    %v3599 = vrot.slane %v3546, 1
    %v3600 = vsel %vm2191, %v3598, %v3599
    %v3601 = vrot.slane %v2875, 1
    %v3602 = vrot.slane %v3547, 1
    %v3603 = vsel %vm2191, %v3601, %v3602
    %v3604 = vrot.slane %v2876, 1
    %v3605 = vrot.slane %v3548, 1
    %v3606 = vsel %vm2191, %v3604, %v3605
    %v3607 = vrot.slane %v2877, 1
    %v3608 = vrot.slane %v3549, 1
    %v3609 = vsel %vm2191, %v3607, %v3608
    %v3610 = vrot.slane %v2878, 1
    %v3611 = vrot.slane %v3550, 1
    %v3612 = vsel %vm2191, %v3610, %v3611
    %v3613 = vrot.slane %v2879, 1
    %v3614 = vrot.slane %v3551, 1
    %v3615 = vsel %vm2191, %v3613, %v3614
    %v3616 = vrot.slane %v2880, 1
    %v3617 = vrot.slane %v3552, 1
    %v3618 = vsel %vm2191, %v3616, %v3617
    %v3619 = vrot.slane %v2881, 1
    %v3620 = vrot.slane %v3553, 1
    %v3621 = vsel %vm2191, %v3619, %v3620
    %v3622 = vrot.slane %v2882, 1
    %v3623 = vrot.slane %v3554, 1
    %v3624 = vsel %vm2191, %v3622, %v3623
    %v3625 = vrot.slane %v2883, 1
    %v3626 = vrot.slane %v3555, 1
    %v3627 = vsel %vm2191, %v3625, %v3626
    %v3628 = vrot.slane %v2884, 1
    %v3629 = vrot.slane %v3556, 1
    %v3630 = vsel %vm2191, %v3628, %v3629
    %v3631 = vrot.slane %v2885, 1
    %v3632 = vrot.slane %v3557, 1
    %v3633 = vsel %vm2191, %v3631, %v3632
    %v3634 = vrot.slane %v2886, 1
    %v3635 = vrot.slane %v3558, 1
    %v3636 = vsel %vm2191, %v3634, %v3635
    %v3637 = vrot.slane %v2887, 1
    %v3638 = vrot.slane %v3559, 1
    %v3639 = vsel %vm2191, %v3637, %v3638
    %v3640 = vrot.slane %v2888, 1
    %v3641 = vrot.slane %v3560, 1
    %v3642 = vsel %vm2191, %v3640, %v3641
    %v3643 = vrot.slane %v2889, 1
    %v3644 = vrot.slane %v3561, 1
    %v3645 = vsel %vm2191, %v3643, %v3644
    %v3646 = vrot.slane %v2890, 1
    %v3647 = vrot.slane %v3562, 1
    %v3648 = vsel %vm2191, %v3646, %v3647
    %v3649 = vrot.slane %v2891, 1
    %v3650 = vrot.slane %v3563, 1
    %v3651 = vsel %vm2191, %v3649, %v3650
    %v3652 = vrot.slane %v2892, 1
    %v3653 = vrot.slane %v3564, 1
    %v3654 = vsel %vm2191, %v3652, %v3653
    %v3655 = vrot.slane %v2893, 1
    %v3656 = vrot.slane %v3565, 1
    %v3657 = vsel %vm2191, %v3655, %v3656
    %v3658 = vrot.slane %v2894, 1
    %v3659 = vrot.slane %v3566, 1
    %v3660 = vsel %vm2191, %v3658, %v3659
    %v3661 = vrot.slane %v2895, 1
    %v3662 = vrot.slane %v3567, 1
    %v3663 = vsel %vm2191, %v3661, %v3662
    %3664 = vrot.lane.b32.xlu0 %v3570, 15
    %v3665 = vpop.permute.xlu0 %3664
    %3666 = vrot.lane.b32.xlu0 %v3569, 15
    %v3667 = vpop.permute.xlu0 %3666
    %3668 = vrot.lane.b32.xlu0 %v3573, 15
    %v3669 = vpop.permute.xlu0 %3668
    %3670 = vrot.lane.b32.xlu0 %v3572, 15
    %v3671 = vpop.permute.xlu0 %3670
    %3672 = vrot.lane.b32.xlu0 %v3576, 15
    %v3673 = vpop.permute.xlu0 %3672
    %3674 = vrot.lane.b32.xlu0 %v3575, 15
    %v3675 = vpop.permute.xlu0 %3674
    %3676 = vrot.lane.b32.xlu0 %v3579, 15
    %v3677 = vpop.permute.xlu0 %3676
    %3678 = vrot.lane.b32.xlu0 %v3578, 15
    %v3679 = vpop.permute.xlu0 %3678
    %3680 = vrot.lane.b32.xlu0 %v3582, 15
    %v3681 = vpop.permute.xlu0 %3680
    %3682 = vrot.lane.b32.xlu0 %v3581, 15
    %v3683 = vpop.permute.xlu0 %3682
    %3684 = vrot.lane.b32.xlu0 %v3585, 15
    %v3685 = vpop.permute.xlu0 %3684
    %3686 = vrot.lane.b32.xlu0 %v3584, 15
    %v3687 = vpop.permute.xlu0 %3686
    %3688 = vrot.lane.b32.xlu0 %v3588, 15
    %v3689 = vpop.permute.xlu0 %3688
    %3690 = vrot.lane.b32.xlu0 %v3587, 15
    %v3691 = vpop.permute.xlu0 %3690
    %3692 = vrot.lane.b32.xlu0 %v3591, 15
    %v3693 = vpop.permute.xlu0 %3692
    %3694 = vrot.lane.b32.xlu0 %v3590, 15
    %v3695 = vpop.permute.xlu0 %3694
    %3696 = vrot.lane.b32.xlu0 %v3594, 15
    %v3697 = vpop.permute.xlu0 %3696
    %3698 = vrot.lane.b32.xlu0 %v3593, 15
    %v3699 = vpop.permute.xlu0 %3698
    %3700 = vrot.lane.b32.xlu0 %v3597, 15
    %v3701 = vpop.permute.xlu0 %3700
    %3702 = vrot.lane.b32.xlu0 %v3596, 15
    %v3703 = vpop.permute.xlu0 %3702
    %3704 = vrot.lane.b32.xlu0 %v3600, 15
    %v3705 = vpop.permute.xlu0 %3704
    %3706 = vrot.lane.b32.xlu0 %v3599, 15
    %v3707 = vpop.permute.xlu0 %3706
    %3708 = vrot.lane.b32.xlu0 %v3603, 15
    %v3709 = vpop.permute.xlu0 %3708
    %3710 = vrot.lane.b32.xlu0 %v3602, 15
    %v3711 = vpop.permute.xlu0 %3710
    %3712 = vrot.lane.b32.xlu0 %v3606, 15
    %v3713 = vpop.permute.xlu0 %3712
    %3714 = vrot.lane.b32.xlu0 %v3605, 15
    %v3715 = vpop.permute.xlu0 %3714
    %3716 = vrot.lane.b32.xlu0 %v3609, 15
    %v3717 = vpop.permute.xlu0 %3716
    %3718 = vrot.lane.b32.xlu0 %v3608, 15
    %v3719 = vpop.permute.xlu0 %3718
    %3720 = vrot.lane.b32.xlu0 %v3612, 15
    %v3721 = vpop.permute.xlu0 %3720
    %3722 = vrot.lane.b32.xlu0 %v3611, 15
    %v3723 = vpop.permute.xlu0 %3722
    %3724 = vrot.lane.b32.xlu0 %v3615, 15
    %v3725 = vpop.permute.xlu0 %3724
    %3726 = vrot.lane.b32.xlu0 %v3614, 15
    %v3727 = vpop.permute.xlu0 %3726
    %3728 = vrot.lane.b32.xlu0 %v3618, 15
    %v3729 = vpop.permute.xlu0 %3728
    %3730 = vrot.lane.b32.xlu0 %v3617, 15
    %v3731 = vpop.permute.xlu0 %3730
    %3732 = vrot.lane.b32.xlu0 %v3621, 15
    %v3733 = vpop.permute.xlu0 %3732
    %3734 = vrot.lane.b32.xlu0 %v3620, 15
    %v3735 = vpop.permute.xlu0 %3734
    %3736 = vrot.lane.b32.xlu0 %v3624, 15
    %v3737 = vpop.permute.xlu0 %3736
    %3738 = vrot.lane.b32.xlu0 %v3623, 15
    %v3739 = vpop.permute.xlu0 %3738
    %3740 = vrot.lane.b32.xlu0 %v3627, 15
    %v3741 = vpop.permute.xlu0 %3740
    %3742 = vrot.lane.b32.xlu0 %v3626, 15
    %v3743 = vpop.permute.xlu0 %3742
    %3744 = vrot.lane.b32.xlu0 %v3630, 15
    %v3745 = vpop.permute.xlu0 %3744
    %3746 = vrot.lane.b32.xlu0 %v3629, 15
    %v3747 = vpop.permute.xlu0 %3746
    %3748 = vrot.lane.b32.xlu0 %v3633, 15
    %v3749 = vpop.permute.xlu0 %3748
    %3750 = vrot.lane.b32.xlu0 %v3632, 15
    %v3751 = vpop.permute.xlu0 %3750
    %3752 = vrot.lane.b32.xlu0 %v3636, 15
    %v3753 = vpop.permute.xlu0 %3752
    %3754 = vrot.lane.b32.xlu0 %v3635, 15
    %v3755 = vpop.permute.xlu0 %3754
    %3756 = vrot.lane.b32.xlu0 %v3639, 15
    %v3757 = vpop.permute.xlu0 %3756
    %3758 = vrot.lane.b32.xlu0 %v3638, 15
    %v3759 = vpop.permute.xlu0 %3758
    %3760 = vrot.lane.b32.xlu0 %v3642, 15
    %v3761 = vpop.permute.xlu0 %3760
    %3762 = vrot.lane.b32.xlu0 %v3641, 15
    %v3763 = vpop.permute.xlu0 %3762
    %3764 = vrot.lane.b32.xlu0 %v3645, 15
    %v3765 = vpop.permute.xlu0 %3764
    %3766 = vrot.lane.b32.xlu0 %v3644, 15
    %v3767 = vpop.permute.xlu0 %3766
    %3768 = vrot.lane.b32.xlu0 %v3648, 15
    %v3769 = vpop.permute.xlu0 %3768
    %3770 = vrot.lane.b32.xlu0 %v3647, 15
    %v3771 = vpop.permute.xlu0 %3770
    %3772 = vrot.lane.b32.xlu0 %v3651, 15
    %v3773 = vpop.permute.xlu0 %3772
    %3774 = vrot.lane.b32.xlu0 %v3650, 15
    %v3775 = vpop.permute.xlu0 %3774
    %3776 = vrot.lane.b32.xlu0 %v3654, 15
    %v3777 = vpop.permute.xlu0 %3776
    %3778 = vrot.lane.b32.xlu0 %v3653, 15
    %v3779 = vpop.permute.xlu0 %3778
    %3780 = vrot.lane.b32.xlu0 %v3657, 15
    %v3781 = vpop.permute.xlu0 %3780
    %3782 = vrot.lane.b32.xlu0 %v3656, 15
    %v3783 = vpop.permute.xlu0 %3782
    %3784 = vrot.lane.b32.xlu0 %v3660, 15
    %v3785 = vpop.permute.xlu0 %3784
    %3786 = vrot.lane.b32.xlu0 %v3659, 15
    %v3787 = vpop.permute.xlu0 %3786
    %3788 = vrot.lane.b32.xlu0 %v3663, 15
    %v3789 = vpop.permute.xlu0 %3788
    %3790 = vrot.lane.b32.xlu0 %v3662, 15
    %v3791 = vpop.permute.xlu0 %3790
    %v3888 = vunpack.c.l.b16 %v1006
    %v3889 = vunpack.c.l.b16 %v1007
    %v3890 = vunpack.c.l.b16 %v1008
    %v3891 = vunpack.c.l.b16 %v1009
    %v3892 = vunpack.c.l.b16 %v1010
    %v3893 = vunpack.c.l.b16 %v1011
    %v3894 = vunpack.c.l.b16 %v1012
    %v3895 = vunpack.c.l.b16 %v1013
    %v3896 = vunpack.c.l.b16 %v1014
    %v3897 = vunpack.c.l.b16 %v1015
    %v3898 = vunpack.c.l.b16 %v1016
    %v3899 = vunpack.c.l.b16 %v1017
    %v3900 = vunpack.c.l.b16 %v1018
    %v3901 = vunpack.c.l.b16 %v1019
    %v3902 = vunpack.c.l.b16 %v1020
    %v3903 = vunpack.c.l.b16 %v1021
    %v3904 = vunpack.c.l.b16 %v1022
    %v3905 = vunpack.c.l.b16 %v1023
    %v3906 = vunpack.c.l.b16 %v1024
    %v3907 = vunpack.c.l.b16 %v1025
    %v3908 = vunpack.c.l.b16 %v1026
    %v3909 = vunpack.c.l.b16 %v1027
    %v3910 = vunpack.c.l.b16 %v1028
    %v3911 = vunpack.c.l.b16 %v1029
    %v3912 = vunpack.c.l.b16 %v1030
    %v3913 = vunpack.c.l.b16 %v1031
    %v3914 = vunpack.c.l.b16 %v1032
    %v3915 = vunpack.c.l.b16 %v1033
    %v3916 = vunpack.c.l.b16 %v1034
    %v3917 = vunpack.c.l.b16 %v1035
    %v3918 = vunpack.c.l.b16 %v1036
    %v3919 = vunpack.c.l.b16 %v1037
    %v3920 = vunpack.c.l.b16 %v1038
    %v3921 = vunpack.c.l.b16 %v1039
    %v3922 = vunpack.c.l.b16 %v1040
    %v3923 = vunpack.c.l.b16 %v1041
    %v3924 = vunpack.c.l.b16 %v1042
    %v3925 = vunpack.c.l.b16 %v1043
    %v3926 = vunpack.c.l.b16 %v1044
    %v3927 = vunpack.c.l.b16 %v1045
    %v3928 = vunpack.c.l.b16 %v1046
    %v3929 = vunpack.c.l.b16 %v1047
    %v3930 = vunpack.c.l.b16 %v1048
    %v3931 = vunpack.c.l.b16 %v1049
    %v3932 = vunpack.c.l.b16 %v1050
    %v3933 = vunpack.c.l.b16 %v1051
    %v3934 = vunpack.c.l.b16 %v1052
    %v3935 = vunpack.c.l.b16 %v1053
    %v3936 = vunpack.c.l.b16 %v1054
    %v3937 = vunpack.c.l.b16 %v1055
    %v3938 = vunpack.c.l.b16 %v1056
    %v3939 = vunpack.c.l.b16 %v1057
    %v3940 = vunpack.c.l.b16 %v1058
    %v3941 = vunpack.c.l.b16 %v1059
    %v3942 = vunpack.c.l.b16 %v1060
    %v3943 = vunpack.c.l.b16 %v1061
    %v3944 = vunpack.c.l.b16 %v1062
    %v3945 = vunpack.c.l.b16 %v1063
    %v3946 = vunpack.c.l.b16 %v1064
    %v3947 = vunpack.c.l.b16 %v1065
    %v3948 = vunpack.c.l.b16 %v1066
    %v3949 = vunpack.c.l.b16 %v1067
    %v3950 = vunpack.c.l.b16 %v1068
    %v3951 = vunpack.c.l.b16 %v1069
    %v3952 = vunpack.c.l.b16 %v1070
    %v3953 = vunpack.c.l.b16 %v1071
    %v3954 = vunpack.c.l.b16 %v1072
    %v3955 = vunpack.c.l.b16 %v1073
    %v3956 = vunpack.c.l.b16 %v1074
    %v3957 = vunpack.c.l.b16 %v1075
    %v3958 = vunpack.c.l.b16 %v1076
    %v3959 = vunpack.c.l.b16 %v1077
    %v3960 = vunpack.c.l.b16 %v1078
    %v3961 = vunpack.c.l.b16 %v1079
    %v3962 = vunpack.c.l.b16 %v1080
    %v3963 = vunpack.c.l.b16 %v1081
    %v3964 = vunpack.c.l.b16 %v1082
    %v3965 = vunpack.c.l.b16 %v1083
    %v3966 = vunpack.c.l.b16 %v1084
    %v3967 = vunpack.c.l.b16 %v1085
    %v3968 = vunpack.c.l.b16 %v1086
    %v3969 = vunpack.c.l.b16 %v1087
    %v3970 = vunpack.c.l.b16 %v1088
    %v3971 = vunpack.c.l.b16 %v1089
    %v3972 = vunpack.c.l.b16 %v1090
    %v3973 = vunpack.c.l.b16 %v1091
    %v3974 = vunpack.c.l.b16 %v1092
    %v3975 = vunpack.c.l.b16 %v1093
    %v3976 = vunpack.c.l.b16 %v1094
    %v3977 = vunpack.c.l.b16 %v1095
    %v3978 = vunpack.c.l.b16 %v1096
    %v3979 = vunpack.c.l.b16 %v1097
    %v3980 = vunpack.c.l.b16 %v1098
    %v3981 = vunpack.c.l.b16 %v1099
    %v3982 = vunpack.c.l.b16 %v1100
    %v3983 = vunpack.c.l.b16 %v1101
    %v3984 = vpack.c.b16 %v3889, %v3888
    %v3985 = vpack.c.b16 %v3890, %v3890
    %v3986 = vpack.c.b16 %v3892, %v3891
    %v3987 = vpack.c.b16 %v3893, %v3893
    %v3988 = vpack.c.b16 %v3895, %v3894
    %v3989 = vpack.c.b16 %v3896, %v3896
    %v3990 = vpack.c.b16 %v3898, %v3897
    %v3991 = vpack.c.b16 %v3899, %v3899
    %v3992 = vpack.c.b16 %v3901, %v3900
    %v3993 = vpack.c.b16 %v3902, %v3902
    %v3994 = vpack.c.b16 %v3904, %v3903
    %v3995 = vpack.c.b16 %v3905, %v3905
    %v3996 = vpack.c.b16 %v3907, %v3906
    %v3997 = vpack.c.b16 %v3908, %v3908
    %v3998 = vpack.c.b16 %v3910, %v3909
    %v3999 = vpack.c.b16 %v3911, %v3911
    %v4000 = vpack.c.b16 %v3913, %v3912
    %v4001 = vpack.c.b16 %v3914, %v3914
    %v4002 = vpack.c.b16 %v3916, %v3915
    %v4003 = vpack.c.b16 %v3917, %v3917
    %v4004 = vpack.c.b16 %v3919, %v3918
    %v4005 = vpack.c.b16 %v3920, %v3920
    %v4006 = vpack.c.b16 %v3922, %v3921
    %v4007 = vpack.c.b16 %v3923, %v3923
    %v4008 = vpack.c.b16 %v3925, %v3924
    %v4009 = vpack.c.b16 %v3926, %v3926
    %v4010 = vpack.c.b16 %v3928, %v3927
    %v4011 = vpack.c.b16 %v3929, %v3929
    %v4012 = vpack.c.b16 %v3931, %v3930
    %v4013 = vpack.c.b16 %v3932, %v3932
    %v4014 = vpack.c.b16 %v3934, %v3933
    %v4015 = vpack.c.b16 %v3935, %v3935
    %v4016 = vpack.c.b16 %v3937, %v3936
    %v4017 = vpack.c.b16 %v3938, %v3938
    %v4018 = vpack.c.b16 %v3940, %v3939
    %v4019 = vpack.c.b16 %v3941, %v3941
    %v4020 = vpack.c.b16 %v3943, %v3942
    %v4021 = vpack.c.b16 %v3944, %v3944
    %v4022 = vpack.c.b16 %v3946, %v3945
    %v4023 = vpack.c.b16 %v3947, %v3947
    %v4024 = vpack.c.b16 %v3949, %v3948
    %v4025 = vpack.c.b16 %v3950, %v3950
    %v4026 = vpack.c.b16 %v3952, %v3951
    %v4027 = vpack.c.b16 %v3953, %v3953
    %v4028 = vpack.c.b16 %v3955, %v3954
    %v4029 = vpack.c.b16 %v3956, %v3956
    %v4030 = vpack.c.b16 %v3958, %v3957
    %v4031 = vpack.c.b16 %v3959, %v3959
    %v4032 = vpack.c.b16 %v3961, %v3960
    %v4033 = vpack.c.b16 %v3962, %v3962
    %v4034 = vpack.c.b16 %v3964, %v3963
    %v4035 = vpack.c.b16 %v3965, %v3965
    %v4036 = vpack.c.b16 %v3967, %v3966
    %v4037 = vpack.c.b16 %v3968, %v3968
    %v4038 = vpack.c.b16 %v3970, %v3969
    %v4039 = vpack.c.b16 %v3971, %v3971
    %v4040 = vpack.c.b16 %v3973, %v3972
    %v4041 = vpack.c.b16 %v3974, %v3974
    %v4042 = vpack.c.b16 %v3976, %v3975
    %v4043 = vpack.c.b16 %v3977, %v3977
    %v4044 = vpack.c.b16 %v3979, %v3978
    %v4045 = vpack.c.b16 %v3980, %v3980
    %v4046 = vpack.c.b16 %v3982, %v3981
    %v4047 = vpack.c.b16 %v3983, %v3983
    %4048 = vrot.lane.b32.xlu0 %v3984, 18
    %v4049 = vpop.permute.xlu0 %4048
    %4050 = vrot.lane.b32.xlu0 %v3985, 18
    %v4051 = vpop.permute.xlu0 %4050
    %4052 = vrot.lane.b32.xlu0 %v3986, 18
    %v4053 = vpop.permute.xlu0 %4052
    %4054 = vrot.lane.b32.xlu0 %v3987, 18
    %v4055 = vpop.permute.xlu0 %4054
    %4056 = vrot.lane.b32.xlu0 %v3988, 18
    %v4057 = vpop.permute.xlu0 %4056
    %4058 = vrot.lane.b32.xlu0 %v3989, 18
    %v4059 = vpop.permute.xlu0 %4058
    %4060 = vrot.lane.b32.xlu0 %v3990, 18
    %v4061 = vpop.permute.xlu0 %4060
    %4062 = vrot.lane.b32.xlu0 %v3991, 18
    %v4063 = vpop.permute.xlu0 %4062
    %4064 = vrot.lane.b32.xlu0 %v3992, 18
    %v4065 = vpop.permute.xlu0 %4064
    %4066 = vrot.lane.b32.xlu0 %v3993, 18
    %v4067 = vpop.permute.xlu0 %4066
    %4068 = vrot.lane.b32.xlu0 %v3994, 18
    %v4069 = vpop.permute.xlu0 %4068
    %4070 = vrot.lane.b32.xlu0 %v3995, 18
    %v4071 = vpop.permute.xlu0 %4070
    %4072 = vrot.lane.b32.xlu0 %v3996, 18
    %v4073 = vpop.permute.xlu0 %4072
    %4074 = vrot.lane.b32.xlu0 %v3997, 18
    %v4075 = vpop.permute.xlu0 %4074
    %4076 = vrot.lane.b32.xlu0 %v3998, 18
    %v4077 = vpop.permute.xlu0 %4076
    %4078 = vrot.lane.b32.xlu0 %v3999, 18
    %v4079 = vpop.permute.xlu0 %4078
    %4080 = vrot.lane.b32.xlu0 %v4000, 18
    %v4081 = vpop.permute.xlu0 %4080
    %4082 = vrot.lane.b32.xlu0 %v4001, 18
    %v4083 = vpop.permute.xlu0 %4082
    %4084 = vrot.lane.b32.xlu0 %v4002, 18
    %v4085 = vpop.permute.xlu0 %4084
    %4086 = vrot.lane.b32.xlu0 %v4003, 18
    %v4087 = vpop.permute.xlu0 %4086
    %4088 = vrot.lane.b32.xlu0 %v4004, 18
    %v4089 = vpop.permute.xlu0 %4088
    %4090 = vrot.lane.b32.xlu0 %v4005, 18
    %v4091 = vpop.permute.xlu0 %4090
    %4092 = vrot.lane.b32.xlu0 %v4006, 18
    %v4093 = vpop.permute.xlu0 %4092
    %4094 = vrot.lane.b32.xlu0 %v4007, 18
    %v4095 = vpop.permute.xlu0 %4094
    %4096 = vrot.lane.b32.xlu0 %v4008, 18
    %v4097 = vpop.permute.xlu0 %4096
    %4098 = vrot.lane.b32.xlu0 %v4009, 18
    %v4099 = vpop.permute.xlu0 %4098
    %4100 = vrot.lane.b32.xlu0 %v4010, 18
    %v4101 = vpop.permute.xlu0 %4100
    %4102 = vrot.lane.b32.xlu0 %v4011, 18
    %v4103 = vpop.permute.xlu0 %4102
    %4104 = vrot.lane.b32.xlu0 %v4012, 18
    %v4105 = vpop.permute.xlu0 %4104
    %4106 = vrot.lane.b32.xlu0 %v4013, 18
    %v4107 = vpop.permute.xlu0 %4106
    %4108 = vrot.lane.b32.xlu0 %v4014, 18
    %v4109 = vpop.permute.xlu0 %4108
    %4110 = vrot.lane.b32.xlu0 %v4015, 18
    %v4111 = vpop.permute.xlu0 %4110
    %4112 = vrot.lane.b32.xlu0 %v4016, 18
    %v4113 = vpop.permute.xlu0 %4112
    %4114 = vrot.lane.b32.xlu0 %v4017, 18
    %v4115 = vpop.permute.xlu0 %4114
    %4116 = vrot.lane.b32.xlu0 %v4018, 18
    %v4117 = vpop.permute.xlu0 %4116
    %4118 = vrot.lane.b32.xlu0 %v4019, 18
    %v4119 = vpop.permute.xlu0 %4118
    %4120 = vrot.lane.b32.xlu0 %v4020, 18
    %v4121 = vpop.permute.xlu0 %4120
    %4122 = vrot.lane.b32.xlu0 %v4021, 18
    %v4123 = vpop.permute.xlu0 %4122
    %4124 = vrot.lane.b32.xlu0 %v4022, 18
    %v4125 = vpop.permute.xlu0 %4124
    %4126 = vrot.lane.b32.xlu0 %v4023, 18
    %v4127 = vpop.permute.xlu0 %4126
    %4128 = vrot.lane.b32.xlu0 %v4024, 18
    %v4129 = vpop.permute.xlu0 %4128
    %4130 = vrot.lane.b32.xlu0 %v4025, 18
    %v4131 = vpop.permute.xlu0 %4130
    %4132 = vrot.lane.b32.xlu0 %v4026, 18
    %v4133 = vpop.permute.xlu0 %4132
    %4134 = vrot.lane.b32.xlu0 %v4027, 18
    %v4135 = vpop.permute.xlu0 %4134
    %4136 = vrot.lane.b32.xlu0 %v4028, 18
    %v4137 = vpop.permute.xlu0 %4136
    %4138 = vrot.lane.b32.xlu0 %v4029, 18
    %v4139 = vpop.permute.xlu0 %4138
    %4140 = vrot.lane.b32.xlu0 %v4030, 18
    %v4141 = vpop.permute.xlu0 %4140
    %4142 = vrot.lane.b32.xlu0 %v4031, 18
    %v4143 = vpop.permute.xlu0 %4142
    %4144 = vrot.lane.b32.xlu0 %v4032, 18
    %v4145 = vpop.permute.xlu0 %4144
    %4146 = vrot.lane.b32.xlu0 %v4033, 18
    %v4147 = vpop.permute.xlu0 %4146
    %4148 = vrot.lane.b32.xlu0 %v4034, 18
    %v4149 = vpop.permute.xlu0 %4148
    %4150 = vrot.lane.b32.xlu0 %v4035, 18
    %v4151 = vpop.permute.xlu0 %4150
    %4152 = vrot.lane.b32.xlu0 %v4036, 18
    %v4153 = vpop.permute.xlu0 %4152
    %4154 = vrot.lane.b32.xlu0 %v4037, 18
    %v4155 = vpop.permute.xlu0 %4154
    %4156 = vrot.lane.b32.xlu0 %v4038, 18
    %v4157 = vpop.permute.xlu0 %4156
    %4158 = vrot.lane.b32.xlu0 %v4039, 18
    %v4159 = vpop.permute.xlu0 %4158
    %4160 = vrot.lane.b32.xlu0 %v4040, 18
    %v4161 = vpop.permute.xlu0 %4160
    %4162 = vrot.lane.b32.xlu0 %v4041, 18
    %v4163 = vpop.permute.xlu0 %4162
    %4164 = vrot.lane.b32.xlu0 %v4042, 18
    %v4165 = vpop.permute.xlu0 %4164
    %4166 = vrot.lane.b32.xlu0 %v4043, 18
    %v4167 = vpop.permute.xlu0 %4166
    %4168 = vrot.lane.b32.xlu0 %v4044, 18
    %v4169 = vpop.permute.xlu0 %4168
    %4170 = vrot.lane.b32.xlu0 %v4045, 18
    %v4171 = vpop.permute.xlu0 %4170
    %4172 = vrot.lane.b32.xlu0 %v4046, 18
    %v4173 = vpop.permute.xlu0 %4172
    %4174 = vrot.lane.b32.xlu0 %v4047, 18
    %v4175 = vpop.permute.xlu0 %4174
    %v4208 = vunpack.c.l.b16 %v1102
    %v4209 = vunpack.c.l.b16 %v1103
    %v4210 = vunpack.c.l.b16 %v1104
    %v4211 = vunpack.c.l.b16 %v1105
    %v4212 = vunpack.c.l.b16 %v1106
    %v4213 = vunpack.c.l.b16 %v1107
    %v4214 = vunpack.c.l.b16 %v1108
    %v4215 = vunpack.c.l.b16 %v1109
    %v4216 = vunpack.c.l.b16 %v1110
    %v4217 = vunpack.c.l.b16 %v1111
    %v4218 = vunpack.c.l.b16 %v1112
    %v4219 = vunpack.c.l.b16 %v1113
    %v4220 = vunpack.c.l.b16 %v1114
    %v4221 = vunpack.c.l.b16 %v1115
    %v4222 = vunpack.c.l.b16 %v1116
    %v4223 = vunpack.c.l.b16 %v1117
    %v4224 = vunpack.c.l.b16 %v1118
    %v4225 = vunpack.c.l.b16 %v1119
    %v4226 = vunpack.c.l.b16 %v1120
    %v4227 = vunpack.c.l.b16 %v1121
    %v4228 = vunpack.c.l.b16 %v1122
    %v4229 = vunpack.c.l.b16 %v1123
    %v4230 = vunpack.c.l.b16 %v1124
    %v4231 = vunpack.c.l.b16 %v1125
    %v4232 = vunpack.c.l.b16 %v1126
    %v4233 = vunpack.c.l.b16 %v1127
    %v4234 = vunpack.c.l.b16 %v1128
    %v4235 = vunpack.c.l.b16 %v1129
    %v4236 = vunpack.c.l.b16 %v1130
    %v4237 = vunpack.c.l.b16 %v1131
    %v4238 = vunpack.c.l.b16 %v1132
    %v4239 = vunpack.c.l.b16 %v1133
    %v4240 = vpack.c.b16 %v3889, %v4208
    %v4241 = vpack.c.b16 %v3892, %v4209
    %v4242 = vpack.c.b16 %v3895, %v4210
    %v4243 = vpack.c.b16 %v3898, %v4211
    %v4244 = vpack.c.b16 %v3901, %v4212
    %v4245 = vpack.c.b16 %v3904, %v4213
    %v4246 = vpack.c.b16 %v3907, %v4214
    %v4247 = vpack.c.b16 %v3910, %v4215
    %v4248 = vpack.c.b16 %v3913, %v4216
    %v4249 = vpack.c.b16 %v3916, %v4217
    %v4250 = vpack.c.b16 %v3919, %v4218
    %v4251 = vpack.c.b16 %v3922, %v4219
    %v4252 = vpack.c.b16 %v3925, %v4220
    %v4253 = vpack.c.b16 %v3928, %v4221
    %v4254 = vpack.c.b16 %v3931, %v4222
    %v4255 = vpack.c.b16 %v3934, %v4223
    %v4256 = vpack.c.b16 %v3937, %v4224
    %v4257 = vpack.c.b16 %v3940, %v4225
    %v4258 = vpack.c.b16 %v3943, %v4226
    %v4259 = vpack.c.b16 %v3946, %v4227
    %v4260 = vpack.c.b16 %v3949, %v4228
    %v4261 = vpack.c.b16 %v3952, %v4229
    %v4262 = vpack.c.b16 %v3955, %v4230
    %v4263 = vpack.c.b16 %v3958, %v4231
    %v4264 = vpack.c.b16 %v3961, %v4232
    %v4265 = vpack.c.b16 %v3964, %v4233
    %v4266 = vpack.c.b16 %v3967, %v4234
    %v4267 = vpack.c.b16 %v3970, %v4235
    %v4268 = vpack.c.b16 %v3973, %v4236
    %v4269 = vpack.c.b16 %v3976, %v4237
    %v4270 = vpack.c.b16 %v3979, %v4238
    %v4271 = vpack.c.b16 %v3982, %v4239
    %v4273 = vshrl.u32 %v4240, 16
    %v4275 = vshll.u32 %v4240, 16
    %v4277 = vrot.slane %v4275, 1
    %v4278 = vor.u32 %v4273, %v4277
    %v4280 = vshll.u32 %v3985, 16
    %v4282 = vrot.slane %v4280, 1
    %v4283 = vsel %vm1518, %v4278, %v4282
    %v4284 = vshrl.u32 %v3985, 16
    %v4287 = vshrl.u32 %v4241, 16
    %v4289 = vshll.u32 %v4241, 16
    %v4291 = vrot.slane %v4289, 1
    %v4292 = vor.u32 %v4287, %v4291
    %v4294 = vshll.u32 %v3987, 16
    %v4296 = vrot.slane %v4294, 1
    %v4297 = vsel %vm1518, %v4292, %v4296
    %v4298 = vshrl.u32 %v3987, 16
    %v4301 = vshrl.u32 %v4242, 16
    %v4303 = vshll.u32 %v4242, 16
    %v4305 = vrot.slane %v4303, 1
    %v4306 = vor.u32 %v4301, %v4305
    %v4308 = vshll.u32 %v3989, 16
    %v4310 = vrot.slane %v4308, 1
    %v4311 = vsel %vm1518, %v4306, %v4310
    %v4312 = vshrl.u32 %v3989, 16
    %v4315 = vshrl.u32 %v4243, 16
    %v4317 = vshll.u32 %v4243, 16
    %v4319 = vrot.slane %v4317, 1
    %v4320 = vor.u32 %v4315, %v4319
    %v4322 = vshll.u32 %v3991, 16
    %v4324 = vrot.slane %v4322, 1
    %v4325 = vsel %vm1518, %v4320, %v4324
    %v4326 = vshrl.u32 %v3991, 16
    %v4329 = vshrl.u32 %v4244, 16
    %v4331 = vshll.u32 %v4244, 16
    %v4333 = vrot.slane %v4331, 1
    %v4334 = vor.u32 %v4329, %v4333
    %v4336 = vshll.u32 %v3993, 16
    %v4338 = vrot.slane %v4336, 1
    %v4339 = vsel %vm1518, %v4334, %v4338
    %v4340 = vshrl.u32 %v3993, 16
    %v4343 = vshrl.u32 %v4245, 16
    %v4345 = vshll.u32 %v4245, 16
    %v4347 = vrot.slane %v4345, 1
    %v4348 = vor.u32 %v4343, %v4347
    %v4350 = vshll.u32 %v3995, 16
    %v4352 = vrot.slane %v4350, 1
    %v4353 = vsel %vm1518, %v4348, %v4352
    %v4354 = vshrl.u32 %v3995, 16
    %v4357 = vshrl.u32 %v4246, 16
    %v4359 = vshll.u32 %v4246, 16
    %v4361 = vrot.slane %v4359, 1
    %v4362 = vor.u32 %v4357, %v4361
    %v4364 = vshll.u32 %v3997, 16
    %v4366 = vrot.slane %v4364, 1
    %v4367 = vsel %vm1518, %v4362, %v4366
    %v4368 = vshrl.u32 %v3997, 16
    %v4371 = vshrl.u32 %v4247, 16
    %v4373 = vshll.u32 %v4247, 16
    %v4375 = vrot.slane %v4373, 1
    %v4376 = vor.u32 %v4371, %v4375
    %v4378 = vshll.u32 %v3999, 16
    %v4380 = vrot.slane %v4378, 1
    %v4381 = vsel %vm1518, %v4376, %v4380
    %v4382 = vshrl.u32 %v3999, 16
    %v4385 = vshrl.u32 %v4248, 16
    %v4387 = vshll.u32 %v4248, 16
    %v4389 = vrot.slane %v4387, 1
    %v4390 = vor.u32 %v4385, %v4389
    %v4392 = vshll.u32 %v4001, 16
    %v4394 = vrot.slane %v4392, 1
    %v4395 = vsel %vm1518, %v4390, %v4394
    %v4396 = vshrl.u32 %v4001, 16
    %v4399 = vshrl.u32 %v4249, 16
    %v4401 = vshll.u32 %v4249, 16
    %v4403 = vrot.slane %v4401, 1
    %v4404 = vor.u32 %v4399, %v4403
    %v4406 = vshll.u32 %v4003, 16
    %v4408 = vrot.slane %v4406, 1
    %v4409 = vsel %vm1518, %v4404, %v4408
    %v4410 = vshrl.u32 %v4003, 16
    %v4413 = vshrl.u32 %v4250, 16
    %v4415 = vshll.u32 %v4250, 16
    %v4417 = vrot.slane %v4415, 1
    %v4418 = vor.u32 %v4413, %v4417
    %v4420 = vshll.u32 %v4005, 16
    %v4422 = vrot.slane %v4420, 1
    %v4423 = vsel %vm1518, %v4418, %v4422
    %v4424 = vshrl.u32 %v4005, 16
    %v4427 = vshrl.u32 %v4251, 16
    %v4429 = vshll.u32 %v4251, 16
    %v4431 = vrot.slane %v4429, 1
    %v4432 = vor.u32 %v4427, %v4431
    %v4434 = vshll.u32 %v4007, 16
    %v4436 = vrot.slane %v4434, 1
    %v4437 = vsel %vm1518, %v4432, %v4436
    %v4438 = vshrl.u32 %v4007, 16
    %v4441 = vshrl.u32 %v4252, 16
    %v4443 = vshll.u32 %v4252, 16
    %v4445 = vrot.slane %v4443, 1
    %v4446 = vor.u32 %v4441, %v4445
    %v4448 = vshll.u32 %v4009, 16
    %v4450 = vrot.slane %v4448, 1
    %v4451 = vsel %vm1518, %v4446, %v4450
    %v4452 = vshrl.u32 %v4009, 16
    %v4455 = vshrl.u32 %v4253, 16
    %v4457 = vshll.u32 %v4253, 16
    %v4459 = vrot.slane %v4457, 1
    %v4460 = vor.u32 %v4455, %v4459
    %v4462 = vshll.u32 %v4011, 16
    %v4464 = vrot.slane %v4462, 1
    %v4465 = vsel %vm1518, %v4460, %v4464
    %v4466 = vshrl.u32 %v4011, 16
    %v4469 = vshrl.u32 %v4254, 16
    %v4471 = vshll.u32 %v4254, 16
    %v4473 = vrot.slane %v4471, 1
    %v4474 = vor.u32 %v4469, %v4473
    %v4476 = vshll.u32 %v4013, 16
    %v4478 = vrot.slane %v4476, 1
    %v4479 = vsel %vm1518, %v4474, %v4478
    %v4480 = vshrl.u32 %v4013, 16
    %v4483 = vshrl.u32 %v4255, 16
    %v4485 = vshll.u32 %v4255, 16
    %v4487 = vrot.slane %v4485, 1
    %v4488 = vor.u32 %v4483, %v4487
    %v4490 = vshll.u32 %v4015, 16
    %v4492 = vrot.slane %v4490, 1
    %v4493 = vsel %vm1518, %v4488, %v4492
    %v4494 = vshrl.u32 %v4015, 16
    %v4497 = vshrl.u32 %v4256, 16
    %v4499 = vshll.u32 %v4256, 16
    %v4501 = vrot.slane %v4499, 1
    %v4502 = vor.u32 %v4497, %v4501
    %v4504 = vshll.u32 %v4017, 16
    %v4506 = vrot.slane %v4504, 1
    %v4507 = vsel %vm1518, %v4502, %v4506
    %v4508 = vshrl.u32 %v4017, 16
    %v4511 = vshrl.u32 %v4257, 16
    %v4513 = vshll.u32 %v4257, 16
    %v4515 = vrot.slane %v4513, 1
    %v4516 = vor.u32 %v4511, %v4515
    %v4518 = vshll.u32 %v4019, 16
    %v4520 = vrot.slane %v4518, 1
    %v4521 = vsel %vm1518, %v4516, %v4520
    %v4522 = vshrl.u32 %v4019, 16
    %v4525 = vshrl.u32 %v4258, 16
    %v4527 = vshll.u32 %v4258, 16
    %v4529 = vrot.slane %v4527, 1
    %v4530 = vor.u32 %v4525, %v4529
    %v4532 = vshll.u32 %v4021, 16
    %v4534 = vrot.slane %v4532, 1
    %v4535 = vsel %vm1518, %v4530, %v4534
    %v4536 = vshrl.u32 %v4021, 16
    %v4539 = vshrl.u32 %v4259, 16
    %v4541 = vshll.u32 %v4259, 16
    %v4543 = vrot.slane %v4541, 1
    %v4544 = vor.u32 %v4539, %v4543
    %v4546 = vshll.u32 %v4023, 16
    %v4548 = vrot.slane %v4546, 1
    %v4549 = vsel %vm1518, %v4544, %v4548
    %v4550 = vshrl.u32 %v4023, 16
    %v4553 = vshrl.u32 %v4260, 16
    %v4555 = vshll.u32 %v4260, 16
    %v4557 = vrot.slane %v4555, 1
    %v4558 = vor.u32 %v4553, %v4557
    %v4560 = vshll.u32 %v4025, 16
    %v4562 = vrot.slane %v4560, 1
    %v4563 = vsel %vm1518, %v4558, %v4562
    %v4564 = vshrl.u32 %v4025, 16
    %v4567 = vshrl.u32 %v4261, 16
    %v4569 = vshll.u32 %v4261, 16
    %v4571 = vrot.slane %v4569, 1
    %v4572 = vor.u32 %v4567, %v4571
    %v4574 = vshll.u32 %v4027, 16
    %v4576 = vrot.slane %v4574, 1
    %v4577 = vsel %vm1518, %v4572, %v4576
    %v4578 = vshrl.u32 %v4027, 16
    %v4581 = vshrl.u32 %v4262, 16
    %v4583 = vshll.u32 %v4262, 16
    %v4585 = vrot.slane %v4583, 1
    %v4586 = vor.u32 %v4581, %v4585
    %v4588 = vshll.u32 %v4029, 16
    %v4590 = vrot.slane %v4588, 1
    %v4591 = vsel %vm1518, %v4586, %v4590
    %v4592 = vshrl.u32 %v4029, 16
    %v4595 = vshrl.u32 %v4263, 16
    %v4597 = vshll.u32 %v4263, 16
    %v4599 = vrot.slane %v4597, 1
    %v4600 = vor.u32 %v4595, %v4599
    %v4602 = vshll.u32 %v4031, 16
    %v4604 = vrot.slane %v4602, 1
    %v4605 = vsel %vm1518, %v4600, %v4604
    %v4606 = vshrl.u32 %v4031, 16
    %v4609 = vshrl.u32 %v4264, 16
    %v4611 = vshll.u32 %v4264, 16
    %v4613 = vrot.slane %v4611, 1
    %v4614 = vor.u32 %v4609, %v4613
    %v4616 = vshll.u32 %v4033, 16
    %v4618 = vrot.slane %v4616, 1
    %v4619 = vsel %vm1518, %v4614, %v4618
    %v4620 = vshrl.u32 %v4033, 16
    %v4623 = vshrl.u32 %v4265, 16
    %v4625 = vshll.u32 %v4265, 16
    %v4627 = vrot.slane %v4625, 1
    %v4628 = vor.u32 %v4623, %v4627
    %v4630 = vshll.u32 %v4035, 16
    %v4632 = vrot.slane %v4630, 1
    %v4633 = vsel %vm1518, %v4628, %v4632
    %v4634 = vshrl.u32 %v4035, 16
    %v4637 = vshrl.u32 %v4266, 16
    %v4639 = vshll.u32 %v4266, 16
    %v4641 = vrot.slane %v4639, 1
    %v4642 = vor.u32 %v4637, %v4641
    %v4644 = vshll.u32 %v4037, 16
    %v4646 = vrot.slane %v4644, 1
    %v4647 = vsel %vm1518, %v4642, %v4646
    %v4648 = vshrl.u32 %v4037, 16
    %v4651 = vshrl.u32 %v4267, 16
    %v4653 = vshll.u32 %v4267, 16
    %v4655 = vrot.slane %v4653, 1
    %v4656 = vor.u32 %v4651, %v4655
    %v4658 = vshll.u32 %v4039, 16
    %v4660 = vrot.slane %v4658, 1
    %v4661 = vsel %vm1518, %v4656, %v4660
    %v4662 = vshrl.u32 %v4039, 16
    %v4665 = vshrl.u32 %v4268, 16
    %v4667 = vshll.u32 %v4268, 16
    %v4669 = vrot.slane %v4667, 1
    %v4670 = vor.u32 %v4665, %v4669
    %v4672 = vshll.u32 %v4041, 16
    %v4674 = vrot.slane %v4672, 1
    %v4675 = vsel %vm1518, %v4670, %v4674
    %v4676 = vshrl.u32 %v4041, 16
    %v4679 = vshrl.u32 %v4269, 16
    %v4681 = vshll.u32 %v4269, 16
    %v4683 = vrot.slane %v4681, 1
    %v4684 = vor.u32 %v4679, %v4683
    %v4686 = vshll.u32 %v4043, 16
    %v4688 = vrot.slane %v4686, 1
    %v4689 = vsel %vm1518, %v4684, %v4688
    %v4690 = vshrl.u32 %v4043, 16
    %v4693 = vshrl.u32 %v4270, 16
    %v4695 = vshll.u32 %v4270, 16
    %v4697 = vrot.slane %v4695, 1
    %v4698 = vor.u32 %v4693, %v4697
    %v4700 = vshll.u32 %v4045, 16
    %v4702 = vrot.slane %v4700, 1
    %v4703 = vsel %vm1518, %v4698, %v4702
    %v4704 = vshrl.u32 %v4045, 16
    %v4707 = vshrl.u32 %v4271, 16
    %v4709 = vshll.u32 %v4271, 16
    %v4711 = vrot.slane %v4709, 1
    %v4712 = vor.u32 %v4707, %v4711
    %v4714 = vshll.u32 %v4047, 16
    %v4716 = vrot.slane %v4714, 1
    %v4717 = vsel %vm1518, %v4712, %v4716
    %v4718 = vshrl.u32 %v4047, 16
    %4720 = vrot.lane.b32.xlu0 %v4283, 21
    %v4721 = vpop.permute.xlu0 %4720
    %4722 = vrot.lane.b32.xlu0 %v4284, 21
    %v4723 = vpop.permute.xlu0 %4722
    %4724 = vrot.lane.b32.xlu0 %v4297, 21
    %v4725 = vpop.permute.xlu0 %4724
    %4726 = vrot.lane.b32.xlu0 %v4298, 21
    %v4727 = vpop.permute.xlu0 %4726
    %4728 = vrot.lane.b32.xlu0 %v4311, 21
    %v4729 = vpop.permute.xlu0 %4728
    %4730 = vrot.lane.b32.xlu0 %v4312, 21
    %v4731 = vpop.permute.xlu0 %4730
    %4732 = vrot.lane.b32.xlu0 %v4325, 21
    %v4733 = vpop.permute.xlu0 %4732
    %4734 = vrot.lane.b32.xlu0 %v4326, 21
    %v4735 = vpop.permute.xlu0 %4734
    %4736 = vrot.lane.b32.xlu0 %v4339, 21
    %v4737 = vpop.permute.xlu0 %4736
    %4738 = vrot.lane.b32.xlu0 %v4340, 21
    %v4739 = vpop.permute.xlu0 %4738
    %4740 = vrot.lane.b32.xlu0 %v4353, 21
    %v4741 = vpop.permute.xlu0 %4740
    %4742 = vrot.lane.b32.xlu0 %v4354, 21
    %v4743 = vpop.permute.xlu0 %4742
    %4744 = vrot.lane.b32.xlu0 %v4367, 21
    %v4745 = vpop.permute.xlu0 %4744
    %4746 = vrot.lane.b32.xlu0 %v4368, 21
    %v4747 = vpop.permute.xlu0 %4746
    %4748 = vrot.lane.b32.xlu0 %v4381, 21
    %v4749 = vpop.permute.xlu0 %4748
    %4750 = vrot.lane.b32.xlu0 %v4382, 21
    %v4751 = vpop.permute.xlu0 %4750
    %4752 = vrot.lane.b32.xlu0 %v4395, 21
    %v4753 = vpop.permute.xlu0 %4752
    %4754 = vrot.lane.b32.xlu0 %v4396, 21
    %v4755 = vpop.permute.xlu0 %4754
    %4756 = vrot.lane.b32.xlu0 %v4409, 21
    %v4757 = vpop.permute.xlu0 %4756
    %4758 = vrot.lane.b32.xlu0 %v4410, 21
    %v4759 = vpop.permute.xlu0 %4758
    %4760 = vrot.lane.b32.xlu0 %v4423, 21
    %v4761 = vpop.permute.xlu0 %4760
    %4762 = vrot.lane.b32.xlu0 %v4424, 21
    %v4763 = vpop.permute.xlu0 %4762
    %4764 = vrot.lane.b32.xlu0 %v4437, 21
    %v4765 = vpop.permute.xlu0 %4764
    %4766 = vrot.lane.b32.xlu0 %v4438, 21
    %v4767 = vpop.permute.xlu0 %4766
    %4768 = vrot.lane.b32.xlu0 %v4451, 21
    %v4769 = vpop.permute.xlu0 %4768
    %4770 = vrot.lane.b32.xlu0 %v4452, 21
    %v4771 = vpop.permute.xlu0 %4770
    %4772 = vrot.lane.b32.xlu0 %v4465, 21
    %v4773 = vpop.permute.xlu0 %4772
    %4774 = vrot.lane.b32.xlu0 %v4466, 21
    %v4775 = vpop.permute.xlu0 %4774
    %4776 = vrot.lane.b32.xlu0 %v4479, 21
    %v4777 = vpop.permute.xlu0 %4776
    %4778 = vrot.lane.b32.xlu0 %v4480, 21
    %v4779 = vpop.permute.xlu0 %4778
    %4780 = vrot.lane.b32.xlu0 %v4493, 21
    %v4781 = vpop.permute.xlu0 %4780
    %4782 = vrot.lane.b32.xlu0 %v4494, 21
    %v4783 = vpop.permute.xlu0 %4782
    %4784 = vrot.lane.b32.xlu0 %v4507, 21
    %v4785 = vpop.permute.xlu0 %4784
    %4786 = vrot.lane.b32.xlu0 %v4508, 21
    %v4787 = vpop.permute.xlu0 %4786
    %4788 = vrot.lane.b32.xlu0 %v4521, 21
    %v4789 = vpop.permute.xlu0 %4788
    %4790 = vrot.lane.b32.xlu0 %v4522, 21
    %v4791 = vpop.permute.xlu0 %4790
    %4792 = vrot.lane.b32.xlu0 %v4535, 21
    %v4793 = vpop.permute.xlu0 %4792
    %4794 = vrot.lane.b32.xlu0 %v4536, 21
    %v4795 = vpop.permute.xlu0 %4794
    %4796 = vrot.lane.b32.xlu0 %v4549, 21
    %v4797 = vpop.permute.xlu0 %4796
    %4798 = vrot.lane.b32.xlu0 %v4550, 21
    %v4799 = vpop.permute.xlu0 %4798
    %4800 = vrot.lane.b32.xlu0 %v4563, 21
    %v4801 = vpop.permute.xlu0 %4800
    %4802 = vrot.lane.b32.xlu0 %v4564, 21
    %v4803 = vpop.permute.xlu0 %4802
    %4804 = vrot.lane.b32.xlu0 %v4577, 21
    %v4805 = vpop.permute.xlu0 %4804
    %4806 = vrot.lane.b32.xlu0 %v4578, 21
    %v4807 = vpop.permute.xlu0 %4806
    %4808 = vrot.lane.b32.xlu0 %v4591, 21
    %v4809 = vpop.permute.xlu0 %4808
    %4810 = vrot.lane.b32.xlu0 %v4592, 21
    %v4811 = vpop.permute.xlu0 %4810
    %4812 = vrot.lane.b32.xlu0 %v4605, 21
    %v4813 = vpop.permute.xlu0 %4812
    %4814 = vrot.lane.b32.xlu0 %v4606, 21
    %v4815 = vpop.permute.xlu0 %4814
    %4816 = vrot.lane.b32.xlu0 %v4619, 21
    %v4817 = vpop.permute.xlu0 %4816
    %4818 = vrot.lane.b32.xlu0 %v4620, 21
    %v4819 = vpop.permute.xlu0 %4818
    %4820 = vrot.lane.b32.xlu0 %v4633, 21
    %v4821 = vpop.permute.xlu0 %4820
    %4822 = vrot.lane.b32.xlu0 %v4634, 21
    %v4823 = vpop.permute.xlu0 %4822
    %4824 = vrot.lane.b32.xlu0 %v4647, 21
    %v4825 = vpop.permute.xlu0 %4824
    %4826 = vrot.lane.b32.xlu0 %v4648, 21
    %v4827 = vpop.permute.xlu0 %4826
    %4828 = vrot.lane.b32.xlu0 %v4661, 21
    %v4829 = vpop.permute.xlu0 %4828
    %4830 = vrot.lane.b32.xlu0 %v4662, 21
    %v4831 = vpop.permute.xlu0 %4830
    %4832 = vrot.lane.b32.xlu0 %v4675, 21
    %v4833 = vpop.permute.xlu0 %4832
    %4834 = vrot.lane.b32.xlu0 %v4676, 21
    %v4835 = vpop.permute.xlu0 %4834
    %4836 = vrot.lane.b32.xlu0 %v4689, 21
    %v4837 = vpop.permute.xlu0 %4836
    %4838 = vrot.lane.b32.xlu0 %v4690, 21
    %v4839 = vpop.permute.xlu0 %4838
    %4840 = vrot.lane.b32.xlu0 %v4703, 21
    %v4841 = vpop.permute.xlu0 %4840
    %4842 = vrot.lane.b32.xlu0 %v4704, 21
    %v4843 = vpop.permute.xlu0 %4842
    %4844 = vrot.lane.b32.xlu0 %v4717, 21
    %v4845 = vpop.permute.xlu0 %4844
    %4846 = vrot.lane.b32.xlu0 %v4718, 21
    %v4847 = vpop.permute.xlu0 %4846
    %v4880 = vunpack.c.l.b16 %v1134
    %v4881 = vunpack.c.l.b16 %v1135
    %v4882 = vunpack.c.l.b16 %v1136
    %v4883 = vunpack.c.l.b16 %v1137
    %v4884 = vunpack.c.l.b16 %v1138
    %v4885 = vunpack.c.l.b16 %v1139
    %v4886 = vunpack.c.l.b16 %v1140
    %v4887 = vunpack.c.l.b16 %v1141
    %v4888 = vunpack.c.l.b16 %v1142
    %v4889 = vunpack.c.l.b16 %v1143
    %v4890 = vunpack.c.l.b16 %v1144
    %v4891 = vunpack.c.l.b16 %v1145
    %v4892 = vunpack.c.l.b16 %v1146
    %v4893 = vunpack.c.l.b16 %v1147
    %v4894 = vunpack.c.l.b16 %v1148
    %v4895 = vunpack.c.l.b16 %v1149
    %v4896 = vunpack.c.l.b16 %v1150
    %v4897 = vunpack.c.l.b16 %v1151
    %v4898 = vunpack.c.l.b16 %v1152
    %v4899 = vunpack.c.l.b16 %v1153
    %v4900 = vunpack.c.l.b16 %v1154
    %v4901 = vunpack.c.l.b16 %v1155
    %v4902 = vunpack.c.l.b16 %v1156
    %v4903 = vunpack.c.l.b16 %v1157
    %v4904 = vunpack.c.l.b16 %v1158
    %v4905 = vunpack.c.l.b16 %v1159
    %v4906 = vunpack.c.l.b16 %v1160
    %v4907 = vunpack.c.l.b16 %v1161
    %v4908 = vunpack.c.l.b16 %v1162
    %v4909 = vunpack.c.l.b16 %v1163
    %v4910 = vunpack.c.l.b16 %v1164
    %v4911 = vunpack.c.l.b16 %v1165
    %v4912 = vpack.c.b16 %v4880, %v4880
    %v4913 = vpack.c.b16 %v4881, %v4881
    %v4914 = vpack.c.b16 %v4882, %v4882
    %v4915 = vpack.c.b16 %v4883, %v4883
    %v4916 = vpack.c.b16 %v4884, %v4884
    %v4917 = vpack.c.b16 %v4885, %v4885
    %v4918 = vpack.c.b16 %v4886, %v4886
    %v4919 = vpack.c.b16 %v4887, %v4887
    %v4920 = vpack.c.b16 %v4888, %v4888
    %v4921 = vpack.c.b16 %v4889, %v4889
    %v4922 = vpack.c.b16 %v4890, %v4890
    %v4923 = vpack.c.b16 %v4891, %v4891
    %v4924 = vpack.c.b16 %v4892, %v4892
    %v4925 = vpack.c.b16 %v4893, %v4893
    %v4926 = vpack.c.b16 %v4894, %v4894
    %v4927 = vpack.c.b16 %v4895, %v4895
    %v4928 = vpack.c.b16 %v4896, %v4896
    %v4929 = vpack.c.b16 %v4897, %v4897
    %v4930 = vpack.c.b16 %v4898, %v4898
    %v4931 = vpack.c.b16 %v4899, %v4899
    %v4932 = vpack.c.b16 %v4900, %v4900
    %v4933 = vpack.c.b16 %v4901, %v4901
    %v4934 = vpack.c.b16 %v4902, %v4902
    %v4935 = vpack.c.b16 %v4903, %v4903
    %v4936 = vpack.c.b16 %v4904, %v4904
    %v4937 = vpack.c.b16 %v4905, %v4905
    %v4938 = vpack.c.b16 %v4906, %v4906
    %v4939 = vpack.c.b16 %v4907, %v4907
    %v4940 = vpack.c.b16 %v4908, %v4908
    %v4941 = vpack.c.b16 %v4909, %v4909
    %v4942 = vpack.c.b16 %v4910, %v4910
    %v4943 = vpack.c.b16 %v4911, %v4911
    %v4944 = vrot.slane %v4240, 1
    %v4945 = vrot.slane %v4912, 1
    %v4946 = vsel %vm2191, %v4944, %v4945
    %v4947 = vrot.slane %v4241, 1
    %v4948 = vrot.slane %v4913, 1
    %v4949 = vsel %vm2191, %v4947, %v4948
    %v4950 = vrot.slane %v4242, 1
    %v4951 = vrot.slane %v4914, 1
    %v4952 = vsel %vm2191, %v4950, %v4951
    %v4953 = vrot.slane %v4243, 1
    %v4954 = vrot.slane %v4915, 1
    %v4955 = vsel %vm2191, %v4953, %v4954
    %v4956 = vrot.slane %v4244, 1
    %v4957 = vrot.slane %v4916, 1
    %v4958 = vsel %vm2191, %v4956, %v4957
    %v4959 = vrot.slane %v4245, 1
    %v4960 = vrot.slane %v4917, 1
    %v4961 = vsel %vm2191, %v4959, %v4960
    %v4962 = vrot.slane %v4246, 1
    %v4963 = vrot.slane %v4918, 1
    %v4964 = vsel %vm2191, %v4962, %v4963
    %v4965 = vrot.slane %v4247, 1
    %v4966 = vrot.slane %v4919, 1
    %v4967 = vsel %vm2191, %v4965, %v4966
    %v4968 = vrot.slane %v4248, 1
    %v4969 = vrot.slane %v4920, 1
    %v4970 = vsel %vm2191, %v4968, %v4969
    %v4971 = vrot.slane %v4249, 1
    %v4972 = vrot.slane %v4921, 1
    %v4973 = vsel %vm2191, %v4971, %v4972
    %v4974 = vrot.slane %v4250, 1
    %v4975 = vrot.slane %v4922, 1
    %v4976 = vsel %vm2191, %v4974, %v4975
    %v4977 = vrot.slane %v4251, 1
    %v4978 = vrot.slane %v4923, 1
    %v4979 = vsel %vm2191, %v4977, %v4978
    %v4980 = vrot.slane %v4252, 1
    %v4981 = vrot.slane %v4924, 1
    %v4982 = vsel %vm2191, %v4980, %v4981
    %v4983 = vrot.slane %v4253, 1
    %v4984 = vrot.slane %v4925, 1
    %v4985 = vsel %vm2191, %v4983, %v4984
    %v4986 = vrot.slane %v4254, 1
    %v4987 = vrot.slane %v4926, 1
    %v4988 = vsel %vm2191, %v4986, %v4987
    %v4989 = vrot.slane %v4255, 1
    %v4990 = vrot.slane %v4927, 1
    %v4991 = vsel %vm2191, %v4989, %v4990
    %v4992 = vrot.slane %v4256, 1
    %v4993 = vrot.slane %v4928, 1
    %v4994 = vsel %vm2191, %v4992, %v4993
    %v4995 = vrot.slane %v4257, 1
    %v4996 = vrot.slane %v4929, 1
    %v4997 = vsel %vm2191, %v4995, %v4996
    %v4998 = vrot.slane %v4258, 1
    %v4999 = vrot.slane %v4930, 1
    %v5000 = vsel %vm2191, %v4998, %v4999
    %v5001 = vrot.slane %v4259, 1
    %v5002 = vrot.slane %v4931, 1
    %v5003 = vsel %vm2191, %v5001, %v5002
    %v5004 = vrot.slane %v4260, 1
    %v5005 = vrot.slane %v4932, 1
    %v5006 = vsel %vm2191, %v5004, %v5005
    %v5007 = vrot.slane %v4261, 1
    %v5008 = vrot.slane %v4933, 1
    %v5009 = vsel %vm2191, %v5007, %v5008
    %v5010 = vrot.slane %v4262, 1
    %v5011 = vrot.slane %v4934, 1
    %v5012 = vsel %vm2191, %v5010, %v5011
    %v5013 = vrot.slane %v4263, 1
    %v5014 = vrot.slane %v4935, 1
    %v5015 = vsel %vm2191, %v5013, %v5014
    %v5016 = vrot.slane %v4264, 1
    %v5017 = vrot.slane %v4936, 1
    %v5018 = vsel %vm2191, %v5016, %v5017
    %v5019 = vrot.slane %v4265, 1
    %v5020 = vrot.slane %v4937, 1
    %v5021 = vsel %vm2191, %v5019, %v5020
    %v5022 = vrot.slane %v4266, 1
    %v5023 = vrot.slane %v4938, 1
    %v5024 = vsel %vm2191, %v5022, %v5023
    %v5025 = vrot.slane %v4267, 1
    %v5026 = vrot.slane %v4939, 1
    %v5027 = vsel %vm2191, %v5025, %v5026
    %v5028 = vrot.slane %v4268, 1
    %v5029 = vrot.slane %v4940, 1
    %v5030 = vsel %vm2191, %v5028, %v5029
    %v5031 = vrot.slane %v4269, 1
    %v5032 = vrot.slane %v4941, 1
    %v5033 = vsel %vm2191, %v5031, %v5032
    %v5034 = vrot.slane %v4270, 1
    %v5035 = vrot.slane %v4942, 1
    %v5036 = vsel %vm2191, %v5034, %v5035
    %v5037 = vrot.slane %v4271, 1
    %v5038 = vrot.slane %v4943, 1
    %v5039 = vsel %vm2191, %v5037, %v5038
    %5040 = vrot.lane.b32.xlu0 %v4946, 24
    %v5041 = vpop.permute.xlu0 %5040
    %5042 = vrot.lane.b32.xlu0 %v4945, 24
    %v5043 = vpop.permute.xlu0 %5042
    %5044 = vrot.lane.b32.xlu0 %v4949, 24
    %v5045 = vpop.permute.xlu0 %5044
    %5046 = vrot.lane.b32.xlu0 %v4948, 24
    %v5047 = vpop.permute.xlu0 %5046
    %5048 = vrot.lane.b32.xlu0 %v4952, 24
    %v5049 = vpop.permute.xlu0 %5048
    %5050 = vrot.lane.b32.xlu0 %v4951, 24
    %v5051 = vpop.permute.xlu0 %5050
    %5052 = vrot.lane.b32.xlu0 %v4955, 24
    %v5053 = vpop.permute.xlu0 %5052
    %5054 = vrot.lane.b32.xlu0 %v4954, 24
    %v5055 = vpop.permute.xlu0 %5054
    %5056 = vrot.lane.b32.xlu0 %v4958, 24
    %v5057 = vpop.permute.xlu0 %5056
    %5058 = vrot.lane.b32.xlu0 %v4957, 24
    %v5059 = vpop.permute.xlu0 %5058
    %5060 = vrot.lane.b32.xlu0 %v4961, 24
    %v5061 = vpop.permute.xlu0 %5060
    %5062 = vrot.lane.b32.xlu0 %v4960, 24
    %v5063 = vpop.permute.xlu0 %5062
    %5064 = vrot.lane.b32.xlu0 %v4964, 24
    %v5065 = vpop.permute.xlu0 %5064
    %5066 = vrot.lane.b32.xlu0 %v4963, 24
    %v5067 = vpop.permute.xlu0 %5066
    %5068 = vrot.lane.b32.xlu0 %v4967, 24
    %v5069 = vpop.permute.xlu0 %5068
    %5070 = vrot.lane.b32.xlu0 %v4966, 24
    %v5071 = vpop.permute.xlu0 %5070
    %5072 = vrot.lane.b32.xlu0 %v4970, 24
    %v5073 = vpop.permute.xlu0 %5072
    %5074 = vrot.lane.b32.xlu0 %v4969, 24
    %v5075 = vpop.permute.xlu0 %5074
    %5076 = vrot.lane.b32.xlu0 %v4973, 24
    %v5077 = vpop.permute.xlu0 %5076
    %5078 = vrot.lane.b32.xlu0 %v4972, 24
    %v5079 = vpop.permute.xlu0 %5078
    %5080 = vrot.lane.b32.xlu0 %v4976, 24
    %v5081 = vpop.permute.xlu0 %5080
    %5082 = vrot.lane.b32.xlu0 %v4975, 24
    %v5083 = vpop.permute.xlu0 %5082
    %5084 = vrot.lane.b32.xlu0 %v4979, 24
    %v5085 = vpop.permute.xlu0 %5084
    %5086 = vrot.lane.b32.xlu0 %v4978, 24
    %v5087 = vpop.permute.xlu0 %5086
    %5088 = vrot.lane.b32.xlu0 %v4982, 24
    %v5089 = vpop.permute.xlu0 %5088
    %5090 = vrot.lane.b32.xlu0 %v4981, 24
    %v5091 = vpop.permute.xlu0 %5090
    %5092 = vrot.lane.b32.xlu0 %v4985, 24
    %v5093 = vpop.permute.xlu0 %5092
    %5094 = vrot.lane.b32.xlu0 %v4984, 24
    %v5095 = vpop.permute.xlu0 %5094
    %5096 = vrot.lane.b32.xlu0 %v4988, 24
    %v5097 = vpop.permute.xlu0 %5096
    %5098 = vrot.lane.b32.xlu0 %v4987, 24
    %v5099 = vpop.permute.xlu0 %5098
    %5100 = vrot.lane.b32.xlu0 %v4991, 24
    %v5101 = vpop.permute.xlu0 %5100
    %5102 = vrot.lane.b32.xlu0 %v4990, 24
    %v5103 = vpop.permute.xlu0 %5102
    %5104 = vrot.lane.b32.xlu0 %v4994, 24
    %v5105 = vpop.permute.xlu0 %5104
    %5106 = vrot.lane.b32.xlu0 %v4993, 24
    %v5107 = vpop.permute.xlu0 %5106
    %5108 = vrot.lane.b32.xlu0 %v4997, 24
    %v5109 = vpop.permute.xlu0 %5108
    %5110 = vrot.lane.b32.xlu0 %v4996, 24
    %v5111 = vpop.permute.xlu0 %5110
    %5112 = vrot.lane.b32.xlu0 %v5000, 24
    %v5113 = vpop.permute.xlu0 %5112
    %5114 = vrot.lane.b32.xlu0 %v4999, 24
    %v5115 = vpop.permute.xlu0 %5114
    %5116 = vrot.lane.b32.xlu0 %v5003, 24
    %v5117 = vpop.permute.xlu0 %5116
    %5118 = vrot.lane.b32.xlu0 %v5002, 24
    %v5119 = vpop.permute.xlu0 %5118
    %5120 = vrot.lane.b32.xlu0 %v5006, 24
    %v5121 = vpop.permute.xlu0 %5120
    %5122 = vrot.lane.b32.xlu0 %v5005, 24
    %v5123 = vpop.permute.xlu0 %5122
    %5124 = vrot.lane.b32.xlu0 %v5009, 24
    %v5125 = vpop.permute.xlu0 %5124
    %5126 = vrot.lane.b32.xlu0 %v5008, 24
    %v5127 = vpop.permute.xlu0 %5126
    %5128 = vrot.lane.b32.xlu0 %v5012, 24
    %v5129 = vpop.permute.xlu0 %5128
    %5130 = vrot.lane.b32.xlu0 %v5011, 24
    %v5131 = vpop.permute.xlu0 %5130
    %5132 = vrot.lane.b32.xlu0 %v5015, 24
    %v5133 = vpop.permute.xlu0 %5132
    %5134 = vrot.lane.b32.xlu0 %v5014, 24
    %v5135 = vpop.permute.xlu0 %5134
    %5136 = vrot.lane.b32.xlu0 %v5018, 24
    %v5137 = vpop.permute.xlu0 %5136
    %5138 = vrot.lane.b32.xlu0 %v5017, 24
    %v5139 = vpop.permute.xlu0 %5138
    %5140 = vrot.lane.b32.xlu0 %v5021, 24
    %v5141 = vpop.permute.xlu0 %5140
    %5142 = vrot.lane.b32.xlu0 %v5020, 24
    %v5143 = vpop.permute.xlu0 %5142
    %5144 = vrot.lane.b32.xlu0 %v5024, 24
    %v5145 = vpop.permute.xlu0 %5144
    %5146 = vrot.lane.b32.xlu0 %v5023, 24
    %v5147 = vpop.permute.xlu0 %5146
    %5148 = vrot.lane.b32.xlu0 %v5027, 24
    %v5149 = vpop.permute.xlu0 %5148
    %5150 = vrot.lane.b32.xlu0 %v5026, 24
    %v5151 = vpop.permute.xlu0 %5150
    %5152 = vrot.lane.b32.xlu0 %v5030, 24
    %v5153 = vpop.permute.xlu0 %5152
    %5154 = vrot.lane.b32.xlu0 %v5029, 24
    %v5155 = vpop.permute.xlu0 %5154
    %5156 = vrot.lane.b32.xlu0 %v5033, 24
    %v5157 = vpop.permute.xlu0 %5156
    %5158 = vrot.lane.b32.xlu0 %v5032, 24
    %v5159 = vpop.permute.xlu0 %5158
    %5160 = vrot.lane.b32.xlu0 %v5036, 24
    %v5161 = vpop.permute.xlu0 %5160
    %5162 = vrot.lane.b32.xlu0 %v5035, 24
    %v5163 = vpop.permute.xlu0 %5162
    %5164 = vrot.lane.b32.xlu0 %v5039, 24
    %v5165 = vpop.permute.xlu0 %5164
    %5166 = vrot.lane.b32.xlu0 %v5038, 24
    %v5167 = vpop.permute.xlu0 %5166
    %vm5168 = vcmask 23552
    %v5171 = vsel %vm5168, %v1358, %v1968
    %v5173 = vsel %vm5168, %v1359, %v1970
    %v5176 = vsel %vm5168, %v1360, %v1972
    %v5178 = vsel %vm5168, %v1361, %v1974
    %v5181 = vsel %vm5168, %v1362, %v1976
    %v5183 = vsel %vm5168, %v1363, %v1978
    %v5186 = vsel %vm5168, %v1364, %v1980
    %v5188 = vsel %vm5168, %v1365, %v1982
    %v5191 = vsel %vm5168, %v1366, %v1984
    %v5193 = vsel %vm5168, %v1367, %v1986
    %v5196 = vsel %vm5168, %v1368, %v1988
    %v5198 = vsel %vm5168, %v1369, %v1990
    %v5201 = vsel %vm5168, %v1370, %v1992
    %v5203 = vsel %vm5168, %v1371, %v1994
    %v5206 = vsel %vm5168, %v1372, %v1996
    %v5208 = vsel %vm5168, %v1373, %v1998
    %v5211 = vsel %vm5168, %v1374, %v2000
    %v5213 = vsel %vm5168, %v1375, %v2002
    %v5216 = vsel %vm5168, %v1376, %v2004
    %v5218 = vsel %vm5168, %v1377, %v2006
    %v5221 = vsel %vm5168, %v1378, %v2008
    %v5223 = vsel %vm5168, %v1379, %v2010
    %v5226 = vsel %vm5168, %v1380, %v2012
    %v5228 = vsel %vm5168, %v1381, %v2014
    %v5231 = vsel %vm5168, %v1382, %v2016
    %v5233 = vsel %vm5168, %v1383, %v2018
    %v5236 = vsel %vm5168, %v1384, %v2020
    %v5238 = vsel %vm5168, %v1385, %v2022
    %v5241 = vsel %vm5168, %v1386, %v2024
    %v5243 = vsel %vm5168, %v1387, %v2026
    %v5246 = vsel %vm5168, %v1388, %v2028
    %v5248 = vsel %vm5168, %v1389, %v2030
    %v5251 = vsel %vm5168, %v1390, %v2032
    %v5253 = vsel %vm5168, %v1391, %v2034
    %v5256 = vsel %vm5168, %v1392, %v2036
    %v5258 = vsel %vm5168, %v1393, %v2038
    %v5261 = vsel %vm5168, %v1394, %v2040
    %v5263 = vsel %vm5168, %v1395, %v2042
    %v5266 = vsel %vm5168, %v1396, %v2044
    %v5268 = vsel %vm5168, %v1397, %v2046
    %v5271 = vsel %vm5168, %v1398, %v2048
    %v5273 = vsel %vm5168, %v1399, %v2050
    %v5276 = vsel %vm5168, %v1400, %v2052
    %v5278 = vsel %vm5168, %v1401, %v2054
    %v5281 = vsel %vm5168, %v1402, %v2056
    %v5283 = vsel %vm5168, %v1403, %v2058
    %v5286 = vsel %vm5168, %v1404, %v2060
    %v5288 = vsel %vm5168, %v1405, %v2062
    %v5291 = vsel %vm5168, %v1406, %v2064
    %v5293 = vsel %vm5168, %v1407, %v2066
    %v5296 = vsel %vm5168, %v1408, %v2068
    %v5298 = vsel %vm5168, %v1409, %v2070
    %v5301 = vsel %vm5168, %v1410, %v2072
    %v5303 = vsel %vm5168, %v1411, %v2074
    %v5306 = vsel %vm5168, %v1412, %v2076
    %v5308 = vsel %vm5168, %v1413, %v2078
    %v5311 = vsel %vm5168, %v1414, %v2080
    %v5313 = vsel %vm5168, %v1415, %v2082
    %v5316 = vsel %vm5168, %v1416, %v2084
    %v5318 = vsel %vm5168, %v1417, %v2086
    %v5321 = vsel %vm5168, %v1418, %v2088
    %v5323 = vsel %vm5168, %v1419, %v2090
    %v5326 = vsel %vm5168, %v1420, %v2092
    %v5328 = vsel %vm5168, %v1421, %v2094
    %vm5329 = vcmask 48128
    %v5331 = vsel %vm5329, %v5171, %v2289
    %v5333 = vsel %vm5329, %v5173, %v2291
    %v5335 = vsel %vm5329, %v5176, %v2293
    %v5337 = vsel %vm5329, %v5178, %v2295
    %v5339 = vsel %vm5329, %v5181, %v2297
    %v5341 = vsel %vm5329, %v5183, %v2299
    %v5343 = vsel %vm5329, %v5186, %v2301
    %v5345 = vsel %vm5329, %v5188, %v2303
    %v5347 = vsel %vm5329, %v5191, %v2305
    %v5349 = vsel %vm5329, %v5193, %v2307
    %v5351 = vsel %vm5329, %v5196, %v2309
    %v5353 = vsel %vm5329, %v5198, %v2311
    %v5355 = vsel %vm5329, %v5201, %v2313
    %v5357 = vsel %vm5329, %v5203, %v2315
    %v5359 = vsel %vm5329, %v5206, %v2317
    %v5361 = vsel %vm5329, %v5208, %v2319
    %v5363 = vsel %vm5329, %v5211, %v2321
    %v5365 = vsel %vm5329, %v5213, %v2323
    %v5367 = vsel %vm5329, %v5216, %v2325
    %v5369 = vsel %vm5329, %v5218, %v2327
    %v5371 = vsel %vm5329, %v5221, %v2329
    %v5373 = vsel %vm5329, %v5223, %v2331
    %v5375 = vsel %vm5329, %v5226, %v2333
    %v5377 = vsel %vm5329, %v5228, %v2335
    %v5379 = vsel %vm5329, %v5231, %v2337
    %v5381 = vsel %vm5329, %v5233, %v2339
    %v5383 = vsel %vm5329, %v5236, %v2341
    %v5385 = vsel %vm5329, %v5238, %v2343
    %v5387 = vsel %vm5329, %v5241, %v2345
    %v5389 = vsel %vm5329, %v5243, %v2347
    %v5391 = vsel %vm5329, %v5246, %v2349
    %v5393 = vsel %vm5329, %v5248, %v2351
    %v5395 = vsel %vm5329, %v5251, %v2353
    %v5397 = vsel %vm5329, %v5253, %v2355
    %v5399 = vsel %vm5329, %v5256, %v2357
    %v5401 = vsel %vm5329, %v5258, %v2359
    %v5403 = vsel %vm5329, %v5261, %v2361
    %v5405 = vsel %vm5329, %v5263, %v2363
    %v5407 = vsel %vm5329, %v5266, %v2365
    %v5409 = vsel %vm5329, %v5268, %v2367
    %v5411 = vsel %vm5329, %v5271, %v2369
    %v5413 = vsel %vm5329, %v5273, %v2371
    %v5415 = vsel %vm5329, %v5276, %v2373
    %v5417 = vsel %vm5329, %v5278, %v2375
    %v5419 = vsel %vm5329, %v5281, %v2377
    %v5421 = vsel %vm5329, %v5283, %v2379
    %v5423 = vsel %vm5329, %v5286, %v2381
    %v5425 = vsel %vm5329, %v5288, %v2383
    %v5427 = vsel %vm5329, %v5291, %v2385
    %v5429 = vsel %vm5329, %v5293, %v2387
    %v5431 = vsel %vm5329, %v5296, %v2389
    %v5433 = vsel %vm5329, %v5298, %v2391
    %v5435 = vsel %vm5329, %v5301, %v2393
    %v5437 = vsel %vm5329, %v5303, %v2395
    %v5439 = vsel %vm5329, %v5306, %v2397
    %v5441 = vsel %vm5329, %v5308, %v2399
    %v5443 = vsel %vm5329, %v5311, %v2401
    %v5445 = vsel %vm5329, %v5313, %v2403
    %v5447 = vsel %vm5329, %v5316, %v2405
    %v5449 = vsel %vm5329, %v5318, %v2407
    %v5451 = vsel %vm5329, %v5321, %v2409
    %v5453 = vsel %vm5329, %v5323, %v2411
    %v5455 = vsel %vm5329, %v5326, %v2413
    %v5457 = vsel %vm5329, %v5328, %v2415
    %vm5458 = vcmask 72704
    %v5460 = vsel %vm5458, %v5331, %v2673
    %v5462 = vsel %vm5458, %v5333, %v2675
    %v5464 = vsel %vm5458, %v5335, %v2677
    %v5466 = vsel %vm5458, %v5337, %v2679
    %v5468 = vsel %vm5458, %v5339, %v2681
    %v5470 = vsel %vm5458, %v5341, %v2683
    %v5472 = vsel %vm5458, %v5343, %v2685
    %v5474 = vsel %vm5458, %v5345, %v2687
    %v5476 = vsel %vm5458, %v5347, %v2689
    %v5478 = vsel %vm5458, %v5349, %v2691
    %v5480 = vsel %vm5458, %v5351, %v2693
    %v5482 = vsel %vm5458, %v5353, %v2695
    %v5484 = vsel %vm5458, %v5355, %v2697
    %v5486 = vsel %vm5458, %v5357, %v2699
    %v5488 = vsel %vm5458, %v5359, %v2701
    %v5490 = vsel %vm5458, %v5361, %v2703
    %v5492 = vsel %vm5458, %v5363, %v2705
    %v5494 = vsel %vm5458, %v5365, %v2707
    %v5496 = vsel %vm5458, %v5367, %v2709
    %v5498 = vsel %vm5458, %v5369, %v2711
    %v5500 = vsel %vm5458, %v5371, %v2713
    %v5502 = vsel %vm5458, %v5373, %v2715
    %v5504 = vsel %vm5458, %v5375, %v2717
    %v5506 = vsel %vm5458, %v5377, %v2719
    %v5508 = vsel %vm5458, %v5379, %v2721
    %v5510 = vsel %vm5458, %v5381, %v2723
    %v5512 = vsel %vm5458, %v5383, %v2725
    %v5514 = vsel %vm5458, %v5385, %v2727
    %v5516 = vsel %vm5458, %v5387, %v2729
    %v5518 = vsel %vm5458, %v5389, %v2731
    %v5520 = vsel %vm5458, %v5391, %v2733
    %v5522 = vsel %vm5458, %v5393, %v2735
    %v5524 = vsel %vm5458, %v5395, %v2737
    %v5526 = vsel %vm5458, %v5397, %v2739
    %v5528 = vsel %vm5458, %v5399, %v2741
    %v5530 = vsel %vm5458, %v5401, %v2743
    %v5532 = vsel %vm5458, %v5403, %v2745
    %v5534 = vsel %vm5458, %v5405, %v2747
    %v5536 = vsel %vm5458, %v5407, %v2749
    %v5538 = vsel %vm5458, %v5409, %v2751
    %v5540 = vsel %vm5458, %v5411, %v2753
    %v5542 = vsel %vm5458, %v5413, %v2755
    %v5544 = vsel %vm5458, %v5415, %v2757
    %v5546 = vsel %vm5458, %v5417, %v2759
    %v5548 = vsel %vm5458, %v5419, %v2761
    %v5550 = vsel %vm5458, %v5421, %v2763
    %v5552 = vsel %vm5458, %v5423, %v2765
    %v5554 = vsel %vm5458, %v5425, %v2767
    %v5556 = vsel %vm5458, %v5427, %v2769
    %v5558 = vsel %vm5458, %v5429, %v2771
    %v5560 = vsel %vm5458, %v5431, %v2773
    %v5562 = vsel %vm5458, %v5433, %v2775
    %v5564 = vsel %vm5458, %v5435, %v2777
    %v5566 = vsel %vm5458, %v5437, %v2779
    %v5568 = vsel %vm5458, %v5439, %v2781
    %v5570 = vsel %vm5458, %v5441, %v2783
    %v5572 = vsel %vm5458, %v5443, %v2785
    %v5574 = vsel %vm5458, %v5445, %v2787
    %v5576 = vsel %vm5458, %v5447, %v2789
    %v5578 = vsel %vm5458, %v5449, %v2791
    %v5580 = vsel %vm5458, %v5451, %v2793
    %v5582 = vsel %vm5458, %v5453, %v2795
    %v5584 = vsel %vm5458, %v5455, %v2797
    %v5586 = vsel %vm5458, %v5457, %v2799
    %vm5587 = vcmask 97280
    %v5589 = vsel %vm5587, %v5460, %v3345
    %v5591 = vsel %vm5587, %v5462, %v3347
    %v5593 = vsel %vm5587, %v5464, %v3349
    %v5595 = vsel %vm5587, %v5466, %v3351
    %v5597 = vsel %vm5587, %v5468, %v3353
    %v5599 = vsel %vm5587, %v5470, %v3355
    %v5601 = vsel %vm5587, %v5472, %v3357
    %v5603 = vsel %vm5587, %v5474, %v3359
    %v5605 = vsel %vm5587, %v5476, %v3361
    %v5607 = vsel %vm5587, %v5478, %v3363
    %v5609 = vsel %vm5587, %v5480, %v3365
    %v5611 = vsel %vm5587, %v5482, %v3367
    %v5613 = vsel %vm5587, %v5484, %v3369
    %v5615 = vsel %vm5587, %v5486, %v3371
    %v5617 = vsel %vm5587, %v5488, %v3373
    %v5619 = vsel %vm5587, %v5490, %v3375
    %v5621 = vsel %vm5587, %v5492, %v3377
    %v5623 = vsel %vm5587, %v5494, %v3379
    %v5625 = vsel %vm5587, %v5496, %v3381
    %v5627 = vsel %vm5587, %v5498, %v3383
    %v5629 = vsel %vm5587, %v5500, %v3385
    %v5631 = vsel %vm5587, %v5502, %v3387
    %v5633 = vsel %vm5587, %v5504, %v3389
    %v5635 = vsel %vm5587, %v5506, %v3391
    %v5637 = vsel %vm5587, %v5508, %v3393
    %v5639 = vsel %vm5587, %v5510, %v3395
    %v5641 = vsel %vm5587, %v5512, %v3397
    %v5643 = vsel %vm5587, %v5514, %v3399
    %v5645 = vsel %vm5587, %v5516, %v3401
    %v5647 = vsel %vm5587, %v5518, %v3403
    %v5649 = vsel %vm5587, %v5520, %v3405
    %v5651 = vsel %vm5587, %v5522, %v3407
    %v5653 = vsel %vm5587, %v5524, %v3409
    %v5655 = vsel %vm5587, %v5526, %v3411
    %v5657 = vsel %vm5587, %v5528, %v3413
    %v5659 = vsel %vm5587, %v5530, %v3415
    %v5661 = vsel %vm5587, %v5532, %v3417
    %v5663 = vsel %vm5587, %v5534, %v3419
    %v5665 = vsel %vm5587, %v5536, %v3421
    %v5667 = vsel %vm5587, %v5538, %v3423
    %v5669 = vsel %vm5587, %v5540, %v3425
    %v5671 = vsel %vm5587, %v5542, %v3427
    %v5673 = vsel %vm5587, %v5544, %v3429
    %v5675 = vsel %vm5587, %v5546, %v3431
    %v5677 = vsel %vm5587, %v5548, %v3433
    %v5679 = vsel %vm5587, %v5550, %v3435
    %v5681 = vsel %vm5587, %v5552, %v3437
    %v5683 = vsel %vm5587, %v5554, %v3439
    %v5685 = vsel %vm5587, %v5556, %v3441
    %v5687 = vsel %vm5587, %v5558, %v3443
    %v5689 = vsel %vm5587, %v5560, %v3445
    %v5691 = vsel %vm5587, %v5562, %v3447
    %v5693 = vsel %vm5587, %v5564, %v3449
    %v5695 = vsel %vm5587, %v5566, %v3451
    %v5697 = vsel %vm5587, %v5568, %v3453
    %v5699 = vsel %vm5587, %v5570, %v3455
    %v5701 = vsel %vm5587, %v5572, %v3457
    %v5703 = vsel %vm5587, %v5574, %v3459
    %v5705 = vsel %vm5587, %v5576, %v3461
    %v5707 = vsel %vm5587, %v5578, %v3463
    %v5709 = vsel %vm5587, %v5580, %v3465
    %v5711 = vsel %vm5587, %v5582, %v3467
    %v5713 = vsel %vm5587, %v5584, %v3469
    %v5715 = vsel %vm5587, %v5586, %v3471
    %vm5716 = vcmask 121856
    %v5718 = vsel %vm5716, %v5589, %v3665
    %v5720 = vsel %vm5716, %v5591, %v3667
    %v5722 = vsel %vm5716, %v5593, %v3669
    %v5724 = vsel %vm5716, %v5595, %v3671
    %v5726 = vsel %vm5716, %v5597, %v3673
    %v5728 = vsel %vm5716, %v5599, %v3675
    %v5730 = vsel %vm5716, %v5601, %v3677
    %v5732 = vsel %vm5716, %v5603, %v3679
    %v5734 = vsel %vm5716, %v5605, %v3681
    %v5736 = vsel %vm5716, %v5607, %v3683
    %v5738 = vsel %vm5716, %v5609, %v3685
    %v5740 = vsel %vm5716, %v5611, %v3687
    %v5742 = vsel %vm5716, %v5613, %v3689
    %v5744 = vsel %vm5716, %v5615, %v3691
    %v5746 = vsel %vm5716, %v5617, %v3693
    %v5748 = vsel %vm5716, %v5619, %v3695
    %v5750 = vsel %vm5716, %v5621, %v3697
    %v5752 = vsel %vm5716, %v5623, %v3699
    %v5754 = vsel %vm5716, %v5625, %v3701
    %v5756 = vsel %vm5716, %v5627, %v3703
    %v5758 = vsel %vm5716, %v5629, %v3705
    %v5760 = vsel %vm5716, %v5631, %v3707
    %v5762 = vsel %vm5716, %v5633, %v3709
    %v5764 = vsel %vm5716, %v5635, %v3711
    %v5766 = vsel %vm5716, %v5637, %v3713
    %v5768 = vsel %vm5716, %v5639, %v3715
    %v5770 = vsel %vm5716, %v5641, %v3717
    %v5772 = vsel %vm5716, %v5643, %v3719
    %v5774 = vsel %vm5716, %v5645, %v3721
    %v5776 = vsel %vm5716, %v5647, %v3723
    %v5778 = vsel %vm5716, %v5649, %v3725
    %v5780 = vsel %vm5716, %v5651, %v3727
    %v5782 = vsel %vm5716, %v5653, %v3729
    %v5784 = vsel %vm5716, %v5655, %v3731
    %v5786 = vsel %vm5716, %v5657, %v3733
    %v5788 = vsel %vm5716, %v5659, %v3735
    %v5790 = vsel %vm5716, %v5661, %v3737
    %v5792 = vsel %vm5716, %v5663, %v3739
    %v5794 = vsel %vm5716, %v5665, %v3741
    %v5796 = vsel %vm5716, %v5667, %v3743
    %v5798 = vsel %vm5716, %v5669, %v3745
    %v5800 = vsel %vm5716, %v5671, %v3747
    %v5802 = vsel %vm5716, %v5673, %v3749
    %v5804 = vsel %vm5716, %v5675, %v3751
    %v5806 = vsel %vm5716, %v5677, %v3753
    %v5808 = vsel %vm5716, %v5679, %v3755
    %v5810 = vsel %vm5716, %v5681, %v3757
    %v5812 = vsel %vm5716, %v5683, %v3759
    %v5814 = vsel %vm5716, %v5685, %v3761
    %v5816 = vsel %vm5716, %v5687, %v3763
    %v5818 = vsel %vm5716, %v5689, %v3765
    %v5820 = vsel %vm5716, %v5691, %v3767
    %v5822 = vsel %vm5716, %v5693, %v3769
    %v5824 = vsel %vm5716, %v5695, %v3771
    %v5826 = vsel %vm5716, %v5697, %v3773
    %v5828 = vsel %vm5716, %v5699, %v3775
    %v5830 = vsel %vm5716, %v5701, %v3777
    %v5832 = vsel %vm5716, %v5703, %v3779
    %v5834 = vsel %vm5716, %v5705, %v3781
    %v5836 = vsel %vm5716, %v5707, %v3783
    %v5838 = vsel %vm5716, %v5709, %v3785
    %v5840 = vsel %vm5716, %v5711, %v3787
    %v5842 = vsel %vm5716, %v5713, %v3789
    %v5844 = vsel %vm5716, %v5715, %v3791
    %vm5845 = vcmask 146432
    %v5847 = vsel %vm5845, %v5718, %v4049
    %v5849 = vsel %vm5845, %v5720, %v4051
    %v5851 = vsel %vm5845, %v5722, %v4053
    %v5853 = vsel %vm5845, %v5724, %v4055
    %v5855 = vsel %vm5845, %v5726, %v4057
    %v5857 = vsel %vm5845, %v5728, %v4059
    %v5859 = vsel %vm5845, %v5730, %v4061
    %v5861 = vsel %vm5845, %v5732, %v4063
    %v5863 = vsel %vm5845, %v5734, %v4065
    %v5865 = vsel %vm5845, %v5736, %v4067
    %v5867 = vsel %vm5845, %v5738, %v4069
    %v5869 = vsel %vm5845, %v5740, %v4071
    %v5871 = vsel %vm5845, %v5742, %v4073
    %v5873 = vsel %vm5845, %v5744, %v4075
    %v5875 = vsel %vm5845, %v5746, %v4077
    %v5877 = vsel %vm5845, %v5748, %v4079
    %v5879 = vsel %vm5845, %v5750, %v4081
    %v5881 = vsel %vm5845, %v5752, %v4083
    %v5883 = vsel %vm5845, %v5754, %v4085
    %v5885 = vsel %vm5845, %v5756, %v4087
    %v5887 = vsel %vm5845, %v5758, %v4089
    %v5889 = vsel %vm5845, %v5760, %v4091
    %v5891 = vsel %vm5845, %v5762, %v4093
    %v5893 = vsel %vm5845, %v5764, %v4095
    %v5895 = vsel %vm5845, %v5766, %v4097
    %v5897 = vsel %vm5845, %v5768, %v4099
    %v5899 = vsel %vm5845, %v5770, %v4101
    %v5901 = vsel %vm5845, %v5772, %v4103
    %v5903 = vsel %vm5845, %v5774, %v4105
    %v5905 = vsel %vm5845, %v5776, %v4107
    %v5907 = vsel %vm5845, %v5778, %v4109
    %v5909 = vsel %vm5845, %v5780, %v4111
    %v5911 = vsel %vm5845, %v5782, %v4113
    %v5913 = vsel %vm5845, %v5784, %v4115
    %v5915 = vsel %vm5845, %v5786, %v4117
    %v5917 = vsel %vm5845, %v5788, %v4119
    %v5919 = vsel %vm5845, %v5790, %v4121
    %v5921 = vsel %vm5845, %v5792, %v4123
    %v5923 = vsel %vm5845, %v5794, %v4125
    %v5925 = vsel %vm5845, %v5796, %v4127
    %v5927 = vsel %vm5845, %v5798, %v4129
    %v5929 = vsel %vm5845, %v5800, %v4131
    %v5931 = vsel %vm5845, %v5802, %v4133
    %v5933 = vsel %vm5845, %v5804, %v4135
    %v5935 = vsel %vm5845, %v5806, %v4137
    %v5937 = vsel %vm5845, %v5808, %v4139
    %v5939 = vsel %vm5845, %v5810, %v4141
    %v5941 = vsel %vm5845, %v5812, %v4143
    %v5943 = vsel %vm5845, %v5814, %v4145
    %v5945 = vsel %vm5845, %v5816, %v4147
    %v5947 = vsel %vm5845, %v5818, %v4149
    %v5949 = vsel %vm5845, %v5820, %v4151
    %v5951 = vsel %vm5845, %v5822, %v4153
    %v5953 = vsel %vm5845, %v5824, %v4155
    %v5955 = vsel %vm5845, %v5826, %v4157
    %v5957 = vsel %vm5845, %v5828, %v4159
    %v5959 = vsel %vm5845, %v5830, %v4161
    %v5961 = vsel %vm5845, %v5832, %v4163
    %v5963 = vsel %vm5845, %v5834, %v4165
    %v5965 = vsel %vm5845, %v5836, %v4167
    %v5967 = vsel %vm5845, %v5838, %v4169
    %v5969 = vsel %vm5845, %v5840, %v4171
    %v5971 = vsel %vm5845, %v5842, %v4173
    %v5973 = vsel %vm5845, %v5844, %v4175
    %vm5974 = vcmask 171008
    %v5976 = vsel %vm5974, %v5847, %v4721
    %v5978 = vsel %vm5974, %v5849, %v4723
    %v5980 = vsel %vm5974, %v5851, %v4725
    %v5982 = vsel %vm5974, %v5853, %v4727
    %v5984 = vsel %vm5974, %v5855, %v4729
    %v5986 = vsel %vm5974, %v5857, %v4731
    %v5988 = vsel %vm5974, %v5859, %v4733
    %v5990 = vsel %vm5974, %v5861, %v4735
    %v5992 = vsel %vm5974, %v5863, %v4737
    %v5994 = vsel %vm5974, %v5865, %v4739
    %v5996 = vsel %vm5974, %v5867, %v4741
    %v5998 = vsel %vm5974, %v5869, %v4743
    %v6000 = vsel %vm5974, %v5871, %v4745
    %v6002 = vsel %vm5974, %v5873, %v4747
    %v6004 = vsel %vm5974, %v5875, %v4749
    %v6006 = vsel %vm5974, %v5877, %v4751
    %v6008 = vsel %vm5974, %v5879, %v4753
    %v6010 = vsel %vm5974, %v5881, %v4755
    %v6012 = vsel %vm5974, %v5883, %v4757
    %v6014 = vsel %vm5974, %v5885, %v4759
    %v6016 = vsel %vm5974, %v5887, %v4761
    %v6018 = vsel %vm5974, %v5889, %v4763
    %v6020 = vsel %vm5974, %v5891, %v4765
    %v6022 = vsel %vm5974, %v5893, %v4767
    %v6024 = vsel %vm5974, %v5895, %v4769
    %v6026 = vsel %vm5974, %v5897, %v4771
    %v6028 = vsel %vm5974, %v5899, %v4773
    %v6030 = vsel %vm5974, %v5901, %v4775
    %v6032 = vsel %vm5974, %v5903, %v4777
    %v6034 = vsel %vm5974, %v5905, %v4779
    %v6036 = vsel %vm5974, %v5907, %v4781
    %v6038 = vsel %vm5974, %v5909, %v4783
    %v6040 = vsel %vm5974, %v5911, %v4785
    %v6042 = vsel %vm5974, %v5913, %v4787
    %v6044 = vsel %vm5974, %v5915, %v4789
    %v6046 = vsel %vm5974, %v5917, %v4791
    %v6048 = vsel %vm5974, %v5919, %v4793
    %v6050 = vsel %vm5974, %v5921, %v4795
    %v6052 = vsel %vm5974, %v5923, %v4797
    %v6054 = vsel %vm5974, %v5925, %v4799
    %v6056 = vsel %vm5974, %v5927, %v4801
    %v6058 = vsel %vm5974, %v5929, %v4803
    %v6060 = vsel %vm5974, %v5931, %v4805
    %v6062 = vsel %vm5974, %v5933, %v4807
    %v6064 = vsel %vm5974, %v5935, %v4809
    %v6066 = vsel %vm5974, %v5937, %v4811
    %v6068 = vsel %vm5974, %v5939, %v4813
    %v6070 = vsel %vm5974, %v5941, %v4815
    %v6072 = vsel %vm5974, %v5943, %v4817
    %v6074 = vsel %vm5974, %v5945, %v4819
    %v6076 = vsel %vm5974, %v5947, %v4821
    %v6078 = vsel %vm5974, %v5949, %v4823
    %v6080 = vsel %vm5974, %v5951, %v4825
    %v6082 = vsel %vm5974, %v5953, %v4827
    %v6084 = vsel %vm5974, %v5955, %v4829
    %v6086 = vsel %vm5974, %v5957, %v4831
    %v6088 = vsel %vm5974, %v5959, %v4833
    %v6090 = vsel %vm5974, %v5961, %v4835
    %v6092 = vsel %vm5974, %v5963, %v4837
    %v6094 = vsel %vm5974, %v5965, %v4839
    %v6096 = vsel %vm5974, %v5967, %v4841
    %v6098 = vsel %vm5974, %v5969, %v4843
    %v6100 = vsel %vm5974, %v5971, %v4845
    %v6102 = vsel %vm5974, %v5973, %v4847
    %vm6103 = vcmask 195584
    %v6105 = vsel %vm6103, %v5976, %v5041
    %v6107 = vsel %vm6103, %v5978, %v5043
    %v6109 = vsel %vm6103, %v5980, %v5045
    %v6111 = vsel %vm6103, %v5982, %v5047
    %v6113 = vsel %vm6103, %v5984, %v5049
    %v6115 = vsel %vm6103, %v5986, %v5051
    %v6117 = vsel %vm6103, %v5988, %v5053
    %v6119 = vsel %vm6103, %v5990, %v5055
    %v6121 = vsel %vm6103, %v5992, %v5057
    %v6123 = vsel %vm6103, %v5994, %v5059
    %v6125 = vsel %vm6103, %v5996, %v5061
    %v6127 = vsel %vm6103, %v5998, %v5063
    %v6129 = vsel %vm6103, %v6000, %v5065
    %v6131 = vsel %vm6103, %v6002, %v5067
    %v6133 = vsel %vm6103, %v6004, %v5069
    %v6135 = vsel %vm6103, %v6006, %v5071
    %v6137 = vsel %vm6103, %v6008, %v5073
    %v6139 = vsel %vm6103, %v6010, %v5075
    %v6141 = vsel %vm6103, %v6012, %v5077
    %v6143 = vsel %vm6103, %v6014, %v5079
    %v6145 = vsel %vm6103, %v6016, %v5081
    %v6147 = vsel %vm6103, %v6018, %v5083
    %v6149 = vsel %vm6103, %v6020, %v5085
    %v6151 = vsel %vm6103, %v6022, %v5087
    %v6153 = vsel %vm6103, %v6024, %v5089
    %v6155 = vsel %vm6103, %v6026, %v5091
    %v6157 = vsel %vm6103, %v6028, %v5093
    %v6159 = vsel %vm6103, %v6030, %v5095
    %v6161 = vsel %vm6103, %v6032, %v5097
    %v6163 = vsel %vm6103, %v6034, %v5099
    %v6165 = vsel %vm6103, %v6036, %v5101
    %v6167 = vsel %vm6103, %v6038, %v5103
    %v6169 = vsel %vm6103, %v6040, %v5105
    %v6171 = vsel %vm6103, %v6042, %v5107
    %v6173 = vsel %vm6103, %v6044, %v5109
    %v6175 = vsel %vm6103, %v6046, %v5111
    %v6177 = vsel %vm6103, %v6048, %v5113
    %v6179 = vsel %vm6103, %v6050, %v5115
    %v6181 = vsel %vm6103, %v6052, %v5117
    %v6183 = vsel %vm6103, %v6054, %v5119
    %v6185 = vsel %vm6103, %v6056, %v5121
    %v6187 = vsel %vm6103, %v6058, %v5123
    %v6189 = vsel %vm6103, %v6060, %v5125
    %v6191 = vsel %vm6103, %v6062, %v5127
    %v6193 = vsel %vm6103, %v6064, %v5129
    %v6195 = vsel %vm6103, %v6066, %v5131
    %v6197 = vsel %vm6103, %v6068, %v5133
    %v6199 = vsel %vm6103, %v6070, %v5135
    %v6201 = vsel %vm6103, %v6072, %v5137
    %v6203 = vsel %vm6103, %v6074, %v5139
    %v6205 = vsel %vm6103, %v6076, %v5141
    %v6207 = vsel %vm6103, %v6078, %v5143
    %v6209 = vsel %vm6103, %v6080, %v5145
    %v6211 = vsel %vm6103, %v6082, %v5147
    %v6213 = vsel %vm6103, %v6084, %v5149
    %v6215 = vsel %vm6103, %v6086, %v5151
    %v6217 = vsel %vm6103, %v6088, %v5153
    %v6219 = vsel %vm6103, %v6090, %v5155
    %v6221 = vsel %vm6103, %v6092, %v5157
    %v6223 = vsel %vm6103, %v6094, %v5159
    %v6225 = vsel %vm6103, %v6096, %v5161
    %v6227 = vsel %vm6103, %v6098, %v5163
    %v6229 = vsel %vm6103, %v6100, %v5165
    %v6231 = vsel %vm6103, %v6102, %v5167
    %v6232 = vshrl.u32 %v6105, 16
    %v6234 = vshll.u32 %v6105, 16
    %v6236 = vrot.slane %v6234, 1
    %v6237 = vor.u32 %v6232, %v6236
    %v6238 = vshll.u32 %v6107, 16
    %v6240 = vrot.slane %v6238, 1
    %v6241 = vsel %vm1518, %v6237, %v6240
    %v6242 = vshrl.u32 %v6109, 16
    %v6244 = vshll.u32 %v6109, 16
    %v6246 = vrot.slane %v6244, 1
    %v6247 = vor.u32 %v6242, %v6246
    %v6248 = vshll.u32 %v6111, 16
    %v6250 = vrot.slane %v6248, 1
    %v6251 = vsel %vm1518, %v6247, %v6250
    %v6252 = vshrl.u32 %v6113, 16
    %v6254 = vshll.u32 %v6113, 16
    %v6256 = vrot.slane %v6254, 1
    %v6257 = vor.u32 %v6252, %v6256
    %v6258 = vshll.u32 %v6115, 16
    %v6260 = vrot.slane %v6258, 1
    %v6261 = vsel %vm1518, %v6257, %v6260
    %v6262 = vshrl.u32 %v6117, 16
    %v6264 = vshll.u32 %v6117, 16
    %v6266 = vrot.slane %v6264, 1
    %v6267 = vor.u32 %v6262, %v6266
    %v6268 = vshll.u32 %v6119, 16
    %v6270 = vrot.slane %v6268, 1
    %v6271 = vsel %vm1518, %v6267, %v6270
    %v6272 = vshrl.u32 %v6121, 16
    %v6274 = vshll.u32 %v6121, 16
    %v6276 = vrot.slane %v6274, 1
    %v6277 = vor.u32 %v6272, %v6276
    %v6278 = vshll.u32 %v6123, 16
    %v6280 = vrot.slane %v6278, 1
    %v6281 = vsel %vm1518, %v6277, %v6280
    %v6282 = vshrl.u32 %v6125, 16
    %v6284 = vshll.u32 %v6125, 16
    %v6286 = vrot.slane %v6284, 1
    %v6287 = vor.u32 %v6282, %v6286
    %v6288 = vshll.u32 %v6127, 16
    %v6290 = vrot.slane %v6288, 1
    %v6291 = vsel %vm1518, %v6287, %v6290
    %v6292 = vshrl.u32 %v6129, 16
    %v6294 = vshll.u32 %v6129, 16
    %v6296 = vrot.slane %v6294, 1
    %v6297 = vor.u32 %v6292, %v6296
    %v6298 = vshll.u32 %v6131, 16
    %v6300 = vrot.slane %v6298, 1
    %v6301 = vsel %vm1518, %v6297, %v6300
    %v6302 = vshrl.u32 %v6133, 16
    %v6304 = vshll.u32 %v6133, 16
    %v6306 = vrot.slane %v6304, 1
    %v6307 = vor.u32 %v6302, %v6306
    %v6308 = vshll.u32 %v6135, 16
    %v6310 = vrot.slane %v6308, 1
    %v6311 = vsel %vm1518, %v6307, %v6310
    %v6312 = vshrl.u32 %v6137, 16
    %v6314 = vshll.u32 %v6137, 16
    %v6316 = vrot.slane %v6314, 1
    %v6317 = vor.u32 %v6312, %v6316
    %v6318 = vshll.u32 %v6139, 16
    %v6320 = vrot.slane %v6318, 1
    %v6321 = vsel %vm1518, %v6317, %v6320
    %v6322 = vshrl.u32 %v6141, 16
    %v6324 = vshll.u32 %v6141, 16
    %v6326 = vrot.slane %v6324, 1
    %v6327 = vor.u32 %v6322, %v6326
    %v6328 = vshll.u32 %v6143, 16
    %v6330 = vrot.slane %v6328, 1
    %v6331 = vsel %vm1518, %v6327, %v6330
    %v6332 = vshrl.u32 %v6145, 16
    %v6334 = vshll.u32 %v6145, 16
    %v6336 = vrot.slane %v6334, 1
    %v6337 = vor.u32 %v6332, %v6336
    %v6338 = vshll.u32 %v6147, 16
    %v6340 = vrot.slane %v6338, 1
    %v6341 = vsel %vm1518, %v6337, %v6340
    %v6342 = vshrl.u32 %v6149, 16
    %v6344 = vshll.u32 %v6149, 16
    %v6346 = vrot.slane %v6344, 1
    %v6347 = vor.u32 %v6342, %v6346
    %v6348 = vshll.u32 %v6151, 16
    %v6350 = vrot.slane %v6348, 1
    %v6351 = vsel %vm1518, %v6347, %v6350
    %v6352 = vshrl.u32 %v6153, 16
    %v6354 = vshll.u32 %v6153, 16
    %v6356 = vrot.slane %v6354, 1
    %v6357 = vor.u32 %v6352, %v6356
    %v6358 = vshll.u32 %v6155, 16
    %v6360 = vrot.slane %v6358, 1
    %v6361 = vsel %vm1518, %v6357, %v6360
    %v6362 = vshrl.u32 %v6157, 16
    %v6364 = vshll.u32 %v6157, 16
    %v6366 = vrot.slane %v6364, 1
    %v6367 = vor.u32 %v6362, %v6366
    %v6368 = vshll.u32 %v6159, 16
    %v6370 = vrot.slane %v6368, 1
    %v6371 = vsel %vm1518, %v6367, %v6370
    %v6372 = vshrl.u32 %v6161, 16
    %v6374 = vshll.u32 %v6161, 16
    %v6376 = vrot.slane %v6374, 1
    %v6377 = vor.u32 %v6372, %v6376
    %v6378 = vshll.u32 %v6163, 16
    %v6380 = vrot.slane %v6378, 1
    %v6381 = vsel %vm1518, %v6377, %v6380
    %v6382 = vshrl.u32 %v6165, 16
    %v6384 = vshll.u32 %v6165, 16
    %v6386 = vrot.slane %v6384, 1
    %v6387 = vor.u32 %v6382, %v6386
    %v6388 = vshll.u32 %v6167, 16
    %v6390 = vrot.slane %v6388, 1
    %v6391 = vsel %vm1518, %v6387, %v6390
    %v6392 = vshrl.u32 %v6169, 16
    %v6394 = vshll.u32 %v6169, 16
    %v6396 = vrot.slane %v6394, 1
    %v6397 = vor.u32 %v6392, %v6396
    %v6398 = vshll.u32 %v6171, 16
    %v6400 = vrot.slane %v6398, 1
    %v6401 = vsel %vm1518, %v6397, %v6400
    %v6402 = vshrl.u32 %v6173, 16
    %v6404 = vshll.u32 %v6173, 16
    %v6406 = vrot.slane %v6404, 1
    %v6407 = vor.u32 %v6402, %v6406
    %v6408 = vshll.u32 %v6175, 16
    %v6410 = vrot.slane %v6408, 1
    %v6411 = vsel %vm1518, %v6407, %v6410
    %v6412 = vshrl.u32 %v6177, 16
    %v6414 = vshll.u32 %v6177, 16
    %v6416 = vrot.slane %v6414, 1
    %v6417 = vor.u32 %v6412, %v6416
    %v6418 = vshll.u32 %v6179, 16
    %v6420 = vrot.slane %v6418, 1
    %v6421 = vsel %vm1518, %v6417, %v6420
    %v6422 = vshrl.u32 %v6181, 16
    %v6424 = vshll.u32 %v6181, 16
    %v6426 = vrot.slane %v6424, 1
    %v6427 = vor.u32 %v6422, %v6426
    %v6428 = vshll.u32 %v6183, 16
    %v6430 = vrot.slane %v6428, 1
    %v6431 = vsel %vm1518, %v6427, %v6430
    %v6432 = vshrl.u32 %v6185, 16
    %v6434 = vshll.u32 %v6185, 16
    %v6436 = vrot.slane %v6434, 1
    %v6437 = vor.u32 %v6432, %v6436
    %v6438 = vshll.u32 %v6187, 16
    %v6440 = vrot.slane %v6438, 1
    %v6441 = vsel %vm1518, %v6437, %v6440
    %v6442 = vshrl.u32 %v6189, 16
    %v6444 = vshll.u32 %v6189, 16
    %v6446 = vrot.slane %v6444, 1
    %v6447 = vor.u32 %v6442, %v6446
    %v6448 = vshll.u32 %v6191, 16
    %v6450 = vrot.slane %v6448, 1
    %v6451 = vsel %vm1518, %v6447, %v6450
    %v6452 = vshrl.u32 %v6193, 16
    %v6454 = vshll.u32 %v6193, 16
    %v6456 = vrot.slane %v6454, 1
    %v6457 = vor.u32 %v6452, %v6456
    %v6458 = vshll.u32 %v6195, 16
    %v6460 = vrot.slane %v6458, 1
    %v6461 = vsel %vm1518, %v6457, %v6460
    %v6462 = vshrl.u32 %v6197, 16
    %v6464 = vshll.u32 %v6197, 16
    %v6466 = vrot.slane %v6464, 1
    %v6467 = vor.u32 %v6462, %v6466
    %v6468 = vshll.u32 %v6199, 16
    %v6470 = vrot.slane %v6468, 1
    %v6471 = vsel %vm1518, %v6467, %v6470
    %v6472 = vshrl.u32 %v6201, 16
    %v6474 = vshll.u32 %v6201, 16
    %v6476 = vrot.slane %v6474, 1
    %v6477 = vor.u32 %v6472, %v6476
    %v6478 = vshll.u32 %v6203, 16
    %v6480 = vrot.slane %v6478, 1
    %v6481 = vsel %vm1518, %v6477, %v6480
    %v6482 = vshrl.u32 %v6205, 16
    %v6484 = vshll.u32 %v6205, 16
    %v6486 = vrot.slane %v6484, 1
    %v6487 = vor.u32 %v6482, %v6486
    %v6488 = vshll.u32 %v6207, 16
    %v6490 = vrot.slane %v6488, 1
    %v6491 = vsel %vm1518, %v6487, %v6490
    %v6492 = vshrl.u32 %v6209, 16
    %v6494 = vshll.u32 %v6209, 16
    %v6496 = vrot.slane %v6494, 1
    %v6497 = vor.u32 %v6492, %v6496
    %v6498 = vshll.u32 %v6211, 16
    %v6500 = vrot.slane %v6498, 1
    %v6501 = vsel %vm1518, %v6497, %v6500
    %v6502 = vshrl.u32 %v6213, 16
    %v6504 = vshll.u32 %v6213, 16
    %v6506 = vrot.slane %v6504, 1
    %v6507 = vor.u32 %v6502, %v6506
    %v6508 = vshll.u32 %v6215, 16
    %v6510 = vrot.slane %v6508, 1
    %v6511 = vsel %vm1518, %v6507, %v6510
    %v6512 = vshrl.u32 %v6217, 16
    %v6514 = vshll.u32 %v6217, 16
    %v6516 = vrot.slane %v6514, 1
    %v6517 = vor.u32 %v6512, %v6516
    %v6518 = vshll.u32 %v6219, 16
    %v6520 = vrot.slane %v6518, 1
    %v6521 = vsel %vm1518, %v6517, %v6520
    %v6522 = vshrl.u32 %v6221, 16
    %v6524 = vshll.u32 %v6221, 16
    %v6526 = vrot.slane %v6524, 1
    %v6527 = vor.u32 %v6522, %v6526
    %v6528 = vshll.u32 %v6223, 16
    %v6530 = vrot.slane %v6528, 1
    %v6531 = vsel %vm1518, %v6527, %v6530
    %v6532 = vshrl.u32 %v6225, 16
    %v6534 = vshll.u32 %v6225, 16
    %v6536 = vrot.slane %v6534, 1
    %v6537 = vor.u32 %v6532, %v6536
    %v6538 = vshll.u32 %v6227, 16
    %v6540 = vrot.slane %v6538, 1
    %v6541 = vsel %vm1518, %v6537, %v6540
    %v6542 = vshrl.u32 %v6229, 16
    %v6544 = vshll.u32 %v6229, 16
    %v6546 = vrot.slane %v6544, 1
    %v6547 = vor.u32 %v6542, %v6546
    %v6548 = vshll.u32 %v6231, 16
    %v6550 = vrot.slane %v6548, 1
    %v6551 = vsel %vm1518, %v6547, %v6550
    %v6552 = vld [vmem:[%s1] sm:$0xf]
    %v6553 = vld [vmem:[%s1 + $0x4] sm:$0xf]
    %v6554 = vld [vmem:[%s1 + $0x8] sm:$0xf]
    %v6555 = vld [vmem:[%s1 + $0xc] sm:$0x3]
    %v6556 = vld [vmem:[%s2] sm:$0x1]
    %v6558 = vperm.slane %v6556, 0
    %v6564 = vunpack.c.l.b16 %v6552
    %v6565 = vunpack.c.l.b16 %v6553
    %v6566 = vunpack.c.l.b16 %v6554
    %v6567 = vunpack.c.l.b16 %v6555
    %v6568 = vpack.c.b16 %v6565, %v6564
    %v6569 = vpack.c.b16 %v6567, %v6566
    %vm6571 = vcmask 220160
    %v6573 = vsel %vm6571, %v6241, 0
    %v6576 = vsel %vm6571, %v6251, 0
    %v6579 = vsel %vm6571, %v6261, 0
    %v6582 = vsel %vm6571, %v6271, 0
    %v6585 = vsel %vm6571, %v6281, 0
    %v6588 = vsel %vm6571, %v6291, 0
    %v6591 = vsel %vm6571, %v6301, 0
    %v6594 = vsel %vm6571, %v6311, 0
    %v6597 = vsel %vm6571, %v6321, 0
    %v6600 = vsel %vm6571, %v6331, 0
    %v6603 = vsel %vm6571, %v6341, 0
    %v6606 = vsel %vm6571, %v6351, 0
    %v6609 = vsel %vm6571, %v6361, 0
    %v6612 = vsel %vm6571, %v6371, 0
    %v6615 = vsel %vm6571, %v6381, 0
    %v6618 = vsel %vm6571, %v6391, 0
    %v6621 = vsel %vm6571, %v6401, 0
    %v6624 = vsel %vm6571, %v6411, 0
    %v6627 = vsel %vm6571, %v6421, 0
    %v6630 = vsel %vm6571, %v6431, 0
    %v6633 = vsel %vm6571, %v6441, 0
    %v6636 = vsel %vm6571, %v6451, 0
    %v6639 = vsel %vm6571, %v6461, 0
    %v6642 = vsel %vm6571, %v6471, 0
    %v6645 = vsel %vm6571, %v6481, 0
    %v6648 = vsel %vm6571, %v6491, 0
    %v6651 = vsel %vm6571, %v6501, 0
    %v6654 = vsel %vm6571, %v6511, 0
    %v6657 = vsel %vm6571, %v6521, 0
    %v6660 = vsel %vm6571, %v6531, 0
    %v6663 = vsel %vm6571, %v6541, 0
    %v6666 = vsel %vm6571, %v6551, 0
    %vm6668 = vcmask 1044480
    %vm6669 = vcmask 1045504
    %v6670 = vsel %vm6668, 4294967295, 65535
    %v6671 = vsel %vm6669, %v6670, 0
    %v6673 = vand.u32 %v6569, %v6671
    %6675 = vmatpush.bf16.msra.mxu0 0
    %6676 = vmatpush.bf16.msra.mxu0 0
    %6677 = vmatpush.bf16.msra.mxu0 0
    %6678 = vmatpush.bf16.msra.mxu0 0
    %6679 = vmatpush.bf16.msra.mxu0 0
    %6680 = vmatpush.bf16.msra.mxu0 0
    %6681 = vmatpush.bf16.msra.mxu0 %v6673
    %6682 = vmatpush.bf16.msra.mxu0 %v6568
    %6683 = vmatmul.bf16.gmra.mxu0 %v6573
    %v6684 = vpop.f32.mrf.mxu0
    %v6685 = vadd.f32 %v6558, %v6684
    %v6686 = vpop.f32.mrf.mxu0
    %v6687 = vadd.f32 %v6558, %v6686
    %6688 = vmatmul.bf16.gmra.mxu0 %v6576
    %v6689 = vpop.f32.mrf.mxu0
    %v6690 = vadd.f32 %v6558, %v6689
    %v6691 = vpop.f32.mrf.mxu0
    %v6692 = vadd.f32 %v6558, %v6691
    %6693 = vmatmul.bf16.gmra.mxu0 %v6579
    %v6694 = vpop.f32.mrf.mxu0
    %v6695 = vadd.f32 %v6558, %v6694
    %v6696 = vpop.f32.mrf.mxu0
    %v6697 = vadd.f32 %v6558, %v6696
    %6698 = vmatmul.bf16.gmra.mxu0 %v6582
    %v6699 = vpop.f32.mrf.mxu0
    %v6700 = vadd.f32 %v6558, %v6699
    %v6701 = vpop.f32.mrf.mxu0
    %v6702 = vadd.f32 %v6558, %v6701
    %6703 = vmatmul.bf16.gmra.mxu0 %v6585
    %v6704 = vpop.f32.mrf.mxu0
    %v6705 = vadd.f32 %v6558, %v6704
    %v6706 = vpop.f32.mrf.mxu0
    %v6707 = vadd.f32 %v6558, %v6706
    %6708 = vmatmul.bf16.gmra.mxu0 %v6588
    %v6709 = vpop.f32.mrf.mxu0
    %v6710 = vadd.f32 %v6558, %v6709
    %v6711 = vpop.f32.mrf.mxu0
    %v6712 = vadd.f32 %v6558, %v6711
    %6713 = vmatmul.bf16.gmra.mxu0 %v6591
    %v6714 = vpop.f32.mrf.mxu0
    %v6715 = vadd.f32 %v6558, %v6714
    %v6716 = vpop.f32.mrf.mxu0
    %v6717 = vadd.f32 %v6558, %v6716
    %6718 = vmatmul.bf16.gmra.mxu0 %v6594
    %v6719 = vpop.f32.mrf.mxu0
    %v6720 = vadd.f32 %v6558, %v6719
    %v6721 = vpop.f32.mrf.mxu0
    %v6722 = vadd.f32 %v6558, %v6721
    %6723 = vmatmul.bf16.gmra.mxu0 %v6597
    %v6724 = vpop.f32.mrf.mxu0
    %v6725 = vadd.f32 %v6558, %v6724
    %v6726 = vpop.f32.mrf.mxu0
    %v6727 = vadd.f32 %v6558, %v6726
    %6728 = vmatmul.bf16.gmra.mxu0 %v6600
    %v6729 = vpop.f32.mrf.mxu0
    %v6730 = vadd.f32 %v6558, %v6729
    %v6731 = vpop.f32.mrf.mxu0
    %v6732 = vadd.f32 %v6558, %v6731
    %6733 = vmatmul.bf16.gmra.mxu0 %v6603
    %v6734 = vpop.f32.mrf.mxu0
    %v6735 = vadd.f32 %v6558, %v6734
    %v6736 = vpop.f32.mrf.mxu0
    %v6737 = vadd.f32 %v6558, %v6736
    %6738 = vmatmul.bf16.gmra.mxu0 %v6606
    %v6739 = vpop.f32.mrf.mxu0
    %v6740 = vadd.f32 %v6558, %v6739
    %v6741 = vpop.f32.mrf.mxu0
    %v6742 = vadd.f32 %v6558, %v6741
    %6743 = vmatmul.bf16.gmra.mxu0 %v6609
    %v6744 = vpop.f32.mrf.mxu0
    %v6745 = vadd.f32 %v6558, %v6744
    %v6746 = vpop.f32.mrf.mxu0
    %v6747 = vadd.f32 %v6558, %v6746
    %6748 = vmatmul.bf16.gmra.mxu0 %v6612
    %v6749 = vpop.f32.mrf.mxu0
    %v6750 = vadd.f32 %v6558, %v6749
    %v6751 = vpop.f32.mrf.mxu0
    %v6752 = vadd.f32 %v6558, %v6751
    %6753 = vmatmul.bf16.gmra.mxu0 %v6615
    %v6754 = vpop.f32.mrf.mxu0
    %v6755 = vadd.f32 %v6558, %v6754
    %v6756 = vpop.f32.mrf.mxu0
    %v6757 = vadd.f32 %v6558, %v6756
    %6758 = vmatmul.bf16.gmra.mxu0 %v6618
    %v6759 = vpop.f32.mrf.mxu0
    %v6760 = vadd.f32 %v6558, %v6759
    %v6761 = vpop.f32.mrf.mxu0
    %v6762 = vadd.f32 %v6558, %v6761
    %6763 = vmatmul.bf16.gmra.mxu0 %v6621
    %v6764 = vpop.f32.mrf.mxu0
    %v6765 = vadd.f32 %v6558, %v6764
    %v6766 = vpop.f32.mrf.mxu0
    %v6767 = vadd.f32 %v6558, %v6766
    %6768 = vmatmul.bf16.gmra.mxu0 %v6624
    %v6769 = vpop.f32.mrf.mxu0
    %v6770 = vadd.f32 %v6558, %v6769
    %v6771 = vpop.f32.mrf.mxu0
    %v6772 = vadd.f32 %v6558, %v6771
    %6773 = vmatmul.bf16.gmra.mxu0 %v6627
    %v6774 = vpop.f32.mrf.mxu0
    %v6775 = vadd.f32 %v6558, %v6774
    %v6776 = vpop.f32.mrf.mxu0
    %v6777 = vadd.f32 %v6558, %v6776
    %6778 = vmatmul.bf16.gmra.mxu0 %v6630
    %v6779 = vpop.f32.mrf.mxu0
    %v6780 = vadd.f32 %v6558, %v6779
    %v6781 = vpop.f32.mrf.mxu0
    %v6782 = vadd.f32 %v6558, %v6781
    %6783 = vmatmul.bf16.gmra.mxu0 %v6633
    %v6784 = vpop.f32.mrf.mxu0
    %v6785 = vadd.f32 %v6558, %v6784
    %v6786 = vpop.f32.mrf.mxu0
    %v6787 = vadd.f32 %v6558, %v6786
    %6788 = vmatmul.bf16.gmra.mxu0 %v6636
    %v6789 = vpop.f32.mrf.mxu0
    %v6790 = vadd.f32 %v6558, %v6789
    %v6791 = vpop.f32.mrf.mxu0
    %v6792 = vadd.f32 %v6558, %v6791
    %6793 = vmatmul.bf16.gmra.mxu0 %v6639
    %v6794 = vpop.f32.mrf.mxu0
    %v6795 = vadd.f32 %v6558, %v6794
    %v6796 = vpop.f32.mrf.mxu0
    %v6797 = vadd.f32 %v6558, %v6796
    %6798 = vmatmul.bf16.gmra.mxu0 %v6642
    %v6799 = vpop.f32.mrf.mxu0
    %v6800 = vadd.f32 %v6558, %v6799
    %v6801 = vpop.f32.mrf.mxu0
    %v6802 = vadd.f32 %v6558, %v6801
    %6803 = vmatmul.bf16.gmra.mxu0 %v6645
    %v6804 = vpop.f32.mrf.mxu0
    %v6805 = vadd.f32 %v6558, %v6804
    %v6806 = vpop.f32.mrf.mxu0
    %v6807 = vadd.f32 %v6558, %v6806
    %6808 = vmatmul.bf16.gmra.mxu0 %v6648
    %v6809 = vpop.f32.mrf.mxu0
    %v6810 = vadd.f32 %v6558, %v6809
    %v6811 = vpop.f32.mrf.mxu0
    %v6812 = vadd.f32 %v6558, %v6811
    %6813 = vmatmul.bf16.gmra.mxu0 %v6651
    %v6814 = vpop.f32.mrf.mxu0
    %v6815 = vadd.f32 %v6558, %v6814
    %v6816 = vpop.f32.mrf.mxu0
    %v6817 = vadd.f32 %v6558, %v6816
    %6818 = vmatmul.bf16.gmra.mxu0 %v6654
    %v6819 = vpop.f32.mrf.mxu0
    %v6820 = vadd.f32 %v6558, %v6819
    %v6821 = vpop.f32.mrf.mxu0
    %v6822 = vadd.f32 %v6558, %v6821
    %6823 = vmatmul.bf16.gmra.mxu0 %v6657
    %v6824 = vpop.f32.mrf.mxu0
    %v6825 = vadd.f32 %v6558, %v6824
    %v6826 = vpop.f32.mrf.mxu0
    %v6827 = vadd.f32 %v6558, %v6826
    %6828 = vmatmul.bf16.gmra.mxu0 %v6660
    %v6829 = vpop.f32.mrf.mxu0
    %v6830 = vadd.f32 %v6558, %v6829
    %v6831 = vpop.f32.mrf.mxu0
    %v6832 = vadd.f32 %v6558, %v6831
    %6833 = vmatmul.bf16.gmra.mxu0 %v6663
    %v6834 = vpop.f32.mrf.mxu0
    %v6835 = vadd.f32 %v6558, %v6834
    %v6836 = vpop.f32.mrf.mxu0
    %v6837 = vadd.f32 %v6558, %v6836
    %6838 = vmatmul.bf16.gmra.mxu0 %v6666
    %v6839 = vpop.f32.mrf.mxu0
    %v6840 = vadd.f32 %v6558, %v6839
    %v6841 = vpop.f32.mrf.mxu0
    %v6842 = vadd.f32 %v6558, %v6841
    %6843 = vdwg.mxu0
    %v6844 = vmax.f32 %v6685, 0.0
    %v6845 = vmax.f32 %v6687, 0.0
    %v6846 = vmax.f32 %v6690, 0.0
    %v6847 = vmax.f32 %v6692, 0.0
    %v6848 = vmax.f32 %v6695, 0.0
    %v6849 = vmax.f32 %v6697, 0.0
    %v6850 = vmax.f32 %v6700, 0.0
    %v6851 = vmax.f32 %v6702, 0.0
    %v6852 = vmax.f32 %v6705, 0.0
    %v6853 = vmax.f32 %v6707, 0.0
    %v6854 = vmax.f32 %v6710, 0.0
    %v6855 = vmax.f32 %v6712, 0.0
    %v6856 = vmax.f32 %v6715, 0.0
    %v6857 = vmax.f32 %v6717, 0.0
    %v6858 = vmax.f32 %v6720, 0.0
    %v6859 = vmax.f32 %v6722, 0.0
    %v6860 = vmax.f32 %v6725, 0.0
    %v6861 = vmax.f32 %v6727, 0.0
    %v6862 = vmax.f32 %v6730, 0.0
    %v6863 = vmax.f32 %v6732, 0.0
    %v6864 = vmax.f32 %v6735, 0.0
    %v6865 = vmax.f32 %v6737, 0.0
    %v6866 = vmax.f32 %v6740, 0.0
    %v6867 = vmax.f32 %v6742, 0.0
    %v6868 = vmax.f32 %v6745, 0.0
    %v6869 = vmax.f32 %v6747, 0.0
    %v6870 = vmax.f32 %v6750, 0.0
    %v6871 = vmax.f32 %v6752, 0.0
    %v6872 = vmax.f32 %v6755, 0.0
    %v6873 = vmax.f32 %v6757, 0.0
    %v6874 = vmax.f32 %v6760, 0.0
    %v6875 = vmax.f32 %v6762, 0.0
    %v6876 = vmax.f32 %v6765, 0.0
    %v6877 = vmax.f32 %v6767, 0.0
    %v6878 = vmax.f32 %v6770, 0.0
    %v6879 = vmax.f32 %v6772, 0.0
    %v6880 = vmax.f32 %v6775, 0.0
    %v6881 = vmax.f32 %v6777, 0.0
    %v6882 = vmax.f32 %v6780, 0.0
    %v6883 = vmax.f32 %v6782, 0.0
    %v6884 = vmax.f32 %v6785, 0.0
    %v6885 = vmax.f32 %v6787, 0.0
    %v6886 = vmax.f32 %v6790, 0.0
    %v6887 = vmax.f32 %v6792, 0.0
    %v6888 = vmax.f32 %v6795, 0.0
    %v6889 = vmax.f32 %v6797, 0.0
    %v6890 = vmax.f32 %v6800, 0.0
    %v6891 = vmax.f32 %v6802, 0.0
    %v6892 = vmax.f32 %v6805, 0.0
    %v6893 = vmax.f32 %v6807, 0.0
    %v6894 = vmax.f32 %v6810, 0.0
    %v6895 = vmax.f32 %v6812, 0.0
    %v6896 = vmax.f32 %v6815, 0.0
    %v6897 = vmax.f32 %v6817, 0.0
    %v6898 = vmax.f32 %v6820, 0.0
    %v6899 = vmax.f32 %v6822, 0.0
    %v6900 = vmax.f32 %v6825, 0.0
    %v6901 = vmax.f32 %v6827, 0.0
    %v6902 = vmax.f32 %v6830, 0.0
    %v6903 = vmax.f32 %v6832, 0.0
    %v6904 = vmax.f32 %v6835, 0.0
    %v6905 = vmax.f32 %v6837, 0.0
    %v6906 = vmax.f32 %v6840, 0.0
    %v6907 = vmax.f32 %v6842, 0.0
    %v6972 = vrot.slane %v6844, 2
    %v6973 = vrot.slane %v6844, 4
    %v6974 = vrot.slane %v6844, 6
    %v6975 = vrot.slane %v6845, 2
    %v6976 = vrot.slane %v6845, 4
    %v6977 = vrot.slane %v6845, 6
    %v6978 = vrot.slane %v6846, 2
    %v6979 = vrot.slane %v6846, 4
    %v6980 = vrot.slane %v6846, 6
    %v6981 = vrot.slane %v6847, 2
    %v6982 = vrot.slane %v6847, 4
    %v6983 = vrot.slane %v6847, 6
    %v6984 = vrot.slane %v6848, 2
    %v6985 = vrot.slane %v6848, 4
    %v6986 = vrot.slane %v6848, 6
    %v6987 = vrot.slane %v6849, 2
    %v6988 = vrot.slane %v6849, 4
    %v6989 = vrot.slane %v6849, 6
    %v6990 = vrot.slane %v6850, 2
    %v6991 = vrot.slane %v6850, 4
    %v6992 = vrot.slane %v6850, 6
    %v6993 = vrot.slane %v6851, 2
    %v6994 = vrot.slane %v6851, 4
    %v6995 = vrot.slane %v6851, 6
    %v6996 = vrot.slane %v6852, 2
    %v6997 = vrot.slane %v6852, 4
    %v6998 = vrot.slane %v6852, 6
    %v6999 = vrot.slane %v6853, 2
    %v7000 = vrot.slane %v6853, 4
    %v7001 = vrot.slane %v6853, 6
    %v7002 = vrot.slane %v6854, 2
    %v7003 = vrot.slane %v6854, 4
    %v7004 = vrot.slane %v6854, 6
    %v7005 = vrot.slane %v6855, 2
    %v7006 = vrot.slane %v6855, 4
    %v7007 = vrot.slane %v6855, 6
    %v7008 = vrot.slane %v6856, 2
    %v7009 = vrot.slane %v6856, 4
    %v7010 = vrot.slane %v6856, 6
    %v7011 = vrot.slane %v6857, 2
    %v7012 = vrot.slane %v6857, 4
    %v7013 = vrot.slane %v6857, 6
    %v7014 = vrot.slane %v6858, 2
    %v7015 = vrot.slane %v6858, 4
    %v7016 = vrot.slane %v6858, 6
    %v7017 = vrot.slane %v6859, 2
    %v7018 = vrot.slane %v6859, 4
    %v7019 = vrot.slane %v6859, 6
    %v7020 = vrot.slane %v6860, 2
    %v7021 = vrot.slane %v6860, 4
    %v7022 = vrot.slane %v6860, 6
    %v7023 = vrot.slane %v6861, 2
    %v7024 = vrot.slane %v6861, 4
    %v7025 = vrot.slane %v6861, 6
    %v7026 = vrot.slane %v6862, 2
    %v7027 = vrot.slane %v6862, 4
    %v7028 = vrot.slane %v6862, 6
    %v7029 = vrot.slane %v6863, 2
    %v7030 = vrot.slane %v6863, 4
    %v7031 = vrot.slane %v6863, 6
    %v7032 = vrot.slane %v6864, 2
    %v7033 = vrot.slane %v6864, 4
    %v7034 = vrot.slane %v6864, 6
    %v7035 = vrot.slane %v6865, 2
    %v7036 = vrot.slane %v6865, 4
    %v7037 = vrot.slane %v6865, 6
    %v7038 = vrot.slane %v6866, 2
    %v7039 = vrot.slane %v6866, 4
    %v7040 = vrot.slane %v6866, 6
    %v7041 = vrot.slane %v6867, 2
    %v7042 = vrot.slane %v6867, 4
    %v7043 = vrot.slane %v6867, 6
    %v7044 = vrot.slane %v6868, 2
    %v7045 = vrot.slane %v6868, 4
    %v7046 = vrot.slane %v6868, 6
    %v7047 = vrot.slane %v6869, 2
    %v7048 = vrot.slane %v6869, 4
    %v7049 = vrot.slane %v6869, 6
    %v7050 = vrot.slane %v6870, 2
    %v7051 = vrot.slane %v6870, 4
    %v7052 = vrot.slane %v6870, 6
    %v7053 = vrot.slane %v6871, 2
    %v7054 = vrot.slane %v6871, 4
    %v7055 = vrot.slane %v6871, 6
    %v7056 = vrot.slane %v6872, 2
    %v7057 = vrot.slane %v6872, 4
    %v7058 = vrot.slane %v6872, 6
    %v7059 = vrot.slane %v6873, 2
    %v7060 = vrot.slane %v6873, 4
    %v7061 = vrot.slane %v6873, 6
    %v7062 = vrot.slane %v6874, 2
    %v7063 = vrot.slane %v6874, 4
    %v7064 = vrot.slane %v6874, 6
    %v7065 = vrot.slane %v6875, 2
    %v7066 = vrot.slane %v6875, 4
    %v7067 = vrot.slane %v6875, 6
    %v7068 = vrot.slane %v6876, 2
    %v7069 = vrot.slane %v6876, 4
    %v7070 = vrot.slane %v6876, 6
    %v7071 = vrot.slane %v6877, 2
    %v7072 = vrot.slane %v6877, 4
    %v7073 = vrot.slane %v6877, 6
    %v7074 = vrot.slane %v6878, 2
    %v7075 = vrot.slane %v6878, 4
    %v7076 = vrot.slane %v6878, 6
    %v7077 = vrot.slane %v6879, 2
    %v7078 = vrot.slane %v6879, 4
    %v7079 = vrot.slane %v6879, 6
    %v7080 = vrot.slane %v6880, 2
    %v7081 = vrot.slane %v6880, 4
    %v7082 = vrot.slane %v6880, 6
    %v7083 = vrot.slane %v6881, 2
    %v7084 = vrot.slane %v6881, 4
    %v7085 = vrot.slane %v6881, 6
    %v7086 = vrot.slane %v6882, 2
    %v7087 = vrot.slane %v6882, 4
    %v7088 = vrot.slane %v6882, 6
    %v7089 = vrot.slane %v6883, 2
    %v7090 = vrot.slane %v6883, 4
    %v7091 = vrot.slane %v6883, 6
    %v7092 = vrot.slane %v6884, 2
    %v7093 = vrot.slane %v6884, 4
    %v7094 = vrot.slane %v6884, 6
    %v7095 = vrot.slane %v6885, 2
    %v7096 = vrot.slane %v6885, 4
    %v7097 = vrot.slane %v6885, 6
    %v7098 = vrot.slane %v6886, 2
    %v7099 = vrot.slane %v6886, 4
    %v7100 = vrot.slane %v6886, 6
    %v7101 = vrot.slane %v6887, 2
    %v7102 = vrot.slane %v6887, 4
    %v7103 = vrot.slane %v6887, 6
    %v7104 = vrot.slane %v6888, 2
    %v7105 = vrot.slane %v6888, 4
    %v7106 = vrot.slane %v6888, 6
    %v7107 = vrot.slane %v6889, 2
    %v7108 = vrot.slane %v6889, 4
    %v7109 = vrot.slane %v6889, 6
    %v7110 = vrot.slane %v6890, 2
    %v7111 = vrot.slane %v6890, 4
    %v7112 = vrot.slane %v6890, 6
    %v7113 = vrot.slane %v6891, 2
    %v7114 = vrot.slane %v6891, 4
    %v7115 = vrot.slane %v6891, 6
    %v7116 = vrot.slane %v6892, 2
    %v7117 = vrot.slane %v6892, 4
    %v7118 = vrot.slane %v6892, 6
    %v7119 = vrot.slane %v6893, 2
    %v7120 = vrot.slane %v6893, 4
    %v7121 = vrot.slane %v6893, 6
    %v7122 = vrot.slane %v6894, 2
    %v7123 = vrot.slane %v6894, 4
    %v7124 = vrot.slane %v6894, 6
    %v7125 = vrot.slane %v6895, 2
    %v7126 = vrot.slane %v6895, 4
    %v7127 = vrot.slane %v6895, 6
    %v7128 = vrot.slane %v6896, 2
    %v7129 = vrot.slane %v6896, 4
    %v7130 = vrot.slane %v6896, 6
    %v7131 = vrot.slane %v6897, 2
    %v7132 = vrot.slane %v6897, 4
    %v7133 = vrot.slane %v6897, 6
    %v7134 = vrot.slane %v6898, 2
    %v7135 = vrot.slane %v6898, 4
    %v7136 = vrot.slane %v6898, 6
    %v7137 = vrot.slane %v6899, 2
    %v7138 = vrot.slane %v6899, 4
    %v7139 = vrot.slane %v6899, 6
    %v7140 = vrot.slane %v6900, 2
    %v7141 = vrot.slane %v6900, 4
    %v7142 = vrot.slane %v6900, 6
    %v7143 = vrot.slane %v6901, 2
    %v7144 = vrot.slane %v6901, 4
    %v7145 = vrot.slane %v6901, 6
    %v7146 = vrot.slane %v6902, 2
    %v7147 = vrot.slane %v6902, 4
    %v7148 = vrot.slane %v6902, 6
    %v7149 = vrot.slane %v6903, 2
    %v7150 = vrot.slane %v6903, 4
    %v7151 = vrot.slane %v6903, 6
    %v7152 = vrot.slane %v6904, 2
    %v7153 = vrot.slane %v6904, 4
    %v7154 = vrot.slane %v6904, 6
    %v7155 = vrot.slane %v6905, 2
    %v7156 = vrot.slane %v6905, 4
    %v7157 = vrot.slane %v6905, 6
    %v7158 = vrot.slane %v6906, 2
    %v7159 = vrot.slane %v6906, 4
    %v7160 = vrot.slane %v6906, 6
    %v7161 = vrot.slane %v6907, 2
    %v7162 = vrot.slane %v6907, 4
    %v7163 = vrot.slane %v6907, 6
    %v7356 = vrot.slane %v6844, 7
    %v7357 = vrot.slane %v7356, 2
    %v7358 = vrot.slane %v6972, 7
    %v7359 = vrot.slane %v7358, 2
    %v7360 = vrot.slane %v6973, 7
    %v7361 = vrot.slane %v7360, 2
    %v7362 = vrot.slane %v6974, 7
    %v7363 = vrot.slane %v7362, 2
    %v7364 = vrot.slane %v6845, 7
    %v7365 = vrot.slane %v7364, 2
    %v7366 = vrot.slane %v6975, 7
    %v7367 = vrot.slane %v7366, 2
    %v7368 = vrot.slane %v6976, 7
    %v7369 = vrot.slane %v7368, 2
    %v7370 = vrot.slane %v6977, 7
    %v7371 = vrot.slane %v7370, 2
    %v7372 = vrot.slane %v6846, 7
    %v7373 = vrot.slane %v7372, 2
    %v7374 = vrot.slane %v6978, 7
    %v7375 = vrot.slane %v7374, 2
    %v7376 = vrot.slane %v6979, 7
    %v7377 = vrot.slane %v7376, 2
    %v7378 = vrot.slane %v6980, 7
    %v7379 = vrot.slane %v7378, 2
    %v7380 = vrot.slane %v6847, 7
    %v7381 = vrot.slane %v7380, 2
    %v7382 = vrot.slane %v6981, 7
    %v7383 = vrot.slane %v7382, 2
    %v7384 = vrot.slane %v6982, 7
    %v7385 = vrot.slane %v7384, 2
    %v7386 = vrot.slane %v6983, 7
    %v7387 = vrot.slane %v7386, 2
    %v7388 = vrot.slane %v6848, 7
    %v7389 = vrot.slane %v7388, 2
    %v7390 = vrot.slane %v6984, 7
    %v7391 = vrot.slane %v7390, 2
    %v7392 = vrot.slane %v6985, 7
    %v7393 = vrot.slane %v7392, 2
    %v7394 = vrot.slane %v6986, 7
    %v7395 = vrot.slane %v7394, 2
    %v7396 = vrot.slane %v6849, 7
    %v7397 = vrot.slane %v7396, 2
    %v7398 = vrot.slane %v6987, 7
    %v7399 = vrot.slane %v7398, 2
    %v7400 = vrot.slane %v6988, 7
    %v7401 = vrot.slane %v7400, 2
    %v7402 = vrot.slane %v6989, 7
    %v7403 = vrot.slane %v7402, 2
    %v7404 = vrot.slane %v6850, 7
    %v7405 = vrot.slane %v7404, 2
    %v7406 = vrot.slane %v6990, 7
    %v7407 = vrot.slane %v7406, 2
    %v7408 = vrot.slane %v6991, 7
    %v7409 = vrot.slane %v7408, 2
    %v7410 = vrot.slane %v6992, 7
    %v7411 = vrot.slane %v7410, 2
    %v7412 = vrot.slane %v6851, 7
    %v7413 = vrot.slane %v7412, 2
    %v7414 = vrot.slane %v6993, 7
    %v7415 = vrot.slane %v7414, 2
    %v7416 = vrot.slane %v6994, 7
    %v7417 = vrot.slane %v7416, 2
    %v7418 = vrot.slane %v6995, 7
    %v7419 = vrot.slane %v7418, 2
    %v7420 = vrot.slane %v6852, 7
    %v7421 = vrot.slane %v7420, 2
    %v7422 = vrot.slane %v6996, 7
    %v7423 = vrot.slane %v7422, 2
    %v7424 = vrot.slane %v6997, 7
    %v7425 = vrot.slane %v7424, 2
    %v7426 = vrot.slane %v6998, 7
    %v7427 = vrot.slane %v7426, 2
    %v7428 = vrot.slane %v6853, 7
    %v7429 = vrot.slane %v7428, 2
    %v7430 = vrot.slane %v6999, 7
    %v7431 = vrot.slane %v7430, 2
    %v7432 = vrot.slane %v7000, 7
    %v7433 = vrot.slane %v7432, 2
    %v7434 = vrot.slane %v7001, 7
    %v7435 = vrot.slane %v7434, 2
    %v7436 = vrot.slane %v6854, 7
    %v7437 = vrot.slane %v7436, 2
    %v7438 = vrot.slane %v7002, 7
    %v7439 = vrot.slane %v7438, 2
    %v7440 = vrot.slane %v7003, 7
    %v7441 = vrot.slane %v7440, 2
    %v7442 = vrot.slane %v7004, 7
    %v7443 = vrot.slane %v7442, 2
    %v7444 = vrot.slane %v6855, 7
    %v7445 = vrot.slane %v7444, 2
    %v7446 = vrot.slane %v7005, 7
    %v7447 = vrot.slane %v7446, 2
    %v7448 = vrot.slane %v7006, 7
    %v7449 = vrot.slane %v7448, 2
    %v7450 = vrot.slane %v7007, 7
    %v7451 = vrot.slane %v7450, 2
    %v7452 = vrot.slane %v6856, 7
    %v7453 = vrot.slane %v7452, 2
    %v7454 = vrot.slane %v7008, 7
    %v7455 = vrot.slane %v7454, 2
    %v7456 = vrot.slane %v7009, 7
    %v7457 = vrot.slane %v7456, 2
    %v7458 = vrot.slane %v7010, 7
    %v7459 = vrot.slane %v7458, 2
    %v7460 = vrot.slane %v6857, 7
    %v7461 = vrot.slane %v7460, 2
    %v7462 = vrot.slane %v7011, 7
    %v7463 = vrot.slane %v7462, 2
    %v7464 = vrot.slane %v7012, 7
    %v7465 = vrot.slane %v7464, 2
    %v7466 = vrot.slane %v7013, 7
    %v7467 = vrot.slane %v7466, 2
    %v7468 = vrot.slane %v6858, 7
    %v7469 = vrot.slane %v7468, 2
    %v7470 = vrot.slane %v7014, 7
    %v7471 = vrot.slane %v7470, 2
    %v7472 = vrot.slane %v7015, 7
    %v7473 = vrot.slane %v7472, 2
    %v7474 = vrot.slane %v7016, 7
    %v7475 = vrot.slane %v7474, 2
    %v7476 = vrot.slane %v6859, 7
    %v7477 = vrot.slane %v7476, 2
    %v7478 = vrot.slane %v7017, 7
    %v7479 = vrot.slane %v7478, 2
    %v7480 = vrot.slane %v7018, 7
    %v7481 = vrot.slane %v7480, 2
    %v7482 = vrot.slane %v7019, 7
    %v7483 = vrot.slane %v7482, 2
    %v7484 = vrot.slane %v6860, 7
    %v7485 = vrot.slane %v7484, 2
    %v7486 = vrot.slane %v7020, 7
    %v7487 = vrot.slane %v7486, 2
    %v7488 = vrot.slane %v7021, 7
    %v7489 = vrot.slane %v7488, 2
    %v7490 = vrot.slane %v7022, 7
    %v7491 = vrot.slane %v7490, 2
    %v7492 = vrot.slane %v6861, 7
    %v7493 = vrot.slane %v7492, 2
    %v7494 = vrot.slane %v7023, 7
    %v7495 = vrot.slane %v7494, 2
    %v7496 = vrot.slane %v7024, 7
    %v7497 = vrot.slane %v7496, 2
    %v7498 = vrot.slane %v7025, 7
    %v7499 = vrot.slane %v7498, 2
    %v7500 = vrot.slane %v6862, 7
    %v7501 = vrot.slane %v7500, 2
    %v7502 = vrot.slane %v7026, 7
    %v7503 = vrot.slane %v7502, 2
    %v7504 = vrot.slane %v7027, 7
    %v7505 = vrot.slane %v7504, 2
    %v7506 = vrot.slane %v7028, 7
    %v7507 = vrot.slane %v7506, 2
    %v7508 = vrot.slane %v6863, 7
    %v7509 = vrot.slane %v7508, 2
    %v7510 = vrot.slane %v7029, 7
    %v7511 = vrot.slane %v7510, 2
    %v7512 = vrot.slane %v7030, 7
    %v7513 = vrot.slane %v7512, 2
    %v7514 = vrot.slane %v7031, 7
    %v7515 = vrot.slane %v7514, 2
    %v7516 = vrot.slane %v6864, 7
    %v7517 = vrot.slane %v7516, 2
    %v7518 = vrot.slane %v7032, 7
    %v7519 = vrot.slane %v7518, 2
    %v7520 = vrot.slane %v7033, 7
    %v7521 = vrot.slane %v7520, 2
    %v7522 = vrot.slane %v7034, 7
    %v7523 = vrot.slane %v7522, 2
    %v7524 = vrot.slane %v6865, 7
    %v7525 = vrot.slane %v7524, 2
    %v7526 = vrot.slane %v7035, 7
    %v7527 = vrot.slane %v7526, 2
    %v7528 = vrot.slane %v7036, 7
    %v7529 = vrot.slane %v7528, 2
    %v7530 = vrot.slane %v7037, 7
    %v7531 = vrot.slane %v7530, 2
    %v7532 = vrot.slane %v6866, 7
    %v7533 = vrot.slane %v7532, 2
    %v7534 = vrot.slane %v7038, 7
    %v7535 = vrot.slane %v7534, 2
    %v7536 = vrot.slane %v7039, 7
    %v7537 = vrot.slane %v7536, 2
    %v7538 = vrot.slane %v7040, 7
    %v7539 = vrot.slane %v7538, 2
    %v7540 = vrot.slane %v6867, 7
    %v7541 = vrot.slane %v7540, 2
    %v7542 = vrot.slane %v7041, 7
    %v7543 = vrot.slane %v7542, 2
    %v7544 = vrot.slane %v7042, 7
    %v7545 = vrot.slane %v7544, 2
    %v7546 = vrot.slane %v7043, 7
    %v7547 = vrot.slane %v7546, 2
    %v7548 = vrot.slane %v6868, 7
    %v7549 = vrot.slane %v7548, 2
    %v7550 = vrot.slane %v7044, 7
    %v7551 = vrot.slane %v7550, 2
    %v7552 = vrot.slane %v7045, 7
    %v7553 = vrot.slane %v7552, 2
    %v7554 = vrot.slane %v7046, 7
    %v7555 = vrot.slane %v7554, 2
    %v7556 = vrot.slane %v6869, 7
    %v7557 = vrot.slane %v7556, 2
    %v7558 = vrot.slane %v7047, 7
    %v7559 = vrot.slane %v7558, 2
    %v7560 = vrot.slane %v7048, 7
    %v7561 = vrot.slane %v7560, 2
    %v7562 = vrot.slane %v7049, 7
    %v7563 = vrot.slane %v7562, 2
    %v7564 = vrot.slane %v6870, 7
    %v7565 = vrot.slane %v7564, 2
    %v7566 = vrot.slane %v7050, 7
    %v7567 = vrot.slane %v7566, 2
    %v7568 = vrot.slane %v7051, 7
    %v7569 = vrot.slane %v7568, 2
    %v7570 = vrot.slane %v7052, 7
    %v7571 = vrot.slane %v7570, 2
    %v7572 = vrot.slane %v6871, 7
    %v7573 = vrot.slane %v7572, 2
    %v7574 = vrot.slane %v7053, 7
    %v7575 = vrot.slane %v7574, 2
    %v7576 = vrot.slane %v7054, 7
    %v7577 = vrot.slane %v7576, 2
    %v7578 = vrot.slane %v7055, 7
    %v7579 = vrot.slane %v7578, 2
    %v7580 = vrot.slane %v6872, 7
    %v7581 = vrot.slane %v7580, 2
    %v7582 = vrot.slane %v7056, 7
    %v7583 = vrot.slane %v7582, 2
    %v7584 = vrot.slane %v7057, 7
    %v7585 = vrot.slane %v7584, 2
    %v7586 = vrot.slane %v7058, 7
    %v7587 = vrot.slane %v7586, 2
    %v7588 = vrot.slane %v6873, 7
    %v7589 = vrot.slane %v7588, 2
    %v7590 = vrot.slane %v7059, 7
    %v7591 = vrot.slane %v7590, 2
    %v7592 = vrot.slane %v7060, 7
    %v7593 = vrot.slane %v7592, 2
    %v7594 = vrot.slane %v7061, 7
    %v7595 = vrot.slane %v7594, 2
    %v7596 = vrot.slane %v6874, 7
    %v7597 = vrot.slane %v7596, 2
    %v7598 = vrot.slane %v7062, 7
    %v7599 = vrot.slane %v7598, 2
    %v7600 = vrot.slane %v7063, 7
    %v7601 = vrot.slane %v7600, 2
    %v7602 = vrot.slane %v7064, 7
    %v7603 = vrot.slane %v7602, 2
    %v7604 = vrot.slane %v6875, 7
    %v7605 = vrot.slane %v7604, 2
    %v7606 = vrot.slane %v7065, 7
    %v7607 = vrot.slane %v7606, 2
    %v7608 = vrot.slane %v7066, 7
    %v7609 = vrot.slane %v7608, 2
    %v7610 = vrot.slane %v7067, 7
    %v7611 = vrot.slane %v7610, 2
    %v7612 = vrot.slane %v6876, 7
    %v7613 = vrot.slane %v7612, 2
    %v7614 = vrot.slane %v7068, 7
    %v7615 = vrot.slane %v7614, 2
    %v7616 = vrot.slane %v7069, 7
    %v7617 = vrot.slane %v7616, 2
    %v7618 = vrot.slane %v7070, 7
    %v7619 = vrot.slane %v7618, 2
    %v7620 = vrot.slane %v6877, 7
    %v7621 = vrot.slane %v7620, 2
    %v7622 = vrot.slane %v7071, 7
    %v7623 = vrot.slane %v7622, 2
    %v7624 = vrot.slane %v7072, 7
    %v7625 = vrot.slane %v7624, 2
    %v7626 = vrot.slane %v7073, 7
    %v7627 = vrot.slane %v7626, 2
    %v7628 = vrot.slane %v6878, 7
    %v7629 = vrot.slane %v7628, 2
    %v7630 = vrot.slane %v7074, 7
    %v7631 = vrot.slane %v7630, 2
    %v7632 = vrot.slane %v7075, 7
    %v7633 = vrot.slane %v7632, 2
    %v7634 = vrot.slane %v7076, 7
    %v7635 = vrot.slane %v7634, 2
    %v7636 = vrot.slane %v6879, 7
    %v7637 = vrot.slane %v7636, 2
    %v7638 = vrot.slane %v7077, 7
    %v7639 = vrot.slane %v7638, 2
    %v7640 = vrot.slane %v7078, 7
    %v7641 = vrot.slane %v7640, 2
    %v7642 = vrot.slane %v7079, 7
    %v7643 = vrot.slane %v7642, 2
    %v7644 = vrot.slane %v6880, 7
    %v7645 = vrot.slane %v7644, 2
    %v7646 = vrot.slane %v7080, 7
    %v7647 = vrot.slane %v7646, 2
    %v7648 = vrot.slane %v7081, 7
    %v7649 = vrot.slane %v7648, 2
    %v7650 = vrot.slane %v7082, 7
    %v7651 = vrot.slane %v7650, 2
    %v7652 = vrot.slane %v6881, 7
    %v7653 = vrot.slane %v7652, 2
    %v7654 = vrot.slane %v7083, 7
    %v7655 = vrot.slane %v7654, 2
    %v7656 = vrot.slane %v7084, 7
    %v7657 = vrot.slane %v7656, 2
    %v7658 = vrot.slane %v7085, 7
    %v7659 = vrot.slane %v7658, 2
    %v7660 = vrot.slane %v6882, 7
    %v7661 = vrot.slane %v7660, 2
    %v7662 = vrot.slane %v7086, 7
    %v7663 = vrot.slane %v7662, 2
    %v7664 = vrot.slane %v7087, 7
    %v7665 = vrot.slane %v7664, 2
    %v7666 = vrot.slane %v7088, 7
    %v7667 = vrot.slane %v7666, 2
    %v7668 = vrot.slane %v6883, 7
    %v7669 = vrot.slane %v7668, 2
    %v7670 = vrot.slane %v7089, 7
    %v7671 = vrot.slane %v7670, 2
    %v7672 = vrot.slane %v7090, 7
    %v7673 = vrot.slane %v7672, 2
    %v7674 = vrot.slane %v7091, 7
    %v7675 = vrot.slane %v7674, 2
    %v7676 = vrot.slane %v6884, 7
    %v7677 = vrot.slane %v7676, 2
    %v7678 = vrot.slane %v7092, 7
    %v7679 = vrot.slane %v7678, 2
    %v7680 = vrot.slane %v7093, 7
    %v7681 = vrot.slane %v7680, 2
    %v7682 = vrot.slane %v7094, 7
    %v7683 = vrot.slane %v7682, 2
    %v7684 = vrot.slane %v6885, 7
    %v7685 = vrot.slane %v7684, 2
    %v7686 = vrot.slane %v7095, 7
    %v7687 = vrot.slane %v7686, 2
    %v7688 = vrot.slane %v7096, 7
    %v7689 = vrot.slane %v7688, 2
    %v7690 = vrot.slane %v7097, 7
    %v7691 = vrot.slane %v7690, 2
    %v7692 = vrot.slane %v6886, 7
    %v7693 = vrot.slane %v7692, 2
    %v7694 = vrot.slane %v7098, 7
    %v7695 = vrot.slane %v7694, 2
    %v7696 = vrot.slane %v7099, 7
    %v7697 = vrot.slane %v7696, 2
    %v7698 = vrot.slane %v7100, 7
    %v7699 = vrot.slane %v7698, 2
    %v7700 = vrot.slane %v6887, 7
    %v7701 = vrot.slane %v7700, 2
    %v7702 = vrot.slane %v7101, 7
    %v7703 = vrot.slane %v7702, 2
    %v7704 = vrot.slane %v7102, 7
    %v7705 = vrot.slane %v7704, 2
    %v7706 = vrot.slane %v7103, 7
    %v7707 = vrot.slane %v7706, 2
    %v7708 = vrot.slane %v6888, 7
    %v7709 = vrot.slane %v7708, 2
    %v7710 = vrot.slane %v7104, 7
    %v7711 = vrot.slane %v7710, 2
    %v7712 = vrot.slane %v7105, 7
    %v7713 = vrot.slane %v7712, 2
    %v7714 = vrot.slane %v7106, 7
    %v7715 = vrot.slane %v7714, 2
    %v7716 = vrot.slane %v6889, 7
    %v7717 = vrot.slane %v7716, 2
    %v7718 = vrot.slane %v7107, 7
    %v7719 = vrot.slane %v7718, 2
    %v7720 = vrot.slane %v7108, 7
    %v7721 = vrot.slane %v7720, 2
    %v7722 = vrot.slane %v7109, 7
    %v7723 = vrot.slane %v7722, 2
    %v7724 = vrot.slane %v6890, 7
    %v7725 = vrot.slane %v7724, 2
    %v7726 = vrot.slane %v7110, 7
    %v7727 = vrot.slane %v7726, 2
    %v7728 = vrot.slane %v7111, 7
    %v7729 = vrot.slane %v7728, 2
    %v7730 = vrot.slane %v7112, 7
    %v7731 = vrot.slane %v7730, 2
    %v7732 = vrot.slane %v6891, 7
    %v7733 = vrot.slane %v7732, 2
    %v7734 = vrot.slane %v7113, 7
    %v7735 = vrot.slane %v7734, 2
    %v7736 = vrot.slane %v7114, 7
    %v7737 = vrot.slane %v7736, 2
    %v7738 = vrot.slane %v7115, 7
    %v7739 = vrot.slane %v7738, 2
    %v7740 = vrot.slane %v6892, 7
    %v7741 = vrot.slane %v7740, 2
    %v7742 = vrot.slane %v7116, 7
    %v7743 = vrot.slane %v7742, 2
    %v7744 = vrot.slane %v7117, 7
    %v7745 = vrot.slane %v7744, 2
    %v7746 = vrot.slane %v7118, 7
    %v7747 = vrot.slane %v7746, 2
    %v7748 = vrot.slane %v6893, 7
    %v7749 = vrot.slane %v7748, 2
    %v7750 = vrot.slane %v7119, 7
    %v7751 = vrot.slane %v7750, 2
    %v7752 = vrot.slane %v7120, 7
    %v7753 = vrot.slane %v7752, 2
    %v7754 = vrot.slane %v7121, 7
    %v7755 = vrot.slane %v7754, 2
    %v7756 = vrot.slane %v6894, 7
    %v7757 = vrot.slane %v7756, 2
    %v7758 = vrot.slane %v7122, 7
    %v7759 = vrot.slane %v7758, 2
    %v7760 = vrot.slane %v7123, 7
    %v7761 = vrot.slane %v7760, 2
    %v7762 = vrot.slane %v7124, 7
    %v7763 = vrot.slane %v7762, 2
    %v7764 = vrot.slane %v6895, 7
    %v7765 = vrot.slane %v7764, 2
    %v7766 = vrot.slane %v7125, 7
    %v7767 = vrot.slane %v7766, 2
    %v7768 = vrot.slane %v7126, 7
    %v7769 = vrot.slane %v7768, 2
    %v7770 = vrot.slane %v7127, 7
    %v7771 = vrot.slane %v7770, 2
    %v7772 = vrot.slane %v6896, 7
    %v7773 = vrot.slane %v7772, 2
    %v7774 = vrot.slane %v7128, 7
    %v7775 = vrot.slane %v7774, 2
    %v7776 = vrot.slane %v7129, 7
    %v7777 = vrot.slane %v7776, 2
    %v7778 = vrot.slane %v7130, 7
    %v7779 = vrot.slane %v7778, 2
    %v7780 = vrot.slane %v6897, 7
    %v7781 = vrot.slane %v7780, 2
    %v7782 = vrot.slane %v7131, 7
    %v7783 = vrot.slane %v7782, 2
    %v7784 = vrot.slane %v7132, 7
    %v7785 = vrot.slane %v7784, 2
    %v7786 = vrot.slane %v7133, 7
    %v7787 = vrot.slane %v7786, 2
    %v7788 = vrot.slane %v6898, 7
    %v7789 = vrot.slane %v7788, 2
    %v7790 = vrot.slane %v7134, 7
    %v7791 = vrot.slane %v7790, 2
    %v7792 = vrot.slane %v7135, 7
    %v7793 = vrot.slane %v7792, 2
    %v7794 = vrot.slane %v7136, 7
    %v7795 = vrot.slane %v7794, 2
    %v7796 = vrot.slane %v6899, 7
    %v7797 = vrot.slane %v7796, 2
    %v7798 = vrot.slane %v7137, 7
    %v7799 = vrot.slane %v7798, 2
    %v7800 = vrot.slane %v7138, 7
    %v7801 = vrot.slane %v7800, 2
    %v7802 = vrot.slane %v7139, 7
    %v7803 = vrot.slane %v7802, 2
    %v7804 = vrot.slane %v6900, 7
    %v7805 = vrot.slane %v7804, 2
    %v7806 = vrot.slane %v7140, 7
    %v7807 = vrot.slane %v7806, 2
    %v7808 = vrot.slane %v7141, 7
    %v7809 = vrot.slane %v7808, 2
    %v7810 = vrot.slane %v7142, 7
    %v7811 = vrot.slane %v7810, 2
    %v7812 = vrot.slane %v6901, 7
    %v7813 = vrot.slane %v7812, 2
    %v7814 = vrot.slane %v7143, 7
    %v7815 = vrot.slane %v7814, 2
    %v7816 = vrot.slane %v7144, 7
    %v7817 = vrot.slane %v7816, 2
    %v7818 = vrot.slane %v7145, 7
    %v7819 = vrot.slane %v7818, 2
    %v7820 = vrot.slane %v6902, 7
    %v7821 = vrot.slane %v7820, 2
    %v7822 = vrot.slane %v7146, 7
    %v7823 = vrot.slane %v7822, 2
    %v7824 = vrot.slane %v7147, 7
    %v7825 = vrot.slane %v7824, 2
    %v7826 = vrot.slane %v7148, 7
    %v7827 = vrot.slane %v7826, 2
    %v7828 = vrot.slane %v6903, 7
    %v7829 = vrot.slane %v7828, 2
    %v7830 = vrot.slane %v7149, 7
    %v7831 = vrot.slane %v7830, 2
    %v7832 = vrot.slane %v7150, 7
    %v7833 = vrot.slane %v7832, 2
    %v7834 = vrot.slane %v7151, 7
    %v7835 = vrot.slane %v7834, 2
    %v7836 = vrot.slane %v6904, 7
    %v7837 = vrot.slane %v7836, 2
    %v7838 = vrot.slane %v7152, 7
    %v7839 = vrot.slane %v7838, 2
    %v7840 = vrot.slane %v7153, 7
    %v7841 = vrot.slane %v7840, 2
    %v7842 = vrot.slane %v7154, 7
    %v7843 = vrot.slane %v7842, 2
    %v7844 = vrot.slane %v6905, 7
    %v7845 = vrot.slane %v7844, 2
    %v7846 = vrot.slane %v7155, 7
    %v7847 = vrot.slane %v7846, 2
    %v7848 = vrot.slane %v7156, 7
    %v7849 = vrot.slane %v7848, 2
    %v7850 = vrot.slane %v7157, 7
    %v7851 = vrot.slane %v7850, 2
    %v7852 = vrot.slane %v6906, 7
    %v7853 = vrot.slane %v7852, 2
    %v7854 = vrot.slane %v7158, 7
    %v7855 = vrot.slane %v7854, 2
    %v7856 = vrot.slane %v7159, 7
    %v7857 = vrot.slane %v7856, 2
    %v7858 = vrot.slane %v7160, 7
    %v7859 = vrot.slane %v7858, 2
    %v7860 = vrot.slane %v6907, 7
    %v7861 = vrot.slane %v7860, 2
    %v7862 = vrot.slane %v7161, 7
    %v7863 = vrot.slane %v7862, 2
    %v7864 = vrot.slane %v7162, 7
    %v7865 = vrot.slane %v7864, 2
    %v7866 = vrot.slane %v7163, 7
    %v7867 = vrot.slane %v7866, 2
    %v8124 = vmax.f32 %v6844, %v7357
    %v8125 = vmax.f32 %v6972, %v7359
    %v8126 = vmax.f32 %v6973, %v7361
    %v8127 = vmax.f32 %v6974, %v7363
    %v8128 = vmax.f32 %v6845, %v7365
    %v8129 = vmax.f32 %v6975, %v7367
    %v8130 = vmax.f32 %v6976, %v7369
    %v8131 = vmax.f32 %v6977, %v7371
    %v8132 = vmax.f32 %v6846, %v7373
    %v8133 = vmax.f32 %v6978, %v7375
    %v8134 = vmax.f32 %v6979, %v7377
    %v8135 = vmax.f32 %v6980, %v7379
    %v8136 = vmax.f32 %v6847, %v7381
    %v8137 = vmax.f32 %v6981, %v7383
    %v8138 = vmax.f32 %v6982, %v7385
    %v8139 = vmax.f32 %v6983, %v7387
    %v8140 = vmax.f32 %v6848, %v7389
    %v8141 = vmax.f32 %v6984, %v7391
    %v8142 = vmax.f32 %v6985, %v7393
    %v8143 = vmax.f32 %v6986, %v7395
    %v8144 = vmax.f32 %v6849, %v7397
    %v8145 = vmax.f32 %v6987, %v7399
    %v8146 = vmax.f32 %v6988, %v7401
    %v8147 = vmax.f32 %v6989, %v7403
    %v8148 = vmax.f32 %v6850, %v7405
    %v8149 = vmax.f32 %v6990, %v7407
    %v8150 = vmax.f32 %v6991, %v7409
    %v8151 = vmax.f32 %v6992, %v7411
    %v8152 = vmax.f32 %v6851, %v7413
    %v8153 = vmax.f32 %v6993, %v7415
    %v8154 = vmax.f32 %v6994, %v7417
    %v8155 = vmax.f32 %v6995, %v7419
    %v8156 = vmax.f32 %v6852, %v7421
    %v8157 = vmax.f32 %v6996, %v7423
    %v8158 = vmax.f32 %v6997, %v7425
    %v8159 = vmax.f32 %v6998, %v7427
    %v8160 = vmax.f32 %v6853, %v7429
    %v8161 = vmax.f32 %v6999, %v7431
    %v8162 = vmax.f32 %v7000, %v7433
    %v8163 = vmax.f32 %v7001, %v7435
    %v8164 = vmax.f32 %v6854, %v7437
    %v8165 = vmax.f32 %v7002, %v7439
    %v8166 = vmax.f32 %v7003, %v7441
    %v8167 = vmax.f32 %v7004, %v7443
    %v8168 = vmax.f32 %v6855, %v7445
    %v8169 = vmax.f32 %v7005, %v7447
    %v8170 = vmax.f32 %v7006, %v7449
    %v8171 = vmax.f32 %v7007, %v7451
    %v8172 = vmax.f32 %v6856, %v7453
    %v8173 = vmax.f32 %v7008, %v7455
    %v8174 = vmax.f32 %v7009, %v7457
    %v8175 = vmax.f32 %v7010, %v7459
    %v8176 = vmax.f32 %v6857, %v7461
    %v8177 = vmax.f32 %v7011, %v7463
    %v8178 = vmax.f32 %v7012, %v7465
    %v8179 = vmax.f32 %v7013, %v7467
    %v8180 = vmax.f32 %v6858, %v7469
    %v8181 = vmax.f32 %v7014, %v7471
    %v8182 = vmax.f32 %v7015, %v7473
    %v8183 = vmax.f32 %v7016, %v7475
    %v8184 = vmax.f32 %v6859, %v7477
    %v8185 = vmax.f32 %v7017, %v7479
    %v8186 = vmax.f32 %v7018, %v7481
    %v8187 = vmax.f32 %v7019, %v7483
    %v8188 = vmax.f32 %v6860, %v7485
    %v8189 = vmax.f32 %v7020, %v7487
    %v8190 = vmax.f32 %v7021, %v7489
    %v8191 = vmax.f32 %v7022, %v7491
    %v8192 = vmax.f32 %v6861, %v7493
    %v8193 = vmax.f32 %v7023, %v7495
    %v8194 = vmax.f32 %v7024, %v7497
    %v8195 = vmax.f32 %v7025, %v7499
    %v8196 = vmax.f32 %v6862, %v7501
    %v8197 = vmax.f32 %v7026, %v7503
    %v8198 = vmax.f32 %v7027, %v7505
    %v8199 = vmax.f32 %v7028, %v7507
    %v8200 = vmax.f32 %v6863, %v7509
    %v8201 = vmax.f32 %v7029, %v7511
    %v8202 = vmax.f32 %v7030, %v7513
    %v8203 = vmax.f32 %v7031, %v7515
    %v8204 = vmax.f32 %v6864, %v7517
    %v8205 = vmax.f32 %v7032, %v7519
    %v8206 = vmax.f32 %v7033, %v7521
    %v8207 = vmax.f32 %v7034, %v7523
    %v8208 = vmax.f32 %v6865, %v7525
    %v8209 = vmax.f32 %v7035, %v7527
    %v8210 = vmax.f32 %v7036, %v7529
    %v8211 = vmax.f32 %v7037, %v7531
    %v8212 = vmax.f32 %v6866, %v7533
    %v8213 = vmax.f32 %v7038, %v7535
    %v8214 = vmax.f32 %v7039, %v7537
    %v8215 = vmax.f32 %v7040, %v7539
    %v8216 = vmax.f32 %v6867, %v7541
    %v8217 = vmax.f32 %v7041, %v7543
    %v8218 = vmax.f32 %v7042, %v7545
    %v8219 = vmax.f32 %v7043, %v7547
    %v8220 = vmax.f32 %v6868, %v7549
    %v8221 = vmax.f32 %v7044, %v7551
    %v8222 = vmax.f32 %v7045, %v7553
    %v8223 = vmax.f32 %v7046, %v7555
    %v8224 = vmax.f32 %v6869, %v7557
    %v8225 = vmax.f32 %v7047, %v7559
    %v8226 = vmax.f32 %v7048, %v7561
    %v8227 = vmax.f32 %v7049, %v7563
    %v8228 = vmax.f32 %v6870, %v7565
    %v8229 = vmax.f32 %v7050, %v7567
    %v8230 = vmax.f32 %v7051, %v7569
    %v8231 = vmax.f32 %v7052, %v7571
    %v8232 = vmax.f32 %v6871, %v7573
    %v8233 = vmax.f32 %v7053, %v7575
    %v8234 = vmax.f32 %v7054, %v7577
    %v8235 = vmax.f32 %v7055, %v7579
    %v8236 = vmax.f32 %v6872, %v7581
    %v8237 = vmax.f32 %v7056, %v7583
    %v8238 = vmax.f32 %v7057, %v7585
    %v8239 = vmax.f32 %v7058, %v7587
    %v8240 = vmax.f32 %v6873, %v7589
    %v8241 = vmax.f32 %v7059, %v7591
    %v8242 = vmax.f32 %v7060, %v7593
    %v8243 = vmax.f32 %v7061, %v7595
    %v8244 = vmax.f32 %v6874, %v7597
    %v8245 = vmax.f32 %v7062, %v7599
    %v8246 = vmax.f32 %v7063, %v7601
    %v8247 = vmax.f32 %v7064, %v7603
    %v8248 = vmax.f32 %v6875, %v7605
    %v8249 = vmax.f32 %v7065, %v7607
    %v8250 = vmax.f32 %v7066, %v7609
    %v8251 = vmax.f32 %v7067, %v7611
    %v8252 = vmax.f32 %v6876, %v7613
    %v8253 = vmax.f32 %v7068, %v7615
    %v8254 = vmax.f32 %v7069, %v7617
    %v8255 = vmax.f32 %v7070, %v7619
    %v8256 = vmax.f32 %v6877, %v7621
    %v8257 = vmax.f32 %v7071, %v7623
    %v8258 = vmax.f32 %v7072, %v7625
    %v8259 = vmax.f32 %v7073, %v7627
    %v8260 = vmax.f32 %v6878, %v7629
    %v8261 = vmax.f32 %v7074, %v7631
    %v8262 = vmax.f32 %v7075, %v7633
    %v8263 = vmax.f32 %v7076, %v7635
    %v8264 = vmax.f32 %v6879, %v7637
    %v8265 = vmax.f32 %v7077, %v7639
    %v8266 = vmax.f32 %v7078, %v7641
    %v8267 = vmax.f32 %v7079, %v7643
    %v8268 = vmax.f32 %v6880, %v7645
    %v8269 = vmax.f32 %v7080, %v7647
    %v8270 = vmax.f32 %v7081, %v7649
    %v8271 = vmax.f32 %v7082, %v7651
    %v8272 = vmax.f32 %v6881, %v7653
    %v8273 = vmax.f32 %v7083, %v7655
    %v8274 = vmax.f32 %v7084, %v7657
    %v8275 = vmax.f32 %v7085, %v7659
    %v8276 = vmax.f32 %v6882, %v7661
    %v8277 = vmax.f32 %v7086, %v7663
    %v8278 = vmax.f32 %v7087, %v7665
    %v8279 = vmax.f32 %v7088, %v7667
    %v8280 = vmax.f32 %v6883, %v7669
    %v8281 = vmax.f32 %v7089, %v7671
    %v8282 = vmax.f32 %v7090, %v7673
    %v8283 = vmax.f32 %v7091, %v7675
    %v8284 = vmax.f32 %v6884, %v7677
    %v8285 = vmax.f32 %v7092, %v7679
    %v8286 = vmax.f32 %v7093, %v7681
    %v8287 = vmax.f32 %v7094, %v7683
    %v8288 = vmax.f32 %v6885, %v7685
    %v8289 = vmax.f32 %v7095, %v7687
    %v8290 = vmax.f32 %v7096, %v7689
    %v8291 = vmax.f32 %v7097, %v7691
    %v8292 = vmax.f32 %v6886, %v7693
    %v8293 = vmax.f32 %v7098, %v7695
    %v8294 = vmax.f32 %v7099, %v7697
    %v8295 = vmax.f32 %v7100, %v7699
    %v8296 = vmax.f32 %v6887, %v7701
    %v8297 = vmax.f32 %v7101, %v7703
    %v8298 = vmax.f32 %v7102, %v7705
    %v8299 = vmax.f32 %v7103, %v7707
    %v8300 = vmax.f32 %v6888, %v7709
    %v8301 = vmax.f32 %v7104, %v7711
    %v8302 = vmax.f32 %v7105, %v7713
    %v8303 = vmax.f32 %v7106, %v7715
    %v8304 = vmax.f32 %v6889, %v7717
    %v8305 = vmax.f32 %v7107, %v7719
    %v8306 = vmax.f32 %v7108, %v7721
    %v8307 = vmax.f32 %v7109, %v7723
    %v8308 = vmax.f32 %v6890, %v7725
    %v8309 = vmax.f32 %v7110, %v7727
    %v8310 = vmax.f32 %v7111, %v7729
    %v8311 = vmax.f32 %v7112, %v7731
    %v8312 = vmax.f32 %v6891, %v7733
    %v8313 = vmax.f32 %v7113, %v7735
    %v8314 = vmax.f32 %v7114, %v7737
    %v8315 = vmax.f32 %v7115, %v7739
    %v8316 = vmax.f32 %v6892, %v7741
    %v8317 = vmax.f32 %v7116, %v7743
    %v8318 = vmax.f32 %v7117, %v7745
    %v8319 = vmax.f32 %v7118, %v7747
    %v8320 = vmax.f32 %v6893, %v7749
    %v8321 = vmax.f32 %v7119, %v7751
    %v8322 = vmax.f32 %v7120, %v7753
    %v8323 = vmax.f32 %v7121, %v7755
    %v8324 = vmax.f32 %v6894, %v7757
    %v8325 = vmax.f32 %v7122, %v7759
    %v8326 = vmax.f32 %v7123, %v7761
    %v8327 = vmax.f32 %v7124, %v7763
    %v8328 = vmax.f32 %v6895, %v7765
    %v8329 = vmax.f32 %v7125, %v7767
    %v8330 = vmax.f32 %v7126, %v7769
    %v8331 = vmax.f32 %v7127, %v7771
    %v8332 = vmax.f32 %v6896, %v7773
    %v8333 = vmax.f32 %v7128, %v7775
    %v8334 = vmax.f32 %v7129, %v7777
    %v8335 = vmax.f32 %v7130, %v7779
    %v8336 = vmax.f32 %v6897, %v7781
    %v8337 = vmax.f32 %v7131, %v7783
    %v8338 = vmax.f32 %v7132, %v7785
    %v8339 = vmax.f32 %v7133, %v7787
    %v8340 = vmax.f32 %v6898, %v7789
    %v8341 = vmax.f32 %v7134, %v7791
    %v8342 = vmax.f32 %v7135, %v7793
    %v8343 = vmax.f32 %v7136, %v7795
    %v8344 = vmax.f32 %v6899, %v7797
    %v8345 = vmax.f32 %v7137, %v7799
    %v8346 = vmax.f32 %v7138, %v7801
    %v8347 = vmax.f32 %v7139, %v7803
    %v8348 = vmax.f32 %v6900, %v7805
    %v8349 = vmax.f32 %v7140, %v7807
    %v8350 = vmax.f32 %v7141, %v7809
    %v8351 = vmax.f32 %v7142, %v7811
    %v8352 = vmax.f32 %v6901, %v7813
    %v8353 = vmax.f32 %v7143, %v7815
    %v8354 = vmax.f32 %v7144, %v7817
    %v8355 = vmax.f32 %v7145, %v7819
    %v8356 = vmax.f32 %v6902, %v7821
    %v8357 = vmax.f32 %v7146, %v7823
    %v8358 = vmax.f32 %v7147, %v7825
    %v8359 = vmax.f32 %v7148, %v7827
    %v8360 = vmax.f32 %v6903, %v7829
    %v8361 = vmax.f32 %v7149, %v7831
    %v8362 = vmax.f32 %v7150, %v7833
    %v8363 = vmax.f32 %v7151, %v7835
    %v8364 = vmax.f32 %v6904, %v7837
    %v8365 = vmax.f32 %v7152, %v7839
    %v8366 = vmax.f32 %v7153, %v7841
    %v8367 = vmax.f32 %v7154, %v7843
    %v8368 = vmax.f32 %v6905, %v7845
    %v8369 = vmax.f32 %v7155, %v7847
    %v8370 = vmax.f32 %v7156, %v7849
    %v8371 = vmax.f32 %v7157, %v7851
    %v8372 = vmax.f32 %v6906, %v7853
    %v8373 = vmax.f32 %v7158, %v7855
    %v8374 = vmax.f32 %v7159, %v7857
    %v8375 = vmax.f32 %v7160, %v7859
    %v8376 = vmax.f32 %v6907, %v7861
    %v8377 = vmax.f32 %v7161, %v7863
    %v8378 = vmax.f32 %v7162, %v7865
    %v8379 = vmax.f32 %v7163, %v7867
    %v8380 = vmax.f32 %v8124, %v8132
    %v8381 = vmax.f32 %v8125, %v8133
    %v8382 = vmax.f32 %v8126, %v8134
    %v8383 = vmax.f32 %v8127, %v8135
    %v8384 = vmax.f32 %v8128, %v8136
    %v8385 = vmax.f32 %v8129, %v8137
    %v8386 = vmax.f32 %v8130, %v8138
    %v8387 = vmax.f32 %v8131, %v8139
    %v8388 = vmax.f32 %v8140, %v8148
    %v8389 = vmax.f32 %v8141, %v8149
    %v8390 = vmax.f32 %v8142, %v8150
    %v8391 = vmax.f32 %v8143, %v8151
    %v8392 = vmax.f32 %v8144, %v8152
    %v8393 = vmax.f32 %v8145, %v8153
    %v8394 = vmax.f32 %v8146, %v8154
    %v8395 = vmax.f32 %v8147, %v8155
    %v8396 = vmax.f32 %v8156, %v8164
    %v8397 = vmax.f32 %v8157, %v8165
    %v8398 = vmax.f32 %v8158, %v8166
    %v8399 = vmax.f32 %v8159, %v8167
    %v8400 = vmax.f32 %v8160, %v8168
    %v8401 = vmax.f32 %v8161, %v8169
    %v8402 = vmax.f32 %v8162, %v8170
    %v8403 = vmax.f32 %v8163, %v8171
    %v8404 = vmax.f32 %v8172, %v8180
    %v8405 = vmax.f32 %v8173, %v8181
    %v8406 = vmax.f32 %v8174, %v8182
    %v8407 = vmax.f32 %v8175, %v8183
    %v8408 = vmax.f32 %v8176, %v8184
    %v8409 = vmax.f32 %v8177, %v8185
    %v8410 = vmax.f32 %v8178, %v8186
    %v8411 = vmax.f32 %v8179, %v8187
    %v8412 = vmax.f32 %v8188, %v8196
    %v8413 = vmax.f32 %v8189, %v8197
    %v8414 = vmax.f32 %v8190, %v8198
    %v8415 = vmax.f32 %v8191, %v8199
    %v8416 = vmax.f32 %v8192, %v8200
    %v8417 = vmax.f32 %v8193, %v8201
    %v8418 = vmax.f32 %v8194, %v8202
    %v8419 = vmax.f32 %v8195, %v8203
    %v8420 = vmax.f32 %v8204, %v8212
    %v8421 = vmax.f32 %v8205, %v8213
    %v8422 = vmax.f32 %v8206, %v8214
    %v8423 = vmax.f32 %v8207, %v8215
    %v8424 = vmax.f32 %v8208, %v8216
    %v8425 = vmax.f32 %v8209, %v8217
    %v8426 = vmax.f32 %v8210, %v8218
    %v8427 = vmax.f32 %v8211, %v8219
    %v8428 = vmax.f32 %v8220, %v8228
    %v8429 = vmax.f32 %v8221, %v8229
    %v8430 = vmax.f32 %v8222, %v8230
    %v8431 = vmax.f32 %v8223, %v8231
    %v8432 = vmax.f32 %v8224, %v8232
    %v8433 = vmax.f32 %v8225, %v8233
    %v8434 = vmax.f32 %v8226, %v8234
    %v8435 = vmax.f32 %v8227, %v8235
    %v8436 = vmax.f32 %v8236, %v8244
    %v8437 = vmax.f32 %v8237, %v8245
    %v8438 = vmax.f32 %v8238, %v8246
    %v8439 = vmax.f32 %v8239, %v8247
    %v8440 = vmax.f32 %v8240, %v8248
    %v8441 = vmax.f32 %v8241, %v8249
    %v8442 = vmax.f32 %v8242, %v8250
    %v8443 = vmax.f32 %v8243, %v8251
    %v8444 = vmax.f32 %v8252, %v8260
    %v8445 = vmax.f32 %v8253, %v8261
    %v8446 = vmax.f32 %v8254, %v8262
    %v8447 = vmax.f32 %v8255, %v8263
    %v8448 = vmax.f32 %v8256, %v8264
    %v8449 = vmax.f32 %v8257, %v8265
    %v8450 = vmax.f32 %v8258, %v8266
    %v8451 = vmax.f32 %v8259, %v8267
    %v8452 = vmax.f32 %v8268, %v8276
    %v8453 = vmax.f32 %v8269, %v8277
    %v8454 = vmax.f32 %v8270, %v8278
    %v8455 = vmax.f32 %v8271, %v8279
    %v8456 = vmax.f32 %v8272, %v8280
    %v8457 = vmax.f32 %v8273, %v8281
    %v8458 = vmax.f32 %v8274, %v8282
    %v8459 = vmax.f32 %v8275, %v8283
    %v8460 = vmax.f32 %v8284, %v8292
    %v8461 = vmax.f32 %v8285, %v8293
    %v8462 = vmax.f32 %v8286, %v8294
    %v8463 = vmax.f32 %v8287, %v8295
    %v8464 = vmax.f32 %v8288, %v8296
    %v8465 = vmax.f32 %v8289, %v8297
    %v8466 = vmax.f32 %v8290, %v8298
    %v8467 = vmax.f32 %v8291, %v8299
    %v8468 = vmax.f32 %v8300, %v8308
    %v8469 = vmax.f32 %v8301, %v8309
    %v8470 = vmax.f32 %v8302, %v8310
    %v8471 = vmax.f32 %v8303, %v8311
    %v8472 = vmax.f32 %v8304, %v8312
    %v8473 = vmax.f32 %v8305, %v8313
    %v8474 = vmax.f32 %v8306, %v8314
    %v8475 = vmax.f32 %v8307, %v8315
    %v8476 = vmax.f32 %v8316, %v8324
    %v8477 = vmax.f32 %v8317, %v8325
    %v8478 = vmax.f32 %v8318, %v8326
    %v8479 = vmax.f32 %v8319, %v8327
    %v8480 = vmax.f32 %v8320, %v8328
    %v8481 = vmax.f32 %v8321, %v8329
    %v8482 = vmax.f32 %v8322, %v8330
    %v8483 = vmax.f32 %v8323, %v8331
    %v8484 = vmax.f32 %v8332, %v8340
    %v8485 = vmax.f32 %v8333, %v8341
    %v8486 = vmax.f32 %v8334, %v8342
    %v8487 = vmax.f32 %v8335, %v8343
    %v8488 = vmax.f32 %v8336, %v8344
    %v8489 = vmax.f32 %v8337, %v8345
    %v8490 = vmax.f32 %v8338, %v8346
    %v8491 = vmax.f32 %v8339, %v8347
    %v8492 = vmax.f32 %v8348, %v8356
    %v8493 = vmax.f32 %v8349, %v8357
    %v8494 = vmax.f32 %v8350, %v8358
    %v8495 = vmax.f32 %v8351, %v8359
    %v8496 = vmax.f32 %v8352, %v8360
    %v8497 = vmax.f32 %v8353, %v8361
    %v8498 = vmax.f32 %v8354, %v8362
    %v8499 = vmax.f32 %v8355, %v8363
    %v8500 = vmax.f32 %v8364, %v8372
    %v8501 = vmax.f32 %v8365, %v8373
    %v8502 = vmax.f32 %v8366, %v8374
    %v8503 = vmax.f32 %v8367, %v8375
    %v8504 = vmax.f32 %v8368, %v8376
    %v8505 = vmax.f32 %v8369, %v8377
    %v8506 = vmax.f32 %v8370, %v8378
    %v8507 = vmax.f32 %v8371, %v8379
    %vm8508 = vcmask 257024
    %8509 = vst.msk [vmem:[#allocation3] sm:$0xf] %vm8508, 0
    %vm8510 = vcmask 254976
    %8511 = vst.msk [vmem:[#allocation3 + $0x4] sm:$0x3] %vm8510, 0
    %8512 = vst.msk [vmem:[#allocation3 + $0x50] sm:$0xf] %vm8508, 0
    %8513 = vst.msk [vmem:[#allocation3 + $0x54] sm:$0x3] %vm8510, 0
    %s8514 = scalar_lea.vmem [#allocation3], 72
    %8515 = vst.msk [vmem:[%s8514] sm:$0xf] %vm8508, 0
    %8516 = vst.msk [vmem:[%s8514 + $0x4] sm:$0x3] %vm8510, 0
    %8517 = vst.msk [vmem:[%s8514 + $0x50] sm:$0xf] %vm8508, 0
    %8518 = vst.msk [vmem:[%s8514 + $0x54] sm:$0x3] %vm8510, 0
    %s8519 = scalar_lea.vmem [#allocation3], 8
    %vm8520 = vcmask 253952
    %8521 = vst.msk [vmem:[%s8519] sm:$0x1] %vm8520, 0
    %8522 = vst.msk [vmem:[%s8519 + $0x8] sm:$0x1] %vm8520, 0
    %8523 = vst.msk [vmem:[%s8519 + $0x10] sm:$0x1] %vm8520, 0
    %8524 = vst.msk [vmem:[%s8519 + $0x18] sm:$0x1] %vm8520, 0
    %8525 = vst.msk [vmem:[%s8519 + $0x20] sm:$0x1] %vm8520, 0
    %8526 = vst.msk [vmem:[%s8519 + $0x28] sm:$0x1] %vm8520, 0
    %8527 = vst.msk [vmem:[%s8519 + $0x30] sm:$0x1] %vm8520, 0
    %8528 = vst.msk [vmem:[%s8519 + $0x38] sm:$0x1] %vm8520, 0
    %8529 = vst.msk [vmem:[%s8519 + $0x50] sm:$0x1] %vm8520, 0
    %8530 = vst.msk [vmem:[%s8519 + $0x58] sm:$0x1] %vm8520, 0
    %8531 = vst.msk [vmem:[%s8519 + $0x60] sm:$0x1] %vm8520, 0
    %8532 = vst.msk [vmem:[%s8519 + $0x68] sm:$0x1] %vm8520, 0
    %8533 = vst.msk [vmem:[%s8519 + $0x70] sm:$0x1] %vm8520, 0
    %8534 = vst.msk [vmem:[%s8519 + $0x78] sm:$0x1] %vm8520, 0
    %8535 = vst.msk [vmem:[%s8519 + $0x80] sm:$0x1] %vm8520, 0
    %8536 = vst.msk [vmem:[%s8519 + $0x88] sm:$0x1] %vm8520, 0
    %vm8537 = vcmask 254977
    %8538 = vst.msk [vmem:[%s8519 + $0x4] sm:$0x2] %vm8537, 0
    %8539 = vst.msk [vmem:[%s8519 + $0xc] sm:$0x2] %vm8537, 0
    %8540 = vst.msk [vmem:[%s8519 + $0x14] sm:$0x2] %vm8537, 0
    %8541 = vst.msk [vmem:[%s8519 + $0x1c] sm:$0x2] %vm8537, 0
    %8542 = vst.msk [vmem:[%s8519 + $0x24] sm:$0x2] %vm8537, 0
    %8543 = vst.msk [vmem:[%s8519 + $0x2c] sm:$0x2] %vm8537, 0
    %8544 = vst.msk [vmem:[%s8519 + $0x34] sm:$0x2] %vm8537, 0
    %8545 = vst.msk [vmem:[%s8519 + $0x3c] sm:$0x2] %vm8537, 0
    %8546 = vst.msk [vmem:[%s8519 + $0x54] sm:$0x2] %vm8537, 0
    %8547 = vst.msk [vmem:[%s8519 + $0x5c] sm:$0x2] %vm8537, 0
    %8548 = vst.msk [vmem:[%s8519 + $0x64] sm:$0x2] %vm8537, 0
    %8549 = vst.msk [vmem:[%s8519 + $0x6c] sm:$0x2] %vm8537, 0
    %8550 = vst.msk [vmem:[%s8519 + $0x74] sm:$0x2] %vm8537, 0
    %8551 = vst.msk [vmem:[%s8519 + $0x7c] sm:$0x2] %vm8537, 0
    %8552 = vst.msk [vmem:[%s8519 + $0x84] sm:$0x2] %vm8537, 0
    %8553 = vst.msk [vmem:[%s8519 + $0x8c] sm:$0x2] %vm8537, 0
    %v8554 = vpack.c.bf16 %v8380, %v8380
    %v8555 = vpack.c.bf16 %v8381, %v8381
    %v8556 = vpack.c.bf16 %v8382, %v8382
    %v8557 = vpack.c.bf16 %v8383, %v8383
    %v8558 = vpack.c.bf16 %v8384, %v8384
    %v8559 = vpack.c.bf16 %v8385, %v8385
    %v8560 = vpack.c.bf16 %v8386, %v8386
    %v8561 = vpack.c.bf16 %v8387, %v8387
    %v8562 = vpack.c.bf16 %v8388, %v8388
    %v8563 = vpack.c.bf16 %v8389, %v8389
    %v8564 = vpack.c.bf16 %v8390, %v8390
    %v8565 = vpack.c.bf16 %v8391, %v8391
    %v8566 = vpack.c.bf16 %v8392, %v8392
    %v8567 = vpack.c.bf16 %v8393, %v8393
    %v8568 = vpack.c.bf16 %v8394, %v8394
    %v8569 = vpack.c.bf16 %v8395, %v8395
    %v8570 = vpack.c.bf16 %v8396, %v8396
    %v8571 = vpack.c.bf16 %v8397, %v8397
    %v8572 = vpack.c.bf16 %v8398, %v8398
    %v8573 = vpack.c.bf16 %v8399, %v8399
    %v8574 = vpack.c.bf16 %v8400, %v8400
    %v8575 = vpack.c.bf16 %v8401, %v8401
    %v8576 = vpack.c.bf16 %v8402, %v8402
    %v8577 = vpack.c.bf16 %v8403, %v8403
    %v8578 = vpack.c.bf16 %v8404, %v8404
    %v8579 = vpack.c.bf16 %v8405, %v8405
    %v8580 = vpack.c.bf16 %v8406, %v8406
    %v8581 = vpack.c.bf16 %v8407, %v8407
    %v8582 = vpack.c.bf16 %v8408, %v8408
    %v8583 = vpack.c.bf16 %v8409, %v8409
    %v8584 = vpack.c.bf16 %v8410, %v8410
    %v8585 = vpack.c.bf16 %v8411, %v8411
    %v8586 = vpack.c.bf16 %v8412, %v8412
    %v8587 = vpack.c.bf16 %v8413, %v8413
    %v8588 = vpack.c.bf16 %v8414, %v8414
    %v8589 = vpack.c.bf16 %v8415, %v8415
    %v8590 = vpack.c.bf16 %v8416, %v8416
    %v8591 = vpack.c.bf16 %v8417, %v8417
    %v8592 = vpack.c.bf16 %v8418, %v8418
    %v8593 = vpack.c.bf16 %v8419, %v8419
    %v8594 = vpack.c.bf16 %v8420, %v8420
    %v8595 = vpack.c.bf16 %v8421, %v8421
    %v8596 = vpack.c.bf16 %v8422, %v8422
    %v8597 = vpack.c.bf16 %v8423, %v8423
    %v8598 = vpack.c.bf16 %v8424, %v8424
    %v8599 = vpack.c.bf16 %v8425, %v8425
    %v8600 = vpack.c.bf16 %v8426, %v8426
    %v8601 = vpack.c.bf16 %v8427, %v8427
    %v8602 = vpack.c.bf16 %v8428, %v8428
    %v8603 = vpack.c.bf16 %v8429, %v8429
    %v8604 = vpack.c.bf16 %v8430, %v8430
    %v8605 = vpack.c.bf16 %v8431, %v8431
    %v8606 = vpack.c.bf16 %v8432, %v8432
    %v8607 = vpack.c.bf16 %v8433, %v8433
    %v8608 = vpack.c.bf16 %v8434, %v8434
    %v8609 = vpack.c.bf16 %v8435, %v8435
    %v8610 = vpack.c.bf16 %v8436, %v8436
    %v8611 = vpack.c.bf16 %v8437, %v8437
    %v8612 = vpack.c.bf16 %v8438, %v8438
    %v8613 = vpack.c.bf16 %v8439, %v8439
    %v8614 = vpack.c.bf16 %v8440, %v8440
    %v8615 = vpack.c.bf16 %v8441, %v8441
    %v8616 = vpack.c.bf16 %v8442, %v8442
    %v8617 = vpack.c.bf16 %v8443, %v8443
    %v8618 = vpack.c.bf16 %v8444, %v8444
    %v8619 = vpack.c.bf16 %v8445, %v8445
    %v8620 = vpack.c.bf16 %v8446, %v8446
    %v8621 = vpack.c.bf16 %v8447, %v8447
    %v8622 = vpack.c.bf16 %v8448, %v8448
    %v8623 = vpack.c.bf16 %v8449, %v8449
    %v8624 = vpack.c.bf16 %v8450, %v8450
    %v8625 = vpack.c.bf16 %v8451, %v8451
    %v8626 = vpack.c.bf16 %v8452, %v8452
    %v8627 = vpack.c.bf16 %v8453, %v8453
    %v8628 = vpack.c.bf16 %v8454, %v8454
    %v8629 = vpack.c.bf16 %v8455, %v8455
    %v8630 = vpack.c.bf16 %v8456, %v8456
    %v8631 = vpack.c.bf16 %v8457, %v8457
    %v8632 = vpack.c.bf16 %v8458, %v8458
    %v8633 = vpack.c.bf16 %v8459, %v8459
    %v8634 = vpack.c.bf16 %v8460, %v8460
    %v8635 = vpack.c.bf16 %v8461, %v8461
    %v8636 = vpack.c.bf16 %v8462, %v8462
    %v8637 = vpack.c.bf16 %v8463, %v8463
    %v8638 = vpack.c.bf16 %v8464, %v8464
    %v8639 = vpack.c.bf16 %v8465, %v8465
    %v8640 = vpack.c.bf16 %v8466, %v8466
    %v8641 = vpack.c.bf16 %v8467, %v8467
    %v8642 = vpack.c.bf16 %v8468, %v8468
    %v8643 = vpack.c.bf16 %v8469, %v8469
    %v8644 = vpack.c.bf16 %v8470, %v8470
    %v8645 = vpack.c.bf16 %v8471, %v8471
    %v8646 = vpack.c.bf16 %v8472, %v8472
    %v8647 = vpack.c.bf16 %v8473, %v8473
    %v8648 = vpack.c.bf16 %v8474, %v8474
    %v8649 = vpack.c.bf16 %v8475, %v8475
    %v8650 = vpack.c.bf16 %v8476, %v8476
    %v8651 = vpack.c.bf16 %v8477, %v8477
    %v8652 = vpack.c.bf16 %v8478, %v8478
    %v8653 = vpack.c.bf16 %v8479, %v8479
    %v8654 = vpack.c.bf16 %v8480, %v8480
    %v8655 = vpack.c.bf16 %v8481, %v8481
    %v8656 = vpack.c.bf16 %v8482, %v8482
    %v8657 = vpack.c.bf16 %v8483, %v8483
    %v8658 = vpack.c.bf16 %v8484, %v8484
    %v8659 = vpack.c.bf16 %v8485, %v8485
    %v8660 = vpack.c.bf16 %v8486, %v8486
    %v8661 = vpack.c.bf16 %v8487, %v8487
    %v8662 = vpack.c.bf16 %v8488, %v8488
    %v8663 = vpack.c.bf16 %v8489, %v8489
    %v8664 = vpack.c.bf16 %v8490, %v8490
    %v8665 = vpack.c.bf16 %v8491, %v8491
    %v8666 = vpack.c.bf16 %v8492, %v8492
    %v8667 = vpack.c.bf16 %v8493, %v8493
    %v8668 = vpack.c.bf16 %v8494, %v8494
    %v8669 = vpack.c.bf16 %v8495, %v8495
    %v8670 = vpack.c.bf16 %v8496, %v8496
    %v8671 = vpack.c.bf16 %v8497, %v8497
    %v8672 = vpack.c.bf16 %v8498, %v8498
    %v8673 = vpack.c.bf16 %v8499, %v8499
    %v8674 = vpack.c.bf16 %v8500, %v8500
    %v8675 = vpack.c.bf16 %v8501, %v8501
    %v8676 = vpack.c.bf16 %v8502, %v8502
    %v8677 = vpack.c.bf16 %v8503, %v8503
    %v8678 = vpack.c.bf16 %v8504, %v8504
    %v8679 = vpack.c.bf16 %v8505, %v8505
    %v8680 = vpack.c.bf16 %v8506, %v8506
    %v8681 = vpack.c.bf16 %v8507, %v8507
    %v8810 = vunpack.c.l.b16 %v8554
    %v8811 = vunpack.c.l.b16 %v8555
    %v8812 = vunpack.c.l.b16 %v8556
    %v8813 = vunpack.c.l.b16 %v8557
    %v8814 = vunpack.c.l.b16 %v8558
    %v8815 = vunpack.c.l.b16 %v8559
    %v8816 = vunpack.c.l.b16 %v8560
    %v8817 = vunpack.c.l.b16 %v8561
    %v8818 = vunpack.c.l.b16 %v8562
    %v8819 = vunpack.c.l.b16 %v8563
    %v8820 = vunpack.c.l.b16 %v8564
    %v8821 = vunpack.c.l.b16 %v8565
    %v8822 = vunpack.c.l.b16 %v8566
    %v8823 = vunpack.c.l.b16 %v8567
    %v8824 = vunpack.c.l.b16 %v8568
    %v8825 = vunpack.c.l.b16 %v8569
    %v8826 = vunpack.c.l.b16 %v8570
    %v8827 = vunpack.c.l.b16 %v8571
    %v8828 = vunpack.c.l.b16 %v8572
    %v8829 = vunpack.c.l.b16 %v8573
    %v8830 = vunpack.c.l.b16 %v8574
    %v8831 = vunpack.c.l.b16 %v8575
    %v8832 = vunpack.c.l.b16 %v8576
    %v8833 = vunpack.c.l.b16 %v8577
    %v8834 = vunpack.c.l.b16 %v8578
    %v8835 = vunpack.c.l.b16 %v8579
    %v8836 = vunpack.c.l.b16 %v8580
    %v8837 = vunpack.c.l.b16 %v8581
    %v8838 = vunpack.c.l.b16 %v8582
    %v8839 = vunpack.c.l.b16 %v8583
    %v8840 = vunpack.c.l.b16 %v8584
    %v8841 = vunpack.c.l.b16 %v8585
    %v8842 = vunpack.c.l.b16 %v8586
    %v8843 = vunpack.c.l.b16 %v8587
    %v8844 = vunpack.c.l.b16 %v8588
    %v8845 = vunpack.c.l.b16 %v8589
    %v8846 = vunpack.c.l.b16 %v8590
    %v8847 = vunpack.c.l.b16 %v8591
    %v8848 = vunpack.c.l.b16 %v8592
    %v8849 = vunpack.c.l.b16 %v8593
    %v8850 = vunpack.c.l.b16 %v8594
    %v8851 = vunpack.c.l.b16 %v8595
    %v8852 = vunpack.c.l.b16 %v8596
    %v8853 = vunpack.c.l.b16 %v8597
    %v8854 = vunpack.c.l.b16 %v8598
    %v8855 = vunpack.c.l.b16 %v8599
    %v8856 = vunpack.c.l.b16 %v8600
    %v8857 = vunpack.c.l.b16 %v8601
    %v8858 = vunpack.c.l.b16 %v8602
    %v8859 = vunpack.c.l.b16 %v8603
    %v8860 = vunpack.c.l.b16 %v8604
    %v8861 = vunpack.c.l.b16 %v8605
    %v8862 = vunpack.c.l.b16 %v8606
    %v8863 = vunpack.c.l.b16 %v8607
    %v8864 = vunpack.c.l.b16 %v8608
    %v8865 = vunpack.c.l.b16 %v8609
    %v8866 = vunpack.c.l.b16 %v8610
    %v8867 = vunpack.c.l.b16 %v8611
    %v8868 = vunpack.c.l.b16 %v8612
    %v8869 = vunpack.c.l.b16 %v8613
    %v8870 = vunpack.c.l.b16 %v8614
    %v8871 = vunpack.c.l.b16 %v8615
    %v8872 = vunpack.c.l.b16 %v8616
    %v8873 = vunpack.c.l.b16 %v8617
    %v8874 = vunpack.c.l.b16 %v8618
    %v8875 = vunpack.c.l.b16 %v8619
    %v8876 = vunpack.c.l.b16 %v8620
    %v8877 = vunpack.c.l.b16 %v8621
    %v8878 = vunpack.c.l.b16 %v8622
    %v8879 = vunpack.c.l.b16 %v8623
    %v8880 = vunpack.c.l.b16 %v8624
    %v8881 = vunpack.c.l.b16 %v8625
    %v8882 = vunpack.c.l.b16 %v8626
    %v8883 = vunpack.c.l.b16 %v8627
    %v8884 = vunpack.c.l.b16 %v8628
    %v8885 = vunpack.c.l.b16 %v8629
    %v8886 = vunpack.c.l.b16 %v8630
    %v8887 = vunpack.c.l.b16 %v8631
    %v8888 = vunpack.c.l.b16 %v8632
    %v8889 = vunpack.c.l.b16 %v8633
    %v8890 = vunpack.c.l.b16 %v8634
    %v8891 = vunpack.c.l.b16 %v8635
    %v8892 = vunpack.c.l.b16 %v8636
    %v8893 = vunpack.c.l.b16 %v8637
    %v8894 = vunpack.c.l.b16 %v8638
    %v8895 = vunpack.c.l.b16 %v8639
    %v8896 = vunpack.c.l.b16 %v8640
    %v8897 = vunpack.c.l.b16 %v8641
    %v8898 = vunpack.c.l.b16 %v8642
    %v8899 = vunpack.c.l.b16 %v8643
    %v8900 = vunpack.c.l.b16 %v8644
    %v8901 = vunpack.c.l.b16 %v8645
    %v8902 = vunpack.c.l.b16 %v8646
    %v8903 = vunpack.c.l.b16 %v8647
    %v8904 = vunpack.c.l.b16 %v8648
    %v8905 = vunpack.c.l.b16 %v8649
    %v8906 = vunpack.c.l.b16 %v8650
    %v8907 = vunpack.c.l.b16 %v8651
    %v8908 = vunpack.c.l.b16 %v8652
    %v8909 = vunpack.c.l.b16 %v8653
    %v8910 = vunpack.c.l.b16 %v8654
    %v8911 = vunpack.c.l.b16 %v8655
    %v8912 = vunpack.c.l.b16 %v8656
    %v8913 = vunpack.c.l.b16 %v8657
    %v8914 = vunpack.c.l.b16 %v8658
    %v8915 = vunpack.c.l.b16 %v8659
    %v8916 = vunpack.c.l.b16 %v8660
    %v8917 = vunpack.c.l.b16 %v8661
    %v8918 = vunpack.c.l.b16 %v8662
    %v8919 = vunpack.c.l.b16 %v8663
    %v8920 = vunpack.c.l.b16 %v8664
    %v8921 = vunpack.c.l.b16 %v8665
    %v8922 = vunpack.c.l.b16 %v8666
    %v8923 = vunpack.c.l.b16 %v8667
    %v8924 = vunpack.c.l.b16 %v8668
    %v8925 = vunpack.c.l.b16 %v8669
    %v8926 = vunpack.c.l.b16 %v8670
    %v8927 = vunpack.c.l.b16 %v8671
    %v8928 = vunpack.c.l.b16 %v8672
    %v8929 = vunpack.c.l.b16 %v8673
    %v8930 = vunpack.c.l.b16 %v8674
    %v8931 = vunpack.c.l.b16 %v8675
    %v8932 = vunpack.c.l.b16 %v8676
    %v8933 = vunpack.c.l.b16 %v8677
    %v8934 = vunpack.c.l.b16 %v8678
    %v8935 = vunpack.c.l.b16 %v8679
    %v8936 = vunpack.c.l.b16 %v8680
    %v8937 = vunpack.c.l.b16 %v8681
    %v8938 = vrot.slane %v8810, 6
    %v8939 = vrot.slane %v8811, 5
    %vm8940 = vcmask 1043459
    %v8941 = vsel %vm8940, %v8939, %v8938
    %v8942 = vrot.slane %v8812, 4
    %vm8943 = vcmask 1044484
    %v8944 = vsel %vm8943, %v8942, %v8941
    %v8945 = vrot.slane %v8813, 3
    %vm8946 = vcmask 1045509
    %v8947 = vsel %vm8946, %v8945, %v8944
    %v8948 = vrot.slane %v8814, 2
    %vm8949 = vcmask 1046534
    %v8950 = vsel %vm8949, %v8948, %v8947
    %v8951 = vrot.slane %v8815, 1
    %vm8952 = vcmask 1047559
    %v8953 = vsel %vm8952, %v8951, %v8950
    %v8954 = vrot.slane %v8817, 7
    %vm8955 = vcmask 1041409
    %v8956 = vsel %vm8955, %v8954, %v8816
    %v8957 = vrot.slane %v8818, 6
    %v8958 = vrot.slane %v8819, 5
    %v8959 = vsel %vm8940, %v8958, %v8957
    %v8960 = vrot.slane %v8820, 4
    %v8961 = vsel %vm8943, %v8960, %v8959
    %v8962 = vrot.slane %v8821, 3
    %v8963 = vsel %vm8946, %v8962, %v8961
    %v8964 = vrot.slane %v8822, 2
    %v8965 = vsel %vm8949, %v8964, %v8963
    %v8966 = vrot.slane %v8823, 1
    %v8967 = vsel %vm8952, %v8966, %v8965
    %v8968 = vrot.slane %v8825, 7
    %v8969 = vsel %vm8955, %v8968, %v8824
    %v8970 = vrot.slane %v8826, 6
    %v8971 = vrot.slane %v8827, 5
    %v8972 = vsel %vm8940, %v8971, %v8970
    %v8973 = vrot.slane %v8828, 4
    %v8974 = vsel %vm8943, %v8973, %v8972
    %v8975 = vrot.slane %v8829, 3
    %v8976 = vsel %vm8946, %v8975, %v8974
    %v8977 = vrot.slane %v8830, 2
    %v8978 = vsel %vm8949, %v8977, %v8976
    %v8979 = vrot.slane %v8831, 1
    %v8980 = vsel %vm8952, %v8979, %v8978
    %v8981 = vrot.slane %v8833, 7
    %v8982 = vsel %vm8955, %v8981, %v8832
    %v8983 = vrot.slane %v8834, 6
    %v8984 = vrot.slane %v8835, 5
    %v8985 = vsel %vm8940, %v8984, %v8983
    %v8986 = vrot.slane %v8836, 4
    %v8987 = vsel %vm8943, %v8986, %v8985
    %v8988 = vrot.slane %v8837, 3
    %v8989 = vsel %vm8946, %v8988, %v8987
    %v8990 = vrot.slane %v8838, 2
    %v8991 = vsel %vm8949, %v8990, %v8989
    %v8992 = vrot.slane %v8839, 1
    %v8993 = vsel %vm8952, %v8992, %v8991
    %v8994 = vrot.slane %v8841, 7
    %v8995 = vsel %vm8955, %v8994, %v8840
    %v8996 = vrot.slane %v8842, 6
    %v8997 = vrot.slane %v8843, 5
    %v8998 = vsel %vm8940, %v8997, %v8996
    %v8999 = vrot.slane %v8844, 4
    %v9000 = vsel %vm8943, %v8999, %v8998
    %v9001 = vrot.slane %v8845, 3
    %v9002 = vsel %vm8946, %v9001, %v9000
    %v9003 = vrot.slane %v8846, 2
    %v9004 = vsel %vm8949, %v9003, %v9002
    %v9005 = vrot.slane %v8847, 1
    %v9006 = vsel %vm8952, %v9005, %v9004
    %v9007 = vrot.slane %v8849, 7
    %v9008 = vsel %vm8955, %v9007, %v8848
    %v9009 = vrot.slane %v8850, 6
    %v9010 = vrot.slane %v8851, 5
    %v9011 = vsel %vm8940, %v9010, %v9009
    %v9012 = vrot.slane %v8852, 4
    %v9013 = vsel %vm8943, %v9012, %v9011
    %v9014 = vrot.slane %v8853, 3
    %v9015 = vsel %vm8946, %v9014, %v9013
    %v9016 = vrot.slane %v8854, 2
    %v9017 = vsel %vm8949, %v9016, %v9015
    %v9018 = vrot.slane %v8855, 1
    %v9019 = vsel %vm8952, %v9018, %v9017
    %v9020 = vrot.slane %v8857, 7
    %v9021 = vsel %vm8955, %v9020, %v8856
    %v9022 = vrot.slane %v8858, 6
    %v9023 = vrot.slane %v8859, 5
    %v9024 = vsel %vm8940, %v9023, %v9022
    %v9025 = vrot.slane %v8860, 4
    %v9026 = vsel %vm8943, %v9025, %v9024
    %v9027 = vrot.slane %v8861, 3
    %v9028 = vsel %vm8946, %v9027, %v9026
    %v9029 = vrot.slane %v8862, 2
    %v9030 = vsel %vm8949, %v9029, %v9028
    %v9031 = vrot.slane %v8863, 1
    %v9032 = vsel %vm8952, %v9031, %v9030
    %v9033 = vrot.slane %v8865, 7
    %v9034 = vsel %vm8955, %v9033, %v8864
    %v9035 = vrot.slane %v8866, 6
    %v9036 = vrot.slane %v8867, 5
    %v9037 = vsel %vm8940, %v9036, %v9035
    %v9038 = vrot.slane %v8868, 4
    %v9039 = vsel %vm8943, %v9038, %v9037
    %v9040 = vrot.slane %v8869, 3
    %v9041 = vsel %vm8946, %v9040, %v9039
    %v9042 = vrot.slane %v8870, 2
    %v9043 = vsel %vm8949, %v9042, %v9041
    %v9044 = vrot.slane %v8871, 1
    %v9045 = vsel %vm8952, %v9044, %v9043
    %v9046 = vrot.slane %v8873, 7
    %v9047 = vsel %vm8955, %v9046, %v8872
    %v9048 = vrot.slane %v8874, 6
    %v9049 = vrot.slane %v8875, 5
    %v9050 = vsel %vm8940, %v9049, %v9048
    %v9051 = vrot.slane %v8876, 4
    %v9052 = vsel %vm8943, %v9051, %v9050
    %v9053 = vrot.slane %v8877, 3
    %v9054 = vsel %vm8946, %v9053, %v9052
    %v9055 = vrot.slane %v8878, 2
    %v9056 = vsel %vm8949, %v9055, %v9054
    %v9057 = vrot.slane %v8879, 1
    %v9058 = vsel %vm8952, %v9057, %v9056
    %v9059 = vrot.slane %v8881, 7
    %v9060 = vsel %vm8955, %v9059, %v8880
    %v9061 = vrot.slane %v8882, 6
    %v9062 = vrot.slane %v8883, 5
    %v9063 = vsel %vm8940, %v9062, %v9061
    %v9064 = vrot.slane %v8884, 4
    %v9065 = vsel %vm8943, %v9064, %v9063
    %v9066 = vrot.slane %v8885, 3
    %v9067 = vsel %vm8946, %v9066, %v9065
    %v9068 = vrot.slane %v8886, 2
    %v9069 = vsel %vm8949, %v9068, %v9067
    %v9070 = vrot.slane %v8887, 1
    %v9071 = vsel %vm8952, %v9070, %v9069
    %v9072 = vrot.slane %v8889, 7
    %v9073 = vsel %vm8955, %v9072, %v8888
    %v9074 = vrot.slane %v8890, 6
    %v9075 = vrot.slane %v8891, 5
    %v9076 = vsel %vm8940, %v9075, %v9074
    %v9077 = vrot.slane %v8892, 4
    %v9078 = vsel %vm8943, %v9077, %v9076
    %v9079 = vrot.slane %v8893, 3
    %v9080 = vsel %vm8946, %v9079, %v9078
    %v9081 = vrot.slane %v8894, 2
    %v9082 = vsel %vm8949, %v9081, %v9080
    %v9083 = vrot.slane %v8895, 1
    %v9084 = vsel %vm8952, %v9083, %v9082
    %v9085 = vrot.slane %v8897, 7
    %v9086 = vsel %vm8955, %v9085, %v8896
    %v9087 = vrot.slane %v8898, 6
    %v9088 = vrot.slane %v8899, 5
    %v9089 = vsel %vm8940, %v9088, %v9087
    %v9090 = vrot.slane %v8900, 4
    %v9091 = vsel %vm8943, %v9090, %v9089
    %v9092 = vrot.slane %v8901, 3
    %v9093 = vsel %vm8946, %v9092, %v9091
    %v9094 = vrot.slane %v8902, 2
    %v9095 = vsel %vm8949, %v9094, %v9093
    %v9096 = vrot.slane %v8903, 1
    %v9097 = vsel %vm8952, %v9096, %v9095
    %v9098 = vrot.slane %v8905, 7
    %v9099 = vsel %vm8955, %v9098, %v8904
    %v9100 = vrot.slane %v8906, 6
    %v9101 = vrot.slane %v8907, 5
    %v9102 = vsel %vm8940, %v9101, %v9100
    %v9103 = vrot.slane %v8908, 4
    %v9104 = vsel %vm8943, %v9103, %v9102
    %v9105 = vrot.slane %v8909, 3
    %v9106 = vsel %vm8946, %v9105, %v9104
    %v9107 = vrot.slane %v8910, 2
    %v9108 = vsel %vm8949, %v9107, %v9106
    %v9109 = vrot.slane %v8911, 1
    %v9110 = vsel %vm8952, %v9109, %v9108
    %v9111 = vrot.slane %v8913, 7
    %v9112 = vsel %vm8955, %v9111, %v8912
    %v9113 = vrot.slane %v8914, 6
    %v9114 = vrot.slane %v8915, 5
    %v9115 = vsel %vm8940, %v9114, %v9113
    %v9116 = vrot.slane %v8916, 4
    %v9117 = vsel %vm8943, %v9116, %v9115
    %v9118 = vrot.slane %v8917, 3
    %v9119 = vsel %vm8946, %v9118, %v9117
    %v9120 = vrot.slane %v8918, 2
    %v9121 = vsel %vm8949, %v9120, %v9119
    %v9122 = vrot.slane %v8919, 1
    %v9123 = vsel %vm8952, %v9122, %v9121
    %v9124 = vrot.slane %v8921, 7
    %v9125 = vsel %vm8955, %v9124, %v8920
    %v9126 = vrot.slane %v8922, 6
    %v9127 = vrot.slane %v8923, 5
    %v9128 = vsel %vm8940, %v9127, %v9126
    %v9129 = vrot.slane %v8924, 4
    %v9130 = vsel %vm8943, %v9129, %v9128
    %v9131 = vrot.slane %v8925, 3
    %v9132 = vsel %vm8946, %v9131, %v9130
    %v9133 = vrot.slane %v8926, 2
    %v9134 = vsel %vm8949, %v9133, %v9132
    %v9135 = vrot.slane %v8927, 1
    %v9136 = vsel %vm8952, %v9135, %v9134
    %v9137 = vrot.slane %v8929, 7
    %v9138 = vsel %vm8955, %v9137, %v8928
    %v9139 = vrot.slane %v8930, 6
    %v9140 = vrot.slane %v8931, 5
    %v9141 = vsel %vm8940, %v9140, %v9139
    %v9142 = vrot.slane %v8932, 4
    %v9143 = vsel %vm8943, %v9142, %v9141
    %v9144 = vrot.slane %v8933, 3
    %v9145 = vsel %vm8946, %v9144, %v9143
    %v9146 = vrot.slane %v8934, 2
    %v9147 = vsel %vm8949, %v9146, %v9145
    %v9148 = vrot.slane %v8935, 1
    %v9149 = vsel %vm8952, %v9148, %v9147
    %v9150 = vrot.slane %v8937, 7
    %v9151 = vsel %vm8955, %v9150, %v8936
    %v9152 = vpack.c.b16 %v8953, %v8953
    %v9153 = vpack.c.b16 %v8956, %v8956
    %v9154 = vpack.c.b16 %v8967, %v8967
    %v9155 = vpack.c.b16 %v8969, %v8969
    %v9156 = vpack.c.b16 %v8980, %v8980
    %v9157 = vpack.c.b16 %v8982, %v8982
    %v9158 = vpack.c.b16 %v8993, %v8993
    %v9159 = vpack.c.b16 %v8995, %v8995
    %v9160 = vpack.c.b16 %v9006, %v9006
    %v9161 = vpack.c.b16 %v9008, %v9008
    %v9162 = vpack.c.b16 %v9019, %v9019
    %v9163 = vpack.c.b16 %v9021, %v9021
    %v9164 = vpack.c.b16 %v9032, %v9032
    %v9165 = vpack.c.b16 %v9034, %v9034
    %v9166 = vpack.c.b16 %v9045, %v9045
    %v9167 = vpack.c.b16 %v9047, %v9047
    %v9168 = vpack.c.b16 %v9058, %v9058
    %v9169 = vpack.c.b16 %v9060, %v9060
    %v9170 = vpack.c.b16 %v9071, %v9071
    %v9171 = vpack.c.b16 %v9073, %v9073
    %v9172 = vpack.c.b16 %v9084, %v9084
    %v9173 = vpack.c.b16 %v9086, %v9086
    %v9174 = vpack.c.b16 %v9097, %v9097
    %v9175 = vpack.c.b16 %v9099, %v9099
    %v9176 = vpack.c.b16 %v9110, %v9110
    %v9177 = vpack.c.b16 %v9112, %v9112
    %v9178 = vpack.c.b16 %v9123, %v9123
    %v9179 = vpack.c.b16 %v9125, %v9125
    %v9180 = vpack.c.b16 %v9136, %v9136
    %v9181 = vpack.c.b16 %v9138, %v9138
    %v9182 = vpack.c.b16 %v9149, %v9149
    %v9183 = vpack.c.b16 %v9151, %v9151
    %vm9216 = vcmask 257025
    %9217 = vst.msk [vmem:[%s8519] sm:$0xe] %vm9216, %v9152
    %9218 = vst.msk [vmem:[%s8519 + $0x4] sm:$0x1] %vm8520, %v9153
    %9219 = vst.msk [vmem:[%s8519 + $0x8] sm:$0xe] %vm9216, %v9154
    %9220 = vst.msk [vmem:[%s8519 + $0xc] sm:$0x1] %vm8520, %v9155
    %9221 = vst.msk [vmem:[%s8519 + $0x10] sm:$0xe] %vm9216, %v9156
    %9222 = vst.msk [vmem:[%s8519 + $0x14] sm:$0x1] %vm8520, %v9157
    %9223 = vst.msk [vmem:[%s8519 + $0x18] sm:$0xe] %vm9216, %v9158
    %9224 = vst.msk [vmem:[%s8519 + $0x1c] sm:$0x1] %vm8520, %v9159
    %9225 = vst.msk [vmem:[%s8519 + $0x20] sm:$0xe] %vm9216, %v9160
    %9226 = vst.msk [vmem:[%s8519 + $0x24] sm:$0x1] %vm8520, %v9161
    %9227 = vst.msk [vmem:[%s8519 + $0x28] sm:$0xe] %vm9216, %v9162
    %9228 = vst.msk [vmem:[%s8519 + $0x2c] sm:$0x1] %vm8520, %v9163
    %9229 = vst.msk [vmem:[%s8519 + $0x30] sm:$0xe] %vm9216, %v9164
    %9230 = vst.msk [vmem:[%s8519 + $0x34] sm:$0x1] %vm8520, %v9165
    %9231 = vst.msk [vmem:[%s8519 + $0x38] sm:$0xe] %vm9216, %v9166
    %9232 = vst.msk [vmem:[%s8519 + $0x3c] sm:$0x1] %vm8520, %v9167
    %9233 = vst.msk [vmem:[%s8519 + $0x50] sm:$0xe] %vm9216, %v9168
    %9234 = vst.msk [vmem:[%s8519 + $0x54] sm:$0x1] %vm8520, %v9169
    %9235 = vst.msk [vmem:[%s8519 + $0x58] sm:$0xe] %vm9216, %v9170
    %9236 = vst.msk [vmem:[%s8519 + $0x5c] sm:$0x1] %vm8520, %v9171
    %9237 = vst.msk [vmem:[%s8519 + $0x60] sm:$0xe] %vm9216, %v9172
    %9238 = vst.msk [vmem:[%s8519 + $0x64] sm:$0x1] %vm8520, %v9173
    %9239 = vst.msk [vmem:[%s8519 + $0x68] sm:$0xe] %vm9216, %v9174
    %9240 = vst.msk [vmem:[%s8519 + $0x6c] sm:$0x1] %vm8520, %v9175
    %9241 = vst.msk [vmem:[%s8519 + $0x70] sm:$0xe] %vm9216, %v9176
    %9242 = vst.msk [vmem:[%s8519 + $0x74] sm:$0x1] %vm8520, %v9177
    %9243 = vst.msk [vmem:[%s8519 + $0x78] sm:$0xe] %vm9216, %v9178
    %9244 = vst.msk [vmem:[%s8519 + $0x7c] sm:$0x1] %vm8520, %v9179
    %9245 = vst.msk [vmem:[%s8519 + $0x80] sm:$0xe] %vm9216, %v9180
    %9246 = vst.msk [vmem:[%s8519 + $0x84] sm:$0x1] %vm8520, %v9181
    %9247 = vst.msk [vmem:[%s8519 + $0x88] sm:$0xe] %vm9216, %v9182
    %9248 = vst.msk [vmem:[%s8519 + $0x8c] sm:$0x1] %vm8520, %v9183
    %v9249 = vld [vmem:[#allocation3] sm:$0xf]
    %v9250 = vld [vmem:[#allocation3 + $0x4] sm:$0x1]
    %v9251 = vld [vmem:[#allocation3 + $0x8] sm:$0xf]
    %v9252 = vld [vmem:[#allocation3 + $0xc] sm:$0x1]
    %v9253 = vld [vmem:[#allocation3 + $0x10] sm:$0xf]
    %v9254 = vld [vmem:[#allocation3 + $0x14] sm:$0x1]
    %v9255 = vld [vmem:[#allocation3 + $0x18] sm:$0xf]
    %v9256 = vld [vmem:[#allocation3 + $0x1c] sm:$0x1]
    %v9257 = vld [vmem:[#allocation3 + $0x20] sm:$0xf]
    %v9258 = vld [vmem:[#allocation3 + $0x24] sm:$0x1]
    %v9259 = vld [vmem:[#allocation3 + $0x28] sm:$0xf]
    %v9260 = vld [vmem:[#allocation3 + $0x2c] sm:$0x1]
    %v9261 = vld [vmem:[#allocation3 + $0x30] sm:$0xf]
    %v9262 = vld [vmem:[#allocation3 + $0x34] sm:$0x1]
    %v9263 = vld [vmem:[#allocation3 + $0x38] sm:$0xf]
    %v9264 = vld [vmem:[#allocation3 + $0x3c] sm:$0x1]
    %v9265 = vld [vmem:[#allocation3 + $0x50] sm:$0xf]
    %v9266 = vld [vmem:[#allocation3 + $0x54] sm:$0x1]
    %v9267 = vld [vmem:[#allocation3 + $0x58] sm:$0xf]
    %v9268 = vld [vmem:[#allocation3 + $0x5c] sm:$0x1]
    %v9269 = vld [vmem:[#allocation3 + $0x60] sm:$0xf]
    %v9270 = vld [vmem:[#allocation3 + $0x64] sm:$0x1]
    %v9271 = vld [vmem:[#allocation3 + $0x68] sm:$0xf]
    %v9272 = vld [vmem:[#allocation3 + $0x6c] sm:$0x1]
    %v9273 = vld [vmem:[#allocation3 + $0x70] sm:$0xf]
    %v9274 = vld [vmem:[#allocation3 + $0x74] sm:$0x1]
    %v9275 = vld [vmem:[#allocation3 + $0x78] sm:$0xf]
    %v9276 = vld [vmem:[#allocation3 + $0x7c] sm:$0x1]
    %v9277 = vld [vmem:[#allocation3 + $0x80] sm:$0xf]
    %v9278 = vld [vmem:[#allocation3 + $0x84] sm:$0x1]
    %v9279 = vld [vmem:[#allocation3 + $0x88] sm:$0xf]
    %v9280 = vld [vmem:[#allocation3 + $0x8c] sm:$0x1]
    %v9281 = vld [vmem:[#allocation3] sm:$0xe]
    %v9282 = vld [vmem:[#allocation3 + $0x8] sm:$0xe]
    %v9283 = vld [vmem:[#allocation3 + $0x10] sm:$0xe]
    %v9284 = vld [vmem:[#allocation3 + $0x18] sm:$0xe]
    %v9285 = vld [vmem:[#allocation3 + $0x20] sm:$0xe]
    %v9286 = vld [vmem:[#allocation3 + $0x28] sm:$0xe]
    %v9287 = vld [vmem:[#allocation3 + $0x30] sm:$0xe]
    %v9288 = vld [vmem:[#allocation3 + $0x38] sm:$0xe]
    %v9289 = vld [vmem:[#allocation3 + $0x50] sm:$0xe]
    %v9290 = vld [vmem:[#allocation3 + $0x58] sm:$0xe]
    %v9291 = vld [vmem:[#allocation3 + $0x60] sm:$0xe]
    %v9292 = vld [vmem:[#allocation3 + $0x68] sm:$0xe]
    %v9293 = vld [vmem:[#allocation3 + $0x70] sm:$0xe]
    %v9294 = vld [vmem:[#allocation3 + $0x78] sm:$0xe]
    %v9295 = vld [vmem:[#allocation3 + $0x80] sm:$0xe]
    %v9296 = vld [vmem:[#allocation3 + $0x88] sm:$0xe]
    %v9297 = vld [vmem:[#allocation3 + $0x4] sm:$0x3]
    %v9298 = vld [vmem:[#allocation3 + $0xc] sm:$0x3]
    %v9299 = vld [vmem:[#allocation3 + $0x14] sm:$0x3]
    %v9300 = vld [vmem:[#allocation3 + $0x1c] sm:$0x3]
    %v9301 = vld [vmem:[#allocation3 + $0x24] sm:$0x3]
    %v9302 = vld [vmem:[#allocation3 + $0x2c] sm:$0x3]
    %v9303 = vld [vmem:[#allocation3 + $0x34] sm:$0x3]
    %v9304 = vld [vmem:[#allocation3 + $0x3c] sm:$0x3]
    %v9305 = vld [vmem:[#allocation3 + $0x54] sm:$0x3]
    %v9306 = vld [vmem:[#allocation3 + $0x5c] sm:$0x3]
    %v9307 = vld [vmem:[#allocation3 + $0x64] sm:$0x3]
    %v9308 = vld [vmem:[#allocation3 + $0x6c] sm:$0x3]
    %v9309 = vld [vmem:[#allocation3 + $0x74] sm:$0x3]
    %v9310 = vld [vmem:[#allocation3 + $0x7c] sm:$0x3]
    %v9311 = vld [vmem:[#allocation3 + $0x84] sm:$0x3]
    %v9312 = vld [vmem:[#allocation3 + $0x8c] sm:$0x3]
    %v9313 = vld [vmem:[%s8519] sm:$0xf]
    %v9314 = vld [vmem:[%s8519 + $0x4] sm:$0x1]
    %v9315 = vld [vmem:[%s8519 + $0x8] sm:$0xf]
    %v9316 = vld [vmem:[%s8519 + $0xc] sm:$0x1]
    %v9317 = vld [vmem:[%s8519 + $0x10] sm:$0xf]
    %v9318 = vld [vmem:[%s8519 + $0x14] sm:$0x1]
    %v9319 = vld [vmem:[%s8519 + $0x18] sm:$0xf]
    %v9320 = vld [vmem:[%s8519 + $0x1c] sm:$0x1]
    %v9321 = vld [vmem:[%s8519 + $0x20] sm:$0xf]
    %v9322 = vld [vmem:[%s8519 + $0x24] sm:$0x1]
    %v9323 = vld [vmem:[%s8519 + $0x28] sm:$0xf]
    %v9324 = vld [vmem:[%s8519 + $0x2c] sm:$0x1]
    %v9325 = vld [vmem:[%s8519 + $0x30] sm:$0xf]
    %v9326 = vld [vmem:[%s8519 + $0x34] sm:$0x1]
    %v9327 = vld [vmem:[%s8519 + $0x38] sm:$0xf]
    %v9328 = vld [vmem:[%s8519 + $0x3c] sm:$0x1]
    %v9329 = vld [vmem:[%s8519 + $0x50] sm:$0xf]
    %v9330 = vld [vmem:[%s8519 + $0x54] sm:$0x1]
    %v9331 = vld [vmem:[%s8519 + $0x58] sm:$0xf]
    %v9332 = vld [vmem:[%s8519 + $0x5c] sm:$0x1]
    %v9333 = vld [vmem:[%s8519 + $0x60] sm:$0xf]
    %v9334 = vld [vmem:[%s8519 + $0x64] sm:$0x1]
    %v9335 = vld [vmem:[%s8519 + $0x68] sm:$0xf]
    %v9336 = vld [vmem:[%s8519 + $0x6c] sm:$0x1]
    %v9337 = vld [vmem:[%s8519 + $0x70] sm:$0xf]
    %v9338 = vld [vmem:[%s8519 + $0x74] sm:$0x1]
    %v9339 = vld [vmem:[%s8519 + $0x78] sm:$0xf]
    %v9340 = vld [vmem:[%s8519 + $0x7c] sm:$0x1]
    %v9341 = vld [vmem:[%s8519 + $0x80] sm:$0xf]
    %v9342 = vld [vmem:[%s8519 + $0x84] sm:$0x1]
    %v9343 = vld [vmem:[%s8519 + $0x88] sm:$0xf]
    %v9344 = vld [vmem:[%s8519 + $0x8c] sm:$0x1]
    %v9345 = vld [vmem:[%s8519] sm:$0xe]
    %v9346 = vld [vmem:[%s8519 + $0x8] sm:$0xe]
    %v9347 = vld [vmem:[%s8519 + $0x10] sm:$0xe]
    %v9348 = vld [vmem:[%s8519 + $0x18] sm:$0xe]
    %v9349 = vld [vmem:[%s8519 + $0x20] sm:$0xe]
    %v9350 = vld [vmem:[%s8519 + $0x28] sm:$0xe]
    %v9351 = vld [vmem:[%s8519 + $0x30] sm:$0xe]
    %v9352 = vld [vmem:[%s8519 + $0x38] sm:$0xe]
    %v9353 = vld [vmem:[%s8519 + $0x50] sm:$0xe]
    %v9354 = vld [vmem:[%s8519 + $0x58] sm:$0xe]
    %v9355 = vld [vmem:[%s8519 + $0x60] sm:$0xe]
    %v9356 = vld [vmem:[%s8519 + $0x68] sm:$0xe]
    %v9357 = vld [vmem:[%s8519 + $0x70] sm:$0xe]
    %v9358 = vld [vmem:[%s8519 + $0x78] sm:$0xe]
    %v9359 = vld [vmem:[%s8519 + $0x80] sm:$0xe]
    %v9360 = vld [vmem:[%s8519 + $0x88] sm:$0xe]
    %v9361 = vld [vmem:[%s8519 + $0x4] sm:$0x3]
    %v9362 = vld [vmem:[%s8519 + $0xc] sm:$0x3]
    %v9363 = vld [vmem:[%s8519 + $0x14] sm:$0x3]
    %v9364 = vld [vmem:[%s8519 + $0x1c] sm:$0x3]
    %v9365 = vld [vmem:[%s8519 + $0x24] sm:$0x3]
    %v9366 = vld [vmem:[%s8519 + $0x2c] sm:$0x3]
    %v9367 = vld [vmem:[%s8519 + $0x34] sm:$0x3]
    %v9368 = vld [vmem:[%s8519 + $0x3c] sm:$0x3]
    %v9369 = vld [vmem:[%s8519 + $0x54] sm:$0x3]
    %v9370 = vld [vmem:[%s8519 + $0x5c] sm:$0x3]
    %v9371 = vld [vmem:[%s8519 + $0x64] sm:$0x3]
    %v9372 = vld [vmem:[%s8519 + $0x6c] sm:$0x3]
    %v9373 = vld [vmem:[%s8519 + $0x74] sm:$0x3]
    %v9374 = vld [vmem:[%s8519 + $0x7c] sm:$0x3]
    %v9375 = vld [vmem:[%s8519 + $0x84] sm:$0x3]
    %v9376 = vld [vmem:[%s8519 + $0x8c] sm:$0x3]
    %s9377 = scalar_lea.vmem [#allocation3], 16
    %v9378 = vld [vmem:[%s9377] sm:$0xf]
    %v9379 = vld [vmem:[%s9377 + $0x4] sm:$0x1]
    %v9380 = vld [vmem:[%s9377 + $0x8] sm:$0xf]
    %v9381 = vld [vmem:[%s9377 + $0xc] sm:$0x1]
    %v9382 = vld [vmem:[%s9377 + $0x10] sm:$0xf]
    %v9383 = vld [vmem:[%s9377 + $0x14] sm:$0x1]
    %v9384 = vld [vmem:[%s9377 + $0x18] sm:$0xf]
    %v9385 = vld [vmem:[%s9377 + $0x1c] sm:$0x1]
    %v9386 = vld [vmem:[%s9377 + $0x20] sm:$0xf]
    %v9387 = vld [vmem:[%s9377 + $0x24] sm:$0x1]
    %v9388 = vld [vmem:[%s9377 + $0x28] sm:$0xf]
    %v9389 = vld [vmem:[%s9377 + $0x2c] sm:$0x1]
    %v9390 = vld [vmem:[%s9377 + $0x30] sm:$0xf]
    %v9391 = vld [vmem:[%s9377 + $0x34] sm:$0x1]
    %v9392 = vld [vmem:[%s9377 + $0x38] sm:$0xf]
    %v9393 = vld [vmem:[%s9377 + $0x3c] sm:$0x1]
    %v9394 = vld [vmem:[%s9377 + $0x50] sm:$0xf]
    %v9395 = vld [vmem:[%s9377 + $0x54] sm:$0x1]
    %v9396 = vld [vmem:[%s9377 + $0x58] sm:$0xf]
    %v9397 = vld [vmem:[%s9377 + $0x5c] sm:$0x1]
    %v9398 = vld [vmem:[%s9377 + $0x60] sm:$0xf]
    %v9399 = vld [vmem:[%s9377 + $0x64] sm:$0x1]
    %v9400 = vld [vmem:[%s9377 + $0x68] sm:$0xf]
    %v9401 = vld [vmem:[%s9377 + $0x6c] sm:$0x1]
    %v9402 = vld [vmem:[%s9377 + $0x70] sm:$0xf]
    %v9403 = vld [vmem:[%s9377 + $0x74] sm:$0x1]
    %v9404 = vld [vmem:[%s9377 + $0x78] sm:$0xf]
    %v9405 = vld [vmem:[%s9377 + $0x7c] sm:$0x1]
    %v9406 = vld [vmem:[%s9377 + $0x80] sm:$0xf]
    %v9407 = vld [vmem:[%s9377 + $0x84] sm:$0x1]
    %v9408 = vld [vmem:[%s9377 + $0x88] sm:$0xf]
    %v9409 = vld [vmem:[%s9377 + $0x8c] sm:$0x1]
    %v9410 = vld [vmem:[%s9377] sm:$0xe]
    %v9411 = vld [vmem:[%s9377 + $0x8] sm:$0xe]
    %v9412 = vld [vmem:[%s9377 + $0x10] sm:$0xe]
    %v9413 = vld [vmem:[%s9377 + $0x18] sm:$0xe]
    %v9414 = vld [vmem:[%s9377 + $0x20] sm:$0xe]
    %v9415 = vld [vmem:[%s9377 + $0x28] sm:$0xe]
    %v9416 = vld [vmem:[%s9377 + $0x30] sm:$0xe]
    %v9417 = vld [vmem:[%s9377 + $0x38] sm:$0xe]
    %v9418 = vld [vmem:[%s9377 + $0x50] sm:$0xe]
    %v9419 = vld [vmem:[%s9377 + $0x58] sm:$0xe]
    %v9420 = vld [vmem:[%s9377 + $0x60] sm:$0xe]
    %v9421 = vld [vmem:[%s9377 + $0x68] sm:$0xe]
    %v9422 = vld [vmem:[%s9377 + $0x70] sm:$0xe]
    %v9423 = vld [vmem:[%s9377 + $0x78] sm:$0xe]
    %v9424 = vld [vmem:[%s9377 + $0x80] sm:$0xe]
    %v9425 = vld [vmem:[%s9377 + $0x88] sm:$0xe]
    %v9426 = vld [vmem:[%s9377 + $0x4] sm:$0x3]
    %v9427 = vld [vmem:[%s9377 + $0xc] sm:$0x3]
    %v9428 = vld [vmem:[%s9377 + $0x14] sm:$0x3]
    %v9429 = vld [vmem:[%s9377 + $0x1c] sm:$0x3]
    %v9430 = vld [vmem:[%s9377 + $0x24] sm:$0x3]
    %v9431 = vld [vmem:[%s9377 + $0x2c] sm:$0x3]
    %v9432 = vld [vmem:[%s9377 + $0x34] sm:$0x3]
    %v9433 = vld [vmem:[%s9377 + $0x3c] sm:$0x3]
    %v9434 = vld [vmem:[%s9377 + $0x54] sm:$0x3]
    %v9435 = vld [vmem:[%s9377 + $0x5c] sm:$0x3]
    %v9436 = vld [vmem:[%s9377 + $0x64] sm:$0x3]
    %v9437 = vld [vmem:[%s9377 + $0x6c] sm:$0x3]
    %v9438 = vld [vmem:[%s9377 + $0x74] sm:$0x3]
    %v9439 = vld [vmem:[%s9377 + $0x7c] sm:$0x3]
    %v9440 = vld [vmem:[%s9377 + $0x84] sm:$0x3]
    %v9441 = vld [vmem:[%s9377 + $0x8c] sm:$0x3]
    %v9474 = vunpack.c.l.b16 %v9249
    %v9475 = vunpack.c.l.b16 %v9250
    %v9476 = vunpack.c.l.b16 %v9251
    %v9477 = vunpack.c.l.b16 %v9252
    %v9478 = vunpack.c.l.b16 %v9253
    %v9479 = vunpack.c.l.b16 %v9254
    %v9480 = vunpack.c.l.b16 %v9255
    %v9481 = vunpack.c.l.b16 %v9256
    %v9482 = vunpack.c.l.b16 %v9257
    %v9483 = vunpack.c.l.b16 %v9258
    %v9484 = vunpack.c.l.b16 %v9259
    %v9485 = vunpack.c.l.b16 %v9260
    %v9486 = vunpack.c.l.b16 %v9261
    %v9487 = vunpack.c.l.b16 %v9262
    %v9488 = vunpack.c.l.b16 %v9263
    %v9489 = vunpack.c.l.b16 %v9264
    %v9490 = vunpack.c.l.b16 %v9265
    %v9491 = vunpack.c.l.b16 %v9266
    %v9492 = vunpack.c.l.b16 %v9267
    %v9493 = vunpack.c.l.b16 %v9268
    %v9494 = vunpack.c.l.b16 %v9269
    %v9495 = vunpack.c.l.b16 %v9270
    %v9496 = vunpack.c.l.b16 %v9271
    %v9497 = vunpack.c.l.b16 %v9272
    %v9498 = vunpack.c.l.b16 %v9273
    %v9499 = vunpack.c.l.b16 %v9274
    %v9500 = vunpack.c.l.b16 %v9275
    %v9501 = vunpack.c.l.b16 %v9276
    %v9502 = vunpack.c.l.b16 %v9277
    %v9503 = vunpack.c.l.b16 %v9278
    %v9504 = vunpack.c.l.b16 %v9279
    %v9505 = vunpack.c.l.b16 %v9280
    %v9506 = vpack.c.b16 %v9475, %v9474
    %v9507 = vpack.c.b16 %v9477, %v9476
    %v9508 = vpack.c.b16 %v9479, %v9478
    %v9509 = vpack.c.b16 %v9481, %v9480
    %v9510 = vpack.c.b16 %v9483, %v9482
    %v9511 = vpack.c.b16 %v9485, %v9484
    %v9512 = vpack.c.b16 %v9487, %v9486
    %v9513 = vpack.c.b16 %v9489, %v9488
    %v9514 = vpack.c.b16 %v9491, %v9490
    %v9515 = vpack.c.b16 %v9493, %v9492
    %v9516 = vpack.c.b16 %v9495, %v9494
    %v9517 = vpack.c.b16 %v9497, %v9496
    %v9518 = vpack.c.b16 %v9499, %v9498
    %v9519 = vpack.c.b16 %v9501, %v9500
    %v9520 = vpack.c.b16 %v9503, %v9502
    %v9521 = vpack.c.b16 %v9505, %v9504
    %v9538 = vunpack.c.l.b16 %v9281
    %v9539 = vunpack.c.l.b16 %v9282
    %v9540 = vunpack.c.l.b16 %v9283
    %v9541 = vunpack.c.l.b16 %v9284
    %v9542 = vunpack.c.l.b16 %v9285
    %v9543 = vunpack.c.l.b16 %v9286
    %v9544 = vunpack.c.l.b16 %v9287
    %v9545 = vunpack.c.l.b16 %v9288
    %v9546 = vunpack.c.l.b16 %v9289
    %v9547 = vunpack.c.l.b16 %v9290
    %v9548 = vunpack.c.l.b16 %v9291
    %v9549 = vunpack.c.l.b16 %v9292
    %v9550 = vunpack.c.l.b16 %v9293
    %v9551 = vunpack.c.l.b16 %v9294
    %v9552 = vunpack.c.l.b16 %v9295
    %v9553 = vunpack.c.l.b16 %v9296
    %v9554 = vpack.c.b16 %v9475, %v9538
    %v9555 = vpack.c.b16 %v9477, %v9539
    %v9556 = vpack.c.b16 %v9479, %v9540
    %v9557 = vpack.c.b16 %v9481, %v9541
    %v9558 = vpack.c.b16 %v9483, %v9542
    %v9559 = vpack.c.b16 %v9485, %v9543
    %v9560 = vpack.c.b16 %v9487, %v9544
    %v9561 = vpack.c.b16 %v9489, %v9545
    %v9562 = vpack.c.b16 %v9491, %v9546
    %v9563 = vpack.c.b16 %v9493, %v9547
    %v9564 = vpack.c.b16 %v9495, %v9548
    %v9565 = vpack.c.b16 %v9497, %v9549
    %v9566 = vpack.c.b16 %v9499, %v9550
    %v9567 = vpack.c.b16 %v9501, %v9551
    %v9568 = vpack.c.b16 %v9503, %v9552
    %v9569 = vpack.c.b16 %v9505, %v9553
    %v9571 = vshrl.u32 %v9554, 16
    %v9573 = vshll.u32 %v9554, 16
    %v9575 = vrot.slane %v9573, 1
    %v9576 = vor.u32 %v9571, %v9575
    %v9578 = vshrl.u32 %v9555, 16
    %v9580 = vshll.u32 %v9555, 16
    %v9582 = vrot.slane %v9580, 1
    %v9583 = vor.u32 %v9578, %v9582
    %v9585 = vshrl.u32 %v9556, 16
    %v9587 = vshll.u32 %v9556, 16
    %v9589 = vrot.slane %v9587, 1
    %v9590 = vor.u32 %v9585, %v9589
    %v9592 = vshrl.u32 %v9557, 16
    %v9594 = vshll.u32 %v9557, 16
    %v9596 = vrot.slane %v9594, 1
    %v9597 = vor.u32 %v9592, %v9596
    %v9599 = vshrl.u32 %v9558, 16
    %v9601 = vshll.u32 %v9558, 16
    %v9603 = vrot.slane %v9601, 1
    %v9604 = vor.u32 %v9599, %v9603
    %v9606 = vshrl.u32 %v9559, 16
    %v9608 = vshll.u32 %v9559, 16
    %v9610 = vrot.slane %v9608, 1
    %v9611 = vor.u32 %v9606, %v9610
    %v9613 = vshrl.u32 %v9560, 16
    %v9615 = vshll.u32 %v9560, 16
    %v9617 = vrot.slane %v9615, 1
    %v9618 = vor.u32 %v9613, %v9617
    %v9620 = vshrl.u32 %v9561, 16
    %v9622 = vshll.u32 %v9561, 16
    %v9624 = vrot.slane %v9622, 1
    %v9625 = vor.u32 %v9620, %v9624
    %v9627 = vshrl.u32 %v9562, 16
    %v9629 = vshll.u32 %v9562, 16
    %v9631 = vrot.slane %v9629, 1
    %v9632 = vor.u32 %v9627, %v9631
    %v9634 = vshrl.u32 %v9563, 16
    %v9636 = vshll.u32 %v9563, 16
    %v9638 = vrot.slane %v9636, 1
    %v9639 = vor.u32 %v9634, %v9638
    %v9641 = vshrl.u32 %v9564, 16
    %v9643 = vshll.u32 %v9564, 16
    %v9645 = vrot.slane %v9643, 1
    %v9646 = vor.u32 %v9641, %v9645
    %v9648 = vshrl.u32 %v9565, 16
    %v9650 = vshll.u32 %v9565, 16
    %v9652 = vrot.slane %v9650, 1
    %v9653 = vor.u32 %v9648, %v9652
    %v9655 = vshrl.u32 %v9566, 16
    %v9657 = vshll.u32 %v9566, 16
    %v9659 = vrot.slane %v9657, 1
    %v9660 = vor.u32 %v9655, %v9659
    %v9662 = vshrl.u32 %v9567, 16
    %v9664 = vshll.u32 %v9567, 16
    %v9666 = vrot.slane %v9664, 1
    %v9667 = vor.u32 %v9662, %v9666
    %v9669 = vshrl.u32 %v9568, 16
    %v9671 = vshll.u32 %v9568, 16
    %v9673 = vrot.slane %v9671, 1
    %v9674 = vor.u32 %v9669, %v9673
    %v9676 = vshrl.u32 %v9569, 16
    %v9678 = vshll.u32 %v9569, 16
    %v9680 = vrot.slane %v9678, 1
    %v9681 = vor.u32 %v9676, %v9680
    %9682 = vrot.lane.b32.xlu0 %v9576, 32
    %v9683 = vpop.permute.xlu0 %9682
    %9684 = vrot.lane.b32.xlu0 %v9583, 32
    %v9685 = vpop.permute.xlu0 %9684
    %9686 = vrot.lane.b32.xlu0 %v9590, 32
    %v9687 = vpop.permute.xlu0 %9686
    %9688 = vrot.lane.b32.xlu0 %v9597, 32
    %v9689 = vpop.permute.xlu0 %9688
    %9690 = vrot.lane.b32.xlu0 %v9604, 32
    %v9691 = vpop.permute.xlu0 %9690
    %9692 = vrot.lane.b32.xlu0 %v9611, 32
    %v9693 = vpop.permute.xlu0 %9692
    %9694 = vrot.lane.b32.xlu0 %v9618, 32
    %v9695 = vpop.permute.xlu0 %9694
    %9696 = vrot.lane.b32.xlu0 %v9625, 32
    %v9697 = vpop.permute.xlu0 %9696
    %9698 = vrot.lane.b32.xlu0 %v9632, 32
    %v9699 = vpop.permute.xlu0 %9698
    %9700 = vrot.lane.b32.xlu0 %v9639, 32
    %v9701 = vpop.permute.xlu0 %9700
    %9702 = vrot.lane.b32.xlu0 %v9646, 32
    %v9703 = vpop.permute.xlu0 %9702
    %9704 = vrot.lane.b32.xlu0 %v9653, 32
    %v9705 = vpop.permute.xlu0 %9704
    %9706 = vrot.lane.b32.xlu0 %v9660, 32
    %v9707 = vpop.permute.xlu0 %9706
    %9708 = vrot.lane.b32.xlu0 %v9667, 32
    %v9709 = vpop.permute.xlu0 %9708
    %9710 = vrot.lane.b32.xlu0 %v9674, 32
    %v9711 = vpop.permute.xlu0 %9710
    %9712 = vrot.lane.b32.xlu0 %v9681, 32
    %v9713 = vpop.permute.xlu0 %9712
    %v9730 = vunpack.c.l.b16 %v9297
    %v9731 = vunpack.c.l.b16 %v9298
    %v9732 = vunpack.c.l.b16 %v9299
    %v9733 = vunpack.c.l.b16 %v9300
    %v9734 = vunpack.c.l.b16 %v9301
    %v9735 = vunpack.c.l.b16 %v9302
    %v9736 = vunpack.c.l.b16 %v9303
    %v9737 = vunpack.c.l.b16 %v9304
    %v9738 = vunpack.c.l.b16 %v9305
    %v9739 = vunpack.c.l.b16 %v9306
    %v9740 = vunpack.c.l.b16 %v9307
    %v9741 = vunpack.c.l.b16 %v9308
    %v9742 = vunpack.c.l.b16 %v9309
    %v9743 = vunpack.c.l.b16 %v9310
    %v9744 = vunpack.c.l.b16 %v9311
    %v9745 = vunpack.c.l.b16 %v9312
    %v9746 = vpack.c.b16 %v9730, %v9538
    %v9747 = vpack.c.b16 %v9731, %v9539
    %v9748 = vpack.c.b16 %v9732, %v9540
    %v9749 = vpack.c.b16 %v9733, %v9541
    %v9750 = vpack.c.b16 %v9734, %v9542
    %v9751 = vpack.c.b16 %v9735, %v9543
    %v9752 = vpack.c.b16 %v9736, %v9544
    %v9753 = vpack.c.b16 %v9737, %v9545
    %v9754 = vpack.c.b16 %v9738, %v9546
    %v9755 = vpack.c.b16 %v9739, %v9547
    %v9756 = vpack.c.b16 %v9740, %v9548
    %v9757 = vpack.c.b16 %v9741, %v9549
    %v9758 = vpack.c.b16 %v9742, %v9550
    %v9759 = vpack.c.b16 %v9743, %v9551
    %v9760 = vpack.c.b16 %v9744, %v9552
    %v9761 = vpack.c.b16 %v9745, %v9553
    %v9762 = vrot.slane %v9746, 1
    %v9763 = vrot.slane %v9747, 1
    %v9764 = vrot.slane %v9748, 1
    %v9765 = vrot.slane %v9749, 1
    %v9766 = vrot.slane %v9750, 1
    %v9767 = vrot.slane %v9751, 1
    %v9768 = vrot.slane %v9752, 1
    %v9769 = vrot.slane %v9753, 1
    %v9770 = vrot.slane %v9754, 1
    %v9771 = vrot.slane %v9755, 1
    %v9772 = vrot.slane %v9756, 1
    %v9773 = vrot.slane %v9757, 1
    %v9774 = vrot.slane %v9758, 1
    %v9775 = vrot.slane %v9759, 1
    %v9776 = vrot.slane %v9760, 1
    %v9777 = vrot.slane %v9761, 1
    %9778 = vrot.lane.b32.xlu0 %v9762, 64
    %v9779 = vpop.permute.xlu0 %9778
    %9780 = vrot.lane.b32.xlu0 %v9763, 64
    %v9781 = vpop.permute.xlu0 %9780
    %9782 = vrot.lane.b32.xlu0 %v9764, 64
    %v9783 = vpop.permute.xlu0 %9782
    %9784 = vrot.lane.b32.xlu0 %v9765, 64
    %v9785 = vpop.permute.xlu0 %9784
    %9786 = vrot.lane.b32.xlu0 %v9766, 64
    %v9787 = vpop.permute.xlu0 %9786
    %9788 = vrot.lane.b32.xlu0 %v9767, 64
    %v9789 = vpop.permute.xlu0 %9788
    %9790 = vrot.lane.b32.xlu0 %v9768, 64
    %v9791 = vpop.permute.xlu0 %9790
    %9792 = vrot.lane.b32.xlu0 %v9769, 64
    %v9793 = vpop.permute.xlu0 %9792
    %9794 = vrot.lane.b32.xlu0 %v9770, 64
    %v9795 = vpop.permute.xlu0 %9794
    %9796 = vrot.lane.b32.xlu0 %v9771, 64
    %v9797 = vpop.permute.xlu0 %9796
    %9798 = vrot.lane.b32.xlu0 %v9772, 64
    %v9799 = vpop.permute.xlu0 %9798
    %9800 = vrot.lane.b32.xlu0 %v9773, 64
    %v9801 = vpop.permute.xlu0 %9800
    %9802 = vrot.lane.b32.xlu0 %v9774, 64
    %v9803 = vpop.permute.xlu0 %9802
    %9804 = vrot.lane.b32.xlu0 %v9775, 64
    %v9805 = vpop.permute.xlu0 %9804
    %9806 = vrot.lane.b32.xlu0 %v9776, 64
    %v9807 = vpop.permute.xlu0 %9806
    %9808 = vrot.lane.b32.xlu0 %v9777, 64
    %v9809 = vpop.permute.xlu0 %9808
    %v9842 = vunpack.c.l.b16 %v9313
    %v9843 = vunpack.c.l.b16 %v9314
    %v9844 = vunpack.c.l.b16 %v9315
    %v9845 = vunpack.c.l.b16 %v9316
    %v9846 = vunpack.c.l.b16 %v9317
    %v9847 = vunpack.c.l.b16 %v9318
    %v9848 = vunpack.c.l.b16 %v9319
    %v9849 = vunpack.c.l.b16 %v9320
    %v9850 = vunpack.c.l.b16 %v9321
    %v9851 = vunpack.c.l.b16 %v9322
    %v9852 = vunpack.c.l.b16 %v9323
    %v9853 = vunpack.c.l.b16 %v9324
    %v9854 = vunpack.c.l.b16 %v9325
    %v9855 = vunpack.c.l.b16 %v9326
    %v9856 = vunpack.c.l.b16 %v9327
    %v9857 = vunpack.c.l.b16 %v9328
    %v9858 = vunpack.c.l.b16 %v9329
    %v9859 = vunpack.c.l.b16 %v9330
    %v9860 = vunpack.c.l.b16 %v9331
    %v9861 = vunpack.c.l.b16 %v9332
    %v9862 = vunpack.c.l.b16 %v9333
    %v9863 = vunpack.c.l.b16 %v9334
    %v9864 = vunpack.c.l.b16 %v9335
    %v9865 = vunpack.c.l.b16 %v9336
    %v9866 = vunpack.c.l.b16 %v9337
    %v9867 = vunpack.c.l.b16 %v9338
    %v9868 = vunpack.c.l.b16 %v9339
    %v9869 = vunpack.c.l.b16 %v9340
    %v9870 = vunpack.c.l.b16 %v9341
    %v9871 = vunpack.c.l.b16 %v9342
    %v9872 = vunpack.c.l.b16 %v9343
    %v9873 = vunpack.c.l.b16 %v9344
    %v9874 = vpack.c.b16 %v9843, %v9842
    %v9875 = vpack.c.b16 %v9845, %v9844
    %v9876 = vpack.c.b16 %v9847, %v9846
    %v9877 = vpack.c.b16 %v9849, %v9848
    %v9878 = vpack.c.b16 %v9851, %v9850
    %v9879 = vpack.c.b16 %v9853, %v9852
    %v9880 = vpack.c.b16 %v9855, %v9854
    %v9881 = vpack.c.b16 %v9857, %v9856
    %v9882 = vpack.c.b16 %v9859, %v9858
    %v9883 = vpack.c.b16 %v9861, %v9860
    %v9884 = vpack.c.b16 %v9863, %v9862
    %v9885 = vpack.c.b16 %v9865, %v9864
    %v9886 = vpack.c.b16 %v9867, %v9866
    %v9887 = vpack.c.b16 %v9869, %v9868
    %v9888 = vpack.c.b16 %v9871, %v9870
    %v9889 = vpack.c.b16 %v9873, %v9872
    %9890 = vrot.lane.b32.xlu0 %v9874, 96
    %v9891 = vpop.permute.xlu0 %9890
    %9892 = vrot.lane.b32.xlu0 %v9875, 96
    %v9893 = vpop.permute.xlu0 %9892
    %9894 = vrot.lane.b32.xlu0 %v9876, 96
    %v9895 = vpop.permute.xlu0 %9894
    %9896 = vrot.lane.b32.xlu0 %v9877, 96
    %v9897 = vpop.permute.xlu0 %9896
    %9898 = vrot.lane.b32.xlu0 %v9878, 96
    %v9899 = vpop.permute.xlu0 %9898
    %9900 = vrot.lane.b32.xlu0 %v9879, 96
    %v9901 = vpop.permute.xlu0 %9900
    %9902 = vrot.lane.b32.xlu0 %v9880, 96
    %v9903 = vpop.permute.xlu0 %9902
    %9904 = vrot.lane.b32.xlu0 %v9881, 96
    %v9905 = vpop.permute.xlu0 %9904
    %9906 = vrot.lane.b32.xlu0 %v9882, 96
    %v9907 = vpop.permute.xlu0 %9906
    %9908 = vrot.lane.b32.xlu0 %v9883, 96
    %v9909 = vpop.permute.xlu0 %9908
    %9910 = vrot.lane.b32.xlu0 %v9884, 96
    %v9911 = vpop.permute.xlu0 %9910
    %9912 = vrot.lane.b32.xlu0 %v9885, 96
    %v9913 = vpop.permute.xlu0 %9912
    %9914 = vrot.lane.b32.xlu0 %v9886, 96
    %v9915 = vpop.permute.xlu0 %9914
    %9916 = vrot.lane.b32.xlu0 %v9887, 96
    %v9917 = vpop.permute.xlu0 %9916
    %9918 = vrot.lane.b32.xlu0 %v9888, 96
    %v9919 = vpop.permute.xlu0 %9918
    %9920 = vrot.lane.b32.xlu0 %v9889, 96
    %v9921 = vpop.permute.xlu0 %9920
    %v9938 = vunpack.c.l.b16 %v9345
    %v9939 = vunpack.c.l.b16 %v9346
    %v9940 = vunpack.c.l.b16 %v9347
    %v9941 = vunpack.c.l.b16 %v9348
    %v9942 = vunpack.c.l.b16 %v9349
    %v9943 = vunpack.c.l.b16 %v9350
    %v9944 = vunpack.c.l.b16 %v9351
    %v9945 = vunpack.c.l.b16 %v9352
    %v9946 = vunpack.c.l.b16 %v9353
    %v9947 = vunpack.c.l.b16 %v9354
    %v9948 = vunpack.c.l.b16 %v9355
    %v9949 = vunpack.c.l.b16 %v9356
    %v9950 = vunpack.c.l.b16 %v9357
    %v9951 = vunpack.c.l.b16 %v9358
    %v9952 = vunpack.c.l.b16 %v9359
    %v9953 = vunpack.c.l.b16 %v9360
    %v9954 = vpack.c.b16 %v9843, %v9938
    %v9955 = vpack.c.b16 %v9845, %v9939
    %v9956 = vpack.c.b16 %v9847, %v9940
    %v9957 = vpack.c.b16 %v9849, %v9941
    %v9958 = vpack.c.b16 %v9851, %v9942
    %v9959 = vpack.c.b16 %v9853, %v9943
    %v9960 = vpack.c.b16 %v9855, %v9944
    %v9961 = vpack.c.b16 %v9857, %v9945
    %v9962 = vpack.c.b16 %v9859, %v9946
    %v9963 = vpack.c.b16 %v9861, %v9947
    %v9964 = vpack.c.b16 %v9863, %v9948
    %v9965 = vpack.c.b16 %v9865, %v9949
    %v9966 = vpack.c.b16 %v9867, %v9950
    %v9967 = vpack.c.b16 %v9869, %v9951
    %v9968 = vpack.c.b16 %v9871, %v9952
    %v9969 = vpack.c.b16 %v9873, %v9953
    %v9971 = vshrl.u32 %v9954, 16
    %v9973 = vshll.u32 %v9954, 16
    %v9975 = vrot.slane %v9973, 1
    %v9976 = vor.u32 %v9971, %v9975
    %v9978 = vshrl.u32 %v9955, 16
    %v9980 = vshll.u32 %v9955, 16
    %v9982 = vrot.slane %v9980, 1
    %v9983 = vor.u32 %v9978, %v9982
    %v9985 = vshrl.u32 %v9956, 16
    %v9987 = vshll.u32 %v9956, 16
    %v9989 = vrot.slane %v9987, 1
    %v9990 = vor.u32 %v9985, %v9989
    %v9992 = vshrl.u32 %v9957, 16
    %v9994 = vshll.u32 %v9957, 16
    %v9996 = vrot.slane %v9994, 1
    %v9997 = vor.u32 %v9992, %v9996
    %v9999 = vshrl.u32 %v9958, 16
    %v10001 = vshll.u32 %v9958, 16
    %v10003 = vrot.slane %v10001, 1
    %v10004 = vor.u32 %v9999, %v10003
    %v10006 = vshrl.u32 %v9959, 16
    %v10008 = vshll.u32 %v9959, 16
    %v10010 = vrot.slane %v10008, 1
    %v10011 = vor.u32 %v10006, %v10010
    %v10013 = vshrl.u32 %v9960, 16
    %v10015 = vshll.u32 %v9960, 16
    %v10017 = vrot.slane %v10015, 1
    %v10018 = vor.u32 %v10013, %v10017
    %v10020 = vshrl.u32 %v9961, 16
    %v10022 = vshll.u32 %v9961, 16
    %v10024 = vrot.slane %v10022, 1
    %v10025 = vor.u32 %v10020, %v10024
    %v10027 = vshrl.u32 %v9962, 16
    %v10029 = vshll.u32 %v9962, 16
    %v10031 = vrot.slane %v10029, 1
    %v10032 = vor.u32 %v10027, %v10031
    %v10034 = vshrl.u32 %v9963, 16
    %v10036 = vshll.u32 %v9963, 16
    %v10038 = vrot.slane %v10036, 1
    %v10039 = vor.u32 %v10034, %v10038
    %v10041 = vshrl.u32 %v9964, 16
    %v10043 = vshll.u32 %v9964, 16
    %v10045 = vrot.slane %v10043, 1
    %v10046 = vor.u32 %v10041, %v10045
    %v10048 = vshrl.u32 %v9965, 16
    %v10050 = vshll.u32 %v9965, 16
    %v10052 = vrot.slane %v10050, 1
    %v10053 = vor.u32 %v10048, %v10052
    %v10055 = vshrl.u32 %v9966, 16
    %v10057 = vshll.u32 %v9966, 16
    %v10059 = vrot.slane %v10057, 1
    %v10060 = vor.u32 %v10055, %v10059
    %v10062 = vshrl.u32 %v9967, 16
    %v10064 = vshll.u32 %v9967, 16
    %v10066 = vrot.slane %v10064, 1
    %v10067 = vor.u32 %v10062, %v10066
    %v10069 = vshrl.u32 %v9968, 16
    %v10071 = vshll.u32 %v9968, 16
    %v10073 = vrot.slane %v10071, 1
    %v10074 = vor.u32 %v10069, %v10073
    %v10076 = vshrl.u32 %v9969, 16
    %v10078 = vshll.u32 %v9969, 16
    %v10080 = vrot.slane %v10078, 1
    %v10081 = vor.u32 %v10076, %v10080
    %v10098 = vunpack.c.l.b16 %v9361
    %v10099 = vunpack.c.l.b16 %v9362
    %v10100 = vunpack.c.l.b16 %v9363
    %v10101 = vunpack.c.l.b16 %v9364
    %v10102 = vunpack.c.l.b16 %v9365
    %v10103 = vunpack.c.l.b16 %v9366
    %v10104 = vunpack.c.l.b16 %v9367
    %v10105 = vunpack.c.l.b16 %v9368
    %v10106 = vunpack.c.l.b16 %v9369
    %v10107 = vunpack.c.l.b16 %v9370
    %v10108 = vunpack.c.l.b16 %v9371
    %v10109 = vunpack.c.l.b16 %v9372
    %v10110 = vunpack.c.l.b16 %v9373
    %v10111 = vunpack.c.l.b16 %v9374
    %v10112 = vunpack.c.l.b16 %v9375
    %v10113 = vunpack.c.l.b16 %v9376
    %v10114 = vpack.c.b16 %v10098, %v9938
    %v10115 = vpack.c.b16 %v10099, %v9939
    %v10116 = vpack.c.b16 %v10100, %v9940
    %v10117 = vpack.c.b16 %v10101, %v9941
    %v10118 = vpack.c.b16 %v10102, %v9942
    %v10119 = vpack.c.b16 %v10103, %v9943
    %v10120 = vpack.c.b16 %v10104, %v9944
    %v10121 = vpack.c.b16 %v10105, %v9945
    %v10122 = vpack.c.b16 %v10106, %v9946
    %v10123 = vpack.c.b16 %v10107, %v9947
    %v10124 = vpack.c.b16 %v10108, %v9948
    %v10125 = vpack.c.b16 %v10109, %v9949
    %v10126 = vpack.c.b16 %v10110, %v9950
    %v10127 = vpack.c.b16 %v10111, %v9951
    %v10128 = vpack.c.b16 %v10112, %v9952
    %v10129 = vpack.c.b16 %v10113, %v9953
    %v10130 = vrot.slane %v10114, 1
    %v10131 = vrot.slane %v10115, 1
    %v10132 = vrot.slane %v10116, 1
    %v10133 = vrot.slane %v10117, 1
    %v10134 = vrot.slane %v10118, 1
    %v10135 = vrot.slane %v10119, 1
    %v10136 = vrot.slane %v10120, 1
    %v10137 = vrot.slane %v10121, 1
    %v10138 = vrot.slane %v10122, 1
    %v10139 = vrot.slane %v10123, 1
    %v10140 = vrot.slane %v10124, 1
    %v10141 = vrot.slane %v10125, 1
    %v10142 = vrot.slane %v10126, 1
    %v10143 = vrot.slane %v10127, 1
    %v10144 = vrot.slane %v10128, 1
    %v10145 = vrot.slane %v10129, 1
    %10146 = vrot.lane.b32.xlu0 %v10130, 32
    %v10147 = vpop.permute.xlu0 %10146
    %10148 = vrot.lane.b32.xlu0 %v10131, 32
    %v10149 = vpop.permute.xlu0 %10148
    %10150 = vrot.lane.b32.xlu0 %v10132, 32
    %v10151 = vpop.permute.xlu0 %10150
    %10152 = vrot.lane.b32.xlu0 %v10133, 32
    %v10153 = vpop.permute.xlu0 %10152
    %10154 = vrot.lane.b32.xlu0 %v10134, 32
    %v10155 = vpop.permute.xlu0 %10154
    %10156 = vrot.lane.b32.xlu0 %v10135, 32
    %v10157 = vpop.permute.xlu0 %10156
    %10158 = vrot.lane.b32.xlu0 %v10136, 32
    %v10159 = vpop.permute.xlu0 %10158
    %10160 = vrot.lane.b32.xlu0 %v10137, 32
    %v10161 = vpop.permute.xlu0 %10160
    %10162 = vrot.lane.b32.xlu0 %v10138, 32
    %v10163 = vpop.permute.xlu0 %10162
    %10164 = vrot.lane.b32.xlu0 %v10139, 32
    %v10165 = vpop.permute.xlu0 %10164
    %10166 = vrot.lane.b32.xlu0 %v10140, 32
    %v10167 = vpop.permute.xlu0 %10166
    %10168 = vrot.lane.b32.xlu0 %v10141, 32
    %v10169 = vpop.permute.xlu0 %10168
    %10170 = vrot.lane.b32.xlu0 %v10142, 32
    %v10171 = vpop.permute.xlu0 %10170
    %10172 = vrot.lane.b32.xlu0 %v10143, 32
    %v10173 = vpop.permute.xlu0 %10172
    %10174 = vrot.lane.b32.xlu0 %v10144, 32
    %v10175 = vpop.permute.xlu0 %10174
    %10176 = vrot.lane.b32.xlu0 %v10145, 32
    %v10177 = vpop.permute.xlu0 %10176
    %v10210 = vunpack.c.l.b16 %v9378
    %v10211 = vunpack.c.l.b16 %v9379
    %v10212 = vunpack.c.l.b16 %v9380
    %v10213 = vunpack.c.l.b16 %v9381
    %v10214 = vunpack.c.l.b16 %v9382
    %v10215 = vunpack.c.l.b16 %v9383
    %v10216 = vunpack.c.l.b16 %v9384
    %v10217 = vunpack.c.l.b16 %v9385
    %v10218 = vunpack.c.l.b16 %v9386
    %v10219 = vunpack.c.l.b16 %v9387
    %v10220 = vunpack.c.l.b16 %v9388
    %v10221 = vunpack.c.l.b16 %v9389
    %v10222 = vunpack.c.l.b16 %v9390
    %v10223 = vunpack.c.l.b16 %v9391
    %v10224 = vunpack.c.l.b16 %v9392
    %v10225 = vunpack.c.l.b16 %v9393
    %v10226 = vunpack.c.l.b16 %v9394
    %v10227 = vunpack.c.l.b16 %v9395
    %v10228 = vunpack.c.l.b16 %v9396
    %v10229 = vunpack.c.l.b16 %v9397
    %v10230 = vunpack.c.l.b16 %v9398
    %v10231 = vunpack.c.l.b16 %v9399
    %v10232 = vunpack.c.l.b16 %v9400
    %v10233 = vunpack.c.l.b16 %v9401
    %v10234 = vunpack.c.l.b16 %v9402
    %v10235 = vunpack.c.l.b16 %v9403
    %v10236 = vunpack.c.l.b16 %v9404
    %v10237 = vunpack.c.l.b16 %v9405
    %v10238 = vunpack.c.l.b16 %v9406
    %v10239 = vunpack.c.l.b16 %v9407
    %v10240 = vunpack.c.l.b16 %v9408
    %v10241 = vunpack.c.l.b16 %v9409
    %v10242 = vpack.c.b16 %v10211, %v10210
    %v10243 = vpack.c.b16 %v10213, %v10212
    %v10244 = vpack.c.b16 %v10215, %v10214
    %v10245 = vpack.c.b16 %v10217, %v10216
    %v10246 = vpack.c.b16 %v10219, %v10218
    %v10247 = vpack.c.b16 %v10221, %v10220
    %v10248 = vpack.c.b16 %v10223, %v10222
    %v10249 = vpack.c.b16 %v10225, %v10224
    %v10250 = vpack.c.b16 %v10227, %v10226
    %v10251 = vpack.c.b16 %v10229, %v10228
    %v10252 = vpack.c.b16 %v10231, %v10230
    %v10253 = vpack.c.b16 %v10233, %v10232
    %v10254 = vpack.c.b16 %v10235, %v10234
    %v10255 = vpack.c.b16 %v10237, %v10236
    %v10256 = vpack.c.b16 %v10239, %v10238
    %v10257 = vpack.c.b16 %v10241, %v10240
    %10258 = vrot.lane.b32.xlu0 %v10242, 64
    %v10259 = vpop.permute.xlu0 %10258
    %10260 = vrot.lane.b32.xlu0 %v10243, 64
    %v10261 = vpop.permute.xlu0 %10260
    %10262 = vrot.lane.b32.xlu0 %v10244, 64
    %v10263 = vpop.permute.xlu0 %10262
    %10264 = vrot.lane.b32.xlu0 %v10245, 64
    %v10265 = vpop.permute.xlu0 %10264
    %10266 = vrot.lane.b32.xlu0 %v10246, 64
    %v10267 = vpop.permute.xlu0 %10266
    %10268 = vrot.lane.b32.xlu0 %v10247, 64
    %v10269 = vpop.permute.xlu0 %10268
    %10270 = vrot.lane.b32.xlu0 %v10248, 64
    %v10271 = vpop.permute.xlu0 %10270
    %10272 = vrot.lane.b32.xlu0 %v10249, 64
    %v10273 = vpop.permute.xlu0 %10272
    %10274 = vrot.lane.b32.xlu0 %v10250, 64
    %v10275 = vpop.permute.xlu0 %10274
    %10276 = vrot.lane.b32.xlu0 %v10251, 64
    %v10277 = vpop.permute.xlu0 %10276
    %10278 = vrot.lane.b32.xlu0 %v10252, 64
    %v10279 = vpop.permute.xlu0 %10278
    %10280 = vrot.lane.b32.xlu0 %v10253, 64
    %v10281 = vpop.permute.xlu0 %10280
    %10282 = vrot.lane.b32.xlu0 %v10254, 64
    %v10283 = vpop.permute.xlu0 %10282
    %10284 = vrot.lane.b32.xlu0 %v10255, 64
    %v10285 = vpop.permute.xlu0 %10284
    %10286 = vrot.lane.b32.xlu0 %v10256, 64
    %v10287 = vpop.permute.xlu0 %10286
    %10288 = vrot.lane.b32.xlu0 %v10257, 64
    %v10289 = vpop.permute.xlu0 %10288
    %v10306 = vunpack.c.l.b16 %v9410
    %v10307 = vunpack.c.l.b16 %v9411
    %v10308 = vunpack.c.l.b16 %v9412
    %v10309 = vunpack.c.l.b16 %v9413
    %v10310 = vunpack.c.l.b16 %v9414
    %v10311 = vunpack.c.l.b16 %v9415
    %v10312 = vunpack.c.l.b16 %v9416
    %v10313 = vunpack.c.l.b16 %v9417
    %v10314 = vunpack.c.l.b16 %v9418
    %v10315 = vunpack.c.l.b16 %v9419
    %v10316 = vunpack.c.l.b16 %v9420
    %v10317 = vunpack.c.l.b16 %v9421
    %v10318 = vunpack.c.l.b16 %v9422
    %v10319 = vunpack.c.l.b16 %v9423
    %v10320 = vunpack.c.l.b16 %v9424
    %v10321 = vunpack.c.l.b16 %v9425
    %v10322 = vpack.c.b16 %v10211, %v10306
    %v10323 = vpack.c.b16 %v10213, %v10307
    %v10324 = vpack.c.b16 %v10215, %v10308
    %v10325 = vpack.c.b16 %v10217, %v10309
    %v10326 = vpack.c.b16 %v10219, %v10310
    %v10327 = vpack.c.b16 %v10221, %v10311
    %v10328 = vpack.c.b16 %v10223, %v10312
    %v10329 = vpack.c.b16 %v10225, %v10313
    %v10330 = vpack.c.b16 %v10227, %v10314
    %v10331 = vpack.c.b16 %v10229, %v10315
    %v10332 = vpack.c.b16 %v10231, %v10316
    %v10333 = vpack.c.b16 %v10233, %v10317
    %v10334 = vpack.c.b16 %v10235, %v10318
    %v10335 = vpack.c.b16 %v10237, %v10319
    %v10336 = vpack.c.b16 %v10239, %v10320
    %v10337 = vpack.c.b16 %v10241, %v10321
    %v10339 = vshrl.u32 %v10322, 16
    %v10341 = vshll.u32 %v10322, 16
    %v10343 = vrot.slane %v10341, 1
    %v10344 = vor.u32 %v10339, %v10343
    %v10346 = vshrl.u32 %v10323, 16
    %v10348 = vshll.u32 %v10323, 16
    %v10350 = vrot.slane %v10348, 1
    %v10351 = vor.u32 %v10346, %v10350
    %v10353 = vshrl.u32 %v10324, 16
    %v10355 = vshll.u32 %v10324, 16
    %v10357 = vrot.slane %v10355, 1
    %v10358 = vor.u32 %v10353, %v10357
    %v10360 = vshrl.u32 %v10325, 16
    %v10362 = vshll.u32 %v10325, 16
    %v10364 = vrot.slane %v10362, 1
    %v10365 = vor.u32 %v10360, %v10364
    %v10367 = vshrl.u32 %v10326, 16
    %v10369 = vshll.u32 %v10326, 16
    %v10371 = vrot.slane %v10369, 1
    %v10372 = vor.u32 %v10367, %v10371
    %v10374 = vshrl.u32 %v10327, 16
    %v10376 = vshll.u32 %v10327, 16
    %v10378 = vrot.slane %v10376, 1
    %v10379 = vor.u32 %v10374, %v10378
    %v10381 = vshrl.u32 %v10328, 16
    %v10383 = vshll.u32 %v10328, 16
    %v10385 = vrot.slane %v10383, 1
    %v10386 = vor.u32 %v10381, %v10385
    %v10388 = vshrl.u32 %v10329, 16
    %v10390 = vshll.u32 %v10329, 16
    %v10392 = vrot.slane %v10390, 1
    %v10393 = vor.u32 %v10388, %v10392
    %v10395 = vshrl.u32 %v10330, 16
    %v10397 = vshll.u32 %v10330, 16
    %v10399 = vrot.slane %v10397, 1
    %v10400 = vor.u32 %v10395, %v10399
    %v10402 = vshrl.u32 %v10331, 16
    %v10404 = vshll.u32 %v10331, 16
    %v10406 = vrot.slane %v10404, 1
    %v10407 = vor.u32 %v10402, %v10406
    %v10409 = vshrl.u32 %v10332, 16
    %v10411 = vshll.u32 %v10332, 16
    %v10413 = vrot.slane %v10411, 1
    %v10414 = vor.u32 %v10409, %v10413
    %v10416 = vshrl.u32 %v10333, 16
    %v10418 = vshll.u32 %v10333, 16
    %v10420 = vrot.slane %v10418, 1
    %v10421 = vor.u32 %v10416, %v10420
    %v10423 = vshrl.u32 %v10334, 16
    %v10425 = vshll.u32 %v10334, 16
    %v10427 = vrot.slane %v10425, 1
    %v10428 = vor.u32 %v10423, %v10427
    %v10430 = vshrl.u32 %v10335, 16
    %v10432 = vshll.u32 %v10335, 16
    %v10434 = vrot.slane %v10432, 1
    %v10435 = vor.u32 %v10430, %v10434
    %v10437 = vshrl.u32 %v10336, 16
    %v10439 = vshll.u32 %v10336, 16
    %v10441 = vrot.slane %v10439, 1
    %v10442 = vor.u32 %v10437, %v10441
    %v10444 = vshrl.u32 %v10337, 16
    %v10446 = vshll.u32 %v10337, 16
    %v10448 = vrot.slane %v10446, 1
    %v10449 = vor.u32 %v10444, %v10448
    %10450 = vrot.lane.b32.xlu0 %v10344, 96
    %v10451 = vpop.permute.xlu0 %10450
    %10452 = vrot.lane.b32.xlu0 %v10351, 96
    %v10453 = vpop.permute.xlu0 %10452
    %10454 = vrot.lane.b32.xlu0 %v10358, 96
    %v10455 = vpop.permute.xlu0 %10454
    %10456 = vrot.lane.b32.xlu0 %v10365, 96
    %v10457 = vpop.permute.xlu0 %10456
    %10458 = vrot.lane.b32.xlu0 %v10372, 96
    %v10459 = vpop.permute.xlu0 %10458
    %10460 = vrot.lane.b32.xlu0 %v10379, 96
    %v10461 = vpop.permute.xlu0 %10460
    %10462 = vrot.lane.b32.xlu0 %v10386, 96
    %v10463 = vpop.permute.xlu0 %10462
    %10464 = vrot.lane.b32.xlu0 %v10393, 96
    %v10465 = vpop.permute.xlu0 %10464
    %10466 = vrot.lane.b32.xlu0 %v10400, 96
    %v10467 = vpop.permute.xlu0 %10466
    %10468 = vrot.lane.b32.xlu0 %v10407, 96
    %v10469 = vpop.permute.xlu0 %10468
    %10470 = vrot.lane.b32.xlu0 %v10414, 96
    %v10471 = vpop.permute.xlu0 %10470
    %10472 = vrot.lane.b32.xlu0 %v10421, 96
    %v10473 = vpop.permute.xlu0 %10472
    %10474 = vrot.lane.b32.xlu0 %v10428, 96
    %v10475 = vpop.permute.xlu0 %10474
    %10476 = vrot.lane.b32.xlu0 %v10435, 96
    %v10477 = vpop.permute.xlu0 %10476
    %10478 = vrot.lane.b32.xlu0 %v10442, 96
    %v10479 = vpop.permute.xlu0 %10478
    %10480 = vrot.lane.b32.xlu0 %v10449, 96
    %v10481 = vpop.permute.xlu0 %10480
    %v10498 = vunpack.c.l.b16 %v9426
    %v10499 = vunpack.c.l.b16 %v9427
    %v10500 = vunpack.c.l.b16 %v9428
    %v10501 = vunpack.c.l.b16 %v9429
    %v10502 = vunpack.c.l.b16 %v9430
    %v10503 = vunpack.c.l.b16 %v9431
    %v10504 = vunpack.c.l.b16 %v9432
    %v10505 = vunpack.c.l.b16 %v9433
    %v10506 = vunpack.c.l.b16 %v9434
    %v10507 = vunpack.c.l.b16 %v9435
    %v10508 = vunpack.c.l.b16 %v9436
    %v10509 = vunpack.c.l.b16 %v9437
    %v10510 = vunpack.c.l.b16 %v9438
    %v10511 = vunpack.c.l.b16 %v9439
    %v10512 = vunpack.c.l.b16 %v9440
    %v10513 = vunpack.c.l.b16 %v9441
    %v10514 = vpack.c.b16 %v10498, %v10306
    %v10515 = vpack.c.b16 %v10499, %v10307
    %v10516 = vpack.c.b16 %v10500, %v10308
    %v10517 = vpack.c.b16 %v10501, %v10309
    %v10518 = vpack.c.b16 %v10502, %v10310
    %v10519 = vpack.c.b16 %v10503, %v10311
    %v10520 = vpack.c.b16 %v10504, %v10312
    %v10521 = vpack.c.b16 %v10505, %v10313
    %v10522 = vpack.c.b16 %v10506, %v10314
    %v10523 = vpack.c.b16 %v10507, %v10315
    %v10524 = vpack.c.b16 %v10508, %v10316
    %v10525 = vpack.c.b16 %v10509, %v10317
    %v10526 = vpack.c.b16 %v10510, %v10318
    %v10527 = vpack.c.b16 %v10511, %v10319
    %v10528 = vpack.c.b16 %v10512, %v10320
    %v10529 = vpack.c.b16 %v10513, %v10321
    %v10530 = vrot.slane %v10514, 1
    %v10531 = vrot.slane %v10515, 1
    %v10532 = vrot.slane %v10516, 1
    %v10533 = vrot.slane %v10517, 1
    %v10534 = vrot.slane %v10518, 1
    %v10535 = vrot.slane %v10519, 1
    %v10536 = vrot.slane %v10520, 1
    %v10537 = vrot.slane %v10521, 1
    %v10538 = vrot.slane %v10522, 1
    %v10539 = vrot.slane %v10523, 1
    %v10540 = vrot.slane %v10524, 1
    %v10541 = vrot.slane %v10525, 1
    %v10542 = vrot.slane %v10526, 1
    %v10543 = vrot.slane %v10527, 1
    %v10544 = vrot.slane %v10528, 1
    %v10545 = vrot.slane %v10529, 1
    %vm10546 = vcmask 261120
    %v10549 = vsel %vm10546, %v9506, %v9683
    %v10552 = vsel %vm10546, %v9507, %v9685
    %v10555 = vsel %vm10546, %v9508, %v9687
    %v10558 = vsel %vm10546, %v9509, %v9689
    %v10561 = vsel %vm10546, %v9510, %v9691
    %v10564 = vsel %vm10546, %v9511, %v9693
    %v10567 = vsel %vm10546, %v9512, %v9695
    %v10570 = vsel %vm10546, %v9513, %v9697
    %v10573 = vsel %vm10546, %v9514, %v9699
    %v10576 = vsel %vm10546, %v9515, %v9701
    %v10579 = vsel %vm10546, %v9516, %v9703
    %v10582 = vsel %vm10546, %v9517, %v9705
    %v10585 = vsel %vm10546, %v9518, %v9707
    %v10588 = vsel %vm10546, %v9519, %v9709
    %v10591 = vsel %vm10546, %v9520, %v9711
    %v10594 = vsel %vm10546, %v9521, %v9713
    %vm10595 = vcmask 523264
    %v10597 = vsel %vm10595, %v10549, %v9779
    %v10599 = vsel %vm10595, %v10552, %v9781
    %v10601 = vsel %vm10595, %v10555, %v9783
    %v10603 = vsel %vm10595, %v10558, %v9785
    %v10605 = vsel %vm10595, %v10561, %v9787
    %v10607 = vsel %vm10595, %v10564, %v9789
    %v10609 = vsel %vm10595, %v10567, %v9791
    %v10611 = vsel %vm10595, %v10570, %v9793
    %v10613 = vsel %vm10595, %v10573, %v9795
    %v10615 = vsel %vm10595, %v10576, %v9797
    %v10617 = vsel %vm10595, %v10579, %v9799
    %v10619 = vsel %vm10595, %v10582, %v9801
    %v10621 = vsel %vm10595, %v10585, %v9803
    %v10623 = vsel %vm10595, %v10588, %v9805
    %v10625 = vsel %vm10595, %v10591, %v9807
    %v10627 = vsel %vm10595, %v10594, %v9809
    %vm10628 = vcmask 785408
    %v10630 = vsel %vm10628, %v10597, %v9891
    %v10632 = vsel %vm10628, %v10599, %v9893
    %v10634 = vsel %vm10628, %v10601, %v9895
    %v10636 = vsel %vm10628, %v10603, %v9897
    %v10638 = vsel %vm10628, %v10605, %v9899
    %v10640 = vsel %vm10628, %v10607, %v9901
    %v10642 = vsel %vm10628, %v10609, %v9903
    %v10644 = vsel %vm10628, %v10611, %v9905
    %v10646 = vsel %vm10628, %v10613, %v9907
    %v10648 = vsel %vm10628, %v10615, %v9909
    %v10650 = vsel %vm10628, %v10617, %v9911
    %v10652 = vsel %vm10628, %v10619, %v9913
    %v10654 = vsel %vm10628, %v10621, %v9915
    %v10656 = vsel %vm10628, %v10623, %v9917
    %v10658 = vsel %vm10628, %v10625, %v9919
    %v10660 = vsel %vm10628, %v10627, %v9921
    %v10663 = vsel %vm10546, %v9976, %v10147
    %v10666 = vsel %vm10546, %v9983, %v10149
    %v10669 = vsel %vm10546, %v9990, %v10151
    %v10672 = vsel %vm10546, %v9997, %v10153
    %v10675 = vsel %vm10546, %v10004, %v10155
    %v10678 = vsel %vm10546, %v10011, %v10157
    %v10681 = vsel %vm10546, %v10018, %v10159
    %v10684 = vsel %vm10546, %v10025, %v10161
    %v10687 = vsel %vm10546, %v10032, %v10163
    %v10690 = vsel %vm10546, %v10039, %v10165
    %v10693 = vsel %vm10546, %v10046, %v10167
    %v10696 = vsel %vm10546, %v10053, %v10169
    %v10699 = vsel %vm10546, %v10060, %v10171
    %v10702 = vsel %vm10546, %v10067, %v10173
    %v10705 = vsel %vm10546, %v10074, %v10175
    %v10708 = vsel %vm10546, %v10081, %v10177
    %v10710 = vsel %vm10595, %v10663, %v10259
    %v10712 = vsel %vm10595, %v10666, %v10261
    %v10714 = vsel %vm10595, %v10669, %v10263
    %v10716 = vsel %vm10595, %v10672, %v10265
    %v10718 = vsel %vm10595, %v10675, %v10267
    %v10720 = vsel %vm10595, %v10678, %v10269
    %v10722 = vsel %vm10595, %v10681, %v10271
    %v10724 = vsel %vm10595, %v10684, %v10273
    %v10726 = vsel %vm10595, %v10687, %v10275
    %v10728 = vsel %vm10595, %v10690, %v10277
    %v10730 = vsel %vm10595, %v10693, %v10279
    %v10732 = vsel %vm10595, %v10696, %v10281
    %v10734 = vsel %vm10595, %v10699, %v10283
    %v10736 = vsel %vm10595, %v10702, %v10285
    %v10738 = vsel %vm10595, %v10705, %v10287
    %v10740 = vsel %vm10595, %v10708, %v10289
    %v10742 = vsel %vm10628, %v10710, %v10451
    %v10744 = vsel %vm10628, %v10712, %v10453
    %v10746 = vsel %vm10628, %v10714, %v10455
    %v10748 = vsel %vm10628, %v10716, %v10457
    %v10750 = vsel %vm10628, %v10718, %v10459
    %v10752 = vsel %vm10628, %v10720, %v10461
    %v10754 = vsel %vm10628, %v10722, %v10463
    %v10756 = vsel %vm10628, %v10724, %v10465
    %v10758 = vsel %vm10628, %v10726, %v10467
    %v10760 = vsel %vm10628, %v10728, %v10469
    %v10762 = vsel %vm10628, %v10730, %v10471
    %v10764 = vsel %vm10628, %v10732, %v10473
    %v10766 = vsel %vm10628, %v10734, %v10475
    %v10768 = vsel %vm10628, %v10736, %v10477
    %v10770 = vsel %vm10628, %v10738, %v10479
    %v10772 = vsel %vm10628, %v10740, %v10481
    %v10805 = vunpack.c.l.b16 %v10630
    %v10806 = vunpack.c.l.b16 %v10742
    %v10807 = vunpack.c.l.b16 %v10530
    %v10808 = vunpack.c.h.b16 %v10630
    %v10809 = vunpack.c.h.b16 %v10742
    %v10810 = vunpack.c.h.b16 %v10530
    %v10811 = vunpack.c.l.b16 %v10632
    %v10812 = vunpack.c.l.b16 %v10744
    %v10813 = vunpack.c.l.b16 %v10531
    %v10814 = vunpack.c.h.b16 %v10632
    %v10815 = vunpack.c.h.b16 %v10744
    %v10816 = vunpack.c.h.b16 %v10531
    %v10817 = vunpack.c.l.b16 %v10634
    %v10818 = vunpack.c.l.b16 %v10746
    %v10819 = vunpack.c.l.b16 %v10532
    %v10820 = vunpack.c.h.b16 %v10634
    %v10821 = vunpack.c.h.b16 %v10746
    %v10822 = vunpack.c.h.b16 %v10532
    %v10823 = vunpack.c.l.b16 %v10636
    %v10824 = vunpack.c.l.b16 %v10748
    %v10825 = vunpack.c.l.b16 %v10533
    %v10826 = vunpack.c.h.b16 %v10636
    %v10827 = vunpack.c.h.b16 %v10748
    %v10828 = vunpack.c.h.b16 %v10533
    %v10829 = vunpack.c.l.b16 %v10638
    %v10830 = vunpack.c.l.b16 %v10750
    %v10831 = vunpack.c.l.b16 %v10534
    %v10832 = vunpack.c.h.b16 %v10638
    %v10833 = vunpack.c.h.b16 %v10750
    %v10834 = vunpack.c.h.b16 %v10534
    %v10835 = vunpack.c.l.b16 %v10640
    %v10836 = vunpack.c.l.b16 %v10752
    %v10837 = vunpack.c.l.b16 %v10535
    %v10838 = vunpack.c.h.b16 %v10640
    %v10839 = vunpack.c.h.b16 %v10752
    %v10840 = vunpack.c.h.b16 %v10535
    %v10841 = vunpack.c.l.b16 %v10642
    %v10842 = vunpack.c.l.b16 %v10754
    %v10843 = vunpack.c.l.b16 %v10536
    %v10844 = vunpack.c.h.b16 %v10642
    %v10845 = vunpack.c.h.b16 %v10754
    %v10846 = vunpack.c.h.b16 %v10536
    %v10847 = vunpack.c.l.b16 %v10644
    %v10848 = vunpack.c.l.b16 %v10756
    %v10849 = vunpack.c.l.b16 %v10537
    %v10850 = vunpack.c.h.b16 %v10644
    %v10851 = vunpack.c.h.b16 %v10756
    %v10852 = vunpack.c.h.b16 %v10537
    %v10853 = vunpack.c.l.b16 %v10646
    %v10854 = vunpack.c.l.b16 %v10758
    %v10855 = vunpack.c.l.b16 %v10538
    %v10856 = vunpack.c.h.b16 %v10646
    %v10857 = vunpack.c.h.b16 %v10758
    %v10858 = vunpack.c.h.b16 %v10538
    %v10859 = vunpack.c.l.b16 %v10648
    %v10860 = vunpack.c.l.b16 %v10760
    %v10861 = vunpack.c.l.b16 %v10539
    %v10862 = vunpack.c.h.b16 %v10648
    %v10863 = vunpack.c.h.b16 %v10760
    %v10864 = vunpack.c.h.b16 %v10539
    %v10865 = vunpack.c.l.b16 %v10650
    %v10866 = vunpack.c.l.b16 %v10762
    %v10867 = vunpack.c.l.b16 %v10540
    %v10868 = vunpack.c.h.b16 %v10650
    %v10869 = vunpack.c.h.b16 %v10762
    %v10870 = vunpack.c.h.b16 %v10540
    %v10871 = vunpack.c.l.b16 %v10652
    %v10872 = vunpack.c.l.b16 %v10764
    %v10873 = vunpack.c.l.b16 %v10541
    %v10874 = vunpack.c.h.b16 %v10652
    %v10875 = vunpack.c.h.b16 %v10764
    %v10876 = vunpack.c.h.b16 %v10541
    %v10877 = vunpack.c.l.b16 %v10654
    %v10878 = vunpack.c.l.b16 %v10766
    %v10879 = vunpack.c.l.b16 %v10542
    %v10880 = vunpack.c.h.b16 %v10654
    %v10881 = vunpack.c.h.b16 %v10766
    %v10882 = vunpack.c.h.b16 %v10542
    %v10883 = vunpack.c.l.b16 %v10656
    %v10884 = vunpack.c.l.b16 %v10768
    %v10885 = vunpack.c.l.b16 %v10543
    %v10886 = vunpack.c.h.b16 %v10656
    %v10887 = vunpack.c.h.b16 %v10768
    %v10888 = vunpack.c.h.b16 %v10543
    %v10889 = vunpack.c.l.b16 %v10658
    %v10890 = vunpack.c.l.b16 %v10770
    %v10891 = vunpack.c.l.b16 %v10544
    %v10892 = vunpack.c.h.b16 %v10658
    %v10893 = vunpack.c.h.b16 %v10770
    %v10894 = vunpack.c.h.b16 %v10544
    %v10895 = vunpack.c.l.b16 %v10660
    %v10896 = vunpack.c.l.b16 %v10772
    %v10897 = vunpack.c.l.b16 %v10545
    %v10898 = vunpack.c.h.b16 %v10660
    %v10899 = vunpack.c.h.b16 %v10772
    %v10900 = vunpack.c.h.b16 %v10545
    %v10901 = vpack.c.b16 %v10806, %v10805
    %v10902 = vpack.c.b16 %v10807, %v10807
    %v10903 = vpack.c.b16 %v10809, %v10808
    %v10904 = vpack.c.b16 %v10810, %v10810
    %v10905 = vpack.c.b16 %v10812, %v10811
    %v10906 = vpack.c.b16 %v10813, %v10813
    %v10907 = vpack.c.b16 %v10815, %v10814
    %v10908 = vpack.c.b16 %v10816, %v10816
    %v10909 = vpack.c.b16 %v10818, %v10817
    %v10910 = vpack.c.b16 %v10819, %v10819
    %v10911 = vpack.c.b16 %v10821, %v10820
    %v10912 = vpack.c.b16 %v10822, %v10822
    %v10913 = vpack.c.b16 %v10824, %v10823
    %v10914 = vpack.c.b16 %v10825, %v10825
    %v10915 = vpack.c.b16 %v10827, %v10826
    %v10916 = vpack.c.b16 %v10828, %v10828
    %v10917 = vpack.c.b16 %v10830, %v10829
    %v10918 = vpack.c.b16 %v10831, %v10831
    %v10919 = vpack.c.b16 %v10833, %v10832
    %v10920 = vpack.c.b16 %v10834, %v10834
    %v10921 = vpack.c.b16 %v10836, %v10835
    %v10922 = vpack.c.b16 %v10837, %v10837
    %v10923 = vpack.c.b16 %v10839, %v10838
    %v10924 = vpack.c.b16 %v10840, %v10840
    %v10925 = vpack.c.b16 %v10842, %v10841
    %v10926 = vpack.c.b16 %v10843, %v10843
    %v10927 = vpack.c.b16 %v10845, %v10844
    %v10928 = vpack.c.b16 %v10846, %v10846
    %v10929 = vpack.c.b16 %v10848, %v10847
    %v10930 = vpack.c.b16 %v10849, %v10849
    %v10931 = vpack.c.b16 %v10851, %v10850
    %v10932 = vpack.c.b16 %v10852, %v10852
    %v10933 = vpack.c.b16 %v10854, %v10853
    %v10934 = vpack.c.b16 %v10855, %v10855
    %v10935 = vpack.c.b16 %v10857, %v10856
    %v10936 = vpack.c.b16 %v10858, %v10858
    %v10937 = vpack.c.b16 %v10860, %v10859
    %v10938 = vpack.c.b16 %v10861, %v10861
    %v10939 = vpack.c.b16 %v10863, %v10862
    %v10940 = vpack.c.b16 %v10864, %v10864
    %v10941 = vpack.c.b16 %v10866, %v10865
    %v10942 = vpack.c.b16 %v10867, %v10867
    %v10943 = vpack.c.b16 %v10869, %v10868
    %v10944 = vpack.c.b16 %v10870, %v10870
    %v10945 = vpack.c.b16 %v10872, %v10871
    %v10946 = vpack.c.b16 %v10873, %v10873
    %v10947 = vpack.c.b16 %v10875, %v10874
    %v10948 = vpack.c.b16 %v10876, %v10876
    %v10949 = vpack.c.b16 %v10878, %v10877
    %v10950 = vpack.c.b16 %v10879, %v10879
    %v10951 = vpack.c.b16 %v10881, %v10880
    %v10952 = vpack.c.b16 %v10882, %v10882
    %v10953 = vpack.c.b16 %v10884, %v10883
    %v10954 = vpack.c.b16 %v10885, %v10885
    %v10955 = vpack.c.b16 %v10887, %v10886
    %v10956 = vpack.c.b16 %v10888, %v10888
    %v10957 = vpack.c.b16 %v10890, %v10889
    %v10958 = vpack.c.b16 %v10891, %v10891
    %v10959 = vpack.c.b16 %v10893, %v10892
    %v10960 = vpack.c.b16 %v10894, %v10894
    %v10961 = vpack.c.b16 %v10896, %v10895
    %v10962 = vpack.c.b16 %v10897, %v10897
    %v10963 = vpack.c.b16 %v10899, %v10898
    %v10964 = vpack.c.b16 %v10900, %v10900
    %vm10965 = vsmask.f32 3328
    %vm10966 = vsmask.f32 7440
    %vm10967 = vmor %vm10965, %vm10966
    %v10969 = vshrl.u32 %v10901, 16
    %v10971 = vrot.slane %v10969, 4
    %v10972 = vshll.u32 %v10901, 16
    %v10974 = vrot.slane %v10972, 5
    %v10975 = vor.u32 %v10971, %v10974
    %v10976 = vrot.slane %v10975, 4
    %v10978 = vshll.u32 %v10903, 16
    %v10980 = vrot.slane %v10978, 5
    %v10981 = vsel %vm10967, %v10976, %v10980
    %v10983 = vshrl.u32 %v10902, 16
    %v10985 = vrot.slane %v10983, 4
    %v10986 = vshll.u32 %v10902, 16
    %v10988 = vrot.slane %v10986, 5
    %v10989 = vor.u32 %v10985, %v10988
    %v10990 = vrot.slane %v10989, 4
    %v10992 = vshll.u32 %v10904, 16
    %v10994 = vrot.slane %v10992, 5
    %v10995 = vsel %vm10967, %v10990, %v10994
    %v10997 = vshrl.u32 %v10905, 16
    %v10999 = vrot.slane %v10997, 4
    %v11000 = vshll.u32 %v10905, 16
    %v11002 = vrot.slane %v11000, 5
    %v11003 = vor.u32 %v10999, %v11002
    %v11004 = vrot.slane %v11003, 4
    %v11006 = vshll.u32 %v10907, 16
    %v11008 = vrot.slane %v11006, 5
    %v11009 = vsel %vm10967, %v11004, %v11008
    %v11011 = vshrl.u32 %v10906, 16
    %v11013 = vrot.slane %v11011, 4
    %v11014 = vshll.u32 %v10906, 16
    %v11016 = vrot.slane %v11014, 5
    %v11017 = vor.u32 %v11013, %v11016
    %v11018 = vrot.slane %v11017, 4
    %v11020 = vshll.u32 %v10908, 16
    %v11022 = vrot.slane %v11020, 5
    %v11023 = vsel %vm10967, %v11018, %v11022
    %v11025 = vshrl.u32 %v10909, 16
    %v11027 = vrot.slane %v11025, 4
    %v11028 = vshll.u32 %v10909, 16
    %v11030 = vrot.slane %v11028, 5
    %v11031 = vor.u32 %v11027, %v11030
    %v11032 = vrot.slane %v11031, 4
    %v11034 = vshll.u32 %v10911, 16
    %v11036 = vrot.slane %v11034, 5
    %v11037 = vsel %vm10967, %v11032, %v11036
    %v11039 = vshrl.u32 %v10910, 16
    %v11041 = vrot.slane %v11039, 4
    %v11042 = vshll.u32 %v10910, 16
    %v11044 = vrot.slane %v11042, 5
    %v11045 = vor.u32 %v11041, %v11044
    %v11046 = vrot.slane %v11045, 4
    %v11048 = vshll.u32 %v10912, 16
    %v11050 = vrot.slane %v11048, 5
    %v11051 = vsel %vm10967, %v11046, %v11050
    %v11053 = vshrl.u32 %v10913, 16
    %v11055 = vrot.slane %v11053, 4
    %v11056 = vshll.u32 %v10913, 16
    %v11058 = vrot.slane %v11056, 5
    %v11059 = vor.u32 %v11055, %v11058
    %v11060 = vrot.slane %v11059, 4
    %v11062 = vshll.u32 %v10915, 16
    %v11064 = vrot.slane %v11062, 5
    %v11065 = vsel %vm10967, %v11060, %v11064
    %v11067 = vshrl.u32 %v10914, 16
    %v11069 = vrot.slane %v11067, 4
    %v11070 = vshll.u32 %v10914, 16
    %v11072 = vrot.slane %v11070, 5
    %v11073 = vor.u32 %v11069, %v11072
    %v11074 = vrot.slane %v11073, 4
    %v11076 = vshll.u32 %v10916, 16
    %v11078 = vrot.slane %v11076, 5
    %v11079 = vsel %vm10967, %v11074, %v11078
    %v11081 = vshrl.u32 %v10917, 16
    %v11083 = vrot.slane %v11081, 4
    %v11084 = vshll.u32 %v10917, 16
    %v11086 = vrot.slane %v11084, 5
    %v11087 = vor.u32 %v11083, %v11086
    %v11088 = vrot.slane %v11087, 4
    %v11090 = vshll.u32 %v10919, 16
    %v11092 = vrot.slane %v11090, 5
    %v11093 = vsel %vm10967, %v11088, %v11092
    %v11095 = vshrl.u32 %v10918, 16
    %v11097 = vrot.slane %v11095, 4
    %v11098 = vshll.u32 %v10918, 16
    %v11100 = vrot.slane %v11098, 5
    %v11101 = vor.u32 %v11097, %v11100
    %v11102 = vrot.slane %v11101, 4
    %v11104 = vshll.u32 %v10920, 16
    %v11106 = vrot.slane %v11104, 5
    %v11107 = vsel %vm10967, %v11102, %v11106
    %v11109 = vshrl.u32 %v10921, 16
    %v11111 = vrot.slane %v11109, 4
    %v11112 = vshll.u32 %v10921, 16
    %v11114 = vrot.slane %v11112, 5
    %v11115 = vor.u32 %v11111, %v11114
    %v11116 = vrot.slane %v11115, 4
    %v11118 = vshll.u32 %v10923, 16
    %v11120 = vrot.slane %v11118, 5
    %v11121 = vsel %vm10967, %v11116, %v11120
    %v11123 = vshrl.u32 %v10922, 16
    %v11125 = vrot.slane %v11123, 4
    %v11126 = vshll.u32 %v10922, 16
    %v11128 = vrot.slane %v11126, 5
    %v11129 = vor.u32 %v11125, %v11128
    %v11130 = vrot.slane %v11129, 4
    %v11132 = vshll.u32 %v10924, 16
    %v11134 = vrot.slane %v11132, 5
    %v11135 = vsel %vm10967, %v11130, %v11134
    %v11137 = vshrl.u32 %v10925, 16
    %v11139 = vrot.slane %v11137, 4
    %v11140 = vshll.u32 %v10925, 16
    %v11142 = vrot.slane %v11140, 5
    %v11143 = vor.u32 %v11139, %v11142
    %v11144 = vrot.slane %v11143, 4
    %v11146 = vshll.u32 %v10927, 16
    %v11148 = vrot.slane %v11146, 5
    %v11149 = vsel %vm10967, %v11144, %v11148
    %v11151 = vshrl.u32 %v10926, 16
    %v11153 = vrot.slane %v11151, 4
    %v11154 = vshll.u32 %v10926, 16
    %v11156 = vrot.slane %v11154, 5
    %v11157 = vor.u32 %v11153, %v11156
    %v11158 = vrot.slane %v11157, 4
    %v11160 = vshll.u32 %v10928, 16
    %v11162 = vrot.slane %v11160, 5
    %v11163 = vsel %vm10967, %v11158, %v11162
    %v11165 = vshrl.u32 %v10929, 16
    %v11167 = vrot.slane %v11165, 4
    %v11168 = vshll.u32 %v10929, 16
    %v11170 = vrot.slane %v11168, 5
    %v11171 = vor.u32 %v11167, %v11170
    %v11172 = vrot.slane %v11171, 4
    %v11174 = vshll.u32 %v10931, 16
    %v11176 = vrot.slane %v11174, 5
    %v11177 = vsel %vm10967, %v11172, %v11176
    %v11179 = vshrl.u32 %v10930, 16
    %v11181 = vrot.slane %v11179, 4
    %v11182 = vshll.u32 %v10930, 16
    %v11184 = vrot.slane %v11182, 5
    %v11185 = vor.u32 %v11181, %v11184
    %v11186 = vrot.slane %v11185, 4
    %v11188 = vshll.u32 %v10932, 16
    %v11190 = vrot.slane %v11188, 5
    %v11191 = vsel %vm10967, %v11186, %v11190
    %v11193 = vshrl.u32 %v10933, 16
    %v11195 = vrot.slane %v11193, 4
    %v11196 = vshll.u32 %v10933, 16
    %v11198 = vrot.slane %v11196, 5
    %v11199 = vor.u32 %v11195, %v11198
    %v11200 = vrot.slane %v11199, 4
    %v11202 = vshll.u32 %v10935, 16
    %v11204 = vrot.slane %v11202, 5
    %v11205 = vsel %vm10967, %v11200, %v11204
    %v11207 = vshrl.u32 %v10934, 16
    %v11209 = vrot.slane %v11207, 4
    %v11210 = vshll.u32 %v10934, 16
    %v11212 = vrot.slane %v11210, 5
    %v11213 = vor.u32 %v11209, %v11212
    %v11214 = vrot.slane %v11213, 4
    %v11216 = vshll.u32 %v10936, 16
    %v11218 = vrot.slane %v11216, 5
    %v11219 = vsel %vm10967, %v11214, %v11218
    %v11221 = vshrl.u32 %v10937, 16
    %v11223 = vrot.slane %v11221, 4
    %v11224 = vshll.u32 %v10937, 16
    %v11226 = vrot.slane %v11224, 5
    %v11227 = vor.u32 %v11223, %v11226
    %v11228 = vrot.slane %v11227, 4
    %v11230 = vshll.u32 %v10939, 16
    %v11232 = vrot.slane %v11230, 5
    %v11233 = vsel %vm10967, %v11228, %v11232
    %v11235 = vshrl.u32 %v10938, 16
    %v11237 = vrot.slane %v11235, 4
    %v11238 = vshll.u32 %v10938, 16
    %v11240 = vrot.slane %v11238, 5
    %v11241 = vor.u32 %v11237, %v11240
    %v11242 = vrot.slane %v11241, 4
    %v11244 = vshll.u32 %v10940, 16
    %v11246 = vrot.slane %v11244, 5
    %v11247 = vsel %vm10967, %v11242, %v11246
    %v11249 = vshrl.u32 %v10941, 16
    %v11251 = vrot.slane %v11249, 4
    %v11252 = vshll.u32 %v10941, 16
    %v11254 = vrot.slane %v11252, 5
    %v11255 = vor.u32 %v11251, %v11254
    %v11256 = vrot.slane %v11255, 4
    %v11258 = vshll.u32 %v10943, 16
    %v11260 = vrot.slane %v11258, 5
    %v11261 = vsel %vm10967, %v11256, %v11260
    %v11263 = vshrl.u32 %v10942, 16
    %v11265 = vrot.slane %v11263, 4
    %v11266 = vshll.u32 %v10942, 16
    %v11268 = vrot.slane %v11266, 5
    %v11269 = vor.u32 %v11265, %v11268
    %v11270 = vrot.slane %v11269, 4
    %v11272 = vshll.u32 %v10944, 16
    %v11274 = vrot.slane %v11272, 5
    %v11275 = vsel %vm10967, %v11270, %v11274
    %v11277 = vshrl.u32 %v10945, 16
    %v11279 = vrot.slane %v11277, 4
    %v11280 = vshll.u32 %v10945, 16
    %v11282 = vrot.slane %v11280, 5
    %v11283 = vor.u32 %v11279, %v11282
    %v11284 = vrot.slane %v11283, 4
    %v11286 = vshll.u32 %v10947, 16
    %v11288 = vrot.slane %v11286, 5
    %v11289 = vsel %vm10967, %v11284, %v11288
    %v11291 = vshrl.u32 %v10946, 16
    %v11293 = vrot.slane %v11291, 4
    %v11294 = vshll.u32 %v10946, 16
    %v11296 = vrot.slane %v11294, 5
    %v11297 = vor.u32 %v11293, %v11296
    %v11298 = vrot.slane %v11297, 4
    %v11300 = vshll.u32 %v10948, 16
    %v11302 = vrot.slane %v11300, 5
    %v11303 = vsel %vm10967, %v11298, %v11302
    %v11305 = vshrl.u32 %v10949, 16
    %v11307 = vrot.slane %v11305, 4
    %v11308 = vshll.u32 %v10949, 16
    %v11310 = vrot.slane %v11308, 5
    %v11311 = vor.u32 %v11307, %v11310
    %v11312 = vrot.slane %v11311, 4
    %v11314 = vshll.u32 %v10951, 16
    %v11316 = vrot.slane %v11314, 5
    %v11317 = vsel %vm10967, %v11312, %v11316
    %v11319 = vshrl.u32 %v10950, 16
    %v11321 = vrot.slane %v11319, 4
    %v11322 = vshll.u32 %v10950, 16
    %v11324 = vrot.slane %v11322, 5
    %v11325 = vor.u32 %v11321, %v11324
    %v11326 = vrot.slane %v11325, 4
    %v11328 = vshll.u32 %v10952, 16
    %v11330 = vrot.slane %v11328, 5
    %v11331 = vsel %vm10967, %v11326, %v11330
    %v11333 = vshrl.u32 %v10953, 16
    %v11335 = vrot.slane %v11333, 4
    %v11336 = vshll.u32 %v10953, 16
    %v11338 = vrot.slane %v11336, 5
    %v11339 = vor.u32 %v11335, %v11338
    %v11340 = vrot.slane %v11339, 4
    %v11342 = vshll.u32 %v10955, 16
    %v11344 = vrot.slane %v11342, 5
    %v11345 = vsel %vm10967, %v11340, %v11344
    %v11347 = vshrl.u32 %v10954, 16
    %v11349 = vrot.slane %v11347, 4
    %v11350 = vshll.u32 %v10954, 16
    %v11352 = vrot.slane %v11350, 5
    %v11353 = vor.u32 %v11349, %v11352
    %v11354 = vrot.slane %v11353, 4
    %v11356 = vshll.u32 %v10956, 16
    %v11358 = vrot.slane %v11356, 5
    %v11359 = vsel %vm10967, %v11354, %v11358
    %v11361 = vshrl.u32 %v10957, 16
    %v11363 = vrot.slane %v11361, 4
    %v11364 = vshll.u32 %v10957, 16
    %v11366 = vrot.slane %v11364, 5
    %v11367 = vor.u32 %v11363, %v11366
    %v11368 = vrot.slane %v11367, 4
    %v11370 = vshll.u32 %v10959, 16
    %v11372 = vrot.slane %v11370, 5
    %v11373 = vsel %vm10967, %v11368, %v11372
    %v11375 = vshrl.u32 %v10958, 16
    %v11377 = vrot.slane %v11375, 4
    %v11378 = vshll.u32 %v10958, 16
    %v11380 = vrot.slane %v11378, 5
    %v11381 = vor.u32 %v11377, %v11380
    %v11382 = vrot.slane %v11381, 4
    %v11384 = vshll.u32 %v10960, 16
    %v11386 = vrot.slane %v11384, 5
    %v11387 = vsel %vm10967, %v11382, %v11386
    %v11389 = vshrl.u32 %v10961, 16
    %v11391 = vrot.slane %v11389, 4
    %v11392 = vshll.u32 %v10961, 16
    %v11394 = vrot.slane %v11392, 5
    %v11395 = vor.u32 %v11391, %v11394
    %v11396 = vrot.slane %v11395, 4
    %v11398 = vshll.u32 %v10963, 16
    %v11400 = vrot.slane %v11398, 5
    %v11401 = vsel %vm10967, %v11396, %v11400
    %v11403 = vshrl.u32 %v10962, 16
    %v11405 = vrot.slane %v11403, 4
    %v11406 = vshll.u32 %v10962, 16
    %v11408 = vrot.slane %v11406, 5
    %v11409 = vor.u32 %v11405, %v11408
    %v11410 = vrot.slane %v11409, 4
    %v11412 = vshll.u32 %v10964, 16
    %v11414 = vrot.slane %v11412, 5
    %v11415 = vsel %vm10967, %v11410, %v11414
    %v11416 = vld [vmem:[%s3] sm:$0xf]
    %v11417 = vld [vmem:[%s3 + $0x4] sm:$0xf]
    %v11418 = vld [vmem:[%s3 + $0x8] sm:$0xf]
    %v11419 = vld [vmem:[%s3 + $0xc] sm:$0xf]
    %v11420 = vld [vmem:[%s3 + $0x10] sm:$0xf]
    %v11421 = vld [vmem:[%s3 + $0x14] sm:$0xf]
    %v11422 = vld [vmem:[%s3 + $0x18] sm:$0xf]
    %v11423 = vld [vmem:[%s3 + $0x1c] sm:$0xf]
    %v11424 = vld [vmem:[%s3 + $0x20] sm:$0xf]
    %v11425 = vld [vmem:[%s3 + $0x24] sm:$0xf]
    %v11426 = vld [vmem:[%s3 + $0x28] sm:$0xf]
    %v11427 = vld [vmem:[%s3 + $0x2c] sm:$0xf]
    %v11428 = vld [vmem:[%s3 + $0x30] sm:$0xf]
    %v11429 = vld [vmem:[%s3 + $0x34] sm:$0xf]
    %v11430 = vld [vmem:[%s3 + $0x38] sm:$0xf]
    %v11431 = vld [vmem:[%s3 + $0x3c] sm:$0xf]
    %v11432 = vld [vmem:[%s3 + $0x40] sm:$0xf]
    %v11433 = vld [vmem:[%s3 + $0x44] sm:$0xf]
    %v11434 = vld [vmem:[%s3 + $0x48] sm:$0xf]
    %v11435 = vld [vmem:[%s3 + $0x4c] sm:$0xf]
    %v11436 = vld [vmem:[%s3 + $0x50] sm:$0xf]
    %v11437 = vld [vmem:[%s3 + $0x54] sm:$0xf]
    %v11438 = vld [vmem:[%s3 + $0x58] sm:$0xf]
    %v11439 = vld [vmem:[%s3 + $0x5c] sm:$0xf]
    %v11440 = vld [vmem:[%s3 + $0x60] sm:$0xf]
    %v11441 = vld [vmem:[%s3 + $0x64] sm:$0xf]
    %v11442 = vld [vmem:[%s3 + $0x68] sm:$0xf]
    %v11443 = vld [vmem:[%s3 + $0x6c] sm:$0xf]
    %v11444 = vld [vmem:[%s3 + $0x70] sm:$0xf]
    %v11445 = vld [vmem:[%s3 + $0x74] sm:$0xf]
    %v11446 = vld [vmem:[%s3 + $0x78] sm:$0xf]
    %v11447 = vld [vmem:[%s3 + $0x7c] sm:$0xf]
    %v11448 = vld [vmem:[%s3 + $0x80] sm:$0xf]
    %v11449 = vld [vmem:[%s3 + $0x84] sm:$0xf]
    %v11450 = vld [vmem:[%s3 + $0x88] sm:$0xf]
    %v11451 = vld [vmem:[%s3 + $0x8c] sm:$0xf]
    %v11452 = vld [vmem:[%s4] sm:$0x1]
    %v11454 = vperm.slane %v11452, 0
    %v11456 = vunpack.c.l.b16 %v10981
    %v11457 = vunpack.c.h.b16 %v10981
    %v11458 = vunpack.c.l.b16 %v10995
    %v11459 = vunpack.c.l.b16 %v11009
    %v11460 = vunpack.c.h.b16 %v11009
    %v11461 = vunpack.c.l.b16 %v11023
    %v11462 = vunpack.c.l.b16 %v11037
    %v11463 = vunpack.c.h.b16 %v11037
    %v11464 = vunpack.c.l.b16 %v11051
    %v11465 = vunpack.c.l.b16 %v11065
    %v11466 = vunpack.c.h.b16 %v11065
    %v11467 = vunpack.c.l.b16 %v11079
    %v11468 = vunpack.c.l.b16 %v11093
    %v11469 = vunpack.c.h.b16 %v11093
    %v11470 = vunpack.c.l.b16 %v11107
    %v11471 = vunpack.c.l.b16 %v11121
    %v11472 = vunpack.c.h.b16 %v11121
    %v11473 = vunpack.c.l.b16 %v11135
    %v11474 = vunpack.c.l.b16 %v11149
    %v11475 = vunpack.c.h.b16 %v11149
    %v11476 = vunpack.c.l.b16 %v11163
    %v11477 = vunpack.c.l.b16 %v11177
    %v11478 = vunpack.c.h.b16 %v11177
    %v11479 = vunpack.c.l.b16 %v11191
    %v11480 = vunpack.c.l.b16 %v11205
    %v11481 = vunpack.c.h.b16 %v11205
    %v11482 = vunpack.c.l.b16 %v11219
    %v11483 = vunpack.c.l.b16 %v11233
    %v11484 = vunpack.c.h.b16 %v11233
    %v11485 = vunpack.c.l.b16 %v11247
    %v11486 = vunpack.c.l.b16 %v11261
    %v11487 = vunpack.c.h.b16 %v11261
    %v11488 = vunpack.c.l.b16 %v11275
    %v11489 = vunpack.c.l.b16 %v11289
    %v11490 = vunpack.c.h.b16 %v11289
    %v11491 = vunpack.c.l.b16 %v11303
    %v11492 = vunpack.c.l.b16 %v11317
    %v11493 = vunpack.c.h.b16 %v11317
    %v11494 = vunpack.c.l.b16 %v11331
    %v11495 = vunpack.c.l.b16 %v11345
    %v11496 = vunpack.c.h.b16 %v11345
    %v11497 = vunpack.c.l.b16 %v11359
    %v11498 = vunpack.c.l.b16 %v11373
    %v11499 = vunpack.c.h.b16 %v11373
    %v11500 = vunpack.c.l.b16 %v11387
    %v11501 = vunpack.c.l.b16 %v11401
    %v11502 = vunpack.c.h.b16 %v11401
    %v11503 = vunpack.c.l.b16 %v11415
    %v11504 = vpack.c.b16 %v11459, %v11456
    %v11505 = vpack.c.b16 %v11460, %v11457
    %v11506 = vpack.c.b16 %v11461, %v11458
    %v11507 = vpack.c.b16 %v11465, %v11462
    %v11508 = vpack.c.b16 %v11466, %v11463
    %v11509 = vpack.c.b16 %v11467, %v11464
    %v11510 = vpack.c.b16 %v11471, %v11468
    %v11511 = vpack.c.b16 %v11472, %v11469
    %v11512 = vpack.c.b16 %v11473, %v11470
    %v11513 = vpack.c.b16 %v11477, %v11474
    %v11514 = vpack.c.b16 %v11478, %v11475
    %v11515 = vpack.c.b16 %v11479, %v11476
    %v11516 = vpack.c.b16 %v11483, %v11480
    %v11517 = vpack.c.b16 %v11484, %v11481
    %v11518 = vpack.c.b16 %v11485, %v11482
    %v11519 = vpack.c.b16 %v11489, %v11486
    %v11520 = vpack.c.b16 %v11490, %v11487
    %v11521 = vpack.c.b16 %v11491, %v11488
    %v11522 = vpack.c.b16 %v11495, %v11492
    %v11523 = vpack.c.b16 %v11496, %v11493
    %v11524 = vpack.c.b16 %v11497, %v11494
    %v11525 = vpack.c.b16 %v11501, %v11498
    %v11526 = vpack.c.b16 %v11502, %v11499
    %v11527 = vpack.c.b16 %v11503, %v11500
    %v11580 = vunpack.c.l.b16 %v11416
    %v11581 = vunpack.c.l.b16 %v11417
    %v11582 = vunpack.c.l.b16 %v11418
    %v11583 = vunpack.c.l.b16 %v11419
    %v11584 = vunpack.c.l.b16 %v11420
    %v11585 = vunpack.c.l.b16 %v11421
    %v11586 = vunpack.c.l.b16 %v11422
    %v11587 = vunpack.c.l.b16 %v11423
    %v11588 = vunpack.c.l.b16 %v11424
    %v11589 = vunpack.c.l.b16 %v11425
    %v11590 = vunpack.c.l.b16 %v11426
    %v11591 = vunpack.c.l.b16 %v11427
    %v11592 = vunpack.c.l.b16 %v11428
    %v11593 = vunpack.c.l.b16 %v11429
    %v11594 = vunpack.c.l.b16 %v11430
    %v11595 = vunpack.c.l.b16 %v11431
    %v11596 = vunpack.c.l.b16 %v11432
    %v11597 = vunpack.c.l.b16 %v11433
    %v11598 = vunpack.c.l.b16 %v11434
    %v11599 = vunpack.c.l.b16 %v11435
    %v11600 = vunpack.c.l.b16 %v11436
    %v11601 = vunpack.c.l.b16 %v11437
    %v11602 = vunpack.c.l.b16 %v11438
    %v11603 = vunpack.c.l.b16 %v11439
    %v11604 = vunpack.c.l.b16 %v11440
    %v11605 = vunpack.c.l.b16 %v11441
    %v11606 = vunpack.c.l.b16 %v11442
    %v11607 = vunpack.c.l.b16 %v11443
    %v11608 = vunpack.c.l.b16 %v11444
    %v11609 = vunpack.c.l.b16 %v11445
    %v11610 = vunpack.c.l.b16 %v11446
    %v11611 = vunpack.c.l.b16 %v11447
    %v11612 = vunpack.c.l.b16 %v11448
    %v11613 = vunpack.c.l.b16 %v11449
    %v11614 = vunpack.c.l.b16 %v11450
    %v11615 = vunpack.c.l.b16 %v11451
    %v11616 = vpack.c.b16 %v11581, %v11580
    %v11617 = vpack.c.b16 %v11583, %v11582
    %v11618 = vpack.c.b16 %v11585, %v11584
    %v11619 = vpack.c.b16 %v11587, %v11586
    %v11620 = vpack.c.b16 %v11589, %v11588
    %v11621 = vpack.c.b16 %v11591, %v11590
    %v11622 = vpack.c.b16 %v11593, %v11592
    %v11623 = vpack.c.b16 %v11595, %v11594
    %v11624 = vpack.c.b16 %v11597, %v11596
    %v11625 = vpack.c.b16 %v11599, %v11598
    %v11626 = vpack.c.b16 %v11601, %v11600
    %v11627 = vpack.c.b16 %v11603, %v11602
    %v11628 = vpack.c.b16 %v11605, %v11604
    %v11629 = vpack.c.b16 %v11607, %v11606
    %v11630 = vpack.c.b16 %v11609, %v11608
    %v11631 = vpack.c.b16 %v11611, %v11610
    %v11632 = vpack.c.b16 %v11613, %v11612
    %v11633 = vpack.c.b16 %v11615, %v11614
    %v11653 = vsel %vm10546, %v11506, 0
    %v11656 = vsel %vm10546, %v11509, 0
    %v11659 = vsel %vm10546, %v11512, 0
    %v11662 = vsel %vm10546, %v11515, 0
    %v11665 = vsel %vm10546, %v11518, 0
    %v11668 = vsel %vm10546, %v11521, 0
    %v11671 = vsel %vm10546, %v11524, 0
    %v11674 = vsel %vm10546, %v11527, 0
    %11676 = vmatpush.bf16.msra.mxu0 %v11623
    %11677 = vmatpush.bf16.msra.mxu0 %v11622
    %11678 = vmatpush.bf16.msra.mxu0 %v11621
    %11679 = vmatpush.bf16.msra.mxu0 %v11620
    %11680 = vmatpush.bf16.msra.mxu0 %v11619
    %11681 = vmatpush.bf16.msra.mxu0 %v11618
    %11682 = vmatpush.bf16.msra.mxu0 %v11617
    %11683 = vmatpush.bf16.msra.mxu0 %v11616
    %11684 = vmatmul.bf16.gmra.mxu0 %v11504
    %v11685 = vpop.f32.mrf.mxu0
    %v11686 = vadd.f32 %v11454, %v11685
    %v11687 = vpop.f32.mrf.mxu0
    %v11688 = vadd.f32 %v11454, %v11687
    %11689 = vmatmul.bf16.gmra.mxu0 %v11507
    %v11690 = vpop.f32.mrf.mxu0
    %v11691 = vadd.f32 %v11454, %v11690
    %v11692 = vpop.f32.mrf.mxu0
    %v11693 = vadd.f32 %v11454, %v11692
    %11694 = vmatmul.bf16.gmra.mxu0 %v11510
    %v11695 = vpop.f32.mrf.mxu0
    %v11696 = vadd.f32 %v11454, %v11695
    %v11697 = vpop.f32.mrf.mxu0
    %v11698 = vadd.f32 %v11454, %v11697
    %11699 = vmatmul.bf16.gmra.mxu0 %v11513
    %v11700 = vpop.f32.mrf.mxu0
    %v11701 = vadd.f32 %v11454, %v11700
    %v11702 = vpop.f32.mrf.mxu0
    %v11703 = vadd.f32 %v11454, %v11702
    %11704 = vmatmul.bf16.gmra.mxu0 %v11516
    %v11705 = vpop.f32.mrf.mxu0
    %v11706 = vadd.f32 %v11454, %v11705
    %v11707 = vpop.f32.mrf.mxu0
    %v11708 = vadd.f32 %v11454, %v11707
    %11709 = vmatmul.bf16.gmra.mxu0 %v11519
    %v11710 = vpop.f32.mrf.mxu0
    %v11711 = vadd.f32 %v11454, %v11710
    %v11712 = vpop.f32.mrf.mxu0
    %v11713 = vadd.f32 %v11454, %v11712
    %11714 = vmatmul.bf16.gmra.mxu0 %v11522
    %v11715 = vpop.f32.mrf.mxu0
    %v11716 = vadd.f32 %v11454, %v11715
    %v11717 = vpop.f32.mrf.mxu0
    %v11718 = vadd.f32 %v11454, %v11717
    %11719 = vmatmul.bf16.gmra.mxu0 %v11525
    %v11720 = vpop.f32.mrf.mxu0
    %v11721 = vadd.f32 %v11454, %v11720
    %v11722 = vpop.f32.mrf.mxu0
    %v11723 = vadd.f32 %v11454, %v11722
    %11724 = vdwg.mxu0
    %11725 = vmatpush.bf16.msra.mxu0 %v11631
    %11726 = vmatpush.bf16.msra.mxu0 %v11630
    %11727 = vmatpush.bf16.msra.mxu0 %v11629
    %11728 = vmatpush.bf16.msra.mxu0 %v11628
    %11729 = vmatpush.bf16.msra.mxu0 %v11627
    %11730 = vmatpush.bf16.msra.mxu0 %v11626
    %11731 = vmatpush.bf16.msra.mxu0 %v11625
    %11732 = vmatpush.bf16.msra.mxu0 %v11624
    %11733 = vmatmul.bf16.gmra.mxu0 %v11505
    %v11734 = vpop.f32.mrf.mxu0
    %v11735 = vadd.f32 %v11686, %v11734
    %v11736 = vpop.f32.mrf.mxu0
    %v11737 = vadd.f32 %v11688, %v11736
    %11738 = vmatmul.bf16.gmra.mxu0 %v11508
    %v11739 = vpop.f32.mrf.mxu0
    %v11740 = vadd.f32 %v11691, %v11739
    %v11741 = vpop.f32.mrf.mxu0
    %v11742 = vadd.f32 %v11693, %v11741
    %11743 = vmatmul.bf16.gmra.mxu0 %v11511
    %v11744 = vpop.f32.mrf.mxu0
    %v11745 = vadd.f32 %v11696, %v11744
    %v11746 = vpop.f32.mrf.mxu0
    %v11747 = vadd.f32 %v11698, %v11746
    %11748 = vmatmul.bf16.gmra.mxu0 %v11514
    %v11749 = vpop.f32.mrf.mxu0
    %v11750 = vadd.f32 %v11701, %v11749
    %v11751 = vpop.f32.mrf.mxu0
    %v11752 = vadd.f32 %v11703, %v11751
    %11753 = vmatmul.bf16.gmra.mxu0 %v11517
    %v11754 = vpop.f32.mrf.mxu0
    %v11755 = vadd.f32 %v11706, %v11754
    %v11756 = vpop.f32.mrf.mxu0
    %v11757 = vadd.f32 %v11708, %v11756
    %11758 = vmatmul.bf16.gmra.mxu0 %v11520
    %v11759 = vpop.f32.mrf.mxu0
    %v11760 = vadd.f32 %v11711, %v11759
    %v11761 = vpop.f32.mrf.mxu0
    %v11762 = vadd.f32 %v11713, %v11761
    %11763 = vmatmul.bf16.gmra.mxu0 %v11523
    %v11764 = vpop.f32.mrf.mxu0
    %v11765 = vadd.f32 %v11716, %v11764
    %v11766 = vpop.f32.mrf.mxu0
    %v11767 = vadd.f32 %v11718, %v11766
    %11768 = vmatmul.bf16.gmra.mxu0 %v11526
    %v11769 = vpop.f32.mrf.mxu0
    %v11770 = vadd.f32 %v11721, %v11769
    %v11771 = vpop.f32.mrf.mxu0
    %v11772 = vadd.f32 %v11723, %v11771
    %11773 = vdwg.mxu0
    %11774 = vmatpush.bf16.msra.mxu0 0
    %11775 = vmatpush.bf16.msra.mxu0 0
    %11776 = vmatpush.bf16.msra.mxu0 0
    %11777 = vmatpush.bf16.msra.mxu0 0
    %11778 = vmatpush.bf16.msra.mxu0 0
    %11779 = vmatpush.bf16.msra.mxu0 0
    %11780 = vmatpush.bf16.msra.mxu0 %v11633
    %11781 = vmatpush.bf16.msra.mxu0 %v11632
    %11782 = vmatmul.bf16.gmra.mxu0 %v11653
    %v11783 = vpop.f32.mrf.mxu0
    %v11784 = vadd.f32 %v11735, %v11783
    %v11785 = vpop.f32.mrf.mxu0
    %v11786 = vadd.f32 %v11737, %v11785
    %11787 = vmatmul.bf16.gmra.mxu0 %v11656
    %v11788 = vpop.f32.mrf.mxu0
    %v11789 = vadd.f32 %v11740, %v11788
    %v11790 = vpop.f32.mrf.mxu0
    %v11791 = vadd.f32 %v11742, %v11790
    %11792 = vmatmul.bf16.gmra.mxu0 %v11659
    %v11793 = vpop.f32.mrf.mxu0
    %v11794 = vadd.f32 %v11745, %v11793
    %v11795 = vpop.f32.mrf.mxu0
    %v11796 = vadd.f32 %v11747, %v11795
    %11797 = vmatmul.bf16.gmra.mxu0 %v11662
    %v11798 = vpop.f32.mrf.mxu0
    %v11799 = vadd.f32 %v11750, %v11798
    %v11800 = vpop.f32.mrf.mxu0
    %v11801 = vadd.f32 %v11752, %v11800
    %11802 = vmatmul.bf16.gmra.mxu0 %v11665
    %v11803 = vpop.f32.mrf.mxu0
    %v11804 = vadd.f32 %v11755, %v11803
    %v11805 = vpop.f32.mrf.mxu0
    %v11806 = vadd.f32 %v11757, %v11805
    %11807 = vmatmul.bf16.gmra.mxu0 %v11668
    %v11808 = vpop.f32.mrf.mxu0
    %v11809 = vadd.f32 %v11760, %v11808
    %v11810 = vpop.f32.mrf.mxu0
    %v11811 = vadd.f32 %v11762, %v11810
    %11812 = vmatmul.bf16.gmra.mxu0 %v11671
    %v11813 = vpop.f32.mrf.mxu0
    %v11814 = vadd.f32 %v11765, %v11813
    %v11815 = vpop.f32.mrf.mxu0
    %v11816 = vadd.f32 %v11767, %v11815
    %11817 = vmatmul.bf16.gmra.mxu0 %v11674
    %v11818 = vpop.f32.mrf.mxu0
    %v11819 = vadd.f32 %v11770, %v11818
    %v11820 = vpop.f32.mrf.mxu0
    %v11821 = vadd.f32 %v11772, %v11820
    %11822 = vdwg.mxu0
    %v11823 = vmax.f32 %v11784, 0.0
    %v11824 = vmax.f32 %v11786, 0.0
    %v11825 = vmax.f32 %v11789, 0.0
    %v11826 = vmax.f32 %v11791, 0.0
    %v11827 = vmax.f32 %v11794, 0.0
    %v11828 = vmax.f32 %v11796, 0.0
    %v11829 = vmax.f32 %v11799, 0.0
    %v11830 = vmax.f32 %v11801, 0.0
    %v11831 = vmax.f32 %v11804, 0.0
    %v11832 = vmax.f32 %v11806, 0.0
    %v11833 = vmax.f32 %v11809, 0.0
    %v11834 = vmax.f32 %v11811, 0.0
    %v11835 = vmax.f32 %v11814, 0.0
    %v11836 = vmax.f32 %v11816, 0.0
    %v11837 = vmax.f32 %v11819, 0.0
    %v11838 = vmax.f32 %v11821, 0.0
    %v11855 = vrot.slane %v11823, 2
    %v11856 = vrot.slane %v11823, 4
    %v11857 = vrot.slane %v11823, 6
    %v11858 = vrot.slane %v11824, 2
    %v11859 = vrot.slane %v11824, 4
    %v11860 = vrot.slane %v11824, 6
    %v11861 = vrot.slane %v11825, 2
    %v11862 = vrot.slane %v11825, 4
    %v11863 = vrot.slane %v11825, 6
    %v11864 = vrot.slane %v11826, 2
    %v11865 = vrot.slane %v11826, 4
    %v11866 = vrot.slane %v11826, 6
    %v11867 = vrot.slane %v11827, 2
    %v11868 = vrot.slane %v11827, 4
    %v11869 = vrot.slane %v11827, 6
    %v11870 = vrot.slane %v11828, 2
    %v11871 = vrot.slane %v11828, 4
    %v11872 = vrot.slane %v11828, 6
    %v11873 = vrot.slane %v11829, 2
    %v11874 = vrot.slane %v11829, 4
    %v11875 = vrot.slane %v11829, 6
    %v11876 = vrot.slane %v11830, 2
    %v11877 = vrot.slane %v11830, 4
    %v11878 = vrot.slane %v11830, 6
    %v11879 = vrot.slane %v11831, 2
    %v11880 = vrot.slane %v11831, 4
    %v11881 = vrot.slane %v11831, 6
    %v11882 = vrot.slane %v11832, 2
    %v11883 = vrot.slane %v11832, 4
    %v11884 = vrot.slane %v11832, 6
    %v11885 = vrot.slane %v11833, 2
    %v11886 = vrot.slane %v11833, 4
    %v11887 = vrot.slane %v11833, 6
    %v11888 = vrot.slane %v11834, 2
    %v11889 = vrot.slane %v11834, 4
    %v11890 = vrot.slane %v11834, 6
    %v11891 = vrot.slane %v11835, 2
    %v11892 = vrot.slane %v11835, 4
    %v11893 = vrot.slane %v11835, 6
    %v11894 = vrot.slane %v11836, 2
    %v11895 = vrot.slane %v11836, 4
    %v11896 = vrot.slane %v11836, 6
    %v11897 = vrot.slane %v11837, 2
    %v11898 = vrot.slane %v11837, 4
    %v11899 = vrot.slane %v11837, 6
    %v11900 = vrot.slane %v11838, 2
    %v11901 = vrot.slane %v11838, 4
    %v11902 = vrot.slane %v11838, 6
    %v11951 = vrot.slane %v11823, 7
    %v11952 = vrot.slane %v11951, 2
    %v11953 = vrot.slane %v11855, 7
    %v11954 = vrot.slane %v11953, 2
    %v11955 = vrot.slane %v11856, 7
    %v11956 = vrot.slane %v11955, 2
    %v11957 = vrot.slane %v11857, 7
    %v11958 = vrot.slane %v11957, 2
    %v11959 = vrot.slane %v11824, 7
    %v11960 = vrot.slane %v11959, 2
    %v11961 = vrot.slane %v11858, 7
    %v11962 = vrot.slane %v11961, 2
    %v11963 = vrot.slane %v11859, 7
    %v11964 = vrot.slane %v11963, 2
    %v11965 = vrot.slane %v11860, 7
    %v11966 = vrot.slane %v11965, 2
    %v11967 = vrot.slane %v11825, 7
    %v11968 = vrot.slane %v11967, 2
    %v11969 = vrot.slane %v11861, 7
    %v11970 = vrot.slane %v11969, 2
    %v11971 = vrot.slane %v11862, 7
    %v11972 = vrot.slane %v11971, 2
    %v11973 = vrot.slane %v11863, 7
    %v11974 = vrot.slane %v11973, 2
    %v11975 = vrot.slane %v11826, 7
    %v11976 = vrot.slane %v11975, 2
    %v11977 = vrot.slane %v11864, 7
    %v11978 = vrot.slane %v11977, 2
    %v11979 = vrot.slane %v11865, 7
    %v11980 = vrot.slane %v11979, 2
    %v11981 = vrot.slane %v11866, 7
    %v11982 = vrot.slane %v11981, 2
    %v11983 = vrot.slane %v11827, 7
    %v11984 = vrot.slane %v11983, 2
    %v11985 = vrot.slane %v11867, 7
    %v11986 = vrot.slane %v11985, 2
    %v11987 = vrot.slane %v11868, 7
    %v11988 = vrot.slane %v11987, 2
    %v11989 = vrot.slane %v11869, 7
    %v11990 = vrot.slane %v11989, 2
    %v11991 = vrot.slane %v11828, 7
    %v11992 = vrot.slane %v11991, 2
    %v11993 = vrot.slane %v11870, 7
    %v11994 = vrot.slane %v11993, 2
    %v11995 = vrot.slane %v11871, 7
    %v11996 = vrot.slane %v11995, 2
    %v11997 = vrot.slane %v11872, 7
    %v11998 = vrot.slane %v11997, 2
    %v11999 = vrot.slane %v11829, 7
    %v12000 = vrot.slane %v11999, 2
    %v12001 = vrot.slane %v11873, 7
    %v12002 = vrot.slane %v12001, 2
    %v12003 = vrot.slane %v11874, 7
    %v12004 = vrot.slane %v12003, 2
    %v12005 = vrot.slane %v11875, 7
    %v12006 = vrot.slane %v12005, 2
    %v12007 = vrot.slane %v11830, 7
    %v12008 = vrot.slane %v12007, 2
    %v12009 = vrot.slane %v11876, 7
    %v12010 = vrot.slane %v12009, 2
    %v12011 = vrot.slane %v11877, 7
    %v12012 = vrot.slane %v12011, 2
    %v12013 = vrot.slane %v11878, 7
    %v12014 = vrot.slane %v12013, 2
    %v12015 = vrot.slane %v11831, 7
    %v12016 = vrot.slane %v12015, 2
    %v12017 = vrot.slane %v11879, 7
    %v12018 = vrot.slane %v12017, 2
    %v12019 = vrot.slane %v11880, 7
    %v12020 = vrot.slane %v12019, 2
    %v12021 = vrot.slane %v11881, 7
    %v12022 = vrot.slane %v12021, 2
    %v12023 = vrot.slane %v11832, 7
    %v12024 = vrot.slane %v12023, 2
    %v12025 = vrot.slane %v11882, 7
    %v12026 = vrot.slane %v12025, 2
    %v12027 = vrot.slane %v11883, 7
    %v12028 = vrot.slane %v12027, 2
    %v12029 = vrot.slane %v11884, 7
    %v12030 = vrot.slane %v12029, 2
    %v12031 = vrot.slane %v11833, 7
    %v12032 = vrot.slane %v12031, 2
    %v12033 = vrot.slane %v11885, 7
    %v12034 = vrot.slane %v12033, 2
    %v12035 = vrot.slane %v11886, 7
    %v12036 = vrot.slane %v12035, 2
    %v12037 = vrot.slane %v11887, 7
    %v12038 = vrot.slane %v12037, 2
    %v12039 = vrot.slane %v11834, 7
    %v12040 = vrot.slane %v12039, 2
    %v12041 = vrot.slane %v11888, 7
    %v12042 = vrot.slane %v12041, 2
    %v12043 = vrot.slane %v11889, 7
    %v12044 = vrot.slane %v12043, 2
    %v12045 = vrot.slane %v11890, 7
    %v12046 = vrot.slane %v12045, 2
    %v12047 = vrot.slane %v11835, 7
    %v12048 = vrot.slane %v12047, 2
    %v12049 = vrot.slane %v11891, 7
    %v12050 = vrot.slane %v12049, 2
    %v12051 = vrot.slane %v11892, 7
    %v12052 = vrot.slane %v12051, 2
    %v12053 = vrot.slane %v11893, 7
    %v12054 = vrot.slane %v12053, 2
    %v12055 = vrot.slane %v11836, 7
    %v12056 = vrot.slane %v12055, 2
    %v12057 = vrot.slane %v11894, 7
    %v12058 = vrot.slane %v12057, 2
    %v12059 = vrot.slane %v11895, 7
    %v12060 = vrot.slane %v12059, 2
    %v12061 = vrot.slane %v11896, 7
    %v12062 = vrot.slane %v12061, 2
    %v12063 = vrot.slane %v11837, 7
    %v12064 = vrot.slane %v12063, 2
    %v12065 = vrot.slane %v11897, 7
    %v12066 = vrot.slane %v12065, 2
    %v12067 = vrot.slane %v11898, 7
    %v12068 = vrot.slane %v12067, 2
    %v12069 = vrot.slane %v11899, 7
    %v12070 = vrot.slane %v12069, 2
    %v12071 = vrot.slane %v11838, 7
    %v12072 = vrot.slane %v12071, 2
    %v12073 = vrot.slane %v11900, 7
    %v12074 = vrot.slane %v12073, 2
    %v12075 = vrot.slane %v11901, 7
    %v12076 = vrot.slane %v12075, 2
    %v12077 = vrot.slane %v11902, 7
    %v12078 = vrot.slane %v12077, 2
    %v12143 = vmax.f32 %v11823, %v11952
    %v12144 = vmax.f32 %v11855, %v11954
    %v12145 = vmax.f32 %v11856, %v11956
    %v12146 = vmax.f32 %v11857, %v11958
    %v12147 = vmax.f32 %v11824, %v11960
    %v12148 = vmax.f32 %v11858, %v11962
    %v12149 = vmax.f32 %v11859, %v11964
    %v12150 = vmax.f32 %v11860, %v11966
    %v12151 = vmax.f32 %v11825, %v11968
    %v12152 = vmax.f32 %v11861, %v11970
    %v12153 = vmax.f32 %v11862, %v11972
    %v12154 = vmax.f32 %v11863, %v11974
    %v12155 = vmax.f32 %v11826, %v11976
    %v12156 = vmax.f32 %v11864, %v11978
    %v12157 = vmax.f32 %v11865, %v11980
    %v12158 = vmax.f32 %v11866, %v11982
    %v12159 = vmax.f32 %v11827, %v11984
    %v12160 = vmax.f32 %v11867, %v11986
    %v12161 = vmax.f32 %v11868, %v11988
    %v12162 = vmax.f32 %v11869, %v11990
    %v12163 = vmax.f32 %v11828, %v11992
    %v12164 = vmax.f32 %v11870, %v11994
    %v12165 = vmax.f32 %v11871, %v11996
    %v12166 = vmax.f32 %v11872, %v11998
    %v12167 = vmax.f32 %v11829, %v12000
    %v12168 = vmax.f32 %v11873, %v12002
    %v12169 = vmax.f32 %v11874, %v12004
    %v12170 = vmax.f32 %v11875, %v12006
    %v12171 = vmax.f32 %v11830, %v12008
    %v12172 = vmax.f32 %v11876, %v12010
    %v12173 = vmax.f32 %v11877, %v12012
    %v12174 = vmax.f32 %v11878, %v12014
    %v12175 = vmax.f32 %v11831, %v12016
    %v12176 = vmax.f32 %v11879, %v12018
    %v12177 = vmax.f32 %v11880, %v12020
    %v12178 = vmax.f32 %v11881, %v12022
    %v12179 = vmax.f32 %v11832, %v12024
    %v12180 = vmax.f32 %v11882, %v12026
    %v12181 = vmax.f32 %v11883, %v12028
    %v12182 = vmax.f32 %v11884, %v12030
    %v12183 = vmax.f32 %v11833, %v12032
    %v12184 = vmax.f32 %v11885, %v12034
    %v12185 = vmax.f32 %v11886, %v12036
    %v12186 = vmax.f32 %v11887, %v12038
    %v12187 = vmax.f32 %v11834, %v12040
    %v12188 = vmax.f32 %v11888, %v12042
    %v12189 = vmax.f32 %v11889, %v12044
    %v12190 = vmax.f32 %v11890, %v12046
    %v12191 = vmax.f32 %v11835, %v12048
    %v12192 = vmax.f32 %v11891, %v12050
    %v12193 = vmax.f32 %v11892, %v12052
    %v12194 = vmax.f32 %v11893, %v12054
    %v12195 = vmax.f32 %v11836, %v12056
    %v12196 = vmax.f32 %v11894, %v12058
    %v12197 = vmax.f32 %v11895, %v12060
    %v12198 = vmax.f32 %v11896, %v12062
    %v12199 = vmax.f32 %v11837, %v12064
    %v12200 = vmax.f32 %v11897, %v12066
    %v12201 = vmax.f32 %v11898, %v12068
    %v12202 = vmax.f32 %v11899, %v12070
    %v12203 = vmax.f32 %v11838, %v12072
    %v12204 = vmax.f32 %v11900, %v12074
    %v12205 = vmax.f32 %v11901, %v12076
    %v12206 = vmax.f32 %v11902, %v12078
    %v12207 = vmax.f32 %v12143, %v12147
    %v12208 = vmax.f32 %v12144, %v12148
    %v12209 = vmax.f32 %v12145, %v12149
    %v12210 = vmax.f32 %v12146, %v12150
    %v12211 = vmax.f32 %v12151, %v12155
    %v12212 = vmax.f32 %v12152, %v12156
    %v12213 = vmax.f32 %v12153, %v12157
    %v12214 = vmax.f32 %v12154, %v12158
    %v12215 = vmax.f32 %v12159, %v12163
    %v12216 = vmax.f32 %v12160, %v12164
    %v12217 = vmax.f32 %v12161, %v12165
    %v12218 = vmax.f32 %v12162, %v12166
    %v12219 = vmax.f32 %v12167, %v12171
    %v12220 = vmax.f32 %v12168, %v12172
    %v12221 = vmax.f32 %v12169, %v12173
    %v12222 = vmax.f32 %v12170, %v12174
    %v12223 = vmax.f32 %v12175, %v12179
    %v12224 = vmax.f32 %v12176, %v12180
    %v12225 = vmax.f32 %v12177, %v12181
    %v12226 = vmax.f32 %v12178, %v12182
    %v12227 = vmax.f32 %v12183, %v12187
    %v12228 = vmax.f32 %v12184, %v12188
    %v12229 = vmax.f32 %v12185, %v12189
    %v12230 = vmax.f32 %v12186, %v12190
    %v12231 = vmax.f32 %v12191, %v12195
    %v12232 = vmax.f32 %v12192, %v12196
    %v12233 = vmax.f32 %v12193, %v12197
    %v12234 = vmax.f32 %v12194, %v12198
    %v12235 = vmax.f32 %v12199, %v12203
    %v12236 = vmax.f32 %v12200, %v12204
    %v12237 = vmax.f32 %v12201, %v12205
    %v12238 = vmax.f32 %v12202, %v12206
    %vm12239 = vcmask 519168
    %12240 = vst.msk [vmem:[#allocation4] sm:$0xf] %vm12239, 0
    %12241 = vst.msk [vmem:[#allocation4 + $0x18] sm:$0xf] %vm12239, 0
    %s12242 = scalar_lea.vmem [#allocation4], 20
    %12243 = vst.msk [vmem:[%s12242] sm:$0xf] %vm12239, 0
    %12244 = vst.msk [vmem:[%s12242 + $0x18] sm:$0xf] %vm12239, 0
    %s12245 = scalar_lea.vmem [#allocation4], 4
    %vm12246 = vcmask 516096
    %12247 = vst.msk [vmem:[%s12245] sm:$0x1] %vm12246, 0
    %12248 = vst.msk [vmem:[%s12245 + $0x4] sm:$0x1] %vm12246, 0
    %12249 = vst.msk [vmem:[%s12245 + $0x8] sm:$0x1] %vm12246, 0
    %12250 = vst.msk [vmem:[%s12245 + $0xc] sm:$0x1] %vm12246, 0
    %12251 = vst.msk [vmem:[%s12245 + $0x18] sm:$0x1] %vm12246, 0
    %12252 = vst.msk [vmem:[%s12245 + $0x1c] sm:$0x1] %vm12246, 0
    %12253 = vst.msk [vmem:[%s12245 + $0x20] sm:$0x1] %vm12246, 0
    %12254 = vst.msk [vmem:[%s12245 + $0x24] sm:$0x1] %vm12246, 0
    %vm12255 = vcmask 519171
    %12256 = vst.msk [vmem:[%s12245] sm:$0x8] %vm12255, 0
    %12257 = vst.msk [vmem:[%s12245 + $0x4] sm:$0x8] %vm12255, 0
    %12258 = vst.msk [vmem:[%s12245 + $0x8] sm:$0x8] %vm12255, 0
    %12259 = vst.msk [vmem:[%s12245 + $0xc] sm:$0x8] %vm12255, 0
    %12260 = vst.msk [vmem:[%s12245 + $0x18] sm:$0x8] %vm12255, 0
    %12261 = vst.msk [vmem:[%s12245 + $0x1c] sm:$0x8] %vm12255, 0
    %12262 = vst.msk [vmem:[%s12245 + $0x20] sm:$0x8] %vm12255, 0
    %12263 = vst.msk [vmem:[%s12245 + $0x24] sm:$0x8] %vm12255, 0
    %v12264 = vpack.c.bf16 %v12207, %v12207
    %v12265 = vpack.c.bf16 %v12208, %v12208
    %v12266 = vpack.c.bf16 %v12209, %v12209
    %v12267 = vpack.c.bf16 %v12210, %v12210
    %v12268 = vpack.c.bf16 %v12211, %v12211
    %v12269 = vpack.c.bf16 %v12212, %v12212
    %v12270 = vpack.c.bf16 %v12213, %v12213
    %v12271 = vpack.c.bf16 %v12214, %v12214
    %v12272 = vpack.c.bf16 %v12215, %v12215
    %v12273 = vpack.c.bf16 %v12216, %v12216
    %v12274 = vpack.c.bf16 %v12217, %v12217
    %v12275 = vpack.c.bf16 %v12218, %v12218
    %v12276 = vpack.c.bf16 %v12219, %v12219
    %v12277 = vpack.c.bf16 %v12220, %v12220
    %v12278 = vpack.c.bf16 %v12221, %v12221
    %v12279 = vpack.c.bf16 %v12222, %v12222
    %v12280 = vpack.c.bf16 %v12223, %v12223
    %v12281 = vpack.c.bf16 %v12224, %v12224
    %v12282 = vpack.c.bf16 %v12225, %v12225
    %v12283 = vpack.c.bf16 %v12226, %v12226
    %v12284 = vpack.c.bf16 %v12227, %v12227
    %v12285 = vpack.c.bf16 %v12228, %v12228
    %v12286 = vpack.c.bf16 %v12229, %v12229
    %v12287 = vpack.c.bf16 %v12230, %v12230
    %v12288 = vpack.c.bf16 %v12231, %v12231
    %v12289 = vpack.c.bf16 %v12232, %v12232
    %v12290 = vpack.c.bf16 %v12233, %v12233
    %v12291 = vpack.c.bf16 %v12234, %v12234
    %v12292 = vpack.c.bf16 %v12235, %v12235
    %v12293 = vpack.c.bf16 %v12236, %v12236
    %v12294 = vpack.c.bf16 %v12237, %v12237
    %v12295 = vpack.c.bf16 %v12238, %v12238
    %v12328 = vunpack.c.l.b16 %v12264
    %v12329 = vunpack.c.l.b16 %v12265
    %v12330 = vunpack.c.l.b16 %v12266
    %v12331 = vunpack.c.l.b16 %v12267
    %v12332 = vunpack.c.l.b16 %v12268
    %v12333 = vunpack.c.l.b16 %v12269
    %v12334 = vunpack.c.l.b16 %v12270
    %v12335 = vunpack.c.l.b16 %v12271
    %v12336 = vunpack.c.l.b16 %v12272
    %v12337 = vunpack.c.l.b16 %v12273
    %v12338 = vunpack.c.l.b16 %v12274
    %v12339 = vunpack.c.l.b16 %v12275
    %v12340 = vunpack.c.l.b16 %v12276
    %v12341 = vunpack.c.l.b16 %v12277
    %v12342 = vunpack.c.l.b16 %v12278
    %v12343 = vunpack.c.l.b16 %v12279
    %v12344 = vunpack.c.l.b16 %v12280
    %v12345 = vunpack.c.l.b16 %v12281
    %v12346 = vunpack.c.l.b16 %v12282
    %v12347 = vunpack.c.l.b16 %v12283
    %v12348 = vunpack.c.l.b16 %v12284
    %v12349 = vunpack.c.l.b16 %v12285
    %v12350 = vunpack.c.l.b16 %v12286
    %v12351 = vunpack.c.l.b16 %v12287
    %v12352 = vunpack.c.l.b16 %v12288
    %v12353 = vunpack.c.l.b16 %v12289
    %v12354 = vunpack.c.l.b16 %v12290
    %v12355 = vunpack.c.l.b16 %v12291
    %v12356 = vunpack.c.l.b16 %v12292
    %v12357 = vunpack.c.l.b16 %v12293
    %v12358 = vunpack.c.l.b16 %v12294
    %v12359 = vunpack.c.l.b16 %v12295
    %v12360 = vrot.slane %v12328, 6
    %v12361 = vrot.slane %v12329, 5
    %v12362 = vsel %vm8940, %v12361, %v12360
    %v12363 = vrot.slane %v12330, 4
    %v12364 = vsel %vm8943, %v12363, %v12362
    %v12365 = vrot.slane %v12331, 3
    %v12366 = vsel %vm8946, %v12365, %v12364
    %v12367 = vrot.slane %v12332, 6
    %v12368 = vrot.slane %v12333, 5
    %v12369 = vsel %vm8940, %v12368, %v12367
    %v12370 = vrot.slane %v12334, 4
    %v12371 = vsel %vm8943, %v12370, %v12369
    %v12372 = vrot.slane %v12335, 3
    %v12373 = vsel %vm8946, %v12372, %v12371
    %v12374 = vrot.slane %v12336, 6
    %v12375 = vrot.slane %v12337, 5
    %v12376 = vsel %vm8940, %v12375, %v12374
    %v12377 = vrot.slane %v12338, 4
    %v12378 = vsel %vm8943, %v12377, %v12376
    %v12379 = vrot.slane %v12339, 3
    %v12380 = vsel %vm8946, %v12379, %v12378
    %v12381 = vrot.slane %v12340, 6
    %v12382 = vrot.slane %v12341, 5
    %v12383 = vsel %vm8940, %v12382, %v12381
    %v12384 = vrot.slane %v12342, 4
    %v12385 = vsel %vm8943, %v12384, %v12383
    %v12386 = vrot.slane %v12343, 3
    %v12387 = vsel %vm8946, %v12386, %v12385
    %v12388 = vrot.slane %v12344, 6
    %v12389 = vrot.slane %v12345, 5
    %v12390 = vsel %vm8940, %v12389, %v12388
    %v12391 = vrot.slane %v12346, 4
    %v12392 = vsel %vm8943, %v12391, %v12390
    %v12393 = vrot.slane %v12347, 3
    %v12394 = vsel %vm8946, %v12393, %v12392
    %v12395 = vrot.slane %v12348, 6
    %v12396 = vrot.slane %v12349, 5
    %v12397 = vsel %vm8940, %v12396, %v12395
    %v12398 = vrot.slane %v12350, 4
    %v12399 = vsel %vm8943, %v12398, %v12397
    %v12400 = vrot.slane %v12351, 3
    %v12401 = vsel %vm8946, %v12400, %v12399
    %v12402 = vrot.slane %v12352, 6
    %v12403 = vrot.slane %v12353, 5
    %v12404 = vsel %vm8940, %v12403, %v12402
    %v12405 = vrot.slane %v12354, 4
    %v12406 = vsel %vm8943, %v12405, %v12404
    %v12407 = vrot.slane %v12355, 3
    %v12408 = vsel %vm8946, %v12407, %v12406
    %v12409 = vrot.slane %v12356, 6
    %v12410 = vrot.slane %v12357, 5
    %v12411 = vsel %vm8940, %v12410, %v12409
    %v12412 = vrot.slane %v12358, 4
    %v12413 = vsel %vm8943, %v12412, %v12411
    %v12414 = vrot.slane %v12359, 3
    %v12415 = vsel %vm8946, %v12414, %v12413
    %v12416 = vpack.c.b16 %v12366, %v12366
    %v12417 = vpack.c.b16 %v12373, %v12373
    %v12418 = vpack.c.b16 %v12380, %v12380
    %v12419 = vpack.c.b16 %v12387, %v12387
    %v12420 = vpack.c.b16 %v12394, %v12394
    %v12421 = vpack.c.b16 %v12401, %v12401
    %v12422 = vpack.c.b16 %v12408, %v12408
    %v12423 = vpack.c.b16 %v12415, %v12415
    %vm12432 = vcmask 518145
    %12433 = vst.msk [vmem:[%s12245] sm:$0x6] %vm12432, %v12416
    %12434 = vst.msk [vmem:[%s12245 + $0x4] sm:$0x6] %vm12432, %v12417
    %12435 = vst.msk [vmem:[%s12245 + $0x8] sm:$0x6] %vm12432, %v12418
    %12436 = vst.msk [vmem:[%s12245 + $0xc] sm:$0x6] %vm12432, %v12419
    %12437 = vst.msk [vmem:[%s12245 + $0x18] sm:$0x6] %vm12432, %v12420
    %12438 = vst.msk [vmem:[%s12245 + $0x1c] sm:$0x6] %vm12432, %v12421
    %12439 = vst.msk [vmem:[%s12245 + $0x20] sm:$0x6] %vm12432, %v12422
    %12440 = vst.msk [vmem:[%s12245 + $0x24] sm:$0x6] %vm12432, %v12423
    %v12441 = vld [vmem:[#allocation4] sm:$0x7]
    %v12442 = vld [vmem:[#allocation4 + $0x4] sm:$0x7]
    %v12443 = vld [vmem:[#allocation4 + $0x8] sm:$0x7]
    %v12444 = vld [vmem:[#allocation4 + $0xc] sm:$0x7]
    %v12445 = vld [vmem:[#allocation4 + $0x18] sm:$0x7]
    %v12446 = vld [vmem:[#allocation4 + $0x1c] sm:$0x7]
    %v12447 = vld [vmem:[#allocation4 + $0x20] sm:$0x7]
    %v12448 = vld [vmem:[#allocation4 + $0x24] sm:$0x7]
    %v12449 = vld [vmem:[#allocation4] sm:$0x6]
    %v12450 = vld [vmem:[#allocation4 + $0x4] sm:$0x6]
    %v12451 = vld [vmem:[#allocation4 + $0x8] sm:$0x6]
    %v12452 = vld [vmem:[#allocation4 + $0xc] sm:$0x6]
    %v12453 = vld [vmem:[#allocation4 + $0x18] sm:$0x6]
    %v12454 = vld [vmem:[#allocation4 + $0x1c] sm:$0x6]
    %v12455 = vld [vmem:[#allocation4 + $0x20] sm:$0x6]
    %v12456 = vld [vmem:[#allocation4 + $0x24] sm:$0x6]
    %v12457 = vld [vmem:[#allocation4] sm:$0xe]
    %v12458 = vld [vmem:[#allocation4 + $0x4] sm:$0xe]
    %v12459 = vld [vmem:[#allocation4 + $0x8] sm:$0xe]
    %v12460 = vld [vmem:[#allocation4 + $0xc] sm:$0xe]
    %v12461 = vld [vmem:[#allocation4 + $0x18] sm:$0xe]
    %v12462 = vld [vmem:[#allocation4 + $0x1c] sm:$0xe]
    %v12463 = vld [vmem:[#allocation4 + $0x20] sm:$0xe]
    %v12464 = vld [vmem:[#allocation4 + $0x24] sm:$0xe]
    %v12465 = vld [vmem:[%s12245] sm:$0x7]
    %v12466 = vld [vmem:[%s12245 + $0x4] sm:$0x7]
    %v12467 = vld [vmem:[%s12245 + $0x8] sm:$0x7]
    %v12468 = vld [vmem:[%s12245 + $0xc] sm:$0x7]
    %v12469 = vld [vmem:[%s12245 + $0x18] sm:$0x7]
    %v12470 = vld [vmem:[%s12245 + $0x1c] sm:$0x7]
    %v12471 = vld [vmem:[%s12245 + $0x20] sm:$0x7]
    %v12472 = vld [vmem:[%s12245 + $0x24] sm:$0x7]
    %v12473 = vld [vmem:[%s12245] sm:$0x6]
    %v12474 = vld [vmem:[%s12245 + $0x4] sm:$0x6]
    %v12475 = vld [vmem:[%s12245 + $0x8] sm:$0x6]
    %v12476 = vld [vmem:[%s12245 + $0xc] sm:$0x6]
    %v12477 = vld [vmem:[%s12245 + $0x18] sm:$0x6]
    %v12478 = vld [vmem:[%s12245 + $0x1c] sm:$0x6]
    %v12479 = vld [vmem:[%s12245 + $0x20] sm:$0x6]
    %v12480 = vld [vmem:[%s12245 + $0x24] sm:$0x6]
    %v12481 = vld [vmem:[%s12245] sm:$0xe]
    %v12482 = vld [vmem:[%s12245 + $0x4] sm:$0xe]
    %v12483 = vld [vmem:[%s12245 + $0x8] sm:$0xe]
    %v12484 = vld [vmem:[%s12245 + $0xc] sm:$0xe]
    %v12485 = vld [vmem:[%s12245 + $0x18] sm:$0xe]
    %v12486 = vld [vmem:[%s12245 + $0x1c] sm:$0xe]
    %v12487 = vld [vmem:[%s12245 + $0x20] sm:$0xe]
    %v12488 = vld [vmem:[%s12245 + $0x24] sm:$0xe]
    %s12489 = scalar_lea.vmem [#allocation4], 8
    %v12490 = vld [vmem:[%s12489] sm:$0x7]
    %v12491 = vld [vmem:[%s12489 + $0x4] sm:$0x7]
    %v12492 = vld [vmem:[%s12489 + $0x8] sm:$0x7]
    %v12493 = vld [vmem:[%s12489 + $0xc] sm:$0x7]
    %v12494 = vld [vmem:[%s12489 + $0x18] sm:$0x7]
    %v12495 = vld [vmem:[%s12489 + $0x1c] sm:$0x7]
    %v12496 = vld [vmem:[%s12489 + $0x20] sm:$0x7]
    %v12497 = vld [vmem:[%s12489 + $0x24] sm:$0x7]
    %v12498 = vld [vmem:[%s12489] sm:$0x6]
    %v12499 = vld [vmem:[%s12489 + $0x4] sm:$0x6]
    %v12500 = vld [vmem:[%s12489 + $0x8] sm:$0x6]
    %v12501 = vld [vmem:[%s12489 + $0xc] sm:$0x6]
    %v12502 = vld [vmem:[%s12489 + $0x18] sm:$0x6]
    %v12503 = vld [vmem:[%s12489 + $0x1c] sm:$0x6]
    %v12504 = vld [vmem:[%s12489 + $0x20] sm:$0x6]
    %v12505 = vld [vmem:[%s12489 + $0x24] sm:$0x6]
    %v12506 = vld [vmem:[%s12489] sm:$0xe]
    %v12507 = vld [vmem:[%s12489 + $0x4] sm:$0xe]
    %v12508 = vld [vmem:[%s12489 + $0x8] sm:$0xe]
    %v12509 = vld [vmem:[%s12489 + $0xc] sm:$0xe]
    %v12510 = vld [vmem:[%s12489 + $0x18] sm:$0xe]
    %v12511 = vld [vmem:[%s12489 + $0x1c] sm:$0xe]
    %v12512 = vld [vmem:[%s12489 + $0x20] sm:$0xe]
    %v12513 = vld [vmem:[%s12489 + $0x24] sm:$0xe]
    %v12522 = vunpack.c.l.b16 %v12449
    %v12523 = vunpack.c.l.b16 %v12450
    %v12524 = vunpack.c.l.b16 %v12451
    %v12525 = vunpack.c.l.b16 %v12452
    %v12526 = vunpack.c.l.b16 %v12453
    %v12527 = vunpack.c.l.b16 %v12454
    %v12528 = vunpack.c.l.b16 %v12455
    %v12529 = vunpack.c.l.b16 %v12456
    %v12530 = vpack.c.b16 %v12522, %v12522
    %v12531 = vpack.c.b16 %v12523, %v12523
    %v12532 = vpack.c.b16 %v12524, %v12524
    %v12533 = vpack.c.b16 %v12525, %v12525
    %v12534 = vpack.c.b16 %v12526, %v12526
    %v12535 = vpack.c.b16 %v12527, %v12527
    %v12536 = vpack.c.b16 %v12528, %v12528
    %v12537 = vpack.c.b16 %v12529, %v12529
    %v12539 = vshrl.u32 %v12530, 16
    %v12541 = vshll.u32 %v12530, 16
    %v12543 = vrot.slane %v12541, 1
    %v12544 = vor.u32 %v12539, %v12543
    %v12546 = vshrl.u32 %v12531, 16
    %v12548 = vshll.u32 %v12531, 16
    %v12550 = vrot.slane %v12548, 1
    %v12551 = vor.u32 %v12546, %v12550
    %v12553 = vshrl.u32 %v12532, 16
    %v12555 = vshll.u32 %v12532, 16
    %v12557 = vrot.slane %v12555, 1
    %v12558 = vor.u32 %v12553, %v12557
    %v12560 = vshrl.u32 %v12533, 16
    %v12562 = vshll.u32 %v12533, 16
    %v12564 = vrot.slane %v12562, 1
    %v12565 = vor.u32 %v12560, %v12564
    %v12567 = vshrl.u32 %v12534, 16
    %v12569 = vshll.u32 %v12534, 16
    %v12571 = vrot.slane %v12569, 1
    %v12572 = vor.u32 %v12567, %v12571
    %v12574 = vshrl.u32 %v12535, 16
    %v12576 = vshll.u32 %v12535, 16
    %v12578 = vrot.slane %v12576, 1
    %v12579 = vor.u32 %v12574, %v12578
    %v12581 = vshrl.u32 %v12536, 16
    %v12583 = vshll.u32 %v12536, 16
    %v12585 = vrot.slane %v12583, 1
    %v12586 = vor.u32 %v12581, %v12585
    %v12588 = vshrl.u32 %v12537, 16
    %v12590 = vshll.u32 %v12537, 16
    %v12592 = vrot.slane %v12590, 1
    %v12593 = vor.u32 %v12588, %v12592
    %12594 = vrot.lane.b32.xlu0 %v12544, 64
    %v12595 = vpop.permute.xlu0 %12594
    %12596 = vrot.lane.b32.xlu0 %v12551, 64
    %v12597 = vpop.permute.xlu0 %12596
    %12598 = vrot.lane.b32.xlu0 %v12558, 64
    %v12599 = vpop.permute.xlu0 %12598
    %12600 = vrot.lane.b32.xlu0 %v12565, 64
    %v12601 = vpop.permute.xlu0 %12600
    %12602 = vrot.lane.b32.xlu0 %v12572, 64
    %v12603 = vpop.permute.xlu0 %12602
    %12604 = vrot.lane.b32.xlu0 %v12579, 64
    %v12605 = vpop.permute.xlu0 %12604
    %12606 = vrot.lane.b32.xlu0 %v12586, 64
    %v12607 = vpop.permute.xlu0 %12606
    %12608 = vrot.lane.b32.xlu0 %v12593, 64
    %v12609 = vpop.permute.xlu0 %12608
    %v12618 = vunpack.c.l.b16 %v12457
    %v12619 = vunpack.c.l.b16 %v12458
    %v12620 = vunpack.c.l.b16 %v12459
    %v12621 = vunpack.c.l.b16 %v12460
    %v12622 = vunpack.c.l.b16 %v12461
    %v12623 = vunpack.c.l.b16 %v12462
    %v12624 = vunpack.c.l.b16 %v12463
    %v12625 = vunpack.c.l.b16 %v12464
    %v12626 = vpack.c.b16 %v12618, %v12618
    %v12627 = vpack.c.b16 %v12619, %v12619
    %v12628 = vpack.c.b16 %v12620, %v12620
    %v12629 = vpack.c.b16 %v12621, %v12621
    %v12630 = vpack.c.b16 %v12622, %v12622
    %v12631 = vpack.c.b16 %v12623, %v12623
    %v12632 = vpack.c.b16 %v12624, %v12624
    %v12633 = vpack.c.b16 %v12625, %v12625
    %v12634 = vrot.slane %v12626, 1
    %v12635 = vrot.slane %v12627, 1
    %v12636 = vrot.slane %v12628, 1
    %v12637 = vrot.slane %v12629, 1
    %v12638 = vrot.slane %v12630, 1
    %v12639 = vrot.slane %v12631, 1
    %v12640 = vrot.slane %v12632, 1
    %v12641 = vrot.slane %v12633, 1
    %v12650 = vunpack.c.l.b16 %v12465
    %v12651 = vunpack.c.l.b16 %v12466
    %v12652 = vunpack.c.l.b16 %v12467
    %v12653 = vunpack.c.l.b16 %v12468
    %v12654 = vunpack.c.l.b16 %v12469
    %v12655 = vunpack.c.l.b16 %v12470
    %v12656 = vunpack.c.l.b16 %v12471
    %v12657 = vunpack.c.l.b16 %v12472
    %v12658 = vpack.c.b16 %v12650, %v12650
    %v12659 = vpack.c.b16 %v12651, %v12651
    %v12660 = vpack.c.b16 %v12652, %v12652
    %v12661 = vpack.c.b16 %v12653, %v12653
    %v12662 = vpack.c.b16 %v12654, %v12654
    %v12663 = vpack.c.b16 %v12655, %v12655
    %v12664 = vpack.c.b16 %v12656, %v12656
    %v12665 = vpack.c.b16 %v12657, %v12657
    %12666 = vrot.lane.b32.xlu0 %v12658, 64
    %v12667 = vpop.permute.xlu0 %12666
    %12668 = vrot.lane.b32.xlu0 %v12659, 64
    %v12669 = vpop.permute.xlu0 %12668
    %12670 = vrot.lane.b32.xlu0 %v12660, 64
    %v12671 = vpop.permute.xlu0 %12670
    %12672 = vrot.lane.b32.xlu0 %v12661, 64
    %v12673 = vpop.permute.xlu0 %12672
    %12674 = vrot.lane.b32.xlu0 %v12662, 64
    %v12675 = vpop.permute.xlu0 %12674
    %12676 = vrot.lane.b32.xlu0 %v12663, 64
    %v12677 = vpop.permute.xlu0 %12676
    %12678 = vrot.lane.b32.xlu0 %v12664, 64
    %v12679 = vpop.permute.xlu0 %12678
    %12680 = vrot.lane.b32.xlu0 %v12665, 64
    %v12681 = vpop.permute.xlu0 %12680
    %v12690 = vunpack.c.l.b16 %v12473
    %v12691 = vunpack.c.l.b16 %v12474
    %v12692 = vunpack.c.l.b16 %v12475
    %v12693 = vunpack.c.l.b16 %v12476
    %v12694 = vunpack.c.l.b16 %v12477
    %v12695 = vunpack.c.l.b16 %v12478
    %v12696 = vunpack.c.l.b16 %v12479
    %v12697 = vunpack.c.l.b16 %v12480
    %v12698 = vpack.c.b16 %v12690, %v12690
    %v12699 = vpack.c.b16 %v12691, %v12691
    %v12700 = vpack.c.b16 %v12692, %v12692
    %v12701 = vpack.c.b16 %v12693, %v12693
    %v12702 = vpack.c.b16 %v12694, %v12694
    %v12703 = vpack.c.b16 %v12695, %v12695
    %v12704 = vpack.c.b16 %v12696, %v12696
    %v12705 = vpack.c.b16 %v12697, %v12697
    %v12707 = vshrl.u32 %v12698, 16
    %v12709 = vshll.u32 %v12698, 16
    %v12711 = vrot.slane %v12709, 1
    %v12712 = vor.u32 %v12707, %v12711
    %v12714 = vshrl.u32 %v12699, 16
    %v12716 = vshll.u32 %v12699, 16
    %v12718 = vrot.slane %v12716, 1
    %v12719 = vor.u32 %v12714, %v12718
    %v12721 = vshrl.u32 %v12700, 16
    %v12723 = vshll.u32 %v12700, 16
    %v12725 = vrot.slane %v12723, 1
    %v12726 = vor.u32 %v12721, %v12725
    %v12728 = vshrl.u32 %v12701, 16
    %v12730 = vshll.u32 %v12701, 16
    %v12732 = vrot.slane %v12730, 1
    %v12733 = vor.u32 %v12728, %v12732
    %v12735 = vshrl.u32 %v12702, 16
    %v12737 = vshll.u32 %v12702, 16
    %v12739 = vrot.slane %v12737, 1
    %v12740 = vor.u32 %v12735, %v12739
    %v12742 = vshrl.u32 %v12703, 16
    %v12744 = vshll.u32 %v12703, 16
    %v12746 = vrot.slane %v12744, 1
    %v12747 = vor.u32 %v12742, %v12746
    %v12749 = vshrl.u32 %v12704, 16
    %v12751 = vshll.u32 %v12704, 16
    %v12753 = vrot.slane %v12751, 1
    %v12754 = vor.u32 %v12749, %v12753
    %v12756 = vshrl.u32 %v12705, 16
    %v12758 = vshll.u32 %v12705, 16
    %v12760 = vrot.slane %v12758, 1
    %v12761 = vor.u32 %v12756, %v12760
    %v12770 = vunpack.c.l.b16 %v12481
    %v12771 = vunpack.c.l.b16 %v12482
    %v12772 = vunpack.c.l.b16 %v12483
    %v12773 = vunpack.c.l.b16 %v12484
    %v12774 = vunpack.c.l.b16 %v12485
    %v12775 = vunpack.c.l.b16 %v12486
    %v12776 = vunpack.c.l.b16 %v12487
    %v12777 = vunpack.c.l.b16 %v12488
    %v12778 = vpack.c.b16 %v12770, %v12770
    %v12779 = vpack.c.b16 %v12771, %v12771
    %v12780 = vpack.c.b16 %v12772, %v12772
    %v12781 = vpack.c.b16 %v12773, %v12773
    %v12782 = vpack.c.b16 %v12774, %v12774
    %v12783 = vpack.c.b16 %v12775, %v12775
    %v12784 = vpack.c.b16 %v12776, %v12776
    %v12785 = vpack.c.b16 %v12777, %v12777
    %v12786 = vrot.slane %v12778, 1
    %v12787 = vrot.slane %v12779, 1
    %v12788 = vrot.slane %v12780, 1
    %v12789 = vrot.slane %v12781, 1
    %v12790 = vrot.slane %v12782, 1
    %v12791 = vrot.slane %v12783, 1
    %v12792 = vrot.slane %v12784, 1
    %v12793 = vrot.slane %v12785, 1
    %12794 = vrot.lane.b32.xlu0 %v12786, 64
    %v12795 = vpop.permute.xlu0 %12794
    %12796 = vrot.lane.b32.xlu0 %v12787, 64
    %v12797 = vpop.permute.xlu0 %12796
    %12798 = vrot.lane.b32.xlu0 %v12788, 64
    %v12799 = vpop.permute.xlu0 %12798
    %12800 = vrot.lane.b32.xlu0 %v12789, 64
    %v12801 = vpop.permute.xlu0 %12800
    %12802 = vrot.lane.b32.xlu0 %v12790, 64
    %v12803 = vpop.permute.xlu0 %12802
    %12804 = vrot.lane.b32.xlu0 %v12791, 64
    %v12805 = vpop.permute.xlu0 %12804
    %12806 = vrot.lane.b32.xlu0 %v12792, 64
    %v12807 = vpop.permute.xlu0 %12806
    %12808 = vrot.lane.b32.xlu0 %v12793, 64
    %v12809 = vpop.permute.xlu0 %12808
    %v12818 = vunpack.c.l.b16 %v12498
    %v12819 = vunpack.c.l.b16 %v12499
    %v12820 = vunpack.c.l.b16 %v12500
    %v12821 = vunpack.c.l.b16 %v12501
    %v12822 = vunpack.c.l.b16 %v12502
    %v12823 = vunpack.c.l.b16 %v12503
    %v12824 = vunpack.c.l.b16 %v12504
    %v12825 = vunpack.c.l.b16 %v12505
    %v12826 = vpack.c.b16 %v12818, %v12818
    %v12827 = vpack.c.b16 %v12819, %v12819
    %v12828 = vpack.c.b16 %v12820, %v12820
    %v12829 = vpack.c.b16 %v12821, %v12821
    %v12830 = vpack.c.b16 %v12822, %v12822
    %v12831 = vpack.c.b16 %v12823, %v12823
    %v12832 = vpack.c.b16 %v12824, %v12824
    %v12833 = vpack.c.b16 %v12825, %v12825
    %v12835 = vshrl.u32 %v12826, 16
    %v12837 = vshll.u32 %v12826, 16
    %v12839 = vrot.slane %v12837, 1
    %v12840 = vor.u32 %v12835, %v12839
    %v12842 = vshrl.u32 %v12827, 16
    %v12844 = vshll.u32 %v12827, 16
    %v12846 = vrot.slane %v12844, 1
    %v12847 = vor.u32 %v12842, %v12846
    %v12849 = vshrl.u32 %v12828, 16
    %v12851 = vshll.u32 %v12828, 16
    %v12853 = vrot.slane %v12851, 1
    %v12854 = vor.u32 %v12849, %v12853
    %v12856 = vshrl.u32 %v12829, 16
    %v12858 = vshll.u32 %v12829, 16
    %v12860 = vrot.slane %v12858, 1
    %v12861 = vor.u32 %v12856, %v12860
    %v12863 = vshrl.u32 %v12830, 16
    %v12865 = vshll.u32 %v12830, 16
    %v12867 = vrot.slane %v12865, 1
    %v12868 = vor.u32 %v12863, %v12867
    %v12870 = vshrl.u32 %v12831, 16
    %v12872 = vshll.u32 %v12831, 16
    %v12874 = vrot.slane %v12872, 1
    %v12875 = vor.u32 %v12870, %v12874
    %v12877 = vshrl.u32 %v12832, 16
    %v12879 = vshll.u32 %v12832, 16
    %v12881 = vrot.slane %v12879, 1
    %v12882 = vor.u32 %v12877, %v12881
    %v12884 = vshrl.u32 %v12833, 16
    %v12886 = vshll.u32 %v12833, 16
    %v12888 = vrot.slane %v12886, 1
    %v12889 = vor.u32 %v12884, %v12888
    %12890 = vrot.lane.b32.xlu0 %v12840, 64
    %v12891 = vpop.permute.xlu0 %12890
    %12892 = vrot.lane.b32.xlu0 %v12847, 64
    %v12893 = vpop.permute.xlu0 %12892
    %12894 = vrot.lane.b32.xlu0 %v12854, 64
    %v12895 = vpop.permute.xlu0 %12894
    %12896 = vrot.lane.b32.xlu0 %v12861, 64
    %v12897 = vpop.permute.xlu0 %12896
    %12898 = vrot.lane.b32.xlu0 %v12868, 64
    %v12899 = vpop.permute.xlu0 %12898
    %12900 = vrot.lane.b32.xlu0 %v12875, 64
    %v12901 = vpop.permute.xlu0 %12900
    %12902 = vrot.lane.b32.xlu0 %v12882, 64
    %v12903 = vpop.permute.xlu0 %12902
    %12904 = vrot.lane.b32.xlu0 %v12889, 64
    %v12905 = vpop.permute.xlu0 %12904
    %v12914 = vunpack.c.l.b16 %v12506
    %v12915 = vunpack.c.l.b16 %v12507
    %v12916 = vunpack.c.l.b16 %v12508
    %v12917 = vunpack.c.l.b16 %v12509
    %v12918 = vunpack.c.l.b16 %v12510
    %v12919 = vunpack.c.l.b16 %v12511
    %v12920 = vunpack.c.l.b16 %v12512
    %v12921 = vunpack.c.l.b16 %v12513
    %v12922 = vpack.c.b16 %v12914, %v12914
    %v12923 = vpack.c.b16 %v12915, %v12915
    %v12924 = vpack.c.b16 %v12916, %v12916
    %v12925 = vpack.c.b16 %v12917, %v12917
    %v12926 = vpack.c.b16 %v12918, %v12918
    %v12927 = vpack.c.b16 %v12919, %v12919
    %v12928 = vpack.c.b16 %v12920, %v12920
    %v12929 = vpack.c.b16 %v12921, %v12921
    %v12930 = vrot.slane %v12922, 1
    %v12931 = vrot.slane %v12923, 1
    %v12932 = vrot.slane %v12924, 1
    %v12933 = vrot.slane %v12925, 1
    %v12934 = vrot.slane %v12926, 1
    %v12935 = vrot.slane %v12927, 1
    %v12936 = vrot.slane %v12928, 1
    %v12937 = vrot.slane %v12929, 1
    %v12940 = vsel %vm10595, %v12441, %v12595
    %v12943 = vsel %vm10595, %v12442, %v12597
    %v12946 = vsel %vm10595, %v12443, %v12599
    %v12949 = vsel %vm10595, %v12444, %v12601
    %v12952 = vsel %vm10595, %v12445, %v12603
    %v12955 = vsel %vm10595, %v12446, %v12605
    %v12958 = vsel %vm10595, %v12447, %v12607
    %v12961 = vsel %vm10595, %v12448, %v12609
    %v12964 = vsel %vm10595, %v12634, %v12667
    %v12967 = vsel %vm10595, %v12635, %v12669
    %v12970 = vsel %vm10595, %v12636, %v12671
    %v12973 = vsel %vm10595, %v12637, %v12673
    %v12976 = vsel %vm10595, %v12638, %v12675
    %v12979 = vsel %vm10595, %v12639, %v12677
    %v12982 = vsel %vm10595, %v12640, %v12679
    %v12985 = vsel %vm10595, %v12641, %v12681
    %v12988 = vsel %vm10595, %v12712, %v12795
    %v12991 = vsel %vm10595, %v12719, %v12797
    %v12994 = vsel %vm10595, %v12726, %v12799
    %v12997 = vsel %vm10595, %v12733, %v12801
    %v13000 = vsel %vm10595, %v12740, %v12803
    %v13003 = vsel %vm10595, %v12747, %v12805
    %v13006 = vsel %vm10595, %v12754, %v12807
    %v13009 = vsel %vm10595, %v12761, %v12809
    %v13012 = vsel %vm10595, %v12490, %v12891
    %v13015 = vsel %vm10595, %v12491, %v12893
    %v13018 = vsel %vm10595, %v12492, %v12895
    %v13021 = vsel %vm10595, %v12493, %v12897
    %v13024 = vsel %vm10595, %v12494, %v12899
    %v13027 = vsel %vm10595, %v12495, %v12901
    %v13030 = vsel %vm10595, %v12496, %v12903
    %v13033 = vsel %vm10595, %v12497, %v12905
    %v13058 = vrot.slane %v12964, 6
    %v13059 = vrot.slane %v12988, 4
    %v13060 = vrot.slane %v13012, 2
    %v13061 = vrot.slane %v12967, 6
    %v13062 = vrot.slane %v12991, 4
    %v13063 = vrot.slane %v13015, 2
    %v13064 = vrot.slane %v12970, 6
    %v13065 = vrot.slane %v12994, 4
    %v13066 = vrot.slane %v13018, 2
    %v13067 = vrot.slane %v12973, 6
    %v13068 = vrot.slane %v12997, 4
    %v13069 = vrot.slane %v13021, 2
    %v13070 = vrot.slane %v12976, 6
    %v13071 = vrot.slane %v13000, 4
    %v13072 = vrot.slane %v13024, 2
    %v13073 = vrot.slane %v12979, 6
    %v13074 = vrot.slane %v13003, 4
    %v13075 = vrot.slane %v13027, 2
    %v13076 = vrot.slane %v12982, 6
    %v13077 = vrot.slane %v13006, 4
    %v13078 = vrot.slane %v13030, 2
    %v13079 = vrot.slane %v12985, 6
    %v13080 = vrot.slane %v13009, 4
    %v13081 = vrot.slane %v13033, 2
    %vm13082 = vcmask 1041408
    %v13084 = vsel %vm13082, %v12940, %v13058
    %vm13085 = vcmask 1045508
    %v13088 = vsel %vm13085, %v13059, %v13060
    %vm13089 = vcmask 1043456
    %v13090 = vsel %vm13089, %v13084, %v13088
    %vm13091 = vcmask 1043458
    %v13092 = vsel %vm13091, %v12940, %v13058
    %v13093 = vsel %vm6669, %v13060, %v13059
    %vm13094 = vcmask 1045506
    %v13095 = vsel %vm13094, %v13092, %v13093
    %v13097 = vrot.slane %v13095, 2
    %v13098 = vrot.slane %v12930, 2
    %v13100 = vsel %vm13082, %v12943, %v13061
    %v13103 = vsel %vm13085, %v13062, %v13063
    %v13104 = vsel %vm13089, %v13100, %v13103
    %v13105 = vsel %vm13091, %v12943, %v13061
    %v13106 = vsel %vm6669, %v13063, %v13062
    %v13107 = vsel %vm13094, %v13105, %v13106
    %v13109 = vrot.slane %v13107, 2
    %v13110 = vrot.slane %v12931, 2
    %v13112 = vsel %vm13082, %v12946, %v13064
    %v13115 = vsel %vm13085, %v13065, %v13066
    %v13116 = vsel %vm13089, %v13112, %v13115
    %v13117 = vsel %vm13091, %v12946, %v13064
    %v13118 = vsel %vm6669, %v13066, %v13065
    %v13119 = vsel %vm13094, %v13117, %v13118
    %v13121 = vrot.slane %v13119, 2
    %v13122 = vrot.slane %v12932, 2
    %v13124 = vsel %vm13082, %v12949, %v13067
    %v13127 = vsel %vm13085, %v13068, %v13069
    %v13128 = vsel %vm13089, %v13124, %v13127
    %v13129 = vsel %vm13091, %v12949, %v13067
    %v13130 = vsel %vm6669, %v13069, %v13068
    %v13131 = vsel %vm13094, %v13129, %v13130
    %v13133 = vrot.slane %v13131, 2
    %v13134 = vrot.slane %v12933, 2
    %v13136 = vsel %vm13082, %v12952, %v13070
    %v13139 = vsel %vm13085, %v13071, %v13072
    %v13140 = vsel %vm13089, %v13136, %v13139
    %v13141 = vsel %vm13091, %v12952, %v13070
    %v13142 = vsel %vm6669, %v13072, %v13071
    %v13143 = vsel %vm13094, %v13141, %v13142
    %v13145 = vrot.slane %v13143, 2
    %v13146 = vrot.slane %v12934, 2
    %v13148 = vsel %vm13082, %v12955, %v13073
    %v13151 = vsel %vm13085, %v13074, %v13075
    %v13152 = vsel %vm13089, %v13148, %v13151
    %v13153 = vsel %vm13091, %v12955, %v13073
    %v13154 = vsel %vm6669, %v13075, %v13074
    %v13155 = vsel %vm13094, %v13153, %v13154
    %v13157 = vrot.slane %v13155, 2
    %v13158 = vrot.slane %v12935, 2
    %v13160 = vsel %vm13082, %v12958, %v13076
    %v13163 = vsel %vm13085, %v13077, %v13078
    %v13164 = vsel %vm13089, %v13160, %v13163
    %v13165 = vsel %vm13091, %v12958, %v13076
    %v13166 = vsel %vm6669, %v13078, %v13077
    %v13167 = vsel %vm13094, %v13165, %v13166
    %v13169 = vrot.slane %v13167, 2
    %v13170 = vrot.slane %v12936, 2
    %v13172 = vsel %vm13082, %v12961, %v13079
    %v13175 = vsel %vm13085, %v13080, %v13081
    %v13176 = vsel %vm13089, %v13172, %v13175
    %v13177 = vsel %vm13091, %v12961, %v13079
    %v13178 = vsel %vm6669, %v13081, %v13080
    %v13179 = vsel %vm13094, %v13177, %v13178
    %v13181 = vrot.slane %v13179, 2
    %v13182 = vrot.slane %v12937, 2
    %vm13183 = vsmask.f32 1280
    %vm13184 = vsmask.f32 3336
    %vm13185 = vmor %vm13183, %vm13184
    %vm13186 = vsmask.f32 5392
    %vm13187 = vmor %vm13185, %vm13186
    %vm13188 = vsmask.f32 7448
    %vm13189 = vmor %vm13187, %vm13188
    %v13190 = vshrl.u32 %v13090, 16
    %v13192 = vrot.slane %v13190, 6
    %v13193 = vshll.u32 %v13090, 16
    %v13195 = vrot.slane %v13193, 7
    %v13196 = vor.u32 %v13192, %v13195
    %v13197 = vrot.slane %v13196, 2
    %v13199 = vshll.u32 %v13097, 16
    %v13201 = vrot.slane %v13199, 7
    %v13202 = vsel %vm13189, %v13197, %v13201
    %v13204 = vshrl.u32 %v12930, 16
    %v13206 = vrot.slane %v13204, 6
    %v13207 = vshll.u32 %v12930, 16
    %v13209 = vrot.slane %v13207, 7
    %v13210 = vor.u32 %v13206, %v13209
    %v13211 = vrot.slane %v13210, 2
    %v13213 = vshll.u32 %v13098, 16
    %v13215 = vrot.slane %v13213, 7
    %v13216 = vsel %vm13189, %v13211, %v13215
    %v13217 = vshrl.u32 %v13104, 16
    %v13219 = vrot.slane %v13217, 6
    %v13220 = vshll.u32 %v13104, 16
    %v13222 = vrot.slane %v13220, 7
    %v13223 = vor.u32 %v13219, %v13222
    %v13224 = vrot.slane %v13223, 2
    %v13226 = vshll.u32 %v13109, 16
    %v13228 = vrot.slane %v13226, 7
    %v13229 = vsel %vm13189, %v13224, %v13228
    %v13231 = vshrl.u32 %v12931, 16
    %v13233 = vrot.slane %v13231, 6
    %v13234 = vshll.u32 %v12931, 16
    %v13236 = vrot.slane %v13234, 7
    %v13237 = vor.u32 %v13233, %v13236
    %v13238 = vrot.slane %v13237, 2
    %v13240 = vshll.u32 %v13110, 16
    %v13242 = vrot.slane %v13240, 7
    %v13243 = vsel %vm13189, %v13238, %v13242
    %v13244 = vshrl.u32 %v13116, 16
    %v13246 = vrot.slane %v13244, 6
    %v13247 = vshll.u32 %v13116, 16
    %v13249 = vrot.slane %v13247, 7
    %v13250 = vor.u32 %v13246, %v13249
    %v13251 = vrot.slane %v13250, 2
    %v13253 = vshll.u32 %v13121, 16
    %v13255 = vrot.slane %v13253, 7
    %v13256 = vsel %vm13189, %v13251, %v13255
    %v13258 = vshrl.u32 %v12932, 16
    %v13260 = vrot.slane %v13258, 6
    %v13261 = vshll.u32 %v12932, 16
    %v13263 = vrot.slane %v13261, 7
    %v13264 = vor.u32 %v13260, %v13263
    %v13265 = vrot.slane %v13264, 2
    %v13267 = vshll.u32 %v13122, 16
    %v13269 = vrot.slane %v13267, 7
    %v13270 = vsel %vm13189, %v13265, %v13269
    %v13271 = vshrl.u32 %v13128, 16
    %v13273 = vrot.slane %v13271, 6
    %v13274 = vshll.u32 %v13128, 16
    %v13276 = vrot.slane %v13274, 7
    %v13277 = vor.u32 %v13273, %v13276
    %v13278 = vrot.slane %v13277, 2
    %v13280 = vshll.u32 %v13133, 16
    %v13282 = vrot.slane %v13280, 7
    %v13283 = vsel %vm13189, %v13278, %v13282
    %v13285 = vshrl.u32 %v12933, 16
    %v13287 = vrot.slane %v13285, 6
    %v13288 = vshll.u32 %v12933, 16
    %v13290 = vrot.slane %v13288, 7
    %v13291 = vor.u32 %v13287, %v13290
    %v13292 = vrot.slane %v13291, 2
    %v13294 = vshll.u32 %v13134, 16
    %v13296 = vrot.slane %v13294, 7
    %v13297 = vsel %vm13189, %v13292, %v13296
    %v13298 = vshrl.u32 %v13140, 16
    %v13300 = vrot.slane %v13298, 6
    %v13301 = vshll.u32 %v13140, 16
    %v13303 = vrot.slane %v13301, 7
    %v13304 = vor.u32 %v13300, %v13303
    %v13305 = vrot.slane %v13304, 2
    %v13307 = vshll.u32 %v13145, 16
    %v13309 = vrot.slane %v13307, 7
    %v13310 = vsel %vm13189, %v13305, %v13309
    %v13312 = vshrl.u32 %v12934, 16
    %v13314 = vrot.slane %v13312, 6
    %v13315 = vshll.u32 %v12934, 16
    %v13317 = vrot.slane %v13315, 7
    %v13318 = vor.u32 %v13314, %v13317
    %v13319 = vrot.slane %v13318, 2
    %v13321 = vshll.u32 %v13146, 16
    %v13323 = vrot.slane %v13321, 7
    %v13324 = vsel %vm13189, %v13319, %v13323
    %v13325 = vshrl.u32 %v13152, 16
    %v13327 = vrot.slane %v13325, 6
    %v13328 = vshll.u32 %v13152, 16
    %v13330 = vrot.slane %v13328, 7
    %v13331 = vor.u32 %v13327, %v13330
    %v13332 = vrot.slane %v13331, 2
    %v13334 = vshll.u32 %v13157, 16
    %v13336 = vrot.slane %v13334, 7
    %v13337 = vsel %vm13189, %v13332, %v13336
    %v13339 = vshrl.u32 %v12935, 16
    %v13341 = vrot.slane %v13339, 6
    %v13342 = vshll.u32 %v12935, 16
    %v13344 = vrot.slane %v13342, 7
    %v13345 = vor.u32 %v13341, %v13344
    %v13346 = vrot.slane %v13345, 2
    %v13348 = vshll.u32 %v13158, 16
    %v13350 = vrot.slane %v13348, 7
    %v13351 = vsel %vm13189, %v13346, %v13350
    %v13352 = vshrl.u32 %v13164, 16
    %v13354 = vrot.slane %v13352, 6
    %v13355 = vshll.u32 %v13164, 16
    %v13357 = vrot.slane %v13355, 7
    %v13358 = vor.u32 %v13354, %v13357
    %v13359 = vrot.slane %v13358, 2
    %v13361 = vshll.u32 %v13169, 16
    %v13363 = vrot.slane %v13361, 7
    %v13364 = vsel %vm13189, %v13359, %v13363
    %v13366 = vshrl.u32 %v12936, 16
    %v13368 = vrot.slane %v13366, 6
    %v13369 = vshll.u32 %v12936, 16
    %v13371 = vrot.slane %v13369, 7
    %v13372 = vor.u32 %v13368, %v13371
    %v13373 = vrot.slane %v13372, 2
    %v13375 = vshll.u32 %v13170, 16
    %v13377 = vrot.slane %v13375, 7
    %v13378 = vsel %vm13189, %v13373, %v13377
    %v13379 = vshrl.u32 %v13176, 16
    %v13381 = vrot.slane %v13379, 6
    %v13382 = vshll.u32 %v13176, 16
    %v13384 = vrot.slane %v13382, 7
    %v13385 = vor.u32 %v13381, %v13384
    %v13386 = vrot.slane %v13385, 2
    %v13388 = vshll.u32 %v13181, 16
    %v13390 = vrot.slane %v13388, 7
    %v13391 = vsel %vm13189, %v13386, %v13390
    %v13393 = vshrl.u32 %v12937, 16
    %v13395 = vrot.slane %v13393, 6
    %v13396 = vshll.u32 %v12937, 16
    %v13398 = vrot.slane %v13396, 7
    %v13399 = vor.u32 %v13395, %v13398
    %v13400 = vrot.slane %v13399, 2
    %v13402 = vshll.u32 %v13182, 16
    %v13404 = vrot.slane %v13402, 7
    %v13405 = vsel %vm13189, %v13400, %v13404
    %v13406 = vld [vmem:[%s5] sm:$0xf]
    %v13407 = vld [vmem:[%s5 + $0x4] sm:$0xf]
    %v13408 = vld [vmem:[%s5 + $0x8] sm:$0xf]
    %v13409 = vld [vmem:[%s5 + $0xc] sm:$0xf]
    %v13410 = vld [vmem:[%s5 + $0x10] sm:$0xf]
    %v13411 = vld [vmem:[%s5 + $0x14] sm:$0xf]
    %v13412 = vld [vmem:[%s5 + $0x18] sm:$0xf]
    %v13413 = vld [vmem:[%s5 + $0x1c] sm:$0xf]
    %v13414 = vld [vmem:[%s5 + $0x20] sm:$0xf]
    %v13415 = vld [vmem:[%s5 + $0x24] sm:$0xf]
    %v13416 = vld [vmem:[%s5 + $0x28] sm:$0xf]
    %v13417 = vld [vmem:[%s5 + $0x2c] sm:$0xf]
    %v13418 = vld [vmem:[%s5 + $0x30] sm:$0xf]
    %v13419 = vld [vmem:[%s5 + $0x34] sm:$0xf]
    %v13420 = vld [vmem:[%s5 + $0x38] sm:$0xf]
    %v13421 = vld [vmem:[%s5 + $0x3c] sm:$0xf]
    %v13422 = vld [vmem:[%s5 + $0x40] sm:$0xf]
    %v13423 = vld [vmem:[%s5 + $0x44] sm:$0xf]
    %v13424 = vld [vmem:[%s5 + $0x48] sm:$0xf]
    %v13425 = vld [vmem:[%s5 + $0x4c] sm:$0xf]
    %v13426 = vld [vmem:[%s5 + $0x50] sm:$0xf]
    %v13427 = vld [vmem:[%s5 + $0x54] sm:$0xf]
    %v13428 = vld [vmem:[%s5 + $0x58] sm:$0xf]
    %v13429 = vld [vmem:[%s5 + $0x5c] sm:$0xf]
    %v13430 = vld [vmem:[%s5 + $0x60] sm:$0xf]
    %v13431 = vld [vmem:[%s5 + $0x64] sm:$0xf]
    %v13432 = vld [vmem:[%s5 + $0x68] sm:$0xf]
    %v13433 = vld [vmem:[%s5 + $0x6c] sm:$0xf]
    %v13434 = vld [vmem:[%s5 + $0x70] sm:$0xf]
    %v13435 = vld [vmem:[%s5 + $0x74] sm:$0xf]
    %v13436 = vld [vmem:[%s5 + $0x78] sm:$0xf]
    %v13437 = vld [vmem:[%s5 + $0x7c] sm:$0xf]
    %v13438 = vld [vmem:[%s5 + $0x80] sm:$0xf]
    %v13439 = vld [vmem:[%s5 + $0x84] sm:$0xf]
    %v13440 = vld [vmem:[%s5 + $0x88] sm:$0xf]
    %v13441 = vld [vmem:[%s5 + $0x8c] sm:$0xf]
    %v13442 = vld [vmem:[%s5 + $0x90] sm:$0xf]
    %v13443 = vld [vmem:[%s5 + $0x94] sm:$0xf]
    %v13444 = vld [vmem:[%s5 + $0x98] sm:$0xf]
    %v13445 = vld [vmem:[%s5 + $0x9c] sm:$0xf]
    %v13446 = vld [vmem:[%s5 + $0xa0] sm:$0xf]
    %v13447 = vld [vmem:[%s5 + $0xa4] sm:$0xf]
    %v13448 = vld [vmem:[%s5 + $0xa8] sm:$0xf]
    %v13449 = vld [vmem:[%s5 + $0xac] sm:$0xf]
    %v13450 = vld [vmem:[%s5 + $0xb0] sm:$0xf]
    %v13451 = vld [vmem:[%s5 + $0xb4] sm:$0xf]
    %v13452 = vld [vmem:[%s5 + $0xb8] sm:$0xf]
    %v13453 = vld [vmem:[%s5 + $0xbc] sm:$0xf]
    %v13454 = vld [vmem:[%s5 + $0xc0] sm:$0xf]
    %v13455 = vld [vmem:[%s5 + $0xc4] sm:$0xf]
    %v13456 = vld [vmem:[%s5 + $0xc8] sm:$0xf]
    %v13457 = vld [vmem:[%s5 + $0xcc] sm:$0xf]
    %v13458 = vld [vmem:[%s5 + $0xd0] sm:$0xf]
    %v13459 = vld [vmem:[%s5 + $0xd4] sm:$0xf]
    %v13460 = vld [vmem:[%s5 + $0xd8] sm:$0xf]
    %v13461 = vld [vmem:[%s5 + $0xdc] sm:$0xf]
    %v13462 = vld [vmem:[%s5 + $0xe0] sm:$0xf]
    %v13463 = vld [vmem:[%s5 + $0xe4] sm:$0xf]
    %v13464 = vld [vmem:[%s5 + $0xe8] sm:$0xf]
    %v13465 = vld [vmem:[%s5 + $0xec] sm:$0xf]
    %v13466 = vld [vmem:[%s5 + $0xf0] sm:$0xf]
    %v13467 = vld [vmem:[%s5 + $0xf4] sm:$0xf]
    %v13468 = vld [vmem:[%s5 + $0xf8] sm:$0xf]
    %v13469 = vld [vmem:[%s5 + $0xfc] sm:$0xf]
    %v13470 = vld [vmem:[%s5 + $0x100] sm:$0xf]
    %v13471 = vld [vmem:[%s5 + $0x104] sm:$0xf]
    %v13472 = vld [vmem:[%s5 + $0x108] sm:$0xf]
    %v13473 = vld [vmem:[%s5 + $0x10c] sm:$0xf]
    %v13474 = vld [vmem:[%s5 + $0x110] sm:$0xf]
    %v13475 = vld [vmem:[%s5 + $0x114] sm:$0xf]
    %v13476 = vld [vmem:[%s5 + $0x118] sm:$0xf]
    %v13477 = vld [vmem:[%s5 + $0x11c] sm:$0xf]
    %v13478 = vld [vmem:[%s6] sm:$0x1]
    %v13480 = vperm.slane %v13478, 0
    %13483 = vst [vmem:[#allocation1] ss:$4 sm:$0xff] %v13202
    %s13485 = scalar_lea.vmem [#allocation1], 1
    %13486 = vst [vmem:[%s13485] ss:$4 sm:$0xff] %v13229
    %s13488 = scalar_lea.vmem [#allocation1], 2
    %13489 = vst [vmem:[%s13488] ss:$4 sm:$0xff] %v13256
    %s13491 = scalar_lea.vmem [#allocation1], 3
    %13492 = vst [vmem:[%s13491] ss:$4 sm:$0xff] %v13283
    %s13494 = scalar_lea.vmem [#allocation1], 32
    %13495 = vst [vmem:[%s13494] ss:$4 sm:$0xff] %v13216
    %s13497 = scalar_lea.vmem [#allocation1], 33
    %13498 = vst [vmem:[%s13497] ss:$4 sm:$0xff] %v13243
    %s13500 = scalar_lea.vmem [#allocation1], 34
    %13501 = vst [vmem:[%s13500] ss:$4 sm:$0xff] %v13270
    %s13503 = scalar_lea.vmem [#allocation1], 35
    %13504 = vst [vmem:[%s13503] ss:$4 sm:$0xff] %v13297
    %v13505 = vld.sshfl [vmem:[#allocation1] sm:$0xff pattern:$0x73625140]
    %v13506 = vld.sshfl [vmem:[#allocation1 + $0x8] sm:$0xff pattern:$0x73625140]
    %v13507 = vld.sshfl [vmem:[#allocation1 + $0x10] sm:$0xff pattern:$0x73625140]
    %v13508 = vld.sshfl [vmem:[#allocation1 + $0x18] sm:$0xff pattern:$0x73625140]
    %v13509 = vld.sshfl [vmem:[#allocation1 + $0x20] sm:$0xff pattern:$0x73625140]
    %13511 = vst [vmem:[#allocation1] ss:$4 sm:$0xff] %v13310
    %13513 = vst [vmem:[%s13485] ss:$4 sm:$0xff] %v13337
    %13515 = vst [vmem:[%s13488] ss:$4 sm:$0xff] %v13364
    %13517 = vst [vmem:[%s13491] ss:$4 sm:$0xff] %v13391
    %13519 = vst [vmem:[%s13494] ss:$4 sm:$0xff] %v13324
    %13521 = vst [vmem:[%s13497] ss:$4 sm:$0xff] %v13351
    %13523 = vst [vmem:[%s13500] ss:$4 sm:$0xff] %v13378
    %13525 = vst [vmem:[%s13503] ss:$4 sm:$0xff] %v13405
    %v13526 = vld.sshfl [vmem:[#allocation1] sm:$0xff pattern:$0x73625140]
    %v13527 = vld.sshfl [vmem:[#allocation1 + $0x8] sm:$0xff pattern:$0x73625140]
    %v13528 = vld.sshfl [vmem:[#allocation1 + $0x10] sm:$0xff pattern:$0x73625140]
    %v13529 = vld.sshfl [vmem:[#allocation1 + $0x18] sm:$0xff pattern:$0x73625140]
    %v13530 = vld.sshfl [vmem:[#allocation1 + $0x20] sm:$0xff pattern:$0x73625140]
    %v13611 = vunpack.c.l.b16 %v13406
    %v13612 = vunpack.c.l.b16 %v13407
    %v13613 = vunpack.c.l.b16 %v13408
    %v13614 = vunpack.c.l.b16 %v13409
    %v13615 = vunpack.c.l.b16 %v13410
    %v13616 = vunpack.c.l.b16 %v13411
    %v13617 = vunpack.c.l.b16 %v13412
    %v13618 = vunpack.c.l.b16 %v13413
    %v13619 = vunpack.c.l.b16 %v13414
    %v13620 = vunpack.c.l.b16 %v13415
    %v13621 = vunpack.c.l.b16 %v13416
    %v13622 = vunpack.c.l.b16 %v13417
    %v13623 = vunpack.c.l.b16 %v13418
    %v13624 = vunpack.c.l.b16 %v13419
    %v13625 = vunpack.c.l.b16 %v13420
    %v13626 = vunpack.c.l.b16 %v13421
    %v13627 = vunpack.c.l.b16 %v13422
    %v13628 = vunpack.c.l.b16 %v13423
    %v13629 = vunpack.c.l.b16 %v13424
    %v13630 = vunpack.c.l.b16 %v13425
    %v13631 = vunpack.c.l.b16 %v13426
    %v13632 = vunpack.c.l.b16 %v13427
    %v13633 = vunpack.c.l.b16 %v13428
    %v13634 = vunpack.c.l.b16 %v13429
    %v13635 = vunpack.c.l.b16 %v13430
    %v13636 = vunpack.c.l.b16 %v13431
    %v13637 = vunpack.c.l.b16 %v13432
    %v13638 = vunpack.c.l.b16 %v13433
    %v13639 = vunpack.c.l.b16 %v13434
    %v13640 = vunpack.c.l.b16 %v13435
    %v13641 = vunpack.c.l.b16 %v13436
    %v13642 = vunpack.c.l.b16 %v13437
    %v13643 = vunpack.c.l.b16 %v13438
    %v13644 = vunpack.c.l.b16 %v13439
    %v13645 = vunpack.c.l.b16 %v13440
    %v13646 = vunpack.c.l.b16 %v13441
    %v13647 = vunpack.c.l.b16 %v13442
    %v13648 = vunpack.c.l.b16 %v13443
    %v13649 = vunpack.c.l.b16 %v13444
    %v13650 = vunpack.c.l.b16 %v13445
    %v13651 = vunpack.c.l.b16 %v13446
    %v13652 = vunpack.c.l.b16 %v13447
    %v13653 = vunpack.c.l.b16 %v13448
    %v13654 = vunpack.c.l.b16 %v13449
    %v13655 = vunpack.c.l.b16 %v13450
    %v13656 = vunpack.c.l.b16 %v13451
    %v13657 = vunpack.c.l.b16 %v13452
    %v13658 = vunpack.c.l.b16 %v13453
    %v13659 = vunpack.c.l.b16 %v13454
    %v13660 = vunpack.c.l.b16 %v13455
    %v13661 = vunpack.c.l.b16 %v13456
    %v13662 = vunpack.c.l.b16 %v13457
    %v13663 = vunpack.c.l.b16 %v13458
    %v13664 = vunpack.c.l.b16 %v13459
    %v13665 = vunpack.c.l.b16 %v13460
    %v13666 = vunpack.c.l.b16 %v13461
    %v13667 = vunpack.c.l.b16 %v13462
    %v13668 = vunpack.c.l.b16 %v13463
    %v13669 = vunpack.c.l.b16 %v13464
    %v13670 = vunpack.c.l.b16 %v13465
    %v13671 = vunpack.c.l.b16 %v13466
    %v13672 = vunpack.c.l.b16 %v13467
    %v13673 = vunpack.c.l.b16 %v13468
    %v13674 = vunpack.c.l.b16 %v13469
    %v13675 = vunpack.c.l.b16 %v13470
    %v13676 = vunpack.c.l.b16 %v13471
    %v13677 = vunpack.c.l.b16 %v13472
    %v13678 = vunpack.c.l.b16 %v13473
    %v13679 = vunpack.c.l.b16 %v13474
    %v13680 = vunpack.c.l.b16 %v13475
    %v13681 = vunpack.c.l.b16 %v13476
    %v13682 = vunpack.c.l.b16 %v13477
    %v13683 = vpack.c.b16 %v13612, %v13611
    %v13684 = vpack.c.b16 %v13614, %v13613
    %v13685 = vpack.c.b16 %v13616, %v13615
    %v13686 = vpack.c.b16 %v13618, %v13617
    %v13687 = vpack.c.b16 %v13620, %v13619
    %v13688 = vpack.c.b16 %v13622, %v13621
    %v13689 = vpack.c.b16 %v13624, %v13623
    %v13690 = vpack.c.b16 %v13626, %v13625
    %v13691 = vpack.c.b16 %v13628, %v13627
    %v13692 = vpack.c.b16 %v13630, %v13629
    %v13693 = vpack.c.b16 %v13632, %v13631
    %v13694 = vpack.c.b16 %v13634, %v13633
    %v13695 = vpack.c.b16 %v13636, %v13635
    %v13696 = vpack.c.b16 %v13638, %v13637
    %v13697 = vpack.c.b16 %v13640, %v13639
    %v13698 = vpack.c.b16 %v13642, %v13641
    %v13699 = vpack.c.b16 %v13644, %v13643
    %v13700 = vpack.c.b16 %v13646, %v13645
    %v13701 = vpack.c.b16 %v13648, %v13647
    %v13702 = vpack.c.b16 %v13650, %v13649
    %v13703 = vpack.c.b16 %v13652, %v13651
    %v13704 = vpack.c.b16 %v13654, %v13653
    %v13705 = vpack.c.b16 %v13656, %v13655
    %v13706 = vpack.c.b16 %v13658, %v13657
    %v13707 = vpack.c.b16 %v13660, %v13659
    %v13708 = vpack.c.b16 %v13662, %v13661
    %v13709 = vpack.c.b16 %v13664, %v13663
    %v13710 = vpack.c.b16 %v13666, %v13665
    %v13711 = vpack.c.b16 %v13668, %v13667
    %v13712 = vpack.c.b16 %v13670, %v13669
    %v13713 = vpack.c.b16 %v13672, %v13671
    %v13714 = vpack.c.b16 %v13674, %v13673
    %v13715 = vpack.c.b16 %v13676, %v13675
    %v13716 = vpack.c.b16 %v13678, %v13677
    %v13717 = vpack.c.b16 %v13680, %v13679
    %v13718 = vpack.c.b16 %v13682, %v13681
    %v13755 = vsel %vm10595, %v13509, 0
    %v13757 = vsel %vm10595, %v13530, 0
    %13759 = vmatpush.bf16.msra.mxu0 %v13690
    %13760 = vmatpush.bf16.msra.mxu0 %v13689
    %13761 = vmatpush.bf16.msra.mxu0 %v13688
    %13762 = vmatpush.bf16.msra.mxu0 %v13687
    %13763 = vmatpush.bf16.msra.mxu0 %v13686
    %13764 = vmatpush.bf16.msra.mxu0 %v13685
    %13765 = vmatpush.bf16.msra.mxu0 %v13684
    %13766 = vmatpush.bf16.msra.mxu0 %v13683
    %13767 = vmatmul.bf16.gmra.mxu0 %v13505
    %v13768 = vpop.f32.mrf.mxu0
    %v13769 = vadd.f32 %v13480, %v13768
    %v13770 = vpop.f32.mrf.mxu0
    %v13771 = vadd.f32 %v13480, %v13770
    %13772 = vmatmul.bf16.gmra.mxu0 %v13526
    %v13773 = vpop.f32.mrf.mxu0
    %v13774 = vadd.f32 %v13480, %v13773
    %v13775 = vpop.f32.mrf.mxu0
    %v13776 = vadd.f32 %v13480, %v13775
    %13777 = vdwg.mxu0
    %13778 = vmatpush.bf16.msra.mxu0 %v13698
    %13779 = vmatpush.bf16.msra.mxu0 %v13697
    %13780 = vmatpush.bf16.msra.mxu0 %v13696
    %13781 = vmatpush.bf16.msra.mxu0 %v13695
    %13782 = vmatpush.bf16.msra.mxu0 %v13694
    %13783 = vmatpush.bf16.msra.mxu0 %v13693
    %13784 = vmatpush.bf16.msra.mxu0 %v13692
    %13785 = vmatpush.bf16.msra.mxu0 %v13691
    %13786 = vmatmul.bf16.gmra.mxu0 %v13506
    %v13787 = vpop.f32.mrf.mxu0
    %v13788 = vadd.f32 %v13769, %v13787
    %v13789 = vpop.f32.mrf.mxu0
    %v13790 = vadd.f32 %v13771, %v13789
    %13791 = vmatmul.bf16.gmra.mxu0 %v13527
    %v13792 = vpop.f32.mrf.mxu0
    %v13793 = vadd.f32 %v13774, %v13792
    %v13794 = vpop.f32.mrf.mxu0
    %v13795 = vadd.f32 %v13776, %v13794
    %13796 = vdwg.mxu0
    %13797 = vmatpush.bf16.msra.mxu0 %v13706
    %13798 = vmatpush.bf16.msra.mxu0 %v13705
    %13799 = vmatpush.bf16.msra.mxu0 %v13704
    %13800 = vmatpush.bf16.msra.mxu0 %v13703
    %13801 = vmatpush.bf16.msra.mxu0 %v13702
    %13802 = vmatpush.bf16.msra.mxu0 %v13701
    %13803 = vmatpush.bf16.msra.mxu0 %v13700
    %13804 = vmatpush.bf16.msra.mxu0 %v13699
    %13805 = vmatmul.bf16.gmra.mxu0 %v13507
    %v13806 = vpop.f32.mrf.mxu0
    %v13807 = vadd.f32 %v13788, %v13806
    %v13808 = vpop.f32.mrf.mxu0
    %v13809 = vadd.f32 %v13790, %v13808
    %13810 = vmatmul.bf16.gmra.mxu0 %v13528
    %v13811 = vpop.f32.mrf.mxu0
    %v13812 = vadd.f32 %v13793, %v13811
    %v13813 = vpop.f32.mrf.mxu0
    %v13814 = vadd.f32 %v13795, %v13813
    %13815 = vdwg.mxu0
    %13816 = vmatpush.bf16.msra.mxu0 %v13714
    %13817 = vmatpush.bf16.msra.mxu0 %v13713
    %13818 = vmatpush.bf16.msra.mxu0 %v13712
    %13819 = vmatpush.bf16.msra.mxu0 %v13711
    %13820 = vmatpush.bf16.msra.mxu0 %v13710
    %13821 = vmatpush.bf16.msra.mxu0 %v13709
    %13822 = vmatpush.bf16.msra.mxu0 %v13708
    %13823 = vmatpush.bf16.msra.mxu0 %v13707
    %13824 = vmatmul.bf16.gmra.mxu0 %v13508
    %v13825 = vpop.f32.mrf.mxu0
    %v13826 = vadd.f32 %v13807, %v13825
    %v13827 = vpop.f32.mrf.mxu0
    %v13828 = vadd.f32 %v13809, %v13827
    %13829 = vmatmul.bf16.gmra.mxu0 %v13529
    %v13830 = vpop.f32.mrf.mxu0
    %v13831 = vadd.f32 %v13812, %v13830
    %v13832 = vpop.f32.mrf.mxu0
    %v13833 = vadd.f32 %v13814, %v13832
    %13834 = vdwg.mxu0
    %13835 = vmatpush.bf16.msra.mxu0 0
    %13836 = vmatpush.bf16.msra.mxu0 0
    %13837 = vmatpush.bf16.msra.mxu0 0
    %13838 = vmatpush.bf16.msra.mxu0 0
    %13839 = vmatpush.bf16.msra.mxu0 %v13718
    %13840 = vmatpush.bf16.msra.mxu0 %v13717
    %13841 = vmatpush.bf16.msra.mxu0 %v13716
    %13842 = vmatpush.bf16.msra.mxu0 %v13715
    %13843 = vmatmul.bf16.gmra.mxu0 %v13755
    %v13844 = vpop.f32.mrf.mxu0
    %v13845 = vadd.f32 %v13826, %v13844
    %v13846 = vpop.f32.mrf.mxu0
    %v13847 = vadd.f32 %v13828, %v13846
    %13848 = vmatmul.bf16.gmra.mxu0 %v13757
    %v13849 = vpop.f32.mrf.mxu0
    %v13850 = vadd.f32 %v13831, %v13849
    %v13851 = vpop.f32.mrf.mxu0
    %v13852 = vadd.f32 %v13833, %v13851
    %13853 = vdwg.mxu0
    %v13854 = vmax.f32 %v13845, 0.0
    %v13855 = vmax.f32 %v13847, 0.0
    %v13856 = vmax.f32 %v13850, 0.0
    %v13857 = vmax.f32 %v13852, 0.0
    %v13862 = vrot.slane %v13854, 2
    %v13863 = vrot.slane %v13854, 4
    %v13864 = vrot.slane %v13854, 6
    %v13865 = vrot.slane %v13855, 2
    %v13866 = vrot.slane %v13855, 4
    %v13867 = vrot.slane %v13855, 6
    %v13868 = vrot.slane %v13856, 2
    %v13869 = vrot.slane %v13856, 4
    %v13870 = vrot.slane %v13856, 6
    %v13871 = vrot.slane %v13857, 2
    %v13872 = vrot.slane %v13857, 4
    %v13873 = vrot.slane %v13857, 6
    %v13886 = vrot.slane %v13854, 7
    %v13887 = vrot.slane %v13886, 2
    %v13888 = vrot.slane %v13862, 7
    %v13889 = vrot.slane %v13888, 2
    %v13890 = vrot.slane %v13863, 7
    %v13891 = vrot.slane %v13890, 2
    %v13892 = vrot.slane %v13864, 7
    %v13893 = vrot.slane %v13892, 2
    %v13894 = vrot.slane %v13855, 7
    %v13895 = vrot.slane %v13894, 2
    %v13896 = vrot.slane %v13865, 7
    %v13897 = vrot.slane %v13896, 2
    %v13898 = vrot.slane %v13866, 7
    %v13899 = vrot.slane %v13898, 2
    %v13900 = vrot.slane %v13867, 7
    %v13901 = vrot.slane %v13900, 2
    %v13902 = vrot.slane %v13856, 7
    %v13903 = vrot.slane %v13902, 2
    %v13904 = vrot.slane %v13868, 7
    %v13905 = vrot.slane %v13904, 2
    %v13906 = vrot.slane %v13869, 7
    %v13907 = vrot.slane %v13906, 2
    %v13908 = vrot.slane %v13870, 7
    %v13909 = vrot.slane %v13908, 2
    %v13910 = vrot.slane %v13857, 7
    %v13911 = vrot.slane %v13910, 2
    %v13912 = vrot.slane %v13871, 7
    %v13913 = vrot.slane %v13912, 2
    %v13914 = vrot.slane %v13872, 7
    %v13915 = vrot.slane %v13914, 2
    %v13916 = vrot.slane %v13873, 7
    %v13917 = vrot.slane %v13916, 2
    %v13934 = vmax.f32 %v13854, %v13887
    %v13935 = vmax.f32 %v13862, %v13889
    %v13936 = vmax.f32 %v13863, %v13891
    %v13937 = vmax.f32 %v13864, %v13893
    %v13938 = vmax.f32 %v13855, %v13895
    %v13939 = vmax.f32 %v13865, %v13897
    %v13940 = vmax.f32 %v13866, %v13899
    %v13941 = vmax.f32 %v13867, %v13901
    %v13942 = vmax.f32 %v13856, %v13903
    %v13943 = vmax.f32 %v13868, %v13905
    %v13944 = vmax.f32 %v13869, %v13907
    %v13945 = vmax.f32 %v13870, %v13909
    %v13946 = vmax.f32 %v13857, %v13911
    %v13947 = vmax.f32 %v13871, %v13913
    %v13948 = vmax.f32 %v13872, %v13915
    %v13949 = vmax.f32 %v13873, %v13917
    %v13950 = vmax.f32 %v13934, %v13936
    %v13951 = vmax.f32 %v13935, %v13937
    %v13952 = vmax.f32 %v13938, %v13940
    %v13953 = vmax.f32 %v13939, %v13941
    %v13954 = vmax.f32 %v13942, %v13944
    %v13955 = vmax.f32 %v13943, %v13945
    %v13956 = vmax.f32 %v13946, %v13948
    %v13957 = vmax.f32 %v13947, %v13949
    %v13960 = vperm.slane %v13950, 0
    %v13961 = vperm.slane %v13954, 0
    %v13962 = vsel %vm8955, %v13961, %v13960
    %v13966 = vperm.slane %v13951, 0
    %v13967 = vperm.slane %v13955, 0
    %v13968 = vsel %vm8955, %v13967, %v13966
    %v13972 = vperm.slane %v13952, 0
    %v13973 = vperm.slane %v13956, 0
    %v13974 = vsel %vm8955, %v13973, %v13972
    %v13978 = vperm.slane %v13953, 0
    %v13979 = vperm.slane %v13957, 0
    %v13980 = vsel %vm8955, %v13979, %v13978
    %v13982 = vpack.c.bf16 %v13962, %v13962
    %v13983 = vpack.c.bf16 %v13968, %v13968
    %v13984 = vpack.c.bf16 %v13974, %v13974
    %v13985 = vpack.c.bf16 %v13980, %v13980
    %v13986 = vld [vmem:[#allocation5] sm:$0xff]
    %v13987 = vld [vmem:[#allocation5 + $0x8] sm:$0xff]
    %v13988 = vld [vmem:[#allocation5 + $0x10] sm:$0xff]
    %v13989 = vld [vmem:[#allocation5 + $0x18] sm:$0xff]
    %v13990 = vld [vmem:[#allocation5 + $0x20] sm:$0xff]
    %v13991 = vld [vmem:[#allocation5 + $0x28] sm:$0xff]
    %v13992 = vld [vmem:[#allocation5 + $0x30] sm:$0xff]
    %v13993 = vld [vmem:[#allocation5 + $0x38] sm:$0xff]
    %v13994 = vld [vmem:[#allocation5 + $0x40] sm:$0xff]
    %v13995 = vld [vmem:[#allocation5 + $0x48] sm:$0xff]
    %v13996 = vld [vmem:[#allocation5 + $0x50] sm:$0xff]
    %v13997 = vld [vmem:[#allocation5 + $0x58] sm:$0xff]
    %v13998 = vld [vmem:[#allocation5 + $0x60] sm:$0xff]
    %v13999 = vld [vmem:[#allocation5 + $0x68] sm:$0xff]
    %v14000 = vld [vmem:[#allocation5 + $0x70] sm:$0xff]
    %v14001 = vld [vmem:[#allocation5 + $0x78] sm:$0xff]
    %v14002 = vld [vmem:[#allocation5 + $0x80] sm:$0xff]
    %v14003 = vld [vmem:[#allocation5 + $0x88] sm:$0xff]
    %v14004 = vld [vmem:[#allocation5 + $0x90] sm:$0xff]
    %v14005 = vld [vmem:[#allocation5 + $0x98] sm:$0xff]
    %v14006 = vld [vmem:[#allocation5 + $0xa0] sm:$0xff]
    %v14007 = vld [vmem:[#allocation5 + $0xa8] sm:$0xff]
    %v14008 = vld [vmem:[#allocation5 + $0xb0] sm:$0xff]
    %v14009 = vld [vmem:[#allocation5 + $0xb8] sm:$0xff]
    %v14010 = vld [vmem:[#allocation5 + $0xc0] sm:$0xff]
    %v14011 = vld [vmem:[#allocation5 + $0xc8] sm:$0xff]
    %v14012 = vld [vmem:[#allocation5 + $0xd0] sm:$0xff]
    %v14013 = vld [vmem:[#allocation5 + $0xd8] sm:$0xff]
    %v14014 = vld [vmem:[#allocation5 + $0xe0] sm:$0xff]
    %v14015 = vld [vmem:[#allocation5 + $0xe8] sm:$0xff]
    %v14016 = vld [vmem:[#allocation5 + $0xf0] sm:$0xff]
    %v14017 = vld [vmem:[#allocation5 + $0xf8] sm:$0xff]
    %v14018 = vld [vmem:[#allocation5 + $0x100] sm:$0xff]
    %v14019 = vld [vmem:[#allocation5 + $0x108] sm:$0xff]
    %v14020 = vld [vmem:[#allocation5 + $0x110] sm:$0xff]
    %v14021 = vld [vmem:[#allocation5 + $0x118] sm:$0xff]
    %v14022 = vld [vmem:[#allocation5 + $0x120] sm:$0xff]
    %v14023 = vld [vmem:[#allocation5 + $0x128] sm:$0xff]
    %v14024 = vld [vmem:[#allocation5 + $0x130] sm:$0xff]
    %v14025 = vld [vmem:[#allocation5 + $0x138] sm:$0xff]
    %v14026 = vld [vmem:[#allocation5 + $0x140] sm:$0xff]
    %v14027 = vld [vmem:[#allocation5 + $0x148] sm:$0xff]
    %v14028 = vld [vmem:[#allocation5 + $0x150] sm:$0xff]
    %v14029 = vld [vmem:[#allocation5 + $0x158] sm:$0xff]
    %v14030 = vld [vmem:[#allocation5 + $0x160] sm:$0xff]
    %v14031 = vld [vmem:[#allocation5 + $0x168] sm:$0xff]
    %v14032 = vld [vmem:[#allocation5 + $0x170] sm:$0xff]
    %v14033 = vld [vmem:[#allocation5 + $0x178] sm:$0xff]
    %v14034 = vld [vmem:[#allocation5 + $0x180] sm:$0xff]
    %v14035 = vld [vmem:[#allocation5 + $0x188] sm:$0xff]
    %v14036 = vld [vmem:[#allocation5 + $0x190] sm:$0xff]
    %v14037 = vld [vmem:[#allocation5 + $0x198] sm:$0xff]
    %v14038 = vld [vmem:[#allocation5 + $0x1a0] sm:$0xff]
    %v14039 = vld [vmem:[#allocation5 + $0x1a8] sm:$0xff]
    %v14040 = vld [vmem:[#allocation5 + $0x1b0] sm:$0xff]
    %v14041 = vld [vmem:[#allocation5 + $0x1b8] sm:$0xff]
    %v14042 = vld [vmem:[#allocation5 + $0x1c0] sm:$0xff]
    %v14043 = vld [vmem:[#allocation5 + $0x1c8] sm:$0xff]
    %v14044 = vld [vmem:[#allocation5 + $0x1d0] sm:$0xff]
    %v14045 = vld [vmem:[#allocation5 + $0x1d8] sm:$0xff]
    %v14046 = vld [vmem:[#allocation5 + $0x1e0] sm:$0xff]
    %v14047 = vld [vmem:[#allocation5 + $0x1e8] sm:$0xff]
    %v14048 = vld [vmem:[#allocation5 + $0x1f0] sm:$0xff]
    %v14049 = vld [vmem:[#allocation5 + $0x1f8] sm:$0xff]
    %v14050 = vld [vmem:[#allocation5 + $0x200] sm:$0xff]
    %v14051 = vld [vmem:[#allocation5 + $0x208] sm:$0xff]
    %v14052 = vld [vmem:[#allocation5 + $0x210] sm:$0xff]
    %v14053 = vld [vmem:[#allocation5 + $0x218] sm:$0xff]
    %v14054 = vld [vmem:[#allocation5 + $0x220] sm:$0xff]
    %v14055 = vld [vmem:[#allocation5 + $0x228] sm:$0xff]
    %v14056 = vld [vmem:[#allocation5 + $0x230] sm:$0xff]
    %v14057 = vld [vmem:[#allocation5 + $0x238] sm:$0xff]
    %v14058 = vld [vmem:[#allocation5 + $0x240] sm:$0xff]
    %v14059 = vld [vmem:[#allocation5 + $0x248] sm:$0xff]
    %v14060 = vld [vmem:[#allocation5 + $0x250] sm:$0xff]
    %v14061 = vld [vmem:[#allocation5 + $0x258] sm:$0xff]
    %v14062 = vld [vmem:[#allocation5 + $0x260] sm:$0xff]
    %v14063 = vld [vmem:[#allocation5 + $0x268] sm:$0xff]
    %v14064 = vld [vmem:[#allocation5 + $0x270] sm:$0xff]
    %v14065 = vld [vmem:[#allocation5 + $0x278] sm:$0xff]
    %v14066 = vld [vmem:[#allocation5 + $0x280] sm:$0xff]
    %v14067 = vld [vmem:[#allocation5 + $0x288] sm:$0xff]
    %v14068 = vld [vmem:[#allocation5 + $0x290] sm:$0xff]
    %v14069 = vld [vmem:[#allocation5 + $0x298] sm:$0xff]
    %v14070 = vld [vmem:[#allocation5 + $0x2a0] sm:$0xff]
    %v14071 = vld [vmem:[#allocation5 + $0x2a8] sm:$0xff]
    %v14072 = vld [vmem:[#allocation5 + $0x2b0] sm:$0xff]
    %v14073 = vld [vmem:[#allocation5 + $0x2b8] sm:$0xff]
    %v14074 = vld [vmem:[#allocation5 + $0x2c0] sm:$0xff]
    %v14075 = vld [vmem:[#allocation5 + $0x2c8] sm:$0xff]
    %v14076 = vld [vmem:[#allocation5 + $0x2d0] sm:$0xff]
    %v14077 = vld [vmem:[#allocation5 + $0x2d8] sm:$0xff]
    %v14078 = vld [vmem:[#allocation5 + $0x2e0] sm:$0xff]
    %v14079 = vld [vmem:[#allocation5 + $0x2e8] sm:$0xff]
    %v14080 = vld [vmem:[#allocation5 + $0x2f0] sm:$0xff]
    %v14081 = vld [vmem:[#allocation5 + $0x2f8] sm:$0xff]
    %v14082 = vld [vmem:[#allocation5 + $0x300] sm:$0xff]
    %v14083 = vld [vmem:[#allocation5 + $0x308] sm:$0xff]
    %v14084 = vld [vmem:[#allocation5 + $0x310] sm:$0xff]
    %v14085 = vld [vmem:[#allocation5 + $0x318] sm:$0xff]
    %v14086 = vld [vmem:[#allocation5 + $0x320] sm:$0xff]
    %v14087 = vld [vmem:[#allocation5 + $0x328] sm:$0xff]
    %v14088 = vld [vmem:[#allocation5 + $0x330] sm:$0xff]
    %v14089 = vld [vmem:[#allocation5 + $0x338] sm:$0xff]
    %v14090 = vld [vmem:[#allocation5 + $0x340] sm:$0xff]
    %v14091 = vld [vmem:[#allocation5 + $0x348] sm:$0xff]
    %v14092 = vld [vmem:[#allocation5 + $0x350] sm:$0xff]
    %v14093 = vld [vmem:[#allocation5 + $0x358] sm:$0xff]
    %v14094 = vld [vmem:[#allocation5 + $0x360] sm:$0xff]
    %v14095 = vld [vmem:[#allocation5 + $0x368] sm:$0xff]
    %v14096 = vld [vmem:[#allocation5 + $0x370] sm:$0xff]
    %v14097 = vld [vmem:[#allocation5 + $0x378] sm:$0xff]
    %v14098 = vld [vmem:[#allocation5 + $0x380] sm:$0xff]
    %v14099 = vld [vmem:[#allocation5 + $0x388] sm:$0xff]
    %v14100 = vld [vmem:[#allocation5 + $0x390] sm:$0xff]
    %v14101 = vld [vmem:[#allocation5 + $0x398] sm:$0xff]
    %v14102 = vld [vmem:[#allocation5 + $0x3a0] sm:$0xff]
    %v14103 = vld [vmem:[#allocation5 + $0x3a8] sm:$0xff]
    %v14104 = vld [vmem:[#allocation5 + $0x3b0] sm:$0xff]
    %v14105 = vld [vmem:[#allocation5 + $0x3b8] sm:$0xff]
    %v14106 = vld [vmem:[#allocation5 + $0x3c0] sm:$0xff]
    %v14107 = vld [vmem:[#allocation5 + $0x3c8] sm:$0xff]
    %v14108 = vld [vmem:[#allocation5 + $0x3d0] sm:$0xff]
    %v14109 = vld [vmem:[#allocation5 + $0x3d8] sm:$0xff]
    %v14110 = vld [vmem:[#allocation5 + $0x3e0] sm:$0xff]
    %v14111 = vld [vmem:[#allocation5 + $0x3e8] sm:$0xff]
    %v14112 = vld [vmem:[#allocation5 + $0x3f0] sm:$0xff]
    %v14113 = vld [vmem:[#allocation5 + $0x3f8] sm:$0xff]
    %v14114 = vld [vmem:[%s8] sm:$0xf]
    %v14116 = vperm.slane %v14114, 0
    %v14117 = vperm.slane %v14114, 1
    %v14118 = vperm.slane %v14114, 2
    %v14119 = vperm.slane %v14114, 3
    %v14252 = vunpack.c.l.b16 %v13986
    %v14253 = vunpack.c.h.b16 %v13986
    %v14254 = vunpack.c.l.b16 %v13987
    %v14255 = vunpack.c.h.b16 %v13987
    %v14256 = vunpack.c.l.b16 %v13988
    %v14257 = vunpack.c.h.b16 %v13988
    %v14258 = vunpack.c.l.b16 %v13989
    %v14259 = vunpack.c.h.b16 %v13989
    %v14260 = vunpack.c.l.b16 %v13990
    %v14261 = vunpack.c.h.b16 %v13990
    %v14262 = vunpack.c.l.b16 %v13991
    %v14263 = vunpack.c.h.b16 %v13991
    %v14264 = vunpack.c.l.b16 %v13992
    %v14265 = vunpack.c.h.b16 %v13992
    %v14266 = vunpack.c.l.b16 %v13993
    %v14267 = vunpack.c.h.b16 %v13993
    %v14268 = vunpack.c.l.b16 %v13994
    %v14269 = vunpack.c.h.b16 %v13994
    %v14270 = vunpack.c.l.b16 %v13995
    %v14271 = vunpack.c.h.b16 %v13995
    %v14272 = vunpack.c.l.b16 %v13996
    %v14273 = vunpack.c.h.b16 %v13996
    %v14274 = vunpack.c.l.b16 %v13997
    %v14275 = vunpack.c.h.b16 %v13997
    %v14276 = vunpack.c.l.b16 %v13998
    %v14277 = vunpack.c.h.b16 %v13998
    %v14278 = vunpack.c.l.b16 %v13999
    %v14279 = vunpack.c.h.b16 %v13999
    %v14280 = vunpack.c.l.b16 %v14000
    %v14281 = vunpack.c.h.b16 %v14000
    %v14282 = vunpack.c.l.b16 %v14001
    %v14283 = vunpack.c.h.b16 %v14001
    %v14284 = vunpack.c.l.b16 %v14002
    %v14285 = vunpack.c.h.b16 %v14002
    %v14286 = vunpack.c.l.b16 %v14003
    %v14287 = vunpack.c.h.b16 %v14003
    %v14288 = vunpack.c.l.b16 %v14004
    %v14289 = vunpack.c.h.b16 %v14004
    %v14290 = vunpack.c.l.b16 %v14005
    %v14291 = vunpack.c.h.b16 %v14005
    %v14292 = vunpack.c.l.b16 %v14006
    %v14293 = vunpack.c.h.b16 %v14006
    %v14294 = vunpack.c.l.b16 %v14007
    %v14295 = vunpack.c.h.b16 %v14007
    %v14296 = vunpack.c.l.b16 %v14008
    %v14297 = vunpack.c.h.b16 %v14008
    %v14298 = vunpack.c.l.b16 %v14009
    %v14299 = vunpack.c.h.b16 %v14009
    %v14300 = vunpack.c.l.b16 %v14010
    %v14301 = vunpack.c.h.b16 %v14010
    %v14302 = vunpack.c.l.b16 %v14011
    %v14303 = vunpack.c.h.b16 %v14011
    %v14304 = vunpack.c.l.b16 %v14012
    %v14305 = vunpack.c.h.b16 %v14012
    %v14306 = vunpack.c.l.b16 %v14013
    %v14307 = vunpack.c.h.b16 %v14013
    %v14308 = vunpack.c.l.b16 %v14014
    %v14309 = vunpack.c.h.b16 %v14014
    %v14310 = vunpack.c.l.b16 %v14015
    %v14311 = vunpack.c.h.b16 %v14015
    %v14312 = vunpack.c.l.b16 %v14016
    %v14313 = vunpack.c.h.b16 %v14016
    %v14314 = vunpack.c.l.b16 %v14017
    %v14315 = vunpack.c.h.b16 %v14017
    %v14316 = vunpack.c.l.b16 %v14018
    %v14317 = vunpack.c.h.b16 %v14018
    %v14318 = vunpack.c.l.b16 %v14019
    %v14319 = vunpack.c.h.b16 %v14019
    %v14320 = vunpack.c.l.b16 %v14020
    %v14321 = vunpack.c.h.b16 %v14020
    %v14322 = vunpack.c.l.b16 %v14021
    %v14323 = vunpack.c.h.b16 %v14021
    %v14324 = vunpack.c.l.b16 %v14022
    %v14325 = vunpack.c.h.b16 %v14022
    %v14326 = vunpack.c.l.b16 %v14023
    %v14327 = vunpack.c.h.b16 %v14023
    %v14328 = vunpack.c.l.b16 %v14024
    %v14329 = vunpack.c.h.b16 %v14024
    %v14330 = vunpack.c.l.b16 %v14025
    %v14331 = vunpack.c.h.b16 %v14025
    %v14332 = vunpack.c.l.b16 %v14026
    %v14333 = vunpack.c.h.b16 %v14026
    %v14334 = vunpack.c.l.b16 %v14027
    %v14335 = vunpack.c.h.b16 %v14027
    %v14336 = vunpack.c.l.b16 %v14028
    %v14337 = vunpack.c.h.b16 %v14028
    %v14338 = vunpack.c.l.b16 %v14029
    %v14339 = vunpack.c.h.b16 %v14029
    %v14340 = vunpack.c.l.b16 %v14030
    %v14341 = vunpack.c.h.b16 %v14030
    %v14342 = vunpack.c.l.b16 %v14031
    %v14343 = vunpack.c.h.b16 %v14031
    %v14344 = vunpack.c.l.b16 %v14032
    %v14345 = vunpack.c.h.b16 %v14032
    %v14346 = vunpack.c.l.b16 %v14033
    %v14347 = vunpack.c.h.b16 %v14033
    %v14348 = vunpack.c.l.b16 %v14034
    %v14349 = vunpack.c.h.b16 %v14034
    %v14350 = vunpack.c.l.b16 %v14035
    %v14351 = vunpack.c.h.b16 %v14035
    %v14352 = vunpack.c.l.b16 %v14036
    %v14353 = vunpack.c.h.b16 %v14036
    %v14354 = vunpack.c.l.b16 %v14037
    %v14355 = vunpack.c.h.b16 %v14037
    %v14356 = vunpack.c.l.b16 %v14038
    %v14357 = vunpack.c.h.b16 %v14038
    %v14358 = vunpack.c.l.b16 %v14039
    %v14359 = vunpack.c.h.b16 %v14039
    %v14360 = vunpack.c.l.b16 %v14040
    %v14361 = vunpack.c.h.b16 %v14040
    %v14362 = vunpack.c.l.b16 %v14041
    %v14363 = vunpack.c.h.b16 %v14041
    %v14364 = vunpack.c.l.b16 %v14042
    %v14365 = vunpack.c.h.b16 %v14042
    %v14366 = vunpack.c.l.b16 %v14043
    %v14367 = vunpack.c.h.b16 %v14043
    %v14368 = vunpack.c.l.b16 %v14044
    %v14369 = vunpack.c.h.b16 %v14044
    %v14370 = vunpack.c.l.b16 %v14045
    %v14371 = vunpack.c.h.b16 %v14045
    %v14372 = vunpack.c.l.b16 %v14046
    %v14373 = vunpack.c.h.b16 %v14046
    %v14374 = vunpack.c.l.b16 %v14047
    %v14375 = vunpack.c.h.b16 %v14047
    %v14376 = vunpack.c.l.b16 %v14048
    %v14377 = vunpack.c.h.b16 %v14048
    %v14378 = vunpack.c.l.b16 %v14049
    %v14379 = vunpack.c.h.b16 %v14049
    %v14380 = vunpack.c.l.b16 %v14050
    %v14381 = vunpack.c.h.b16 %v14050
    %v14382 = vunpack.c.l.b16 %v14051
    %v14383 = vunpack.c.h.b16 %v14051
    %v14384 = vunpack.c.l.b16 %v14052
    %v14385 = vunpack.c.h.b16 %v14052
    %v14386 = vunpack.c.l.b16 %v14053
    %v14387 = vunpack.c.h.b16 %v14053
    %v14388 = vunpack.c.l.b16 %v14054
    %v14389 = vunpack.c.h.b16 %v14054
    %v14390 = vunpack.c.l.b16 %v14055
    %v14391 = vunpack.c.h.b16 %v14055
    %v14392 = vunpack.c.l.b16 %v14056
    %v14393 = vunpack.c.h.b16 %v14056
    %v14394 = vunpack.c.l.b16 %v14057
    %v14395 = vunpack.c.h.b16 %v14057
    %v14396 = vunpack.c.l.b16 %v14058
    %v14397 = vunpack.c.h.b16 %v14058
    %v14398 = vunpack.c.l.b16 %v14059
    %v14399 = vunpack.c.h.b16 %v14059
    %v14400 = vunpack.c.l.b16 %v14060
    %v14401 = vunpack.c.h.b16 %v14060
    %v14402 = vunpack.c.l.b16 %v14061
    %v14403 = vunpack.c.h.b16 %v14061
    %v14404 = vunpack.c.l.b16 %v14062
    %v14405 = vunpack.c.h.b16 %v14062
    %v14406 = vunpack.c.l.b16 %v14063
    %v14407 = vunpack.c.h.b16 %v14063
    %v14408 = vunpack.c.l.b16 %v14064
    %v14409 = vunpack.c.h.b16 %v14064
    %v14410 = vunpack.c.l.b16 %v14065
    %v14411 = vunpack.c.h.b16 %v14065
    %v14412 = vunpack.c.l.b16 %v14066
    %v14413 = vunpack.c.h.b16 %v14066
    %v14414 = vunpack.c.l.b16 %v14067
    %v14415 = vunpack.c.h.b16 %v14067
    %v14416 = vunpack.c.l.b16 %v14068
    %v14417 = vunpack.c.h.b16 %v14068
    %v14418 = vunpack.c.l.b16 %v14069
    %v14419 = vunpack.c.h.b16 %v14069
    %v14420 = vunpack.c.l.b16 %v14070
    %v14421 = vunpack.c.h.b16 %v14070
    %v14422 = vunpack.c.l.b16 %v14071
    %v14423 = vunpack.c.h.b16 %v14071
    %v14424 = vunpack.c.l.b16 %v14072
    %v14425 = vunpack.c.h.b16 %v14072
    %v14426 = vunpack.c.l.b16 %v14073
    %v14427 = vunpack.c.h.b16 %v14073
    %v14428 = vunpack.c.l.b16 %v14074
    %v14429 = vunpack.c.h.b16 %v14074
    %v14430 = vunpack.c.l.b16 %v14075
    %v14431 = vunpack.c.h.b16 %v14075
    %v14432 = vunpack.c.l.b16 %v14076
    %v14433 = vunpack.c.h.b16 %v14076
    %v14434 = vunpack.c.l.b16 %v14077
    %v14435 = vunpack.c.h.b16 %v14077
    %v14436 = vunpack.c.l.b16 %v14078
    %v14437 = vunpack.c.h.b16 %v14078
    %v14438 = vunpack.c.l.b16 %v14079
    %v14439 = vunpack.c.h.b16 %v14079
    %v14440 = vunpack.c.l.b16 %v14080
    %v14441 = vunpack.c.h.b16 %v14080
    %v14442 = vunpack.c.l.b16 %v14081
    %v14443 = vunpack.c.h.b16 %v14081
    %v14444 = vunpack.c.l.b16 %v14082
    %v14445 = vunpack.c.h.b16 %v14082
    %v14446 = vunpack.c.l.b16 %v14083
    %v14447 = vunpack.c.h.b16 %v14083
    %v14448 = vunpack.c.l.b16 %v14084
    %v14449 = vunpack.c.h.b16 %v14084
    %v14450 = vunpack.c.l.b16 %v14085
    %v14451 = vunpack.c.h.b16 %v14085
    %v14452 = vunpack.c.l.b16 %v14086
    %v14453 = vunpack.c.h.b16 %v14086
    %v14454 = vunpack.c.l.b16 %v14087
    %v14455 = vunpack.c.h.b16 %v14087
    %v14456 = vunpack.c.l.b16 %v14088
    %v14457 = vunpack.c.h.b16 %v14088
    %v14458 = vunpack.c.l.b16 %v14089
    %v14459 = vunpack.c.h.b16 %v14089
    %v14460 = vunpack.c.l.b16 %v14090
    %v14461 = vunpack.c.h.b16 %v14090
    %v14462 = vunpack.c.l.b16 %v14091
    %v14463 = vunpack.c.h.b16 %v14091
    %v14464 = vunpack.c.l.b16 %v14092
    %v14465 = vunpack.c.h.b16 %v14092
    %v14466 = vunpack.c.l.b16 %v14093
    %v14467 = vunpack.c.h.b16 %v14093
    %v14468 = vunpack.c.l.b16 %v14094
    %v14469 = vunpack.c.h.b16 %v14094
    %v14470 = vunpack.c.l.b16 %v14095
    %v14471 = vunpack.c.h.b16 %v14095
    %v14472 = vunpack.c.l.b16 %v14096
    %v14473 = vunpack.c.h.b16 %v14096
    %v14474 = vunpack.c.l.b16 %v14097
    %v14475 = vunpack.c.h.b16 %v14097
    %v14476 = vunpack.c.l.b16 %v14098
    %v14477 = vunpack.c.h.b16 %v14098
    %v14478 = vunpack.c.l.b16 %v14099
    %v14479 = vunpack.c.h.b16 %v14099
    %v14480 = vunpack.c.l.b16 %v14100
    %v14481 = vunpack.c.h.b16 %v14100
    %v14482 = vunpack.c.l.b16 %v14101
    %v14483 = vunpack.c.h.b16 %v14101
    %v14484 = vunpack.c.l.b16 %v14102
    %v14485 = vunpack.c.h.b16 %v14102
    %v14486 = vunpack.c.l.b16 %v14103
    %v14487 = vunpack.c.h.b16 %v14103
    %v14488 = vunpack.c.l.b16 %v14104
    %v14489 = vunpack.c.h.b16 %v14104
    %v14490 = vunpack.c.l.b16 %v14105
    %v14491 = vunpack.c.h.b16 %v14105
    %v14492 = vunpack.c.l.b16 %v14106
    %v14493 = vunpack.c.h.b16 %v14106
    %v14494 = vunpack.c.l.b16 %v14107
    %v14495 = vunpack.c.h.b16 %v14107
    %v14496 = vunpack.c.l.b16 %v14108
    %v14497 = vunpack.c.h.b16 %v14108
    %v14498 = vunpack.c.l.b16 %v14109
    %v14499 = vunpack.c.h.b16 %v14109
    %v14500 = vunpack.c.l.b16 %v14110
    %v14501 = vunpack.c.h.b16 %v14110
    %v14502 = vunpack.c.l.b16 %v14111
    %v14503 = vunpack.c.h.b16 %v14111
    %v14504 = vunpack.c.l.b16 %v14112
    %v14505 = vunpack.c.h.b16 %v14112
    %v14506 = vunpack.c.l.b16 %v14113
    %v14507 = vunpack.c.h.b16 %v14113
    %v14508 = vpack.c.b16 %v14256, %v14252
    %v14509 = vpack.c.b16 %v14257, %v14253
    %v14510 = vpack.c.b16 %v14258, %v14254
    %v14511 = vpack.c.b16 %v14259, %v14255
    %v14512 = vpack.c.b16 %v14264, %v14260
    %v14513 = vpack.c.b16 %v14265, %v14261
    %v14514 = vpack.c.b16 %v14266, %v14262
    %v14515 = vpack.c.b16 %v14267, %v14263
    %v14516 = vpack.c.b16 %v14272, %v14268
    %v14517 = vpack.c.b16 %v14273, %v14269
    %v14518 = vpack.c.b16 %v14274, %v14270
    %v14519 = vpack.c.b16 %v14275, %v14271
    %v14520 = vpack.c.b16 %v14280, %v14276
    %v14521 = vpack.c.b16 %v14281, %v14277
    %v14522 = vpack.c.b16 %v14282, %v14278
    %v14523 = vpack.c.b16 %v14283, %v14279
    %v14524 = vpack.c.b16 %v14288, %v14284
    %v14525 = vpack.c.b16 %v14289, %v14285
    %v14526 = vpack.c.b16 %v14290, %v14286
    %v14527 = vpack.c.b16 %v14291, %v14287
    %v14528 = vpack.c.b16 %v14296, %v14292
    %v14529 = vpack.c.b16 %v14297, %v14293
    %v14530 = vpack.c.b16 %v14298, %v14294
    %v14531 = vpack.c.b16 %v14299, %v14295
    %v14532 = vpack.c.b16 %v14304, %v14300
    %v14533 = vpack.c.b16 %v14305, %v14301
    %v14534 = vpack.c.b16 %v14306, %v14302
    %v14535 = vpack.c.b16 %v14307, %v14303
    %v14536 = vpack.c.b16 %v14312, %v14308
    %v14537 = vpack.c.b16 %v14313, %v14309
    %v14538 = vpack.c.b16 %v14314, %v14310
    %v14539 = vpack.c.b16 %v14315, %v14311
    %v14540 = vpack.c.b16 %v14320, %v14316
    %v14541 = vpack.c.b16 %v14321, %v14317
    %v14542 = vpack.c.b16 %v14322, %v14318
    %v14543 = vpack.c.b16 %v14323, %v14319
    %v14544 = vpack.c.b16 %v14328, %v14324
    %v14545 = vpack.c.b16 %v14329, %v14325
    %v14546 = vpack.c.b16 %v14330, %v14326
    %v14547 = vpack.c.b16 %v14331, %v14327
    %v14548 = vpack.c.b16 %v14336, %v14332
    %v14549 = vpack.c.b16 %v14337, %v14333
    %v14550 = vpack.c.b16 %v14338, %v14334
    %v14551 = vpack.c.b16 %v14339, %v14335
    %v14552 = vpack.c.b16 %v14344, %v14340
    %v14553 = vpack.c.b16 %v14345, %v14341
    %v14554 = vpack.c.b16 %v14346, %v14342
    %v14555 = vpack.c.b16 %v14347, %v14343
    %v14556 = vpack.c.b16 %v14352, %v14348
    %v14557 = vpack.c.b16 %v14353, %v14349
    %v14558 = vpack.c.b16 %v14354, %v14350
    %v14559 = vpack.c.b16 %v14355, %v14351
    %v14560 = vpack.c.b16 %v14360, %v14356
    %v14561 = vpack.c.b16 %v14361, %v14357
    %v14562 = vpack.c.b16 %v14362, %v14358
    %v14563 = vpack.c.b16 %v14363, %v14359
    %v14564 = vpack.c.b16 %v14368, %v14364
    %v14565 = vpack.c.b16 %v14369, %v14365
    %v14566 = vpack.c.b16 %v14370, %v14366
    %v14567 = vpack.c.b16 %v14371, %v14367
    %v14568 = vpack.c.b16 %v14376, %v14372
    %v14569 = vpack.c.b16 %v14377, %v14373
    %v14570 = vpack.c.b16 %v14378, %v14374
    %v14571 = vpack.c.b16 %v14379, %v14375
    %v14572 = vpack.c.b16 %v14384, %v14380
    %v14573 = vpack.c.b16 %v14385, %v14381
    %v14574 = vpack.c.b16 %v14386, %v14382
    %v14575 = vpack.c.b16 %v14387, %v14383
    %v14576 = vpack.c.b16 %v14392, %v14388
    %v14577 = vpack.c.b16 %v14393, %v14389
    %v14578 = vpack.c.b16 %v14394, %v14390
    %v14579 = vpack.c.b16 %v14395, %v14391
    %v14580 = vpack.c.b16 %v14400, %v14396
    %v14581 = vpack.c.b16 %v14401, %v14397
    %v14582 = vpack.c.b16 %v14402, %v14398
    %v14583 = vpack.c.b16 %v14403, %v14399
    %v14584 = vpack.c.b16 %v14408, %v14404
    %v14585 = vpack.c.b16 %v14409, %v14405
    %v14586 = vpack.c.b16 %v14410, %v14406
    %v14587 = vpack.c.b16 %v14411, %v14407
    %v14588 = vpack.c.b16 %v14416, %v14412
    %v14589 = vpack.c.b16 %v14417, %v14413
    %v14590 = vpack.c.b16 %v14418, %v14414
    %v14591 = vpack.c.b16 %v14419, %v14415
    %v14592 = vpack.c.b16 %v14424, %v14420
    %v14593 = vpack.c.b16 %v14425, %v14421
    %v14594 = vpack.c.b16 %v14426, %v14422
    %v14595 = vpack.c.b16 %v14427, %v14423
    %v14596 = vpack.c.b16 %v14432, %v14428
    %v14597 = vpack.c.b16 %v14433, %v14429
    %v14598 = vpack.c.b16 %v14434, %v14430
    %v14599 = vpack.c.b16 %v14435, %v14431
    %v14600 = vpack.c.b16 %v14440, %v14436
    %v14601 = vpack.c.b16 %v14441, %v14437
    %v14602 = vpack.c.b16 %v14442, %v14438
    %v14603 = vpack.c.b16 %v14443, %v14439
    %v14604 = vpack.c.b16 %v14448, %v14444
    %v14605 = vpack.c.b16 %v14449, %v14445
    %v14606 = vpack.c.b16 %v14450, %v14446
    %v14607 = vpack.c.b16 %v14451, %v14447
    %v14608 = vpack.c.b16 %v14456, %v14452
    %v14609 = vpack.c.b16 %v14457, %v14453
    %v14610 = vpack.c.b16 %v14458, %v14454
    %v14611 = vpack.c.b16 %v14459, %v14455
    %v14612 = vpack.c.b16 %v14464, %v14460
    %v14613 = vpack.c.b16 %v14465, %v14461
    %v14614 = vpack.c.b16 %v14466, %v14462
    %v14615 = vpack.c.b16 %v14467, %v14463
    %v14616 = vpack.c.b16 %v14472, %v14468
    %v14617 = vpack.c.b16 %v14473, %v14469
    %v14618 = vpack.c.b16 %v14474, %v14470
    %v14619 = vpack.c.b16 %v14475, %v14471
    %v14620 = vpack.c.b16 %v14480, %v14476
    %v14621 = vpack.c.b16 %v14481, %v14477
    %v14622 = vpack.c.b16 %v14482, %v14478
    %v14623 = vpack.c.b16 %v14483, %v14479
    %v14624 = vpack.c.b16 %v14488, %v14484
    %v14625 = vpack.c.b16 %v14489, %v14485
    %v14626 = vpack.c.b16 %v14490, %v14486
    %v14627 = vpack.c.b16 %v14491, %v14487
    %v14628 = vpack.c.b16 %v14496, %v14492
    %v14629 = vpack.c.b16 %v14497, %v14493
    %v14630 = vpack.c.b16 %v14498, %v14494
    %v14631 = vpack.c.b16 %v14499, %v14495
    %v14632 = vpack.c.b16 %v14504, %v14500
    %v14633 = vpack.c.b16 %v14505, %v14501
    %v14634 = vpack.c.b16 %v14506, %v14502
    %v14635 = vpack.c.b16 %v14507, %v14503
    %14764 = vmatpush.bf16.msra.mxu0 %v14536
    %14765 = vmatpush.bf16.msra.mxu0 %v14532
    %14766 = vmatpush.bf16.msra.mxu0 %v14528
    %14767 = vmatpush.bf16.msra.mxu0 %v14524
    %14768 = vmatpush.bf16.msra.mxu0 %v14520
    %14769 = vmatpush.bf16.msra.mxu0 %v14516
    %14770 = vmatpush.bf16.msra.mxu0 %v14512
    %14771 = vmatpush.bf16.msra.mxu0 %v14508
    %14772 = vmatmul.bf16.gmra.mxu0 %v13982
    %v14773 = vpop.f32.mrf.mxu0
    %v14774 = vadd.f32 %v14116, %v14773
    %v14775 = vpop.f32.mrf.mxu0
    %14776 = vdwg.mxu0
    %14777 = vmatpush.bf16.msra.mxu0 %v14568
    %14778 = vmatpush.bf16.msra.mxu0 %v14564
    %14779 = vmatpush.bf16.msra.mxu0 %v14560
    %14780 = vmatpush.bf16.msra.mxu0 %v14556
    %14781 = vmatpush.bf16.msra.mxu0 %v14552
    %14782 = vmatpush.bf16.msra.mxu0 %v14548
    %14783 = vmatpush.bf16.msra.mxu0 %v14544
    %14784 = vmatpush.bf16.msra.mxu0 %v14540
    %14785 = vmatmul.bf16.gmra.mxu0 %v13983
    %v14786 = vpop.f32.mrf.mxu0
    %v14787 = vadd.f32 %v14774, %v14786
    %v14788 = vpop.f32.mrf.mxu0
    %14789 = vdwg.mxu0
    %14790 = vmatpush.bf16.msra.mxu0 %v14600
    %14791 = vmatpush.bf16.msra.mxu0 %v14596
    %14792 = vmatpush.bf16.msra.mxu0 %v14592
    %14793 = vmatpush.bf16.msra.mxu0 %v14588
    %14794 = vmatpush.bf16.msra.mxu0 %v14584
    %14795 = vmatpush.bf16.msra.mxu0 %v14580
    %14796 = vmatpush.bf16.msra.mxu0 %v14576
    %14797 = vmatpush.bf16.msra.mxu0 %v14572
    %14798 = vmatmul.bf16.gmra.mxu0 %v13984
    %v14799 = vpop.f32.mrf.mxu0
    %v14800 = vadd.f32 %v14787, %v14799
    %v14801 = vpop.f32.mrf.mxu0
    %14802 = vdwg.mxu0
    %14803 = vmatpush.bf16.msra.mxu0 %v14632
    %14804 = vmatpush.bf16.msra.mxu0 %v14628
    %14805 = vmatpush.bf16.msra.mxu0 %v14624
    %14806 = vmatpush.bf16.msra.mxu0 %v14620
    %14807 = vmatpush.bf16.msra.mxu0 %v14616
    %14808 = vmatpush.bf16.msra.mxu0 %v14612
    %14809 = vmatpush.bf16.msra.mxu0 %v14608
    %14810 = vmatpush.bf16.msra.mxu0 %v14604
    %14811 = vmatmul.bf16.gmra.mxu0 %v13985
    %v14812 = vpop.f32.mrf.mxu0
    %v14813 = vadd.f32 %v14800, %v14812
    %v14814 = vpop.f32.mrf.mxu0
    %14815 = vdwg.mxu0
    %14816 = vmatpush.bf16.msra.mxu0 %v14537
    %14817 = vmatpush.bf16.msra.mxu0 %v14533
    %14818 = vmatpush.bf16.msra.mxu0 %v14529
    %14819 = vmatpush.bf16.msra.mxu0 %v14525
    %14820 = vmatpush.bf16.msra.mxu0 %v14521
    %14821 = vmatpush.bf16.msra.mxu0 %v14517
    %14822 = vmatpush.bf16.msra.mxu0 %v14513
    %14823 = vmatpush.bf16.msra.mxu0 %v14509
    %14824 = vmatmul.bf16.gmra.mxu0 %v13982
    %v14825 = vpop.f32.mrf.mxu0
    %v14826 = vadd.f32 %v14117, %v14825
    %v14827 = vpop.f32.mrf.mxu0
    %14828 = vdwg.mxu0
    %14829 = vmatpush.bf16.msra.mxu0 %v14569
    %14830 = vmatpush.bf16.msra.mxu0 %v14565
    %14831 = vmatpush.bf16.msra.mxu0 %v14561
    %14832 = vmatpush.bf16.msra.mxu0 %v14557
    %14833 = vmatpush.bf16.msra.mxu0 %v14553
    %14834 = vmatpush.bf16.msra.mxu0 %v14549
    %14835 = vmatpush.bf16.msra.mxu0 %v14545
    %14836 = vmatpush.bf16.msra.mxu0 %v14541
    %14837 = vmatmul.bf16.gmra.mxu0 %v13983
    %v14838 = vpop.f32.mrf.mxu0
    %v14839 = vadd.f32 %v14826, %v14838
    %v14840 = vpop.f32.mrf.mxu0
    %14841 = vdwg.mxu0
    %14842 = vmatpush.bf16.msra.mxu0 %v14601
    %14843 = vmatpush.bf16.msra.mxu0 %v14597
    %14844 = vmatpush.bf16.msra.mxu0 %v14593
    %14845 = vmatpush.bf16.msra.mxu0 %v14589
    %14846 = vmatpush.bf16.msra.mxu0 %v14585
    %14847 = vmatpush.bf16.msra.mxu0 %v14581
    %14848 = vmatpush.bf16.msra.mxu0 %v14577
    %14849 = vmatpush.bf16.msra.mxu0 %v14573
    %14850 = vmatmul.bf16.gmra.mxu0 %v13984
    %v14851 = vpop.f32.mrf.mxu0
    %v14852 = vadd.f32 %v14839, %v14851
    %v14853 = vpop.f32.mrf.mxu0
    %14854 = vdwg.mxu0
    %14855 = vmatpush.bf16.msra.mxu0 %v14633
    %14856 = vmatpush.bf16.msra.mxu0 %v14629
    %14857 = vmatpush.bf16.msra.mxu0 %v14625
    %14858 = vmatpush.bf16.msra.mxu0 %v14621
    %14859 = vmatpush.bf16.msra.mxu0 %v14617
    %14860 = vmatpush.bf16.msra.mxu0 %v14613
    %14861 = vmatpush.bf16.msra.mxu0 %v14609
    %14862 = vmatpush.bf16.msra.mxu0 %v14605
    %14863 = vmatmul.bf16.gmra.mxu0 %v13985
    %v14864 = vpop.f32.mrf.mxu0
    %v14865 = vadd.f32 %v14852, %v14864
    %v14866 = vpop.f32.mrf.mxu0
    %14867 = vdwg.mxu0
    %14868 = vmatpush.bf16.msra.mxu0 %v14538
    %14869 = vmatpush.bf16.msra.mxu0 %v14534
    %14870 = vmatpush.bf16.msra.mxu0 %v14530
    %14871 = vmatpush.bf16.msra.mxu0 %v14526
    %14872 = vmatpush.bf16.msra.mxu0 %v14522
    %14873 = vmatpush.bf16.msra.mxu0 %v14518
    %14874 = vmatpush.bf16.msra.mxu0 %v14514
    %14875 = vmatpush.bf16.msra.mxu0 %v14510
    %14876 = vmatmul.bf16.gmra.mxu0 %v13982
    %v14877 = vpop.f32.mrf.mxu0
    %v14878 = vadd.f32 %v14118, %v14877
    %v14879 = vpop.f32.mrf.mxu0
    %14880 = vdwg.mxu0
    %14881 = vmatpush.bf16.msra.mxu0 %v14570
    %14882 = vmatpush.bf16.msra.mxu0 %v14566
    %14883 = vmatpush.bf16.msra.mxu0 %v14562
    %14884 = vmatpush.bf16.msra.mxu0 %v14558
    %14885 = vmatpush.bf16.msra.mxu0 %v14554
    %14886 = vmatpush.bf16.msra.mxu0 %v14550
    %14887 = vmatpush.bf16.msra.mxu0 %v14546
    %14888 = vmatpush.bf16.msra.mxu0 %v14542
    %14889 = vmatmul.bf16.gmra.mxu0 %v13983
    %v14890 = vpop.f32.mrf.mxu0
    %v14891 = vadd.f32 %v14878, %v14890
    %v14892 = vpop.f32.mrf.mxu0
    %14893 = vdwg.mxu0
    %14894 = vmatpush.bf16.msra.mxu0 %v14602
    %14895 = vmatpush.bf16.msra.mxu0 %v14598
    %14896 = vmatpush.bf16.msra.mxu0 %v14594
    %14897 = vmatpush.bf16.msra.mxu0 %v14590
    %14898 = vmatpush.bf16.msra.mxu0 %v14586
    %14899 = vmatpush.bf16.msra.mxu0 %v14582
    %14900 = vmatpush.bf16.msra.mxu0 %v14578
    %14901 = vmatpush.bf16.msra.mxu0 %v14574
    %14902 = vmatmul.bf16.gmra.mxu0 %v13984
    %v14903 = vpop.f32.mrf.mxu0
    %v14904 = vadd.f32 %v14891, %v14903
    %v14905 = vpop.f32.mrf.mxu0
    %14906 = vdwg.mxu0
    %14907 = vmatpush.bf16.msra.mxu0 %v14634
    %14908 = vmatpush.bf16.msra.mxu0 %v14630
    %14909 = vmatpush.bf16.msra.mxu0 %v14626
    %14910 = vmatpush.bf16.msra.mxu0 %v14622
    %14911 = vmatpush.bf16.msra.mxu0 %v14618
    %14912 = vmatpush.bf16.msra.mxu0 %v14614
    %14913 = vmatpush.bf16.msra.mxu0 %v14610
    %14914 = vmatpush.bf16.msra.mxu0 %v14606
    %14915 = vmatmul.bf16.gmra.mxu0 %v13985
    %v14916 = vpop.f32.mrf.mxu0
    %v14917 = vadd.f32 %v14904, %v14916
    %v14918 = vpop.f32.mrf.mxu0
    %14919 = vdwg.mxu0
    %14920 = vmatpush.bf16.msra.mxu0 %v14539
    %14921 = vmatpush.bf16.msra.mxu0 %v14535
    %14922 = vmatpush.bf16.msra.mxu0 %v14531
    %14923 = vmatpush.bf16.msra.mxu0 %v14527
    %14924 = vmatpush.bf16.msra.mxu0 %v14523
    %14925 = vmatpush.bf16.msra.mxu0 %v14519
    %14926 = vmatpush.bf16.msra.mxu0 %v14515
    %14927 = vmatpush.bf16.msra.mxu0 %v14511
    %14928 = vmatmul.bf16.gmra.mxu0 %v13982
    %v14929 = vpop.f32.mrf.mxu0
    %v14930 = vadd.f32 %v14119, %v14929
    %v14931 = vpop.f32.mrf.mxu0
    %14932 = vdwg.mxu0
    %14933 = vmatpush.bf16.msra.mxu0 %v14571
    %14934 = vmatpush.bf16.msra.mxu0 %v14567
    %14935 = vmatpush.bf16.msra.mxu0 %v14563
    %14936 = vmatpush.bf16.msra.mxu0 %v14559
    %14937 = vmatpush.bf16.msra.mxu0 %v14555
    %14938 = vmatpush.bf16.msra.mxu0 %v14551
    %14939 = vmatpush.bf16.msra.mxu0 %v14547
    %14940 = vmatpush.bf16.msra.mxu0 %v14543
    %14941 = vmatmul.bf16.gmra.mxu0 %v13983
    %v14942 = vpop.f32.mrf.mxu0
    %v14943 = vadd.f32 %v14930, %v14942
    %v14944 = vpop.f32.mrf.mxu0
    %14945 = vdwg.mxu0
    %14946 = vmatpush.bf16.msra.mxu0 %v14603
    %14947 = vmatpush.bf16.msra.mxu0 %v14599
    %14948 = vmatpush.bf16.msra.mxu0 %v14595
    %14949 = vmatpush.bf16.msra.mxu0 %v14591
    %14950 = vmatpush.bf16.msra.mxu0 %v14587
    %14951 = vmatpush.bf16.msra.mxu0 %v14583
    %14952 = vmatpush.bf16.msra.mxu0 %v14579
    %14953 = vmatpush.bf16.msra.mxu0 %v14575
    %14954 = vmatmul.bf16.gmra.mxu0 %v13984
    %v14955 = vpop.f32.mrf.mxu0
    %v14956 = vadd.f32 %v14943, %v14955
    %v14957 = vpop.f32.mrf.mxu0
    %14958 = vdwg.mxu0
    %14959 = vmatpush.bf16.msra.mxu0 %v14635
    %14960 = vmatpush.bf16.msra.mxu0 %v14631
    %14961 = vmatpush.bf16.msra.mxu0 %v14627
    %14962 = vmatpush.bf16.msra.mxu0 %v14623
    %14963 = vmatpush.bf16.msra.mxu0 %v14619
    %14964 = vmatpush.bf16.msra.mxu0 %v14615
    %14965 = vmatpush.bf16.msra.mxu0 %v14611
    %14966 = vmatpush.bf16.msra.mxu0 %v14607
    %14967 = vmatmul.bf16.gmra.mxu0 %v13985
    %v14968 = vpop.f32.mrf.mxu0
    %v14969 = vadd.f32 %v14956, %v14968
    %v14970 = vpop.f32.mrf.mxu0
    %14971 = vdwg.mxu0
    %v14972 = vmax.f32 %v14813, 0.0
    %v14973 = vmax.f32 %v14865, 0.0
    %v14974 = vmax.f32 %v14917, 0.0
    %v14975 = vmax.f32 %v14969, 0.0
    %v14976 = vpack.c.bf16 %v14972, %v14972
    %v14977 = vpack.c.bf16 %v14973, %v14973
    %v14978 = vpack.c.bf16 %v14974, %v14974
    %v14979 = vpack.c.bf16 %v14975, %v14975
    %v14980 = vld [vmem:[%s9] sm:$0xf]
    %v14981 = vld [vmem:[%s9 + $0x4] sm:$0xf]
    %v14982 = vld [vmem:[%s9 + $0x8] sm:$0xf]
    %v14983 = vld [vmem:[%s9 + $0xc] sm:$0xf]
    %v14984 = vld [vmem:[%s9 + $0x10] sm:$0xf]
    %v14985 = vld [vmem:[%s9 + $0x14] sm:$0xf]
    %v14986 = vld [vmem:[%s9 + $0x18] sm:$0xf]
    %v14987 = vld [vmem:[%s9 + $0x1c] sm:$0xf]
    %v14988 = vld [vmem:[%s9 + $0x20] sm:$0xf]
    %v14989 = vld [vmem:[%s9 + $0x24] sm:$0xf]
    %v14990 = vld [vmem:[%s9 + $0x28] sm:$0xf]
    %v14991 = vld [vmem:[%s9 + $0x2c] sm:$0xf]
    %v14992 = vld [vmem:[%s9 + $0x30] sm:$0xf]
    %v14993 = vld [vmem:[%s9 + $0x34] sm:$0xf]
    %v14994 = vld [vmem:[%s9 + $0x38] sm:$0xf]
    %v14995 = vld [vmem:[%s9 + $0x3c] sm:$0xf]
    %v14996 = vld [vmem:[%s9 + $0x40] sm:$0xf]
    %v14997 = vld [vmem:[%s9 + $0x44] sm:$0xf]
    %v14998 = vld [vmem:[%s9 + $0x48] sm:$0xf]
    %v14999 = vld [vmem:[%s9 + $0x4c] sm:$0xf]
    %v15000 = vld [vmem:[%s9 + $0x50] sm:$0xf]
    %v15001 = vld [vmem:[%s9 + $0x54] sm:$0xf]
    %v15002 = vld [vmem:[%s9 + $0x58] sm:$0xf]
    %v15003 = vld [vmem:[%s9 + $0x5c] sm:$0xf]
    %v15004 = vld [vmem:[%s9 + $0x60] sm:$0xf]
    %v15005 = vld [vmem:[%s9 + $0x64] sm:$0xf]
    %v15006 = vld [vmem:[%s9 + $0x68] sm:$0xf]
    %v15007 = vld [vmem:[%s9 + $0x6c] sm:$0xf]
    %v15008 = vld [vmem:[%s9 + $0x70] sm:$0xf]
    %v15009 = vld [vmem:[%s9 + $0x74] sm:$0xf]
    %v15010 = vld [vmem:[%s9 + $0x78] sm:$0xf]
    %v15011 = vld [vmem:[%s9 + $0x7c] sm:$0xf]
    %v15012 = vld [vmem:[%s9 + $0x80] sm:$0xf]
    %v15013 = vld [vmem:[%s9 + $0x84] sm:$0xf]
    %v15014 = vld [vmem:[%s9 + $0x88] sm:$0xf]
    %v15015 = vld [vmem:[%s9 + $0x8c] sm:$0xf]
    %v15016 = vld [vmem:[%s9 + $0x90] sm:$0xf]
    %v15017 = vld [vmem:[%s9 + $0x94] sm:$0xf]
    %v15018 = vld [vmem:[%s9 + $0x98] sm:$0xf]
    %v15019 = vld [vmem:[%s9 + $0x9c] sm:$0xf]
    %v15020 = vld [vmem:[%s9 + $0xa0] sm:$0xf]
    %v15021 = vld [vmem:[%s9 + $0xa4] sm:$0xf]
    %v15022 = vld [vmem:[%s9 + $0xa8] sm:$0xf]
    %v15023 = vld [vmem:[%s9 + $0xac] sm:$0xf]
    %v15024 = vld [vmem:[%s9 + $0xb0] sm:$0xf]
    %v15025 = vld [vmem:[%s9 + $0xb4] sm:$0xf]
    %v15026 = vld [vmem:[%s9 + $0xb8] sm:$0xf]
    %v15027 = vld [vmem:[%s9 + $0xbc] sm:$0xf]
    %v15028 = vld [vmem:[%s9 + $0xc0] sm:$0xf]
    %v15029 = vld [vmem:[%s9 + $0xc4] sm:$0xf]
    %v15030 = vld [vmem:[%s9 + $0xc8] sm:$0xf]
    %v15031 = vld [vmem:[%s9 + $0xcc] sm:$0xf]
    %v15032 = vld [vmem:[%s9 + $0xd0] sm:$0xf]
    %v15033 = vld [vmem:[%s9 + $0xd4] sm:$0xf]
    %v15034 = vld [vmem:[%s9 + $0xd8] sm:$0xf]
    %v15035 = vld [vmem:[%s9 + $0xdc] sm:$0xf]
    %v15036 = vld [vmem:[%s9 + $0xe0] sm:$0xf]
    %v15037 = vld [vmem:[%s9 + $0xe4] sm:$0xf]
    %v15038 = vld [vmem:[%s9 + $0xe8] sm:$0xf]
    %v15039 = vld [vmem:[%s9 + $0xec] sm:$0xf]
    %v15040 = vld [vmem:[%s9 + $0xf0] sm:$0xf]
    %v15041 = vld [vmem:[%s9 + $0xf4] sm:$0xf]
    %v15042 = vld [vmem:[%s9 + $0xf8] sm:$0xf]
    %v15043 = vld [vmem:[%s9 + $0xfc] sm:$0xf]
    %v15044 = vld [vmem:[%s10] sm:$0x1]
    %v15046 = vperm.slane %v15044, 0
    %v15112 = vunpack.c.l.b16 %v14980
    %v15113 = vunpack.c.l.b16 %v14981
    %v15114 = vunpack.c.l.b16 %v14982
    %v15115 = vunpack.c.l.b16 %v14983
    %v15116 = vunpack.c.l.b16 %v14984
    %v15117 = vunpack.c.l.b16 %v14985
    %v15118 = vunpack.c.l.b16 %v14986
    %v15119 = vunpack.c.l.b16 %v14987
    %v15120 = vunpack.c.l.b16 %v14988
    %v15121 = vunpack.c.l.b16 %v14989
    %v15122 = vunpack.c.l.b16 %v14990
    %v15123 = vunpack.c.l.b16 %v14991
    %v15124 = vunpack.c.l.b16 %v14992
    %v15125 = vunpack.c.l.b16 %v14993
    %v15126 = vunpack.c.l.b16 %v14994
    %v15127 = vunpack.c.l.b16 %v14995
    %v15128 = vunpack.c.l.b16 %v14996
    %v15129 = vunpack.c.l.b16 %v14997
    %v15130 = vunpack.c.l.b16 %v14998
    %v15131 = vunpack.c.l.b16 %v14999
    %v15132 = vunpack.c.l.b16 %v15000
    %v15133 = vunpack.c.l.b16 %v15001
    %v15134 = vunpack.c.l.b16 %v15002
    %v15135 = vunpack.c.l.b16 %v15003
    %v15136 = vunpack.c.l.b16 %v15004
    %v15137 = vunpack.c.l.b16 %v15005
    %v15138 = vunpack.c.l.b16 %v15006
    %v15139 = vunpack.c.l.b16 %v15007
    %v15140 = vunpack.c.l.b16 %v15008
    %v15141 = vunpack.c.l.b16 %v15009
    %v15142 = vunpack.c.l.b16 %v15010
    %v15143 = vunpack.c.l.b16 %v15011
    %v15144 = vunpack.c.l.b16 %v15012
    %v15145 = vunpack.c.l.b16 %v15013
    %v15146 = vunpack.c.l.b16 %v15014
    %v15147 = vunpack.c.l.b16 %v15015
    %v15148 = vunpack.c.l.b16 %v15016
    %v15149 = vunpack.c.l.b16 %v15017
    %v15150 = vunpack.c.l.b16 %v15018
    %v15151 = vunpack.c.l.b16 %v15019
    %v15152 = vunpack.c.l.b16 %v15020
    %v15153 = vunpack.c.l.b16 %v15021
    %v15154 = vunpack.c.l.b16 %v15022
    %v15155 = vunpack.c.l.b16 %v15023
    %v15156 = vunpack.c.l.b16 %v15024
    %v15157 = vunpack.c.l.b16 %v15025
    %v15158 = vunpack.c.l.b16 %v15026
    %v15159 = vunpack.c.l.b16 %v15027
    %v15160 = vunpack.c.l.b16 %v15028
    %v15161 = vunpack.c.l.b16 %v15029
    %v15162 = vunpack.c.l.b16 %v15030
    %v15163 = vunpack.c.l.b16 %v15031
    %v15164 = vunpack.c.l.b16 %v15032
    %v15165 = vunpack.c.l.b16 %v15033
    %v15166 = vunpack.c.l.b16 %v15034
    %v15167 = vunpack.c.l.b16 %v15035
    %v15168 = vunpack.c.l.b16 %v15036
    %v15169 = vunpack.c.l.b16 %v15037
    %v15170 = vunpack.c.l.b16 %v15038
    %v15171 = vunpack.c.l.b16 %v15039
    %v15172 = vunpack.c.l.b16 %v15040
    %v15173 = vunpack.c.l.b16 %v15041
    %v15174 = vunpack.c.l.b16 %v15042
    %v15175 = vunpack.c.l.b16 %v15043
    %v15176 = vpack.c.b16 %v15113, %v15112
    %v15177 = vpack.c.b16 %v15115, %v15114
    %v15178 = vpack.c.b16 %v15117, %v15116
    %v15179 = vpack.c.b16 %v15119, %v15118
    %v15180 = vpack.c.b16 %v15121, %v15120
    %v15181 = vpack.c.b16 %v15123, %v15122
    %v15182 = vpack.c.b16 %v15125, %v15124
    %v15183 = vpack.c.b16 %v15127, %v15126
    %v15184 = vpack.c.b16 %v15129, %v15128
    %v15185 = vpack.c.b16 %v15131, %v15130
    %v15186 = vpack.c.b16 %v15133, %v15132
    %v15187 = vpack.c.b16 %v15135, %v15134
    %v15188 = vpack.c.b16 %v15137, %v15136
    %v15189 = vpack.c.b16 %v15139, %v15138
    %v15190 = vpack.c.b16 %v15141, %v15140
    %v15191 = vpack.c.b16 %v15143, %v15142
    %v15192 = vpack.c.b16 %v15145, %v15144
    %v15193 = vpack.c.b16 %v15147, %v15146
    %v15194 = vpack.c.b16 %v15149, %v15148
    %v15195 = vpack.c.b16 %v15151, %v15150
    %v15196 = vpack.c.b16 %v15153, %v15152
    %v15197 = vpack.c.b16 %v15155, %v15154
    %v15198 = vpack.c.b16 %v15157, %v15156
    %v15199 = vpack.c.b16 %v15159, %v15158
    %v15200 = vpack.c.b16 %v15161, %v15160
    %v15201 = vpack.c.b16 %v15163, %v15162
    %v15202 = vpack.c.b16 %v15165, %v15164
    %v15203 = vpack.c.b16 %v15167, %v15166
    %v15204 = vpack.c.b16 %v15169, %v15168
    %v15205 = vpack.c.b16 %v15171, %v15170
    %v15206 = vpack.c.b16 %v15173, %v15172
    %v15207 = vpack.c.b16 %v15175, %v15174
    %15240 = vmatpush.bf16.msra.mxu0 %v15183
    %15241 = vmatpush.bf16.msra.mxu0 %v15182
    %15242 = vmatpush.bf16.msra.mxu0 %v15181
    %15243 = vmatpush.bf16.msra.mxu0 %v15180
    %15244 = vmatpush.bf16.msra.mxu0 %v15179
    %15245 = vmatpush.bf16.msra.mxu0 %v15178
    %15246 = vmatpush.bf16.msra.mxu0 %v15177
    %15247 = vmatpush.bf16.msra.mxu0 %v15176
    %15248 = vmatmul.bf16.gmra.mxu0 %v14976
    %v15249 = vpop.f32.mrf.mxu0
    %v15250 = vadd.f32 %v15046, %v15249
    %v15251 = vpop.f32.mrf.mxu0
    %15252 = vdwg.mxu0
    %15253 = vmatpush.bf16.msra.mxu0 %v15191
    %15254 = vmatpush.bf16.msra.mxu0 %v15190
    %15255 = vmatpush.bf16.msra.mxu0 %v15189
    %15256 = vmatpush.bf16.msra.mxu0 %v15188
    %15257 = vmatpush.bf16.msra.mxu0 %v15187
    %15258 = vmatpush.bf16.msra.mxu0 %v15186
    %15259 = vmatpush.bf16.msra.mxu0 %v15185
    %15260 = vmatpush.bf16.msra.mxu0 %v15184
    %15261 = vmatmul.bf16.gmra.mxu0 %v14977
    %v15262 = vpop.f32.mrf.mxu0
    %v15263 = vadd.f32 %v15250, %v15262
    %v15264 = vpop.f32.mrf.mxu0
    %15265 = vdwg.mxu0
    %15266 = vmatpush.bf16.msra.mxu0 %v15199
    %15267 = vmatpush.bf16.msra.mxu0 %v15198
    %15268 = vmatpush.bf16.msra.mxu0 %v15197
    %15269 = vmatpush.bf16.msra.mxu0 %v15196
    %15270 = vmatpush.bf16.msra.mxu0 %v15195
    %15271 = vmatpush.bf16.msra.mxu0 %v15194
    %15272 = vmatpush.bf16.msra.mxu0 %v15193
    %15273 = vmatpush.bf16.msra.mxu0 %v15192
    %15274 = vmatmul.bf16.gmra.mxu0 %v14978
    %v15275 = vpop.f32.mrf.mxu0
    %v15276 = vadd.f32 %v15263, %v15275
    %v15277 = vpop.f32.mrf.mxu0
    %15278 = vdwg.mxu0
    %15279 = vmatpush.bf16.msra.mxu0 %v15207
    %15280 = vmatpush.bf16.msra.mxu0 %v15206
    %15281 = vmatpush.bf16.msra.mxu0 %v15205
    %15282 = vmatpush.bf16.msra.mxu0 %v15204
    %15283 = vmatpush.bf16.msra.mxu0 %v15203
    %15284 = vmatpush.bf16.msra.mxu0 %v15202
    %15285 = vmatpush.bf16.msra.mxu0 %v15201
    %15286 = vmatpush.bf16.msra.mxu0 %v15200
    %15287 = vmatmul.bf16.gmra.mxu0 %v14979
    %v15288 = vpop.f32.mrf.mxu0
    %v15289 = vadd.f32 %v15276, %v15288
    %v15290 = vpop.f32.mrf.mxu0
    %15291 = vdwg.mxu0
    %15292 = vst [vmem:[%s11] sm:$0x3] %v15289
    // Predicated region
    $region50: #{captcha_cnn_forward.1} parent=1 // pred_check
      _
    $region51: #{captcha_cnn_forward.1} parent=1 // pred_check_branch
      %15294 = sbr.rel (0) target = $region53
    $region52: #{captcha_cnn_forward.1} parent=1 // pred_region
      _
    $region53: #{captcha_cnn_forward.1} parent=1 // pred_fallthru
      _
    // Predicated region
    $region54: #{captcha_cnn_forward.1} parent=1 // pred_check
      _
    $region55: #{captcha_cnn_forward.1} parent=1 // pred_check_branch
      %15296 = sbr.rel (0) target = $region57
    $region56: #{captcha_cnn_forward.1} parent=1 // pred_region
      _
    $region57: #{captcha_cnn_forward.1} parent=1 // pred_fallthru
      _
    %15297 = vsyncpa [#allocation6], 1

</llo_original>
